<compile_context>
chip_gen: v5e
topology: v5e:2x2
jax: 0.10.0
libtpu: 0.0.40
codegen_flags: <defaults>
</compile_context>

<pallas_src>
import jax
import jax.numpy as jnp
from jax import lax
from jax.experimental import pallas as pl
from jax.experimental.pallas import tpu as pltpu

# Make the pure-JAX reference (and any traced dots) use true f32 matmuls so the
# numerical comparison against the f32 Pallas kernels is meaningful.
jax.config.update("jax_default_matmul_precision", "highest")

BN_EPS = 1e-5
KERNEL_SIZES = (6, 9, 12, 15)
OUT_CHANNELS = 256
FC_DIMS = (256, 1024, 64)
NUM_CLASSES = 16
SEQ_LEN = 110
CIN = 4

_VMEM = pl.BlockSpec(memory_space=pltpu.MemorySpace.VMEM)


# ----------------------------------------------------------------------------
# Kernel 1: all four ConvBlocks fused
# ----------------------------------------------------------------------------
def conv_blocks_kernel(*refs):
    """Fused forward of all ConvBlocks.

    refs = (xcol_0, ..., xcol_{B-1}, w_0, ..., w_{B-1}, gb, out)
      xcol_b : (N, T_b, Cin*K_b)  im2col'ed input for block b
      w_b    : (Cin*K_b, C)       flattened conv weight
      gb     : (2*B, C)           rows 2b / 2b+1 = gamma / beta of block b
      out    : (N, B*C)           relu(maxpool(bn(conv(x)))) for all blocks
    """
    nblk = (len(refs) - 2) // 2
    xcol_refs = refs[:nblk]
    w_refs = refs[nblk:2 * nblk]
    gb_ref = refs[2 * nblk]
    out_ref = refs[2 * nblk + 1]

    for blk in range(nblk):
        xcol_ref = xcol_refs[blk]
        w_ref = w_refs[blk]
        n, t, _ = xcol_ref.shape
        c = w_ref.shape[1]
        w = w_ref[...]                                   # (CK, C)

        s = jnp.zeros((1, c), jnp.float32)
        ss = jnp.zeros((1, c), jnp.float32)
        ymax = []
        ymin = []
        # TODO(synk): for large N, tile this over a grid axis with a two-pass BN
        # (per-tile sum/sumsq/max/min accumulation, then finalize) instead of the
        # static unroll + whole-batch VMEM residency used here for the toy size.
        for b in range(n):
            # Conv1d as a clean 2-D MXU dot: (T, CK) x (CK, C) -> (T, C)
            yb = jnp.dot(xcol_ref[b], w, preferred_element_type=jnp.float32)
            s = s + jnp.sum(yb, axis=0, keepdims=True)       # one-sweep stats
            ss = ss + jnp.sum(yb * yb, axis=0, keepdims=True)
            ymax.append(jnp.max(yb, axis=0, keepdims=True))  # (1, C)
            ymin.append(jnp.min(yb, axis=0, keepdims=True))  # (1, C)

        # Training-mode BatchNorm1d batch stats over (N, T), biased variance,
        # folded into one per-channel scale/shift.  The conv bias is omitted:
        # it is exactly cancelled by the mean subtraction.
        inv_count = 1.0 / float(n * t)
        mean = s * inv_count
        var = ss * inv_count - mean * mean
        gamma = gb_ref[2 * blk:2 * blk + 1, :]           # (1, C)
        beta = gb_ref[2 * blk + 1:2 * blk + 2, :]        # (1, C)
        scale = gamma * lax.rsqrt(var + BN_EPS)          # (1, C)
        shift = beta - mean * scale                      # (1, C)

        # max_t(scale*y + shift) == scale*max_t(y) + shift when scale >= 0
        # (min_t otherwise), and ReLU commutes with the max, so the whole
        # BN/ReLU/MaxPool tail runs on (1, C) tiles only.
        for b in range(n):
            zb = jnp.where(scale >= 0.0, ymax[b] * scale, ymin[b] * scale) + shift
            out_ref[b:b + 1, blk * c:(blk + 1) * c] = jnp.maximum(zb, 0.0)


# ----------------------------------------------------------------------------
# Kernel 2: fused MLP head (fc1 + hidden fc layers + fc2)
# ----------------------------------------------------------------------------
def mlp_kernel(convf_ref, extras_ref, w1a_ref, w1b_ref, b1_ref,
               w2_ref, b2_ref, w3_ref, b3_ref, w4_ref, b4_ref, out_ref):
    # fc1 on the lane-aligned 1024-wide conv features ...
    h = jnp.dot(convf_ref[...], w1a_ref[...], preferred_element_type=jnp.float32)
    # ... plus the 2 scalar side-features as rank-1 updates (avoids a K=2 dot).
    h = h + extras_ref[:, 0:1] * w1b_ref[0:1, :]
    h = h + extras_ref[:, 1:2] * w1b_ref[1:2, :]
    h = jnp.maximum(h + b1_ref[...], 0.0)
    h = jnp.maximum(
        jnp.dot(h, w2_ref[...], preferred_element_type=jnp.float32) + b2_ref[...], 0.0)
    h = jnp.maximum(
        jnp.dot(h, w3_ref[...], preferred_element_type=jnp.float32) + b3_ref[...], 0.0)
    out_ref[...] = (
        jnp.dot(h, w4_ref[...], preferred_element_type=jnp.float32) + b4_ref[...])


# ----------------------------------------------------------------------------
# Wrapper (plain-JAX glue: transpose, im2col, weight reshapes, packing)
# ----------------------------------------------------------------------------
def _im2col(x_ncl, k):
    n, cin, length = x_ncl.shape
    t = length - k + 1
    idx = jnp.arange(t)[:, None] + jnp.arange(k)[None, :]          # (T, K)
    patches = x_ncl[:, :, idx]                                     # (N, Cin, T, K)
    return jnp.transpose(patches, (0, 2, 1, 3)).reshape(n, t, cin * k)


def multi_deepfam_forward(x, plus_init, minus_init, params):
    """x: (N, 110, 4); plus_init, minus_init: (N,).  Returns (N, 16)."""
    n = x.shape[0]
    x_ncl = jnp.transpose(x, (0, 2, 1)).astype(jnp.float32)        # (N, 4, 110)

    nblk = len(KERNEL_SIZES)
    xcols, w_flats, gb_rows = [], [], []
    for k in KERNEL_SIZES:
        p = params["conv"][k]
        xcols.append(_im2col(x_ncl, k))                            # (N, T_k, 4k)
        w_flats.append(
            jnp.transpose(p["w"], (1, 2, 0)).reshape(CIN * k, OUT_CHANNELS))
        gb_rows.append(p["gamma"])
        gb_rows.append(p["beta"])
        # note: conv bias p["b"] is NOT passed -- it is exactly cancelled by the
        # training-mode BatchNorm mean subtraction.
    gb = jnp.stack(gb_rows, axis=0)                                # (2*B, C)

    convf = pl.pallas_call(
        conv_blocks_kernel,
        out_shape=jax.ShapeDtypeStruct((n, nblk * OUT_CHANNELS), jnp.float32),
        in_specs=[_VMEM] * (2 * nblk + 1),
        out_specs=_VMEM,
    )(*xcols, *w_flats, gb)

    extras = jnp.stack([plus_init, minus_init], axis=1).astype(jnp.float32)  # (N, 2)

    # Split the fc1 weight: 1024 lane-aligned conv features + 2 scalar features.
    w1 = params["fc1_w"]                                  # torch layout (out, in)
    w1a = jnp.transpose(w1[:, :nblk * OUT_CHANNELS])      # (1024, 256)
    w1b = jnp.transpose(w1[:, nblk * OUT_CHANNELS:])      # (2, 256)
    b1 = params["fc1_b"].reshape(1, -1)
    w2 = jnp.transpose(params["fc_w2"]); b2 = params["fc_b2"].reshape(1, -1)
    w3 = jnp.transpose(params["fc_w3"]); b3 = params["fc_b3"].reshape(1, -1)
    w4 = jnp.transpose(params["fc2_w"]); b4 = params["fc2_b"].reshape(1, -1)

    return pl.pallas_call(
        mlp_kernel,
        out_shape=jax.ShapeDtypeStruct((n, NUM_CLASSES), jnp.float32),
        in_specs=[_VMEM] * 11,
        out_specs=_VMEM,
    )(convf, extras, w1a, w1b, b1, w2, b2, w3, b3, w4, b4)


# ----------------------------------------------------------------------------
# Pure-JAX reference (mirrors the PyTorch module exactly, incl. conv bias)
# ----------------------------------------------------------------------------
def multi_deepfam_reference(x, plus_init, minus_init, params):
    x_ncl = jnp.transpose(x, (0, 2, 1)).astype(jnp.float32)
    feats = []
    for k in KERNEL_SIZES:
        p = params["conv"][k]
        y = lax.conv_general_dilated(
            x_ncl, p["w"], window_strides=(1,), padding="VALID",
            dimension_numbers=("NCH", "OIH", "NCH"))
        y = y + p["b"][None, :, None]
        mean = jnp.mean(y, axis=(0, 2), keepdims=True)
        var = jnp.mean((y - mean) ** 2, axis=(0, 2), keepdims=True)
        y = (y - mean) * lax.rsqrt(var + BN_EPS)
        y = y * p["gamma"][None, :, None] + p["beta"][None, :, None]
        y = jnp.maximum(y, 0.0)
        feats.append(jnp.max(y, axis=-1))
    feats.append(plus_init[:, None].astype(jnp.float32))
    feats.append(minus_init[:, None].astype(jnp.float32))
    h = jnp.concatenate(feats, axis=1)                               # (N, 1026)
    h = jnp.maximum(h @ params["fc1_w"].T + params["fc1_b"], 0.0)
    h = jnp.maximum(h @ params["fc_w2"].T + params["fc_b2"], 0.0)
    h = jnp.maximum(h @ params["fc_w3"].T + params["fc_b3"], 0.0)
    return h @ params["fc2_w"].T + params["fc2_b"]


if __name__ == "__main__":
    N = 2                      # small batch; L = 110 is fixed by the module spec

    key = jax.random.PRNGKey(0)
    keys = iter(jax.random.split(key, 32))

    params = {"conv": {}}
    for k in KERNEL_SIZES:
        params["conv"][k] = dict(
            w=jax.random.normal(next(keys), (OUT_CHANNELS, CIN, k), jnp.float32) * 0.1,
            b=jax.random.normal(next(keys), (OUT_CHANNELS,), jnp.float32) * 0.1,
            gamma=1.0 + 0.1 * jax.random.normal(next(keys), (OUT_CHANNELS,), jnp.float32),
            beta=0.1 * jax.random.normal(next(keys), (OUT_CHANNELS,), jnp.float32),
        )

    def linear_init(kw, kb, fan_in, fan_out):
        scale = 1.0 / float(fan_in) ** 0.5
        w = jax.random.normal(kw, (fan_out, fan_in), jnp.float32) * scale
        b = jax.random.normal(kb, (fan_out,), jnp.float32) * scale
        return w, b

    in_dim = OUT_CHANNELS * len(KERNEL_SIZES) + 2
    params["fc1_w"], params["fc1_b"] = linear_init(next(keys), next(keys), in_dim, FC_DIMS[0])
    params["fc_w2"], params["fc_b2"] = linear_init(next(keys), next(keys), FC_DIMS[0], FC_DIMS[1])
    params["fc_w3"], params["fc_b3"] = linear_init(next(keys), next(keys), FC_DIMS[1], FC_DIMS[2])
    params["fc2_w"], params["fc2_b"] = linear_init(next(keys), next(keys), FC_DIMS[2], NUM_CLASSES)

    x = jax.random.normal(next(keys), (N, SEQ_LEN, CIN), jnp.float32)
    plus_init = jax.random.normal(next(keys), (N,), jnp.float32)
    minus_init = jax.random.normal(next(keys), (N,), jnp.float32)

    out = multi_deepfam_forward(x, plus_init, minus_init, params)
    out = jax.block_until_ready(out)
    assert out.shape == (N, NUM_CLASSES), out.shape

    ref = multi_deepfam_reference(x, plus_init, minus_init, params)
    max_err = float(jnp.max(jnp.abs(out - ref)))
    assert jnp.allclose(out, ref, rtol=2e-3, atol=2e-3), max_err

    print("KERNEL_OK")
</pallas_src>

<mosaic_0001>
module attributes {stable_mosaic.version = 11 : i64} {
  func.func @conv_blocks_kernel(%arg0: memref<2x105x24xf32, #tpu.memory_space<vmem>>, %arg1: memref<2x102x36xf32, #tpu.memory_space<vmem>>, %arg2: memref<2x99x48xf32, #tpu.memory_space<vmem>>, %arg3: memref<2x96x60xf32, #tpu.memory_space<vmem>>, %arg4: memref<24x256xf32, #tpu.memory_space<vmem>>, %arg5: memref<36x256xf32, #tpu.memory_space<vmem>>, %arg6: memref<48x256xf32, #tpu.memory_space<vmem>>, %arg7: memref<60x256xf32, #tpu.memory_space<vmem>>, %arg8: memref<8x256xf32, #tpu.memory_space<vmem>>, %arg9: memref<2x1024xf32, #tpu.memory_space<vmem>>) attributes {dimension_semantics = [], scalar_prefetch = 0 : i64, scratch_operands = 0 : i64, tpu.core_type = #tpu.core_type<tc>} {
    %c0 = arith.constant 0 : index
    %c0_0 = arith.constant 0 : index
    %0 = vector.load %arg4[%c0, %c0_0] : memref<24x256xf32, #tpu.memory_space<vmem>>, vector<24x256xf32>
    %cst = arith.constant 0.000000e+00 : f32
    %1 = vector.broadcast %cst : f32 to vector<1x256xf32>
    %cst_1 = arith.constant 0.000000e+00 : f32
    %2 = vector.broadcast %cst_1 : f32 to vector<1x256xf32>
    %c0_2 = arith.constant 0 : index
    %c0_3 = arith.constant 0 : index
    %c0_4 = arith.constant 0 : index
    %3 = vector.load %arg0[%c0_2, %c0_3, %c0_4] : memref<2x105x24xf32, #tpu.memory_space<vmem>>, vector<1x105x24xf32>
    %4 = vector.shape_cast %3 : vector<1x105x24xf32> to vector<105x24xf32>
    %cst_5 = arith.constant dense<0.000000e+00> : vector<105x256xf32>
    %5 = tpu.matmul %4, %0, %cst_5 {dimension_numbers = #tpu.dot_dimension_numbers<[1], [0], [0], [1], [0, 0, 1, 1], [], []>, precision = #tpu.contract_precision<fp32>} : vector<105x24xf32>, vector<24x256xf32>, vector<105x256xf32> -> vector<105x256xf32>
    %cst_6 = arith.constant dense<0.000000e+00> : vector<256xf32>
    %6 = vector.multi_reduction <add>, %5, %cst_6 [0] : vector<105x256xf32> to vector<256xf32>
    %7 = vector.shape_cast %6 : vector<256xf32> to vector<1x256xf32>
    %8 = arith.addf %1, %7 : vector<1x256xf32>
    %9 = arith.mulf %5, %5 : vector<105x256xf32>
    %cst_7 = arith.constant dense<0.000000e+00> : vector<256xf32>
    %10 = vector.multi_reduction <add>, %9, %cst_7 [0] : vector<105x256xf32> to vector<256xf32>
    %11 = vector.shape_cast %10 : vector<256xf32> to vector<1x256xf32>
    %12 = arith.addf %2, %11 : vector<1x256xf32>
    %cst_8 = arith.constant dense<0xFF800000> : vector<256xf32>
    %13 = vector.multi_reduction <maximumf>, %5, %cst_8 [0] : vector<105x256xf32> to vector<256xf32>
    %14 = vector.shape_cast %13 : vector<256xf32> to vector<1x256xf32>
    %cst_9 = arith.constant dense<0x7F800000> : vector<256xf32>
    %15 = vector.multi_reduction <minimumf>, %5, %cst_9 [0] : vector<105x256xf32> to vector<256xf32>
    %16 = vector.shape_cast %15 : vector<256xf32> to vector<1x256xf32>
    %c1 = arith.constant 1 : index
    %c0_10 = arith.constant 0 : index
    %c0_11 = arith.constant 0 : index
    %17 = vector.load %arg0[%c1, %c0_10, %c0_11] : memref<2x105x24xf32, #tpu.memory_space<vmem>>, vector<1x105x24xf32>
    %18 = vector.shape_cast %17 : vector<1x105x24xf32> to vector<105x24xf32>
    %cst_12 = arith.constant dense<0.000000e+00> : vector<105x256xf32>
    %19 = tpu.matmul %18, %0, %cst_12 {dimension_numbers = #tpu.dot_dimension_numbers<[1], [0], [0], [1], [0, 0, 1, 1], [], []>, precision = #tpu.contract_precision<fp32>} : vector<105x24xf32>, vector<24x256xf32>, vector<105x256xf32> -> vector<105x256xf32>
    %cst_13 = arith.constant dense<0.000000e+00> : vector<256xf32>
    %20 = vector.multi_reduction <add>, %19, %cst_13 [0] : vector<105x256xf32> to vector<256xf32>
    %21 = vector.shape_cast %20 : vector<256xf32> to vector<1x256xf32>
    %22 = arith.addf %8, %21 : vector<1x256xf32>
    %23 = arith.mulf %19, %19 : vector<105x256xf32>
    %cst_14 = arith.constant dense<0.000000e+00> : vector<256xf32>
    %24 = vector.multi_reduction <add>, %23, %cst_14 [0] : vector<105x256xf32> to vector<256xf32>
    %25 = vector.shape_cast %24 : vector<256xf32> to vector<1x256xf32>
    %26 = arith.addf %12, %25 : vector<1x256xf32>
    %cst_15 = arith.constant dense<0xFF800000> : vector<256xf32>
    %27 = vector.multi_reduction <maximumf>, %19, %cst_15 [0] : vector<105x256xf32> to vector<256xf32>
    %28 = vector.shape_cast %27 : vector<256xf32> to vector<1x256xf32>
    %cst_16 = arith.constant dense<0x7F800000> : vector<256xf32>
    %29 = vector.multi_reduction <minimumf>, %19, %cst_16 [0] : vector<105x256xf32> to vector<256xf32>
    %30 = vector.shape_cast %29 : vector<256xf32> to vector<1x256xf32>
    %cst_17 = arith.constant 0.00476190494 : f32
    %31 = vector.broadcast %cst_17 : f32 to vector<1x256xf32>
    %32 = arith.mulf %22, %31 : vector<1x256xf32>
    %cst_18 = arith.constant 0.00476190494 : f32
    %33 = vector.broadcast %cst_18 : f32 to vector<1x256xf32>
    %34 = arith.mulf %26, %33 : vector<1x256xf32>
    %35 = arith.mulf %32, %32 : vector<1x256xf32>
    %36 = arith.subf %34, %35 : vector<1x256xf32>
    %c0_19 = arith.constant 0 : index
    %c0_20 = arith.constant 0 : index
    %37 = vector.load %arg8[%c0_19, %c0_20] : memref<8x256xf32, #tpu.memory_space<vmem>>, vector<1x256xf32>
    %c1_21 = arith.constant 1 : index
    %c0_22 = arith.constant 0 : index
    %38 = vector.load %arg8[%c1_21, %c0_22] : memref<8x256xf32, #tpu.memory_space<vmem>>, vector<1x256xf32>
    %cst_23 = arith.constant 9.99999974E-6 : f32
    %39 = vector.broadcast %cst_23 : f32 to vector<1x256xf32>
    %40 = arith.addf %36, %39 : vector<1x256xf32>
    %41 = math.rsqrt %40 : vector<1x256xf32>
    %42 = arith.mulf %37, %41 : vector<1x256xf32>
    %43 = arith.mulf %32, %42 : vector<1x256xf32>
    %44 = arith.subf %38, %43 : vector<1x256xf32>
    %cst_24 = arith.constant 0.000000e+00 : f32
    %45 = vector.broadcast %cst_24 : f32 to vector<1x256xf32>
    %46 = arith.cmpf oge, %42, %45 : vector<1x256xf32>
    %47 = arith.mulf %14, %42 : vector<1x256xf32>
    %48 = arith.mulf %16, %42 : vector<1x256xf32>
    %49 = arith.select %46, %47, %48 : vector<1x256xi1>, vector<1x256xf32>
    %50 = arith.addf %49, %44 : vector<1x256xf32>
    %cst_25 = arith.constant 0.000000e+00 : f32
    %51 = vector.broadcast %cst_25 : f32 to vector<1x256xf32>
    %52 = arith.maximumf %50, %51 : vector<1x256xf32>
    %c0_26 = arith.constant 0 : index
    %c0_27 = arith.constant 0 : index
    %53 = vector.load %arg9[%c0_26, %c0_27] : memref<2x1024xf32, #tpu.memory_space<vmem>>, vector<1x256xf32>
    tpu.vector_store %arg9[%c0_26, %c0_27], %52 {strides = array<i32>} : memref<2x1024xf32, #tpu.memory_space<vmem>>, vector<1x256xf32>,
    %cst_28 = arith.constant 0.000000e+00 : f32
    %54 = vector.broadcast %cst_28 : f32 to vector<1x256xf32>
    %55 = arith.cmpf oge, %42, %54 : vector<1x256xf32>
    %56 = arith.mulf %28, %42 : vector<1x256xf32>
    %57 = arith.mulf %30, %42 : vector<1x256xf32>
    %58 = arith.select %55, %56, %57 : vector<1x256xi1>, vector<1x256xf32>
    %59 = arith.addf %58, %44 : vector<1x256xf32>
    %cst_29 = arith.constant 0.000000e+00 : f32
    %60 = vector.broadcast %cst_29 : f32 to vector<1x256xf32>
    %61 = arith.maximumf %59, %60 : vector<1x256xf32>
    %c1_30 = arith.constant 1 : index
    %c0_31 = arith.constant 0 : index
    %62 = vector.load %arg9[%c1_30, %c0_31] : memref<2x1024xf32, #tpu.memory_space<vmem>>, vector<1x256xf32>
    tpu.vector_store %arg9[%c1_30, %c0_31], %61 {strides = array<i32>} : memref<2x1024xf32, #tpu.memory_space<vmem>>, vector<1x256xf32>,
    %c0_32 = arith.constant 0 : index
    %c0_33 = arith.constant 0 : index
    %63 = vector.load %arg5[%c0_32, %c0_33] : memref<36x256xf32, #tpu.memory_space<vmem>>, vector<36x256xf32>
    %cst_34 = arith.constant 0.000000e+00 : f32
    %64 = vector.broadcast %cst_34 : f32 to vector<1x256xf32>
    %cst_35 = arith.constant 0.000000e+00 : f32
    %65 = vector.broadcast %cst_35 : f32 to vector<1x256xf32>
    %c0_36 = arith.constant 0 : index
    %c0_37 = arith.constant 0 : index
    %c0_38 = arith.constant 0 : index
    %66 = vector.load %arg1[%c0_36, %c0_37, %c0_38] : memref<2x102x36xf32, #tpu.memory_space<vmem>>, vector<1x102x36xf32>
    %67 = vector.shape_cast %66 : vector<1x102x36xf32> to vector<102x36xf32>
    %cst_39 = arith.constant dense<0.000000e+00> : vector<102x256xf32>
    %68 = tpu.matmul %67, %63, %cst_39 {dimension_numbers = #tpu.dot_dimension_numbers<[1], [0], [0], [1], [0, 0, 1, 1], [], []>, precision = #tpu.contract_precision<fp32>} : vector<102x36xf32>, vector<36x256xf32>, vector<102x256xf32> -> vector<102x256xf32>
    %cst_40 = arith.constant dense<0.000000e+00> : vector<256xf32>
    %69 = vector.multi_reduction <add>, %68, %cst_40 [0] : vector<102x256xf32> to vector<256xf32>
    %70 = vector.shape_cast %69 : vector<256xf32> to vector<1x256xf32>
    %71 = arith.addf %64, %70 : vector<1x256xf32>
    %72 = arith.mulf %68, %68 : vector<102x256xf32>
    %cst_41 = arith.constant dense<0.000000e+00> : vector<256xf32>
    %73 = vector.multi_reduction <add>, %72, %cst_41 [0] : vector<102x256xf32> to vector<256xf32>
    %74 = vector.shape_cast %73 : vector<256xf32> to vector<1x256xf32>
    %75 = arith.addf %65, %74 : vector<1x256xf32>
    %cst_42 = arith.constant dense<0xFF800000> : vector<256xf32>
    %76 = vector.multi_reduction <maximumf>, %68, %cst_42 [0] : vector<102x256xf32> to vector<256xf32>
    %77 = vector.shape_cast %76 : vector<256xf32> to vector<1x256xf32>
    %cst_43 = arith.constant dense<0x7F800000> : vector<256xf32>
    %78 = vector.multi_reduction <minimumf>, %68, %cst_43 [0] : vector<102x256xf32> to vector<256xf32>
    %79 = vector.shape_cast %78 : vector<256xf32> to vector<1x256xf32>
    %c1_44 = arith.constant 1 : index
    %c0_45 = arith.constant 0 : index
    %c0_46 = arith.constant 0 : index
    %80 = vector.load %arg1[%c1_44, %c0_45, %c0_46] : memref<2x102x36xf32, #tpu.memory_space<vmem>>, vector<1x102x36xf32>
    %81 = vector.shape_cast %80 : vector<1x102x36xf32> to vector<102x36xf32>
    %cst_47 = arith.constant dense<0.000000e+00> : vector<102x256xf32>
    %82 = tpu.matmul %81, %63, %cst_47 {dimension_numbers = #tpu.dot_dimension_numbers<[1], [0], [0], [1], [0, 0, 1, 1], [], []>, precision = #tpu.contract_precision<fp32>} : vector<102x36xf32>, vector<36x256xf32>, vector<102x256xf32> -> vector<102x256xf32>
    %cst_48 = arith.constant dense<0.000000e+00> : vector<256xf32>
    %83 = vector.multi_reduction <add>, %82, %cst_48 [0] : vector<102x256xf32> to vector<256xf32>
    %84 = vector.shape_cast %83 : vector<256xf32> to vector<1x256xf32>
    %85 = arith.addf %71, %84 : vector<1x256xf32>
    %86 = arith.mulf %82, %82 : vector<102x256xf32>
    %cst_49 = arith.constant dense<0.000000e+00> : vector<256xf32>
    %87 = vector.multi_reduction <add>, %86, %cst_49 [0] : vector<102x256xf32> to vector<256xf32>
    %88 = vector.shape_cast %87 : vector<256xf32> to vector<1x256xf32>
    %89 = arith.addf %75, %88 : vector<1x256xf32>
    %cst_50 = arith.constant dense<0xFF800000> : vector<256xf32>
    %90 = vector.multi_reduction <maximumf>, %82, %cst_50 [0] : vector<102x256xf32> to vector<256xf32>
    %91 = vector.shape_cast %90 : vector<256xf32> to vector<1x256xf32>
    %cst_51 = arith.constant dense<0x7F800000> : vector<256xf32>
    %92 = vector.multi_reduction <minimumf>, %82, %cst_51 [0] : vector<102x256xf32> to vector<256xf32>
    %93 = vector.shape_cast %92 : vector<256xf32> to vector<1x256xf32>
    %cst_52 = arith.constant 0.00490196096 : f32
    %94 = vector.broadcast %cst_52 : f32 to vector<1x256xf32>
    %95 = arith.mulf %85, %94 : vector<1x256xf32>
    %cst_53 = arith.constant 0.00490196096 : f32
    %96 = vector.broadcast %cst_53 : f32 to vector<1x256xf32>
    %97 = arith.mulf %89, %96 : vector<1x256xf32>
    %98 = arith.mulf %95, %95 : vector<1x256xf32>
    %99 = arith.subf %97, %98 : vector<1x256xf32>
    %c2 = arith.constant 2 : index
    %c0_54 = arith.constant 0 : index
    %100 = vector.load %arg8[%c2, %c0_54] : memref<8x256xf32, #tpu.memory_space<vmem>>, vector<1x256xf32>
    %c3 = arith.constant 3 : index
    %c0_55 = arith.constant 0 : index
    %101 = vector.load %arg8[%c3, %c0_55] : memref<8x256xf32, #tpu.memory_space<vmem>>, vector<1x256xf32>
    %cst_56 = arith.constant 9.99999974E-6 : f32
    %102 = vector.broadcast %cst_56 : f32 to vector<1x256xf32>
    %103 = arith.addf %99, %102 : vector<1x256xf32>
    %104 = math.rsqrt %103 : vector<1x256xf32>
    %105 = arith.mulf %100, %104 : vector<1x256xf32>
    %106 = arith.mulf %95, %105 : vector<1x256xf32>
    %107 = arith.subf %101, %106 : vector<1x256xf32>
    %cst_57 = arith.constant 0.000000e+00 : f32
    %108 = vector.broadcast %cst_57 : f32 to vector<1x256xf32>
    %109 = arith.cmpf oge, %105, %108 : vector<1x256xf32>
    %110 = arith.mulf %77, %105 : vector<1x256xf32>
    %111 = arith.mulf %79, %105 : vector<1x256xf32>
    %112 = arith.select %109, %110, %111 : vector<1x256xi1>, vector<1x256xf32>
    %113 = arith.addf %112, %107 : vector<1x256xf32>
    %cst_58 = arith.constant 0.000000e+00 : f32
    %114 = vector.broadcast %cst_58 : f32 to vector<1x256xf32>
    %115 = arith.maximumf %113, %114 : vector<1x256xf32>
    %c0_59 = arith.constant 0 : index
    %c256 = arith.constant 256 : index
    %116 = vector.load %arg9[%c0_59, %c256] : memref<2x1024xf32, #tpu.memory_space<vmem>>, vector<1x256xf32>
    tpu.vector_store %arg9[%c0_59, %c256], %115 {strides = array<i32>} : memref<2x1024xf32, #tpu.memory_space<vmem>>, vector<1x256xf32>,
    %cst_60 = arith.constant 0.000000e+00 : f32
    %117 = vector.broadcast %cst_60 : f32 to vector<1x256xf32>
    %118 = arith.cmpf oge, %105, %117 : vector<1x256xf32>
    %119 = arith.mulf %91, %105 : vector<1x256xf32>
    %120 = arith.mulf %93, %105 : vector<1x256xf32>
    %121 = arith.select %118, %119, %120 : vector<1x256xi1>, vector<1x256xf32>
    %122 = arith.addf %121, %107 : vector<1x256xf32>
    %cst_61 = arith.constant 0.000000e+00 : f32
    %123 = vector.broadcast %cst_61 : f32 to vector<1x256xf32>
    %124 = arith.maximumf %122, %123 : vector<1x256xf32>
    %c1_62 = arith.constant 1 : index
    %c256_63 = arith.constant 256 : index
    %125 = vector.load %arg9[%c1_62, %c256_63] : memref<2x1024xf32, #tpu.memory_space<vmem>>, vector<1x256xf32>
    tpu.vector_store %arg9[%c1_62, %c256_63], %124 {strides = array<i32>} : memref<2x1024xf32, #tpu.memory_space<vmem>>, vector<1x256xf32>,
    %c0_64 = arith.constant 0 : index
    %c0_65 = arith.constant 0 : index
    %126 = vector.load %arg6[%c0_64, %c0_65] : memref<48x256xf32, #tpu.memory_space<vmem>>, vector<48x256xf32>
    %cst_66 = arith.constant 0.000000e+00 : f32
    %127 = vector.broadcast %cst_66 : f32 to vector<1x256xf32>
    %cst_67 = arith.constant 0.000000e+00 : f32
    %128 = vector.broadcast %cst_67 : f32 to vector<1x256xf32>
    %c0_68 = arith.constant 0 : index
    %c0_69 = arith.constant 0 : index
    %c0_70 = arith.constant 0 : index
    %129 = vector.load %arg2[%c0_68, %c0_69, %c0_70] : memref<2x99x48xf32, #tpu.memory_space<vmem>>, vector<1x99x48xf32>
    %130 = vector.shape_cast %129 : vector<1x99x48xf32> to vector<99x48xf32>
    %cst_71 = arith.constant dense<0.000000e+00> : vector<99x256xf32>
    %131 = tpu.matmul %130, %126, %cst_71 {dimension_numbers = #tpu.dot_dimension_numbers<[1], [0], [0], [1], [0, 0, 1, 1], [], []>, precision = #tpu.contract_precision<fp32>} : vector<99x48xf32>, vector<48x256xf32>, vector<99x256xf32> -> vector<99x256xf32>
    %cst_72 = arith.constant dense<0.000000e+00> : vector<256xf32>
    %132 = vector.multi_reduction <add>, %131, %cst_72 [0] : vector<99x256xf32> to vector<256xf32>
    %133 = vector.shape_cast %132 : vector<256xf32> to vector<1x256xf32>
    %134 = arith.addf %127, %133 : vector<1x256xf32>
    %135 = arith.mulf %131, %131 : vector<99x256xf32>
    %cst_73 = arith.constant dense<0.000000e+00> : vector<256xf32>
    %136 = vector.multi_reduction <add>, %135, %cst_73 [0] : vector<99x256xf32> to vector<256xf32>
    %137 = vector.shape_cast %136 : vector<256xf32> to vector<1x256xf32>
    %138 = arith.addf %128, %137 : vector<1x256xf32>
    %cst_74 = arith.constant dense<0xFF800000> : vector<256xf32>
    %139 = vector.multi_reduction <maximumf>, %131, %cst_74 [0] : vector<99x256xf32> to vector<256xf32>
    %140 = vector.shape_cast %139 : vector<256xf32> to vector<1x256xf32>
    %cst_75 = arith.constant dense<0x7F800000> : vector<256xf32>
    %141 = vector.multi_reduction <minimumf>, %131, %cst_75 [0] : vector<99x256xf32> to vector<256xf32>
    %142 = vector.shape_cast %141 : vector<256xf32> to vector<1x256xf32>
    %c1_76 = arith.constant 1 : index
    %c0_77 = arith.constant 0 : index
    %c0_78 = arith.constant 0 : index
    %143 = vector.load %arg2[%c1_76, %c0_77, %c0_78] : memref<2x99x48xf32, #tpu.memory_space<vmem>>, vector<1x99x48xf32>
    %144 = vector.shape_cast %143 : vector<1x99x48xf32> to vector<99x48xf32>
    %cst_79 = arith.constant dense<0.000000e+00> : vector<99x256xf32>
    %145 = tpu.matmul %144, %126, %cst_79 {dimension_numbers = #tpu.dot_dimension_numbers<[1], [0], [0], [1], [0, 0, 1, 1], [], []>, precision = #tpu.contract_precision<fp32>} : vector<99x48xf32>, vector<48x256xf32>, vector<99x256xf32> -> vector<99x256xf32>
    %cst_80 = arith.constant dense<0.000000e+00> : vector<256xf32>
    %146 = vector.multi_reduction <add>, %145, %cst_80 [0] : vector<99x256xf32> to vector<256xf32>
    %147 = vector.shape_cast %146 : vector<256xf32> to vector<1x256xf32>
    %148 = arith.addf %134, %147 : vector<1x256xf32>
    %149 = arith.mulf %145, %145 : vector<99x256xf32>
    %cst_81 = arith.constant dense<0.000000e+00> : vector<256xf32>
    %150 = vector.multi_reduction <add>, %149, %cst_81 [0] : vector<99x256xf32> to vector<256xf32>
    %151 = vector.shape_cast %150 : vector<256xf32> to vector<1x256xf32>
    %152 = arith.addf %138, %151 : vector<1x256xf32>
    %cst_82 = arith.constant dense<0xFF800000> : vector<256xf32>
    %153 = vector.multi_reduction <maximumf>, %145, %cst_82 [0] : vector<99x256xf32> to vector<256xf32>
    %154 = vector.shape_cast %153 : vector<256xf32> to vector<1x256xf32>
    %cst_83 = arith.constant dense<0x7F800000> : vector<256xf32>
    %155 = vector.multi_reduction <minimumf>, %145, %cst_83 [0] : vector<99x256xf32> to vector<256xf32>
    %156 = vector.shape_cast %155 : vector<256xf32> to vector<1x256xf32>
    %cst_84 = arith.constant 0.00505050505 : f32
    %157 = vector.broadcast %cst_84 : f32 to vector<1x256xf32>
    %158 = arith.mulf %148, %157 : vector<1x256xf32>
    %cst_85 = arith.constant 0.00505050505 : f32
    %159 = vector.broadcast %cst_85 : f32 to vector<1x256xf32>
    %160 = arith.mulf %152, %159 : vector<1x256xf32>
    %161 = arith.mulf %158, %158 : vector<1x256xf32>
    %162 = arith.subf %160, %161 : vector<1x256xf32>
    %c4 = arith.constant 4 : index
    %c0_86 = arith.constant 0 : index
    %163 = vector.load %arg8[%c4, %c0_86] : memref<8x256xf32, #tpu.memory_space<vmem>>, vector<1x256xf32>
    %c5 = arith.constant 5 : index
    %c0_87 = arith.constant 0 : index
    %164 = vector.load %arg8[%c5, %c0_87] : memref<8x256xf32, #tpu.memory_space<vmem>>, vector<1x256xf32>
    %cst_88 = arith.constant 9.99999974E-6 : f32
    %165 = vector.broadcast %cst_88 : f32 to vector<1x256xf32>
    %166 = arith.addf %162, %165 : vector<1x256xf32>
    %167 = math.rsqrt %166 : vector<1x256xf32>
    %168 = arith.mulf %163, %167 : vector<1x256xf32>
    %169 = arith.mulf %158, %168 : vector<1x256xf32>
    %170 = arith.subf %164, %169 : vector<1x256xf32>
    %cst_89 = arith.constant 0.000000e+00 : f32
    %171 = vector.broadcast %cst_89 : f32 to vector<1x256xf32>
    %172 = arith.cmpf oge, %168, %171 : vector<1x256xf32>
    %173 = arith.mulf %140, %168 : vector<1x256xf32>
    %174 = arith.mulf %142, %168 : vector<1x256xf32>
    %175 = arith.select %172, %173, %174 : vector<1x256xi1>, vector<1x256xf32>
    %176 = arith.addf %175, %170 : vector<1x256xf32>
    %cst_90 = arith.constant 0.000000e+00 : f32
    %177 = vector.broadcast %cst_90 : f32 to vector<1x256xf32>
    %178 = arith.maximumf %176, %177 : vector<1x256xf32>
    %c0_91 = arith.constant 0 : index
    %c512 = arith.constant 512 : index
    %179 = vector.load %arg9[%c0_91, %c512] : memref<2x1024xf32, #tpu.memory_space<vmem>>, vector<1x256xf32>
    tpu.vector_store %arg9[%c0_91, %c512], %178 {strides = array<i32>} : memref<2x1024xf32, #tpu.memory_space<vmem>>, vector<1x256xf32>,
    %cst_92 = arith.constant 0.000000e+00 : f32
    %180 = vector.broadcast %cst_92 : f32 to vector<1x256xf32>
    %181 = arith.cmpf oge, %168, %180 : vector<1x256xf32>
    %182 = arith.mulf %154, %168 : vector<1x256xf32>
    %183 = arith.mulf %156, %168 : vector<1x256xf32>
    %184 = arith.select %181, %182, %183 : vector<1x256xi1>, vector<1x256xf32>
    %185 = arith.addf %184, %170 : vector<1x256xf32>
    %cst_93 = arith.constant 0.000000e+00 : f32
    %186 = vector.broadcast %cst_93 : f32 to vector<1x256xf32>
    %187 = arith.maximumf %185, %186 : vector<1x256xf32>
    %c1_94 = arith.constant 1 : index
    %c512_95 = arith.constant 512 : index
    %188 = vector.load %arg9[%c1_94, %c512_95] : memref<2x1024xf32, #tpu.memory_space<vmem>>, vector<1x256xf32>
    tpu.vector_store %arg9[%c1_94, %c512_95], %187 {strides = array<i32>} : memref<2x1024xf32, #tpu.memory_space<vmem>>, vector<1x256xf32>,
    %c0_96 = arith.constant 0 : index
    %c0_97 = arith.constant 0 : index
    %189 = vector.load %arg7[%c0_96, %c0_97] : memref<60x256xf32, #tpu.memory_space<vmem>>, vector<60x256xf32>
    %cst_98 = arith.constant 0.000000e+00 : f32
    %190 = vector.broadcast %cst_98 : f32 to vector<1x256xf32>
    %cst_99 = arith.constant 0.000000e+00 : f32
    %191 = vector.broadcast %cst_99 : f32 to vector<1x256xf32>
    %c0_100 = arith.constant 0 : index
    %c0_101 = arith.constant 0 : index
    %c0_102 = arith.constant 0 : index
    %192 = vector.load %arg3[%c0_100, %c0_101, %c0_102] : memref<2x96x60xf32, #tpu.memory_space<vmem>>, vector<1x96x60xf32>
    %193 = vector.shape_cast %192 : vector<1x96x60xf32> to vector<96x60xf32>
    %cst_103 = arith.constant dense<0.000000e+00> : vector<96x256xf32>
    %194 = tpu.matmul %193, %189, %cst_103 {dimension_numbers = #tpu.dot_dimension_numbers<[1], [0], [0], [1], [0, 0, 1, 1], [], []>, precision = #tpu.contract_precision<fp32>} : vector<96x60xf32>, vector<60x256xf32>, vector<96x256xf32> -> vector<96x256xf32>
    %cst_104 = arith.constant dense<0.000000e+00> : vector<256xf32>
    %195 = vector.multi_reduction <add>, %194, %cst_104 [0] : vector<96x256xf32> to vector<256xf32>
    %196 = vector.shape_cast %195 : vector<256xf32> to vector<1x256xf32>
    %197 = arith.addf %190, %196 : vector<1x256xf32>
    %198 = arith.mulf %194, %194 : vector<96x256xf32>
    %cst_105 = arith.constant dense<0.000000e+00> : vector<256xf32>
    %199 = vector.multi_reduction <add>, %198, %cst_105 [0] : vector<96x256xf32> to vector<256xf32>
    %200 = vector.shape_cast %199 : vector<256xf32> to vector<1x256xf32>
    %201 = arith.addf %191, %200 : vector<1x256xf32>
    %cst_106 = arith.constant dense<0xFF800000> : vector<256xf32>
    %202 = vector.multi_reduction <maximumf>, %194, %cst_106 [0] : vector<96x256xf32> to vector<256xf32>
    %203 = vector.shape_cast %202 : vector<256xf32> to vector<1x256xf32>
    %cst_107 = arith.constant dense<0x7F800000> : vector<256xf32>
    %204 = vector.multi_reduction <minimumf>, %194, %cst_107 [0] : vector<96x256xf32> to vector<256xf32>
    %205 = vector.shape_cast %204 : vector<256xf32> to vector<1x256xf32>
    %c1_108 = arith.constant 1 : index
    %c0_109 = arith.constant 0 : index
    %c0_110 = arith.constant 0 : index
    %206 = vector.load %arg3[%c1_108, %c0_109, %c0_110] : memref<2x96x60xf32, #tpu.memory_space<vmem>>, vector<1x96x60xf32>
    %207 = vector.shape_cast %206 : vector<1x96x60xf32> to vector<96x60xf32>
    %cst_111 = arith.constant dense<0.000000e+00> : vector<96x256xf32>
    %208 = tpu.matmul %207, %189, %cst_111 {dimension_numbers = #tpu.dot_dimension_numbers<[1], [0], [0], [1], [0, 0, 1, 1], [], []>, precision = #tpu.contract_precision<fp32>} : vector<96x60xf32>, vector<60x256xf32>, vector<96x256xf32> -> vector<96x256xf32>
    %cst_112 = arith.constant dense<0.000000e+00> : vector<256xf32>
    %209 = vector.multi_reduction <add>, %208, %cst_112 [0] : vector<96x256xf32> to vector<256xf32>
    %210 = vector.shape_cast %209 : vector<256xf32> to vector<1x256xf32>
    %211 = arith.addf %197, %210 : vector<1x256xf32>
    %212 = arith.mulf %208, %208 : vector<96x256xf32>
    %cst_113 = arith.constant dense<0.000000e+00> : vector<256xf32>
    %213 = vector.multi_reduction <add>, %212, %cst_113 [0] : vector<96x256xf32> to vector<256xf32>
    %214 = vector.shape_cast %213 : vector<256xf32> to vector<1x256xf32>
    %215 = arith.addf %201, %214 : vector<1x256xf32>
    %cst_114 = arith.constant dense<0xFF800000> : vector<256xf32>
    %216 = vector.multi_reduction <maximumf>, %208, %cst_114 [0] : vector<96x256xf32> to vector<256xf32>
    %217 = vector.shape_cast %216 : vector<256xf32> to vector<1x256xf32>
    %cst_115 = arith.constant dense<0x7F800000> : vector<256xf32>
    %218 = vector.multi_reduction <minimumf>, %208, %cst_115 [0] : vector<96x256xf32> to vector<256xf32>
    %219 = vector.shape_cast %218 : vector<256xf32> to vector<1x256xf32>
    %cst_116 = arith.constant 0.00520833349 : f32
    %220 = vector.broadcast %cst_116 : f32 to vector<1x256xf32>
    %221 = arith.mulf %211, %220 : vector<1x256xf32>
    %cst_117 = arith.constant 0.00520833349 : f32
    %222 = vector.broadcast %cst_117 : f32 to vector<1x256xf32>
    %223 = arith.mulf %215, %222 : vector<1x256xf32>
    %224 = arith.mulf %221, %221 : vector<1x256xf32>
    %225 = arith.subf %223, %224 : vector<1x256xf32>
    %c6 = arith.constant 6 : index
    %c0_118 = arith.constant 0 : index
    %226 = vector.load %arg8[%c6, %c0_118] : memref<8x256xf32, #tpu.memory_space<vmem>>, vector<1x256xf32>
    %c7 = arith.constant 7 : index
    %c0_119 = arith.constant 0 : index
    %227 = vector.load %arg8[%c7, %c0_119] : memref<8x256xf32, #tpu.memory_space<vmem>>, vector<1x256xf32>
    %cst_120 = arith.constant 9.99999974E-6 : f32
    %228 = vector.broadcast %cst_120 : f32 to vector<1x256xf32>
    %229 = arith.addf %225, %228 : vector<1x256xf32>
    %230 = math.rsqrt %229 : vector<1x256xf32>
    %231 = arith.mulf %226, %230 : vector<1x256xf32>
    %232 = arith.mulf %221, %231 : vector<1x256xf32>
    %233 = arith.subf %227, %232 : vector<1x256xf32>
    %cst_121 = arith.constant 0.000000e+00 : f32
    %234 = vector.broadcast %cst_121 : f32 to vector<1x256xf32>
    %235 = arith.cmpf oge, %231, %234 : vector<1x256xf32>
    %236 = arith.mulf %203, %231 : vector<1x256xf32>
    %237 = arith.mulf %205, %231 : vector<1x256xf32>
    %238 = arith.select %235, %236, %237 : vector<1x256xi1>, vector<1x256xf32>
    %239 = arith.addf %238, %233 : vector<1x256xf32>
    %cst_122 = arith.constant 0.000000e+00 : f32
    %240 = vector.broadcast %cst_122 : f32 to vector<1x256xf32>
    %241 = arith.maximumf %239, %240 : vector<1x256xf32>
    %c0_123 = arith.constant 0 : index
    %c768 = arith.constant 768 : index
    %242 = vector.load %arg9[%c0_123, %c768] : memref<2x1024xf32, #tpu.memory_space<vmem>>, vector<1x256xf32>
    tpu.vector_store %arg9[%c0_123, %c768], %241 {strides = array<i32>} : memref<2x1024xf32, #tpu.memory_space<vmem>>, vector<1x256xf32>,
    %cst_124 = arith.constant 0.000000e+00 : f32
    %243 = vector.broadcast %cst_124 : f32 to vector<1x256xf32>
    %244 = arith.cmpf oge, %231, %243 : vector<1x256xf32>
    %245 = arith.mulf %217, %231 : vector<1x256xf32>
    %246 = arith.mulf %219, %231 : vector<1x256xf32>
    %247 = arith.select %244, %245, %246 : vector<1x256xi1>, vector<1x256xf32>
    %248 = arith.addf %247, %233 : vector<1x256xf32>
    %cst_125 = arith.constant 0.000000e+00 : f32
    %249 = vector.broadcast %cst_125 : f32 to vector<1x256xf32>
    %250 = arith.maximumf %248, %249 : vector<1x256xf32>
    %c1_126 = arith.constant 1 : index
    %c768_127 = arith.constant 768 : index
    %251 = vector.load %arg9[%c1_126, %c768_127] : memref<2x1024xf32, #tpu.memory_space<vmem>>, vector<1x256xf32>
    tpu.vector_store %arg9[%c1_126, %c768_127], %250 {strides = array<i32>} : memref<2x1024xf32, #tpu.memory_space<vmem>>, vector<1x256xf32>,
    return
  }
}

</mosaic_0001>

<llo_original>
// kernel: tpu_custom_call.1
$region0: #{tpu_custom_call.1}
  #allocation0 [shape = 'u32[]', space=smem, size = 0x4, offset = 0x4, fixed_abs, tag = 'smem constant byte address 0x4 - core index']
  #allocation1 [shape = 'u32[72,128]{1,0:T(1,128)}', space=vmem, size = 0x9000, scoped, tag = 'internal scratch']
  %s0 = inlined_call_operand.vmem [shape: f32[2,105,24], index: 0, kind: input, shape index: {}]
  %s1 = inlined_call_operand.vmem [shape: f32[2,102,36], index: 1, kind: input, shape index: {}]
  %s2 = inlined_call_operand.vmem [shape: f32[2,99,48], index: 2, kind: input, shape index: {}]
  %s3 = inlined_call_operand.vmem [shape: f32[2,96,60], index: 3, kind: input, shape index: {}]
  %s4 = inlined_call_operand.vmem [shape: f32[24,256], index: 4, kind: input, shape index: {}]
  %s5 = inlined_call_operand.vmem [shape: f32[36,256], index: 5, kind: input, shape index: {}]
  %s6 = inlined_call_operand.vmem [shape: f32[48,256], index: 6, kind: input, shape index: {}]
  %s7 = inlined_call_operand.vmem [shape: f32[60,256], index: 7, kind: input, shape index: {}]
  %s8 = inlined_call_operand.vmem [shape: f32[8,256], index: 8, kind: input, shape index: {}]
  %s9 = inlined_call_operand.hbm [shape: f32[2,1024], index: 9, kind: output, shape index: {}]
  %s10 = sld [smem:[#allocation0]]
  $region46: #{tpu_custom_call.1} parent=0
    _
  %s12 = ssub.s32 1, %s10
  %s13 = scalar_select 0, %s12, %s10
  $region1: #{tpu_custom_call.1} parent=0
    #allocation2 [shape = 'u8[8192]{0}', space=vmem, size = 0x2000, scoped, tag = 'output window, operand 0, single buffered']
    #allocation3 [shape = 's32[1]{0}', space=sflag, size = 0x4, scoped, tag = 'scoped memory for tpu_custom_call.1']
    %14 = vsyncpa [#allocation3], 0
    // Predicated region
    $region2: #{tpu_custom_call.1} parent=1 // pred_check
      _
    $region3: #{tpu_custom_call.1} parent=1 // pred_check_branch
      %16 = sbr.rel (0) target = $region5
    $region4: #{tpu_custom_call.1} parent=1 // pred_region
      _
    $region5: #{tpu_custom_call.1} parent=1 // pred_fallthru
      _
    // Predicated region
    $region6: #{tpu_custom_call.1} parent=1 // pred_check
      _
    $region7: #{tpu_custom_call.1} parent=1 // pred_check_branch
      %18 = sbr.rel (0) target = $region9
    $region8: #{tpu_custom_call.1} parent=1 // pred_region
      _
    $region9: #{tpu_custom_call.1} parent=1 // pred_fallthru
      _
    // Predicated region
    $region10: #{tpu_custom_call.1} parent=1 // pred_check
      _
    $region11: #{tpu_custom_call.1} parent=1 // pred_check_branch
      %20 = sbr.rel (0) target = $region13
    $region12: #{tpu_custom_call.1} parent=1 // pred_region
      _
    $region13: #{tpu_custom_call.1} parent=1 // pred_fallthru
      _
    // Predicated region
    $region14: #{tpu_custom_call.1} parent=1 // pred_check
      _
    $region15: #{tpu_custom_call.1} parent=1 // pred_check_branch
      %22 = sbr.rel (0) target = $region17
    $region16: #{tpu_custom_call.1} parent=1 // pred_region
      _
    $region17: #{tpu_custom_call.1} parent=1 // pred_fallthru
      _
    // Predicated region
    $region18: #{tpu_custom_call.1} parent=1 // pred_check
      _
    $region19: #{tpu_custom_call.1} parent=1 // pred_check_branch
      %24 = sbr.rel (0) target = $region21
    $region20: #{tpu_custom_call.1} parent=1 // pred_region
      _
    $region21: #{tpu_custom_call.1} parent=1 // pred_fallthru
      _
    // Predicated region
    $region22: #{tpu_custom_call.1} parent=1 // pred_check
      _
    $region23: #{tpu_custom_call.1} parent=1 // pred_check_branch
      %26 = sbr.rel (0) target = $region25
    $region24: #{tpu_custom_call.1} parent=1 // pred_region
      _
    $region25: #{tpu_custom_call.1} parent=1 // pred_fallthru
      _
    // Predicated region
    $region26: #{tpu_custom_call.1} parent=1 // pred_check
      _
    $region27: #{tpu_custom_call.1} parent=1 // pred_check_branch
      %28 = sbr.rel (0) target = $region29
    $region28: #{tpu_custom_call.1} parent=1 // pred_region
      _
    $region29: #{tpu_custom_call.1} parent=1 // pred_fallthru
      _
    // Predicated region
    $region30: #{tpu_custom_call.1} parent=1 // pred_check
      _
    $region31: #{tpu_custom_call.1} parent=1 // pred_check_branch
      %30 = sbr.rel (0) target = $region33
    $region32: #{tpu_custom_call.1} parent=1 // pred_region
      _
    $region33: #{tpu_custom_call.1} parent=1 // pred_fallthru
      _
    // Predicated region
    $region34: #{tpu_custom_call.1} parent=1 // pred_check
      _
    $region35: #{tpu_custom_call.1} parent=1 // pred_check_branch
      %32 = sbr.rel (0) target = $region37
    $region36: #{tpu_custom_call.1} parent=1 // pred_region
      _
    $region37: #{tpu_custom_call.1} parent=1 // pred_fallthru
      _
    %v33 = vld [vmem:[%s4] sm:$0xff]
    %v34 = vld [vmem:[%s4 + $0x8] sm:$0xff]
    %v35 = vld [vmem:[%s4 + $0x10] sm:$0xff]
    %v36 = vld [vmem:[%s4 + $0x18] sm:$0xff]
    %v37 = vld [vmem:[%s4 + $0x20] sm:$0xff]
    %v38 = vld [vmem:[%s4 + $0x28] sm:$0xff]
    %v39 = vld [vmem:[%s0] sm:$0xff]
    %v40 = vld [vmem:[%s0 + $0x8] sm:$0xff]
    %v41 = vld [vmem:[%s0 + $0x10] sm:$0xff]
    %v42 = vld [vmem:[%s0 + $0x18] sm:$0xff]
    %v43 = vld [vmem:[%s0 + $0x20] sm:$0xff]
    %v44 = vld [vmem:[%s0 + $0x28] sm:$0xff]
    %v45 = vld [vmem:[%s0 + $0x30] sm:$0xff]
    %v46 = vld [vmem:[%s0 + $0x38] sm:$0xff]
    %v47 = vld [vmem:[%s0 + $0x40] sm:$0xff]
    %v48 = vld [vmem:[%s0 + $0x48] sm:$0xff]
    %v49 = vld [vmem:[%s0 + $0x50] sm:$0xff]
    %v50 = vld [vmem:[%s0 + $0x58] sm:$0xff]
    %v51 = vld [vmem:[%s0 + $0x60] sm:$0xff]
    %v52 = vld [vmem:[%s0 + $0x68] sm:$0x1]
    %vm53 = vcmask 195584
    %v55 = vsel %vm53, %v39, 0
    %v58 = vsel %vm53, %v40, 0
    %v61 = vsel %vm53, %v41, 0
    %v64 = vsel %vm53, %v42, 0
    %v67 = vsel %vm53, %v43, 0
    %v70 = vsel %vm53, %v44, 0
    %v73 = vsel %vm53, %v45, 0
    %v76 = vsel %vm53, %v46, 0
    %v79 = vsel %vm53, %v47, 0
    %v82 = vsel %vm53, %v48, 0
    %v85 = vsel %vm53, %v49, 0
    %v88 = vsel %vm53, %v50, 0
    %v91 = vsel %vm53, %v51, 0
    %v94 = vsel %vm53, %v52, 0
    %96 = vmatpush.msra.mxu0 0.0
    %97 = vmatpush.msra.mxu0 0.0
    %98 = vmatpush.msra.mxu0 0.0
    %99 = vmatpush.msra.mxu0 0.0
    %100 = vmatpush.msra.mxu0 0.0
    %101 = vmatpush.msra.mxu0 0.0
    %102 = vmatpush.msra.mxu0 0.0
    %103 = vmatpush.msra.mxu0 0.0
    %104 = vmatpush.msra.mxu0 0.0
    %105 = vmatpush.msra.mxu0 0.0
    %106 = vmatpush.msra.mxu0 0.0
    %107 = vmatpush.msra.mxu0 0.0
    %108 = vmatpush.msra.mxu0 0.0
    %v109 = vand.u32 %v37, 4294901760
    %110 = vmatpush.msra.mxu0 %v109
    %v111 = vand.u32 %v35, 4294901760
    %112 = vmatpush.msra.mxu0 %v111
    %v113 = vand.u32 %v33, 4294901760
    %114 = vmatpush.msra.mxu0 %v113
    %v115 = vand.u32 %v55, 4294901760
    %v116 = vsub.f32 %v55, %v115
    %v117 = vand.u32 %v116, 4294901760
    %v118 = vsub.f32 %v116, %v117
    %v119 = vand.u32 %v118, 4294901760
    %120 = vmatmul.f32.gmra.mxu0 %v119
    %v121 = vpop.f32.mrf.mxu0
    %v122 = vadd.f32 0.0, %v121
    %v123 = vand.u32 %v58, 4294901760
    %v124 = vsub.f32 %v58, %v123
    %v125 = vand.u32 %v124, 4294901760
    %v126 = vsub.f32 %v124, %v125
    %v127 = vand.u32 %v126, 4294901760
    %128 = vmatmul.f32.gmra.mxu0 %v127
    %v129 = vpop.f32.mrf.mxu0
    %v130 = vadd.f32 0.0, %v129
    %v131 = vand.u32 %v61, 4294901760
    %v132 = vsub.f32 %v61, %v131
    %v133 = vand.u32 %v132, 4294901760
    %v134 = vsub.f32 %v132, %v133
    %v135 = vand.u32 %v134, 4294901760
    %136 = vmatmul.f32.gmra.mxu0 %v135
    %v137 = vpop.f32.mrf.mxu0
    %v138 = vadd.f32 0.0, %v137
    %v139 = vand.u32 %v64, 4294901760
    %v140 = vsub.f32 %v64, %v139
    %v141 = vand.u32 %v140, 4294901760
    %v142 = vsub.f32 %v140, %v141
    %v143 = vand.u32 %v142, 4294901760
    %144 = vmatmul.f32.gmra.mxu0 %v143
    %v145 = vpop.f32.mrf.mxu0
    %v146 = vadd.f32 0.0, %v145
    %v147 = vand.u32 %v67, 4294901760
    %v148 = vsub.f32 %v67, %v147
    %v149 = vand.u32 %v148, 4294901760
    %v150 = vsub.f32 %v148, %v149
    %v151 = vand.u32 %v150, 4294901760
    %152 = vmatmul.f32.gmra.mxu0 %v151
    %v153 = vpop.f32.mrf.mxu0
    %v154 = vadd.f32 0.0, %v153
    %v155 = vand.u32 %v70, 4294901760
    %v156 = vsub.f32 %v70, %v155
    %v157 = vand.u32 %v156, 4294901760
    %v158 = vsub.f32 %v156, %v157
    %v159 = vand.u32 %v158, 4294901760
    %160 = vmatmul.f32.gmra.mxu0 %v159
    %v161 = vpop.f32.mrf.mxu0
    %v162 = vadd.f32 0.0, %v161
    %v163 = vand.u32 %v73, 4294901760
    %v164 = vsub.f32 %v73, %v163
    %v165 = vand.u32 %v164, 4294901760
    %v166 = vsub.f32 %v164, %v165
    %v167 = vand.u32 %v166, 4294901760
    %168 = vmatmul.f32.gmra.mxu0 %v167
    %v169 = vpop.f32.mrf.mxu0
    %v170 = vadd.f32 0.0, %v169
    %v171 = vand.u32 %v76, 4294901760
    %v172 = vsub.f32 %v76, %v171
    %v173 = vand.u32 %v172, 4294901760
    %v174 = vsub.f32 %v172, %v173
    %v175 = vand.u32 %v174, 4294901760
    %176 = vmatmul.f32.gmra.mxu0 %v175
    %v177 = vpop.f32.mrf.mxu0
    %v178 = vadd.f32 0.0, %v177
    %v179 = vand.u32 %v79, 4294901760
    %v180 = vsub.f32 %v79, %v179
    %v181 = vand.u32 %v180, 4294901760
    %v182 = vsub.f32 %v180, %v181
    %v183 = vand.u32 %v182, 4294901760
    %184 = vmatmul.f32.gmra.mxu0 %v183
    %v185 = vpop.f32.mrf.mxu0
    %v186 = vadd.f32 0.0, %v185
    %v187 = vand.u32 %v82, 4294901760
    %v188 = vsub.f32 %v82, %v187
    %v189 = vand.u32 %v188, 4294901760
    %v190 = vsub.f32 %v188, %v189
    %v191 = vand.u32 %v190, 4294901760
    %192 = vmatmul.f32.gmra.mxu0 %v191
    %v193 = vpop.f32.mrf.mxu0
    %v194 = vadd.f32 0.0, %v193
    %v195 = vand.u32 %v85, 4294901760
    %v196 = vsub.f32 %v85, %v195
    %v197 = vand.u32 %v196, 4294901760
    %v198 = vsub.f32 %v196, %v197
    %v199 = vand.u32 %v198, 4294901760
    %200 = vmatmul.f32.gmra.mxu0 %v199
    %v201 = vpop.f32.mrf.mxu0
    %v202 = vadd.f32 0.0, %v201
    %v203 = vand.u32 %v88, 4294901760
    %v204 = vsub.f32 %v88, %v203
    %v205 = vand.u32 %v204, 4294901760
    %v206 = vsub.f32 %v204, %v205
    %v207 = vand.u32 %v206, 4294901760
    %208 = vmatmul.f32.gmra.mxu0 %v207
    %v209 = vpop.f32.mrf.mxu0
    %v210 = vadd.f32 0.0, %v209
    %v211 = vand.u32 %v91, 4294901760
    %v212 = vsub.f32 %v91, %v211
    %v213 = vand.u32 %v212, 4294901760
    %v214 = vsub.f32 %v212, %v213
    %v215 = vand.u32 %v214, 4294901760
    %216 = vmatmul.f32.gmra.mxu0 %v215
    %v217 = vpop.f32.mrf.mxu0
    %v218 = vadd.f32 0.0, %v217
    %v219 = vand.u32 %v94, 4294901760
    %v220 = vsub.f32 %v94, %v219
    %v221 = vand.u32 %v220, 4294901760
    %v222 = vsub.f32 %v220, %v221
    %v223 = vand.u32 %v222, 4294901760
    %224 = vmatmul.f32.gmra.mxu0 %v223
    %v225 = vpop.f32.mrf.mxu0
    %v226 = vadd.f32 0.0, %v225
    %227 = vdwg.mxu0
    %228 = vmatpush.msra.mxu0 0.0
    %229 = vmatpush.msra.mxu0 0.0
    %230 = vmatpush.msra.mxu0 0.0
    %231 = vmatpush.msra.mxu0 0.0
    %232 = vmatpush.msra.mxu0 0.0
    %233 = vmatpush.msra.mxu0 0.0
    %234 = vmatpush.msra.mxu0 0.0
    %235 = vmatpush.msra.mxu0 0.0
    %236 = vmatpush.msra.mxu0 0.0
    %237 = vmatpush.msra.mxu0 0.0
    %238 = vmatpush.msra.mxu0 0.0
    %239 = vmatpush.msra.mxu0 0.0
    %240 = vmatpush.msra.mxu0 0.0
    %v241 = vand.u32 %v37, 4294901760
    %v242 = vsub.f32 %v37, %v241
    %v243 = vand.u32 %v242, 4294901760
    %v244 = vsub.f32 %v242, %v243
    %v245 = vand.u32 %v244, 4294901760
    %246 = vmatpush.msra.mxu0 %v245
    %v247 = vand.u32 %v35, 4294901760
    %v248 = vsub.f32 %v35, %v247
    %v249 = vand.u32 %v248, 4294901760
    %v250 = vsub.f32 %v248, %v249
    %v251 = vand.u32 %v250, 4294901760
    %252 = vmatpush.msra.mxu0 %v251
    %v253 = vand.u32 %v33, 4294901760
    %v254 = vsub.f32 %v33, %v253
    %v255 = vand.u32 %v254, 4294901760
    %v256 = vsub.f32 %v254, %v255
    %v257 = vand.u32 %v256, 4294901760
    %258 = vmatpush.msra.mxu0 %v257
    %v259 = vand.u32 %v55, 4294901760
    %260 = vmatmul.f32.gmra.mxu0 %v259
    %v261 = vpop.f32.mrf.mxu0
    %v262 = vadd.f32 %v122, %v261
    %v263 = vand.u32 %v58, 4294901760
    %264 = vmatmul.f32.gmra.mxu0 %v263
    %v265 = vpop.f32.mrf.mxu0
    %v266 = vadd.f32 %v130, %v265
    %v267 = vand.u32 %v61, 4294901760
    %268 = vmatmul.f32.gmra.mxu0 %v267
    %v269 = vpop.f32.mrf.mxu0
    %v270 = vadd.f32 %v138, %v269
    %v271 = vand.u32 %v64, 4294901760
    %272 = vmatmul.f32.gmra.mxu0 %v271
    %v273 = vpop.f32.mrf.mxu0
    %v274 = vadd.f32 %v146, %v273
    %v275 = vand.u32 %v67, 4294901760
    %276 = vmatmul.f32.gmra.mxu0 %v275
    %v277 = vpop.f32.mrf.mxu0
    %v278 = vadd.f32 %v154, %v277
    %v279 = vand.u32 %v70, 4294901760
    %280 = vmatmul.f32.gmra.mxu0 %v279
    %v281 = vpop.f32.mrf.mxu0
    %v282 = vadd.f32 %v162, %v281
    %v283 = vand.u32 %v73, 4294901760
    %284 = vmatmul.f32.gmra.mxu0 %v283
    %v285 = vpop.f32.mrf.mxu0
    %v286 = vadd.f32 %v170, %v285
    %v287 = vand.u32 %v76, 4294901760
    %288 = vmatmul.f32.gmra.mxu0 %v287
    %v289 = vpop.f32.mrf.mxu0
    %v290 = vadd.f32 %v178, %v289
    %v291 = vand.u32 %v79, 4294901760
    %292 = vmatmul.f32.gmra.mxu0 %v291
    %v293 = vpop.f32.mrf.mxu0
    %v294 = vadd.f32 %v186, %v293
    %v295 = vand.u32 %v82, 4294901760
    %296 = vmatmul.f32.gmra.mxu0 %v295
    %v297 = vpop.f32.mrf.mxu0
    %v298 = vadd.f32 %v194, %v297
    %v299 = vand.u32 %v85, 4294901760
    %300 = vmatmul.f32.gmra.mxu0 %v299
    %v301 = vpop.f32.mrf.mxu0
    %v302 = vadd.f32 %v202, %v301
    %v303 = vand.u32 %v88, 4294901760
    %304 = vmatmul.f32.gmra.mxu0 %v303
    %v305 = vpop.f32.mrf.mxu0
    %v306 = vadd.f32 %v210, %v305
    %v307 = vand.u32 %v91, 4294901760
    %308 = vmatmul.f32.gmra.mxu0 %v307
    %v309 = vpop.f32.mrf.mxu0
    %v310 = vadd.f32 %v218, %v309
    %v311 = vand.u32 %v94, 4294901760
    %312 = vmatmul.f32.gmra.mxu0 %v311
    %v313 = vpop.f32.mrf.mxu0
    %v314 = vadd.f32 %v226, %v313
    %315 = vdwg.mxu0
    %316 = vmatpush.msra.mxu0 0.0
    %317 = vmatpush.msra.mxu0 0.0
    %318 = vmatpush.msra.mxu0 0.0
    %319 = vmatpush.msra.mxu0 0.0
    %320 = vmatpush.msra.mxu0 0.0
    %321 = vmatpush.msra.mxu0 0.0
    %322 = vmatpush.msra.mxu0 0.0
    %323 = vmatpush.msra.mxu0 0.0
    %324 = vmatpush.msra.mxu0 0.0
    %325 = vmatpush.msra.mxu0 0.0
    %326 = vmatpush.msra.mxu0 0.0
    %327 = vmatpush.msra.mxu0 0.0
    %328 = vmatpush.msra.mxu0 0.0
    %v329 = vand.u32 %v37, 4294901760
    %v330 = vsub.f32 %v37, %v329
    %331 = vmatpush.msra.mxu0 %v330
    %v332 = vand.u32 %v35, 4294901760
    %v333 = vsub.f32 %v35, %v332
    %334 = vmatpush.msra.mxu0 %v333
    %v335 = vand.u32 %v33, 4294901760
    %v336 = vsub.f32 %v33, %v335
    %337 = vmatpush.msra.mxu0 %v336
    %v338 = vand.u32 %v55, 4294901760
    %v339 = vsub.f32 %v55, %v338
    %340 = vmatmul.f32.gmra.mxu0 %v339
    %v341 = vpop.f32.mrf.mxu0
    %v342 = vadd.f32 %v262, %v341
    %v343 = vand.u32 %v58, 4294901760
    %v344 = vsub.f32 %v58, %v343
    %345 = vmatmul.f32.gmra.mxu0 %v344
    %v346 = vpop.f32.mrf.mxu0
    %v347 = vadd.f32 %v266, %v346
    %v348 = vand.u32 %v61, 4294901760
    %v349 = vsub.f32 %v61, %v348
    %350 = vmatmul.f32.gmra.mxu0 %v349
    %v351 = vpop.f32.mrf.mxu0
    %v352 = vadd.f32 %v270, %v351
    %v353 = vand.u32 %v64, 4294901760
    %v354 = vsub.f32 %v64, %v353
    %355 = vmatmul.f32.gmra.mxu0 %v354
    %v356 = vpop.f32.mrf.mxu0
    %v357 = vadd.f32 %v274, %v356
    %v358 = vand.u32 %v67, 4294901760
    %v359 = vsub.f32 %v67, %v358
    %360 = vmatmul.f32.gmra.mxu0 %v359
    %v361 = vpop.f32.mrf.mxu0
    %v362 = vadd.f32 %v278, %v361
    %v363 = vand.u32 %v70, 4294901760
    %v364 = vsub.f32 %v70, %v363
    %365 = vmatmul.f32.gmra.mxu0 %v364
    %v366 = vpop.f32.mrf.mxu0
    %v367 = vadd.f32 %v282, %v366
    %v368 = vand.u32 %v73, 4294901760
    %v369 = vsub.f32 %v73, %v368
    %370 = vmatmul.f32.gmra.mxu0 %v369
    %v371 = vpop.f32.mrf.mxu0
    %v372 = vadd.f32 %v286, %v371
    %v373 = vand.u32 %v76, 4294901760
    %v374 = vsub.f32 %v76, %v373
    %375 = vmatmul.f32.gmra.mxu0 %v374
    %v376 = vpop.f32.mrf.mxu0
    %v377 = vadd.f32 %v290, %v376
    %v378 = vand.u32 %v79, 4294901760
    %v379 = vsub.f32 %v79, %v378
    %380 = vmatmul.f32.gmra.mxu0 %v379
    %v381 = vpop.f32.mrf.mxu0
    %v382 = vadd.f32 %v294, %v381
    %v383 = vand.u32 %v82, 4294901760
    %v384 = vsub.f32 %v82, %v383
    %385 = vmatmul.f32.gmra.mxu0 %v384
    %v386 = vpop.f32.mrf.mxu0
    %v387 = vadd.f32 %v298, %v386
    %v388 = vand.u32 %v85, 4294901760
    %v389 = vsub.f32 %v85, %v388
    %390 = vmatmul.f32.gmra.mxu0 %v389
    %v391 = vpop.f32.mrf.mxu0
    %v392 = vadd.f32 %v302, %v391
    %v393 = vand.u32 %v88, 4294901760
    %v394 = vsub.f32 %v88, %v393
    %395 = vmatmul.f32.gmra.mxu0 %v394
    %v396 = vpop.f32.mrf.mxu0
    %v397 = vadd.f32 %v306, %v396
    %v398 = vand.u32 %v91, 4294901760
    %v399 = vsub.f32 %v91, %v398
    %400 = vmatmul.f32.gmra.mxu0 %v399
    %v401 = vpop.f32.mrf.mxu0
    %v402 = vadd.f32 %v310, %v401
    %v403 = vand.u32 %v94, 4294901760
    %v404 = vsub.f32 %v94, %v403
    %405 = vmatmul.f32.gmra.mxu0 %v404
    %v406 = vpop.f32.mrf.mxu0
    %v407 = vadd.f32 %v314, %v406
    %408 = vdwg.mxu0
    %409 = vmatpush.msra.mxu0 0.0
    %410 = vmatpush.msra.mxu0 0.0
    %411 = vmatpush.msra.mxu0 0.0
    %412 = vmatpush.msra.mxu0 0.0
    %413 = vmatpush.msra.mxu0 0.0
    %414 = vmatpush.msra.mxu0 0.0
    %415 = vmatpush.msra.mxu0 0.0
    %416 = vmatpush.msra.mxu0 0.0
    %417 = vmatpush.msra.mxu0 0.0
    %418 = vmatpush.msra.mxu0 0.0
    %419 = vmatpush.msra.mxu0 0.0
    %420 = vmatpush.msra.mxu0 0.0
    %421 = vmatpush.msra.mxu0 0.0
    %v422 = vand.u32 %v37, 4294901760
    %423 = vmatpush.msra.mxu0 %v422
    %v424 = vand.u32 %v35, 4294901760
    %425 = vmatpush.msra.mxu0 %v424
    %v426 = vand.u32 %v33, 4294901760
    %427 = vmatpush.msra.mxu0 %v426
    %v428 = vand.u32 %v55, 4294901760
    %v429 = vsub.f32 %v55, %v428
    %v430 = vand.u32 %v429, 4294901760
    %431 = vmatmul.f32.gmra.mxu0 %v430
    %v432 = vpop.f32.mrf.mxu0
    %v433 = vadd.f32 %v342, %v432
    %v434 = vand.u32 %v58, 4294901760
    %v435 = vsub.f32 %v58, %v434
    %v436 = vand.u32 %v435, 4294901760
    %437 = vmatmul.f32.gmra.mxu0 %v436
    %v438 = vpop.f32.mrf.mxu0
    %v439 = vadd.f32 %v347, %v438
    %v440 = vand.u32 %v61, 4294901760
    %v441 = vsub.f32 %v61, %v440
    %v442 = vand.u32 %v441, 4294901760
    %443 = vmatmul.f32.gmra.mxu0 %v442
    %v444 = vpop.f32.mrf.mxu0
    %v445 = vadd.f32 %v352, %v444
    %v446 = vand.u32 %v64, 4294901760
    %v447 = vsub.f32 %v64, %v446
    %v448 = vand.u32 %v447, 4294901760
    %449 = vmatmul.f32.gmra.mxu0 %v448
    %v450 = vpop.f32.mrf.mxu0
    %v451 = vadd.f32 %v357, %v450
    %v452 = vand.u32 %v67, 4294901760
    %v453 = vsub.f32 %v67, %v452
    %v454 = vand.u32 %v453, 4294901760
    %455 = vmatmul.f32.gmra.mxu0 %v454
    %v456 = vpop.f32.mrf.mxu0
    %v457 = vadd.f32 %v362, %v456
    %v458 = vand.u32 %v70, 4294901760
    %v459 = vsub.f32 %v70, %v458
    %v460 = vand.u32 %v459, 4294901760
    %461 = vmatmul.f32.gmra.mxu0 %v460
    %v462 = vpop.f32.mrf.mxu0
    %v463 = vadd.f32 %v367, %v462
    %v464 = vand.u32 %v73, 4294901760
    %v465 = vsub.f32 %v73, %v464
    %v466 = vand.u32 %v465, 4294901760
    %467 = vmatmul.f32.gmra.mxu0 %v466
    %v468 = vpop.f32.mrf.mxu0
    %v469 = vadd.f32 %v372, %v468
    %v470 = vand.u32 %v76, 4294901760
    %v471 = vsub.f32 %v76, %v470
    %v472 = vand.u32 %v471, 4294901760
    %473 = vmatmul.f32.gmra.mxu0 %v472
    %v474 = vpop.f32.mrf.mxu0
    %v475 = vadd.f32 %v377, %v474
    %v476 = vand.u32 %v79, 4294901760
    %v477 = vsub.f32 %v79, %v476
    %v478 = vand.u32 %v477, 4294901760
    %479 = vmatmul.f32.gmra.mxu0 %v478
    %v480 = vpop.f32.mrf.mxu0
    %v481 = vadd.f32 %v382, %v480
    %v482 = vand.u32 %v82, 4294901760
    %v483 = vsub.f32 %v82, %v482
    %v484 = vand.u32 %v483, 4294901760
    %485 = vmatmul.f32.gmra.mxu0 %v484
    %v486 = vpop.f32.mrf.mxu0
    %v487 = vadd.f32 %v387, %v486
    %v488 = vand.u32 %v85, 4294901760
    %v489 = vsub.f32 %v85, %v488
    %v490 = vand.u32 %v489, 4294901760
    %491 = vmatmul.f32.gmra.mxu0 %v490
    %v492 = vpop.f32.mrf.mxu0
    %v493 = vadd.f32 %v392, %v492
    %v494 = vand.u32 %v88, 4294901760
    %v495 = vsub.f32 %v88, %v494
    %v496 = vand.u32 %v495, 4294901760
    %497 = vmatmul.f32.gmra.mxu0 %v496
    %v498 = vpop.f32.mrf.mxu0
    %v499 = vadd.f32 %v397, %v498
    %v500 = vand.u32 %v91, 4294901760
    %v501 = vsub.f32 %v91, %v500
    %v502 = vand.u32 %v501, 4294901760
    %503 = vmatmul.f32.gmra.mxu0 %v502
    %v504 = vpop.f32.mrf.mxu0
    %v505 = vadd.f32 %v402, %v504
    %v506 = vand.u32 %v94, 4294901760
    %v507 = vsub.f32 %v94, %v506
    %v508 = vand.u32 %v507, 4294901760
    %509 = vmatmul.f32.gmra.mxu0 %v508
    %v510 = vpop.f32.mrf.mxu0
    %v511 = vadd.f32 %v407, %v510
    %512 = vdwg.mxu0
    %513 = vmatpush.msra.mxu0 0.0
    %514 = vmatpush.msra.mxu0 0.0
    %515 = vmatpush.msra.mxu0 0.0
    %516 = vmatpush.msra.mxu0 0.0
    %517 = vmatpush.msra.mxu0 0.0
    %518 = vmatpush.msra.mxu0 0.0
    %519 = vmatpush.msra.mxu0 0.0
    %520 = vmatpush.msra.mxu0 0.0
    %521 = vmatpush.msra.mxu0 0.0
    %522 = vmatpush.msra.mxu0 0.0
    %523 = vmatpush.msra.mxu0 0.0
    %524 = vmatpush.msra.mxu0 0.0
    %525 = vmatpush.msra.mxu0 0.0
    %v526 = vand.u32 %v37, 4294901760
    %v527 = vsub.f32 %v37, %v526
    %v528 = vand.u32 %v527, 4294901760
    %529 = vmatpush.msra.mxu0 %v528
    %v530 = vand.u32 %v35, 4294901760
    %v531 = vsub.f32 %v35, %v530
    %v532 = vand.u32 %v531, 4294901760
    %533 = vmatpush.msra.mxu0 %v532
    %v534 = vand.u32 %v33, 4294901760
    %v535 = vsub.f32 %v33, %v534
    %v536 = vand.u32 %v535, 4294901760
    %537 = vmatpush.msra.mxu0 %v536
    %v538 = vand.u32 %v55, 4294901760
    %539 = vmatmul.f32.gmra.mxu0 %v538
    %v540 = vpop.f32.mrf.mxu0
    %v541 = vadd.f32 %v433, %v540
    %v542 = vand.u32 %v58, 4294901760
    %543 = vmatmul.f32.gmra.mxu0 %v542
    %v544 = vpop.f32.mrf.mxu0
    %v545 = vadd.f32 %v439, %v544
    %v546 = vand.u32 %v61, 4294901760
    %547 = vmatmul.f32.gmra.mxu0 %v546
    %v548 = vpop.f32.mrf.mxu0
    %v549 = vadd.f32 %v445, %v548
    %v550 = vand.u32 %v64, 4294901760
    %551 = vmatmul.f32.gmra.mxu0 %v550
    %v552 = vpop.f32.mrf.mxu0
    %v553 = vadd.f32 %v451, %v552
    %v554 = vand.u32 %v67, 4294901760
    %555 = vmatmul.f32.gmra.mxu0 %v554
    %v556 = vpop.f32.mrf.mxu0
    %v557 = vadd.f32 %v457, %v556
    %v558 = vand.u32 %v70, 4294901760
    %559 = vmatmul.f32.gmra.mxu0 %v558
    %v560 = vpop.f32.mrf.mxu0
    %v561 = vadd.f32 %v463, %v560
    %v562 = vand.u32 %v73, 4294901760
    %563 = vmatmul.f32.gmra.mxu0 %v562
    %v564 = vpop.f32.mrf.mxu0
    %v565 = vadd.f32 %v469, %v564
    %v566 = vand.u32 %v76, 4294901760
    %567 = vmatmul.f32.gmra.mxu0 %v566
    %v568 = vpop.f32.mrf.mxu0
    %v569 = vadd.f32 %v475, %v568
    %v570 = vand.u32 %v79, 4294901760
    %571 = vmatmul.f32.gmra.mxu0 %v570
    %v572 = vpop.f32.mrf.mxu0
    %v573 = vadd.f32 %v481, %v572
    %v574 = vand.u32 %v82, 4294901760
    %575 = vmatmul.f32.gmra.mxu0 %v574
    %v576 = vpop.f32.mrf.mxu0
    %v577 = vadd.f32 %v487, %v576
    %v578 = vand.u32 %v85, 4294901760
    %579 = vmatmul.f32.gmra.mxu0 %v578
    %v580 = vpop.f32.mrf.mxu0
    %v581 = vadd.f32 %v493, %v580
    %v582 = vand.u32 %v88, 4294901760
    %583 = vmatmul.f32.gmra.mxu0 %v582
    %v584 = vpop.f32.mrf.mxu0
    %v585 = vadd.f32 %v499, %v584
    %v586 = vand.u32 %v91, 4294901760
    %587 = vmatmul.f32.gmra.mxu0 %v586
    %v588 = vpop.f32.mrf.mxu0
    %v589 = vadd.f32 %v505, %v588
    %v590 = vand.u32 %v94, 4294901760
    %591 = vmatmul.f32.gmra.mxu0 %v590
    %v592 = vpop.f32.mrf.mxu0
    %v593 = vadd.f32 %v511, %v592
    %594 = vdwg.mxu0
    %595 = vmatpush.msra.mxu0 0.0
    %596 = vmatpush.msra.mxu0 0.0
    %597 = vmatpush.msra.mxu0 0.0
    %598 = vmatpush.msra.mxu0 0.0
    %599 = vmatpush.msra.mxu0 0.0
    %600 = vmatpush.msra.mxu0 0.0
    %601 = vmatpush.msra.mxu0 0.0
    %602 = vmatpush.msra.mxu0 0.0
    %603 = vmatpush.msra.mxu0 0.0
    %604 = vmatpush.msra.mxu0 0.0
    %605 = vmatpush.msra.mxu0 0.0
    %606 = vmatpush.msra.mxu0 0.0
    %607 = vmatpush.msra.mxu0 0.0
    %v608 = vand.u32 %v37, 4294901760
    %609 = vmatpush.msra.mxu0 %v608
    %v610 = vand.u32 %v35, 4294901760
    %611 = vmatpush.msra.mxu0 %v610
    %v612 = vand.u32 %v33, 4294901760
    %613 = vmatpush.msra.mxu0 %v612
    %v614 = vand.u32 %v55, 4294901760
    %615 = vmatmul.f32.gmra.mxu0 %v614
    %v616 = vpop.f32.mrf.mxu0
    %v617 = vadd.f32 %v541, %v616
    %v618 = vand.u32 %v58, 4294901760
    %619 = vmatmul.f32.gmra.mxu0 %v618
    %v620 = vpop.f32.mrf.mxu0
    %v621 = vadd.f32 %v545, %v620
    %v622 = vand.u32 %v61, 4294901760
    %623 = vmatmul.f32.gmra.mxu0 %v622
    %v624 = vpop.f32.mrf.mxu0
    %v625 = vadd.f32 %v549, %v624
    %v626 = vand.u32 %v64, 4294901760
    %627 = vmatmul.f32.gmra.mxu0 %v626
    %v628 = vpop.f32.mrf.mxu0
    %v629 = vadd.f32 %v553, %v628
    %v630 = vand.u32 %v67, 4294901760
    %631 = vmatmul.f32.gmra.mxu0 %v630
    %v632 = vpop.f32.mrf.mxu0
    %v633 = vadd.f32 %v557, %v632
    %v634 = vand.u32 %v70, 4294901760
    %635 = vmatmul.f32.gmra.mxu0 %v634
    %v636 = vpop.f32.mrf.mxu0
    %v637 = vadd.f32 %v561, %v636
    %v638 = vand.u32 %v73, 4294901760
    %639 = vmatmul.f32.gmra.mxu0 %v638
    %v640 = vpop.f32.mrf.mxu0
    %v641 = vadd.f32 %v565, %v640
    %v642 = vand.u32 %v76, 4294901760
    %643 = vmatmul.f32.gmra.mxu0 %v642
    %v644 = vpop.f32.mrf.mxu0
    %v645 = vadd.f32 %v569, %v644
    %v646 = vand.u32 %v79, 4294901760
    %647 = vmatmul.f32.gmra.mxu0 %v646
    %v648 = vpop.f32.mrf.mxu0
    %v649 = vadd.f32 %v573, %v648
    %v650 = vand.u32 %v82, 4294901760
    %651 = vmatmul.f32.gmra.mxu0 %v650
    %v652 = vpop.f32.mrf.mxu0
    %v653 = vadd.f32 %v577, %v652
    %v654 = vand.u32 %v85, 4294901760
    %655 = vmatmul.f32.gmra.mxu0 %v654
    %v656 = vpop.f32.mrf.mxu0
    %v657 = vadd.f32 %v581, %v656
    %v658 = vand.u32 %v88, 4294901760
    %659 = vmatmul.f32.gmra.mxu0 %v658
    %v660 = vpop.f32.mrf.mxu0
    %v661 = vadd.f32 %v585, %v660
    %v662 = vand.u32 %v91, 4294901760
    %663 = vmatmul.f32.gmra.mxu0 %v662
    %v664 = vpop.f32.mrf.mxu0
    %v665 = vadd.f32 %v589, %v664
    %v666 = vand.u32 %v94, 4294901760
    %667 = vmatmul.f32.gmra.mxu0 %v666
    %v668 = vpop.f32.mrf.mxu0
    %v669 = vadd.f32 %v593, %v668
    %670 = vdwg.mxu0
    %671 = vmatpush.msra.mxu0 0.0
    %672 = vmatpush.msra.mxu0 0.0
    %673 = vmatpush.msra.mxu0 0.0
    %674 = vmatpush.msra.mxu0 0.0
    %675 = vmatpush.msra.mxu0 0.0
    %676 = vmatpush.msra.mxu0 0.0
    %677 = vmatpush.msra.mxu0 0.0
    %678 = vmatpush.msra.mxu0 0.0
    %679 = vmatpush.msra.mxu0 0.0
    %680 = vmatpush.msra.mxu0 0.0
    %681 = vmatpush.msra.mxu0 0.0
    %682 = vmatpush.msra.mxu0 0.0
    %683 = vmatpush.msra.mxu0 0.0
    %v684 = vand.u32 %v38, 4294901760
    %685 = vmatpush.msra.mxu0 %v684
    %v686 = vand.u32 %v36, 4294901760
    %687 = vmatpush.msra.mxu0 %v686
    %v688 = vand.u32 %v34, 4294901760
    %689 = vmatpush.msra.mxu0 %v688
    %v690 = vand.u32 %v55, 4294901760
    %v691 = vsub.f32 %v55, %v690
    %v692 = vand.u32 %v691, 4294901760
    %v693 = vsub.f32 %v691, %v692
    %v694 = vand.u32 %v693, 4294901760
    %695 = vmatmul.f32.gmra.mxu0 %v694
    %v696 = vpop.f32.mrf.mxu0
    %v697 = vadd.f32 0.0, %v696
    %v698 = vand.u32 %v58, 4294901760
    %v699 = vsub.f32 %v58, %v698
    %v700 = vand.u32 %v699, 4294901760
    %v701 = vsub.f32 %v699, %v700
    %v702 = vand.u32 %v701, 4294901760
    %703 = vmatmul.f32.gmra.mxu0 %v702
    %v704 = vpop.f32.mrf.mxu0
    %v705 = vadd.f32 0.0, %v704
    %v706 = vand.u32 %v61, 4294901760
    %v707 = vsub.f32 %v61, %v706
    %v708 = vand.u32 %v707, 4294901760
    %v709 = vsub.f32 %v707, %v708
    %v710 = vand.u32 %v709, 4294901760
    %711 = vmatmul.f32.gmra.mxu0 %v710
    %v712 = vpop.f32.mrf.mxu0
    %v713 = vadd.f32 0.0, %v712
    %v714 = vand.u32 %v64, 4294901760
    %v715 = vsub.f32 %v64, %v714
    %v716 = vand.u32 %v715, 4294901760
    %v717 = vsub.f32 %v715, %v716
    %v718 = vand.u32 %v717, 4294901760
    %719 = vmatmul.f32.gmra.mxu0 %v718
    %v720 = vpop.f32.mrf.mxu0
    %v721 = vadd.f32 0.0, %v720
    %v722 = vand.u32 %v67, 4294901760
    %v723 = vsub.f32 %v67, %v722
    %v724 = vand.u32 %v723, 4294901760
    %v725 = vsub.f32 %v723, %v724
    %v726 = vand.u32 %v725, 4294901760
    %727 = vmatmul.f32.gmra.mxu0 %v726
    %v728 = vpop.f32.mrf.mxu0
    %v729 = vadd.f32 0.0, %v728
    %v730 = vand.u32 %v70, 4294901760
    %v731 = vsub.f32 %v70, %v730
    %v732 = vand.u32 %v731, 4294901760
    %v733 = vsub.f32 %v731, %v732
    %v734 = vand.u32 %v733, 4294901760
    %735 = vmatmul.f32.gmra.mxu0 %v734
    %v736 = vpop.f32.mrf.mxu0
    %v737 = vadd.f32 0.0, %v736
    %v738 = vand.u32 %v73, 4294901760
    %v739 = vsub.f32 %v73, %v738
    %v740 = vand.u32 %v739, 4294901760
    %v741 = vsub.f32 %v739, %v740
    %v742 = vand.u32 %v741, 4294901760
    %743 = vmatmul.f32.gmra.mxu0 %v742
    %v744 = vpop.f32.mrf.mxu0
    %v745 = vadd.f32 0.0, %v744
    %v746 = vand.u32 %v76, 4294901760
    %v747 = vsub.f32 %v76, %v746
    %v748 = vand.u32 %v747, 4294901760
    %v749 = vsub.f32 %v747, %v748
    %v750 = vand.u32 %v749, 4294901760
    %751 = vmatmul.f32.gmra.mxu0 %v750
    %v752 = vpop.f32.mrf.mxu0
    %v753 = vadd.f32 0.0, %v752
    %v754 = vand.u32 %v79, 4294901760
    %v755 = vsub.f32 %v79, %v754
    %v756 = vand.u32 %v755, 4294901760
    %v757 = vsub.f32 %v755, %v756
    %v758 = vand.u32 %v757, 4294901760
    %759 = vmatmul.f32.gmra.mxu0 %v758
    %v760 = vpop.f32.mrf.mxu0
    %v761 = vadd.f32 0.0, %v760
    %v762 = vand.u32 %v82, 4294901760
    %v763 = vsub.f32 %v82, %v762
    %v764 = vand.u32 %v763, 4294901760
    %v765 = vsub.f32 %v763, %v764
    %v766 = vand.u32 %v765, 4294901760
    %767 = vmatmul.f32.gmra.mxu0 %v766
    %v768 = vpop.f32.mrf.mxu0
    %v769 = vadd.f32 0.0, %v768
    %v770 = vand.u32 %v85, 4294901760
    %v771 = vsub.f32 %v85, %v770
    %v772 = vand.u32 %v771, 4294901760
    %v773 = vsub.f32 %v771, %v772
    %v774 = vand.u32 %v773, 4294901760
    %775 = vmatmul.f32.gmra.mxu0 %v774
    %v776 = vpop.f32.mrf.mxu0
    %v777 = vadd.f32 0.0, %v776
    %v778 = vand.u32 %v88, 4294901760
    %v779 = vsub.f32 %v88, %v778
    %v780 = vand.u32 %v779, 4294901760
    %v781 = vsub.f32 %v779, %v780
    %v782 = vand.u32 %v781, 4294901760
    %783 = vmatmul.f32.gmra.mxu0 %v782
    %v784 = vpop.f32.mrf.mxu0
    %v785 = vadd.f32 0.0, %v784
    %v786 = vand.u32 %v91, 4294901760
    %v787 = vsub.f32 %v91, %v786
    %v788 = vand.u32 %v787, 4294901760
    %v789 = vsub.f32 %v787, %v788
    %v790 = vand.u32 %v789, 4294901760
    %791 = vmatmul.f32.gmra.mxu0 %v790
    %v792 = vpop.f32.mrf.mxu0
    %v793 = vadd.f32 0.0, %v792
    %v794 = vand.u32 %v94, 4294901760
    %v795 = vsub.f32 %v94, %v794
    %v796 = vand.u32 %v795, 4294901760
    %v797 = vsub.f32 %v795, %v796
    %v798 = vand.u32 %v797, 4294901760
    %799 = vmatmul.f32.gmra.mxu0 %v798
    %v800 = vpop.f32.mrf.mxu0
    %v801 = vadd.f32 0.0, %v800
    %802 = vdwg.mxu0
    %803 = vmatpush.msra.mxu0 0.0
    %804 = vmatpush.msra.mxu0 0.0
    %805 = vmatpush.msra.mxu0 0.0
    %806 = vmatpush.msra.mxu0 0.0
    %807 = vmatpush.msra.mxu0 0.0
    %808 = vmatpush.msra.mxu0 0.0
    %809 = vmatpush.msra.mxu0 0.0
    %810 = vmatpush.msra.mxu0 0.0
    %811 = vmatpush.msra.mxu0 0.0
    %812 = vmatpush.msra.mxu0 0.0
    %813 = vmatpush.msra.mxu0 0.0
    %814 = vmatpush.msra.mxu0 0.0
    %815 = vmatpush.msra.mxu0 0.0
    %v816 = vand.u32 %v38, 4294901760
    %v817 = vsub.f32 %v38, %v816
    %v818 = vand.u32 %v817, 4294901760
    %v819 = vsub.f32 %v817, %v818
    %v820 = vand.u32 %v819, 4294901760
    %821 = vmatpush.msra.mxu0 %v820
    %v822 = vand.u32 %v36, 4294901760
    %v823 = vsub.f32 %v36, %v822
    %v824 = vand.u32 %v823, 4294901760
    %v825 = vsub.f32 %v823, %v824
    %v826 = vand.u32 %v825, 4294901760
    %827 = vmatpush.msra.mxu0 %v826
    %v828 = vand.u32 %v34, 4294901760
    %v829 = vsub.f32 %v34, %v828
    %v830 = vand.u32 %v829, 4294901760
    %v831 = vsub.f32 %v829, %v830
    %v832 = vand.u32 %v831, 4294901760
    %833 = vmatpush.msra.mxu0 %v832
    %v834 = vand.u32 %v55, 4294901760
    %835 = vmatmul.f32.gmra.mxu0 %v834
    %v836 = vpop.f32.mrf.mxu0
    %v837 = vadd.f32 %v697, %v836
    %v838 = vand.u32 %v58, 4294901760
    %839 = vmatmul.f32.gmra.mxu0 %v838
    %v840 = vpop.f32.mrf.mxu0
    %v841 = vadd.f32 %v705, %v840
    %v842 = vand.u32 %v61, 4294901760
    %843 = vmatmul.f32.gmra.mxu0 %v842
    %v844 = vpop.f32.mrf.mxu0
    %v845 = vadd.f32 %v713, %v844
    %v846 = vand.u32 %v64, 4294901760
    %847 = vmatmul.f32.gmra.mxu0 %v846
    %v848 = vpop.f32.mrf.mxu0
    %v849 = vadd.f32 %v721, %v848
    %v850 = vand.u32 %v67, 4294901760
    %851 = vmatmul.f32.gmra.mxu0 %v850
    %v852 = vpop.f32.mrf.mxu0
    %v853 = vadd.f32 %v729, %v852
    %v854 = vand.u32 %v70, 4294901760
    %855 = vmatmul.f32.gmra.mxu0 %v854
    %v856 = vpop.f32.mrf.mxu0
    %v857 = vadd.f32 %v737, %v856
    %v858 = vand.u32 %v73, 4294901760
    %859 = vmatmul.f32.gmra.mxu0 %v858
    %v860 = vpop.f32.mrf.mxu0
    %v861 = vadd.f32 %v745, %v860
    %v862 = vand.u32 %v76, 4294901760
    %863 = vmatmul.f32.gmra.mxu0 %v862
    %v864 = vpop.f32.mrf.mxu0
    %v865 = vadd.f32 %v753, %v864
    %v866 = vand.u32 %v79, 4294901760
    %867 = vmatmul.f32.gmra.mxu0 %v866
    %v868 = vpop.f32.mrf.mxu0
    %v869 = vadd.f32 %v761, %v868
    %v870 = vand.u32 %v82, 4294901760
    %871 = vmatmul.f32.gmra.mxu0 %v870
    %v872 = vpop.f32.mrf.mxu0
    %v873 = vadd.f32 %v769, %v872
    %v874 = vand.u32 %v85, 4294901760
    %875 = vmatmul.f32.gmra.mxu0 %v874
    %v876 = vpop.f32.mrf.mxu0
    %v877 = vadd.f32 %v777, %v876
    %v878 = vand.u32 %v88, 4294901760
    %879 = vmatmul.f32.gmra.mxu0 %v878
    %v880 = vpop.f32.mrf.mxu0
    %v881 = vadd.f32 %v785, %v880
    %v882 = vand.u32 %v91, 4294901760
    %883 = vmatmul.f32.gmra.mxu0 %v882
    %v884 = vpop.f32.mrf.mxu0
    %v885 = vadd.f32 %v793, %v884
    %v886 = vand.u32 %v94, 4294901760
    %887 = vmatmul.f32.gmra.mxu0 %v886
    %v888 = vpop.f32.mrf.mxu0
    %v889 = vadd.f32 %v801, %v888
    %890 = vdwg.mxu0
    %891 = vmatpush.msra.mxu0 0.0
    %892 = vmatpush.msra.mxu0 0.0
    %893 = vmatpush.msra.mxu0 0.0
    %894 = vmatpush.msra.mxu0 0.0
    %895 = vmatpush.msra.mxu0 0.0
    %896 = vmatpush.msra.mxu0 0.0
    %897 = vmatpush.msra.mxu0 0.0
    %898 = vmatpush.msra.mxu0 0.0
    %899 = vmatpush.msra.mxu0 0.0
    %900 = vmatpush.msra.mxu0 0.0
    %901 = vmatpush.msra.mxu0 0.0
    %902 = vmatpush.msra.mxu0 0.0
    %903 = vmatpush.msra.mxu0 0.0
    %v904 = vand.u32 %v38, 4294901760
    %v905 = vsub.f32 %v38, %v904
    %906 = vmatpush.msra.mxu0 %v905
    %v907 = vand.u32 %v36, 4294901760
    %v908 = vsub.f32 %v36, %v907
    %909 = vmatpush.msra.mxu0 %v908
    %v910 = vand.u32 %v34, 4294901760
    %v911 = vsub.f32 %v34, %v910
    %912 = vmatpush.msra.mxu0 %v911
    %v913 = vand.u32 %v55, 4294901760
    %v914 = vsub.f32 %v55, %v913
    %915 = vmatmul.f32.gmra.mxu0 %v914
    %v916 = vpop.f32.mrf.mxu0
    %v917 = vadd.f32 %v837, %v916
    %v918 = vand.u32 %v58, 4294901760
    %v919 = vsub.f32 %v58, %v918
    %920 = vmatmul.f32.gmra.mxu0 %v919
    %v921 = vpop.f32.mrf.mxu0
    %v922 = vadd.f32 %v841, %v921
    %v923 = vand.u32 %v61, 4294901760
    %v924 = vsub.f32 %v61, %v923
    %925 = vmatmul.f32.gmra.mxu0 %v924
    %v926 = vpop.f32.mrf.mxu0
    %v927 = vadd.f32 %v845, %v926
    %v928 = vand.u32 %v64, 4294901760
    %v929 = vsub.f32 %v64, %v928
    %930 = vmatmul.f32.gmra.mxu0 %v929
    %v931 = vpop.f32.mrf.mxu0
    %v932 = vadd.f32 %v849, %v931
    %v933 = vand.u32 %v67, 4294901760
    %v934 = vsub.f32 %v67, %v933
    %935 = vmatmul.f32.gmra.mxu0 %v934
    %v936 = vpop.f32.mrf.mxu0
    %v937 = vadd.f32 %v853, %v936
    %v938 = vand.u32 %v70, 4294901760
    %v939 = vsub.f32 %v70, %v938
    %940 = vmatmul.f32.gmra.mxu0 %v939
    %v941 = vpop.f32.mrf.mxu0
    %v942 = vadd.f32 %v857, %v941
    %v943 = vand.u32 %v73, 4294901760
    %v944 = vsub.f32 %v73, %v943
    %945 = vmatmul.f32.gmra.mxu0 %v944
    %v946 = vpop.f32.mrf.mxu0
    %v947 = vadd.f32 %v861, %v946
    %v948 = vand.u32 %v76, 4294901760
    %v949 = vsub.f32 %v76, %v948
    %950 = vmatmul.f32.gmra.mxu0 %v949
    %v951 = vpop.f32.mrf.mxu0
    %v952 = vadd.f32 %v865, %v951
    %v953 = vand.u32 %v79, 4294901760
    %v954 = vsub.f32 %v79, %v953
    %955 = vmatmul.f32.gmra.mxu0 %v954
    %v956 = vpop.f32.mrf.mxu0
    %v957 = vadd.f32 %v869, %v956
    %v958 = vand.u32 %v82, 4294901760
    %v959 = vsub.f32 %v82, %v958
    %960 = vmatmul.f32.gmra.mxu0 %v959
    %v961 = vpop.f32.mrf.mxu0
    %v962 = vadd.f32 %v873, %v961
    %v963 = vand.u32 %v85, 4294901760
    %v964 = vsub.f32 %v85, %v963
    %965 = vmatmul.f32.gmra.mxu0 %v964
    %v966 = vpop.f32.mrf.mxu0
    %v967 = vadd.f32 %v877, %v966
    %v968 = vand.u32 %v88, 4294901760
    %v969 = vsub.f32 %v88, %v968
    %970 = vmatmul.f32.gmra.mxu0 %v969
    %v971 = vpop.f32.mrf.mxu0
    %v972 = vadd.f32 %v881, %v971
    %v973 = vand.u32 %v91, 4294901760
    %v974 = vsub.f32 %v91, %v973
    %975 = vmatmul.f32.gmra.mxu0 %v974
    %v976 = vpop.f32.mrf.mxu0
    %v977 = vadd.f32 %v885, %v976
    %v978 = vand.u32 %v94, 4294901760
    %v979 = vsub.f32 %v94, %v978
    %980 = vmatmul.f32.gmra.mxu0 %v979
    %v981 = vpop.f32.mrf.mxu0
    %v982 = vadd.f32 %v889, %v981
    %983 = vdwg.mxu0
    %984 = vmatpush.msra.mxu0 0.0
    %985 = vmatpush.msra.mxu0 0.0
    %986 = vmatpush.msra.mxu0 0.0
    %987 = vmatpush.msra.mxu0 0.0
    %988 = vmatpush.msra.mxu0 0.0
    %989 = vmatpush.msra.mxu0 0.0
    %990 = vmatpush.msra.mxu0 0.0
    %991 = vmatpush.msra.mxu0 0.0
    %992 = vmatpush.msra.mxu0 0.0
    %993 = vmatpush.msra.mxu0 0.0
    %994 = vmatpush.msra.mxu0 0.0
    %995 = vmatpush.msra.mxu0 0.0
    %996 = vmatpush.msra.mxu0 0.0
    %v997 = vand.u32 %v38, 4294901760
    %998 = vmatpush.msra.mxu0 %v997
    %v999 = vand.u32 %v36, 4294901760
    %1000 = vmatpush.msra.mxu0 %v999
    %v1001 = vand.u32 %v34, 4294901760
    %1002 = vmatpush.msra.mxu0 %v1001
    %v1003 = vand.u32 %v55, 4294901760
    %v1004 = vsub.f32 %v55, %v1003
    %v1005 = vand.u32 %v1004, 4294901760
    %1006 = vmatmul.f32.gmra.mxu0 %v1005
    %v1007 = vpop.f32.mrf.mxu0
    %v1008 = vadd.f32 %v917, %v1007
    %v1009 = vand.u32 %v58, 4294901760
    %v1010 = vsub.f32 %v58, %v1009
    %v1011 = vand.u32 %v1010, 4294901760
    %1012 = vmatmul.f32.gmra.mxu0 %v1011
    %v1013 = vpop.f32.mrf.mxu0
    %v1014 = vadd.f32 %v922, %v1013
    %v1015 = vand.u32 %v61, 4294901760
    %v1016 = vsub.f32 %v61, %v1015
    %v1017 = vand.u32 %v1016, 4294901760
    %1018 = vmatmul.f32.gmra.mxu0 %v1017
    %v1019 = vpop.f32.mrf.mxu0
    %v1020 = vadd.f32 %v927, %v1019
    %v1021 = vand.u32 %v64, 4294901760
    %v1022 = vsub.f32 %v64, %v1021
    %v1023 = vand.u32 %v1022, 4294901760
    %1024 = vmatmul.f32.gmra.mxu0 %v1023
    %v1025 = vpop.f32.mrf.mxu0
    %v1026 = vadd.f32 %v932, %v1025
    %v1027 = vand.u32 %v67, 4294901760
    %v1028 = vsub.f32 %v67, %v1027
    %v1029 = vand.u32 %v1028, 4294901760
    %1030 = vmatmul.f32.gmra.mxu0 %v1029
    %v1031 = vpop.f32.mrf.mxu0
    %v1032 = vadd.f32 %v937, %v1031
    %v1033 = vand.u32 %v70, 4294901760
    %v1034 = vsub.f32 %v70, %v1033
    %v1035 = vand.u32 %v1034, 4294901760
    %1036 = vmatmul.f32.gmra.mxu0 %v1035
    %v1037 = vpop.f32.mrf.mxu0
    %v1038 = vadd.f32 %v942, %v1037
    %v1039 = vand.u32 %v73, 4294901760
    %v1040 = vsub.f32 %v73, %v1039
    %v1041 = vand.u32 %v1040, 4294901760
    %1042 = vmatmul.f32.gmra.mxu0 %v1041
    %v1043 = vpop.f32.mrf.mxu0
    %v1044 = vadd.f32 %v947, %v1043
    %v1045 = vand.u32 %v76, 4294901760
    %v1046 = vsub.f32 %v76, %v1045
    %v1047 = vand.u32 %v1046, 4294901760
    %1048 = vmatmul.f32.gmra.mxu0 %v1047
    %v1049 = vpop.f32.mrf.mxu0
    %v1050 = vadd.f32 %v952, %v1049
    %v1051 = vand.u32 %v79, 4294901760
    %v1052 = vsub.f32 %v79, %v1051
    %v1053 = vand.u32 %v1052, 4294901760
    %1054 = vmatmul.f32.gmra.mxu0 %v1053
    %v1055 = vpop.f32.mrf.mxu0
    %v1056 = vadd.f32 %v957, %v1055
    %v1057 = vand.u32 %v82, 4294901760
    %v1058 = vsub.f32 %v82, %v1057
    %v1059 = vand.u32 %v1058, 4294901760
    %1060 = vmatmul.f32.gmra.mxu0 %v1059
    %v1061 = vpop.f32.mrf.mxu0
    %v1062 = vadd.f32 %v962, %v1061
    %v1063 = vand.u32 %v85, 4294901760
    %v1064 = vsub.f32 %v85, %v1063
    %v1065 = vand.u32 %v1064, 4294901760
    %1066 = vmatmul.f32.gmra.mxu0 %v1065
    %v1067 = vpop.f32.mrf.mxu0
    %v1068 = vadd.f32 %v967, %v1067
    %v1069 = vand.u32 %v88, 4294901760
    %v1070 = vsub.f32 %v88, %v1069
    %v1071 = vand.u32 %v1070, 4294901760
    %1072 = vmatmul.f32.gmra.mxu0 %v1071
    %v1073 = vpop.f32.mrf.mxu0
    %v1074 = vadd.f32 %v972, %v1073
    %v1075 = vand.u32 %v91, 4294901760
    %v1076 = vsub.f32 %v91, %v1075
    %v1077 = vand.u32 %v1076, 4294901760
    %1078 = vmatmul.f32.gmra.mxu0 %v1077
    %v1079 = vpop.f32.mrf.mxu0
    %v1080 = vadd.f32 %v977, %v1079
    %v1081 = vand.u32 %v94, 4294901760
    %v1082 = vsub.f32 %v94, %v1081
    %v1083 = vand.u32 %v1082, 4294901760
    %1084 = vmatmul.f32.gmra.mxu0 %v1083
    %v1085 = vpop.f32.mrf.mxu0
    %v1086 = vadd.f32 %v982, %v1085
    %1087 = vdwg.mxu0
    %1088 = vmatpush.msra.mxu0 0.0
    %1089 = vmatpush.msra.mxu0 0.0
    %1090 = vmatpush.msra.mxu0 0.0
    %1091 = vmatpush.msra.mxu0 0.0
    %1092 = vmatpush.msra.mxu0 0.0
    %1093 = vmatpush.msra.mxu0 0.0
    %1094 = vmatpush.msra.mxu0 0.0
    %1095 = vmatpush.msra.mxu0 0.0
    %1096 = vmatpush.msra.mxu0 0.0
    %1097 = vmatpush.msra.mxu0 0.0
    %1098 = vmatpush.msra.mxu0 0.0
    %1099 = vmatpush.msra.mxu0 0.0
    %1100 = vmatpush.msra.mxu0 0.0
    %v1101 = vand.u32 %v38, 4294901760
    %v1102 = vsub.f32 %v38, %v1101
    %v1103 = vand.u32 %v1102, 4294901760
    %1104 = vmatpush.msra.mxu0 %v1103
    %v1105 = vand.u32 %v36, 4294901760
    %v1106 = vsub.f32 %v36, %v1105
    %v1107 = vand.u32 %v1106, 4294901760
    %1108 = vmatpush.msra.mxu0 %v1107
    %v1109 = vand.u32 %v34, 4294901760
    %v1110 = vsub.f32 %v34, %v1109
    %v1111 = vand.u32 %v1110, 4294901760
    %1112 = vmatpush.msra.mxu0 %v1111
    %v1113 = vand.u32 %v55, 4294901760
    %1114 = vmatmul.f32.gmra.mxu0 %v1113
    %v1115 = vpop.f32.mrf.mxu0
    %v1116 = vadd.f32 %v1008, %v1115
    %v1117 = vand.u32 %v58, 4294901760
    %1118 = vmatmul.f32.gmra.mxu0 %v1117
    %v1119 = vpop.f32.mrf.mxu0
    %v1120 = vadd.f32 %v1014, %v1119
    %v1121 = vand.u32 %v61, 4294901760
    %1122 = vmatmul.f32.gmra.mxu0 %v1121
    %v1123 = vpop.f32.mrf.mxu0
    %v1124 = vadd.f32 %v1020, %v1123
    %v1125 = vand.u32 %v64, 4294901760
    %1126 = vmatmul.f32.gmra.mxu0 %v1125
    %v1127 = vpop.f32.mrf.mxu0
    %v1128 = vadd.f32 %v1026, %v1127
    %v1129 = vand.u32 %v67, 4294901760
    %1130 = vmatmul.f32.gmra.mxu0 %v1129
    %v1131 = vpop.f32.mrf.mxu0
    %v1132 = vadd.f32 %v1032, %v1131
    %v1133 = vand.u32 %v70, 4294901760
    %1134 = vmatmul.f32.gmra.mxu0 %v1133
    %v1135 = vpop.f32.mrf.mxu0
    %v1136 = vadd.f32 %v1038, %v1135
    %v1137 = vand.u32 %v73, 4294901760
    %1138 = vmatmul.f32.gmra.mxu0 %v1137
    %v1139 = vpop.f32.mrf.mxu0
    %v1140 = vadd.f32 %v1044, %v1139
    %v1141 = vand.u32 %v76, 4294901760
    %1142 = vmatmul.f32.gmra.mxu0 %v1141
    %v1143 = vpop.f32.mrf.mxu0
    %v1144 = vadd.f32 %v1050, %v1143
    %v1145 = vand.u32 %v79, 4294901760
    %1146 = vmatmul.f32.gmra.mxu0 %v1145
    %v1147 = vpop.f32.mrf.mxu0
    %v1148 = vadd.f32 %v1056, %v1147
    %v1149 = vand.u32 %v82, 4294901760
    %1150 = vmatmul.f32.gmra.mxu0 %v1149
    %v1151 = vpop.f32.mrf.mxu0
    %v1152 = vadd.f32 %v1062, %v1151
    %v1153 = vand.u32 %v85, 4294901760
    %1154 = vmatmul.f32.gmra.mxu0 %v1153
    %v1155 = vpop.f32.mrf.mxu0
    %v1156 = vadd.f32 %v1068, %v1155
    %v1157 = vand.u32 %v88, 4294901760
    %1158 = vmatmul.f32.gmra.mxu0 %v1157
    %v1159 = vpop.f32.mrf.mxu0
    %v1160 = vadd.f32 %v1074, %v1159
    %v1161 = vand.u32 %v91, 4294901760
    %1162 = vmatmul.f32.gmra.mxu0 %v1161
    %v1163 = vpop.f32.mrf.mxu0
    %v1164 = vadd.f32 %v1080, %v1163
    %v1165 = vand.u32 %v94, 4294901760
    %1166 = vmatmul.f32.gmra.mxu0 %v1165
    %v1167 = vpop.f32.mrf.mxu0
    %v1168 = vadd.f32 %v1086, %v1167
    %1169 = vdwg.mxu0
    %1170 = vmatpush.msra.mxu0 0.0
    %1171 = vmatpush.msra.mxu0 0.0
    %1172 = vmatpush.msra.mxu0 0.0
    %1173 = vmatpush.msra.mxu0 0.0
    %1174 = vmatpush.msra.mxu0 0.0
    %1175 = vmatpush.msra.mxu0 0.0
    %1176 = vmatpush.msra.mxu0 0.0
    %1177 = vmatpush.msra.mxu0 0.0
    %1178 = vmatpush.msra.mxu0 0.0
    %1179 = vmatpush.msra.mxu0 0.0
    %1180 = vmatpush.msra.mxu0 0.0
    %1181 = vmatpush.msra.mxu0 0.0
    %1182 = vmatpush.msra.mxu0 0.0
    %v1183 = vand.u32 %v38, 4294901760
    %1184 = vmatpush.msra.mxu0 %v1183
    %v1185 = vand.u32 %v36, 4294901760
    %1186 = vmatpush.msra.mxu0 %v1185
    %v1187 = vand.u32 %v34, 4294901760
    %1188 = vmatpush.msra.mxu0 %v1187
    %v1189 = vand.u32 %v55, 4294901760
    %1190 = vmatmul.f32.gmra.mxu0 %v1189
    %v1191 = vpop.f32.mrf.mxu0
    %v1192 = vadd.f32 %v1116, %v1191
    %v1193 = vand.u32 %v58, 4294901760
    %1194 = vmatmul.f32.gmra.mxu0 %v1193
    %v1195 = vpop.f32.mrf.mxu0
    %v1196 = vadd.f32 %v1120, %v1195
    %v1197 = vand.u32 %v61, 4294901760
    %1198 = vmatmul.f32.gmra.mxu0 %v1197
    %v1199 = vpop.f32.mrf.mxu0
    %v1200 = vadd.f32 %v1124, %v1199
    %v1201 = vand.u32 %v64, 4294901760
    %1202 = vmatmul.f32.gmra.mxu0 %v1201
    %v1203 = vpop.f32.mrf.mxu0
    %v1204 = vadd.f32 %v1128, %v1203
    %v1205 = vand.u32 %v67, 4294901760
    %1206 = vmatmul.f32.gmra.mxu0 %v1205
    %v1207 = vpop.f32.mrf.mxu0
    %v1208 = vadd.f32 %v1132, %v1207
    %v1209 = vand.u32 %v70, 4294901760
    %1210 = vmatmul.f32.gmra.mxu0 %v1209
    %v1211 = vpop.f32.mrf.mxu0
    %v1212 = vadd.f32 %v1136, %v1211
    %v1213 = vand.u32 %v73, 4294901760
    %1214 = vmatmul.f32.gmra.mxu0 %v1213
    %v1215 = vpop.f32.mrf.mxu0
    %v1216 = vadd.f32 %v1140, %v1215
    %v1217 = vand.u32 %v76, 4294901760
    %1218 = vmatmul.f32.gmra.mxu0 %v1217
    %v1219 = vpop.f32.mrf.mxu0
    %v1220 = vadd.f32 %v1144, %v1219
    %v1221 = vand.u32 %v79, 4294901760
    %1222 = vmatmul.f32.gmra.mxu0 %v1221
    %v1223 = vpop.f32.mrf.mxu0
    %v1224 = vadd.f32 %v1148, %v1223
    %v1225 = vand.u32 %v82, 4294901760
    %1226 = vmatmul.f32.gmra.mxu0 %v1225
    %v1227 = vpop.f32.mrf.mxu0
    %v1228 = vadd.f32 %v1152, %v1227
    %v1229 = vand.u32 %v85, 4294901760
    %1230 = vmatmul.f32.gmra.mxu0 %v1229
    %v1231 = vpop.f32.mrf.mxu0
    %v1232 = vadd.f32 %v1156, %v1231
    %v1233 = vand.u32 %v88, 4294901760
    %1234 = vmatmul.f32.gmra.mxu0 %v1233
    %v1235 = vpop.f32.mrf.mxu0
    %v1236 = vadd.f32 %v1160, %v1235
    %v1237 = vand.u32 %v91, 4294901760
    %1238 = vmatmul.f32.gmra.mxu0 %v1237
    %v1239 = vpop.f32.mrf.mxu0
    %v1240 = vadd.f32 %v1164, %v1239
    %v1241 = vand.u32 %v94, 4294901760
    %1242 = vmatmul.f32.gmra.mxu0 %v1241
    %v1243 = vpop.f32.mrf.mxu0
    %v1244 = vadd.f32 %v1168, %v1243
    %1245 = vdwg.mxu0
    %v1246 = vadd.f32 %v617, %v621
    %v1247 = vadd.f32 %v1246, %v625
    %v1248 = vadd.f32 %v1247, %v629
    %v1249 = vadd.f32 %v1248, %v633
    %v1250 = vadd.f32 %v1249, %v637
    %v1251 = vadd.f32 %v1250, %v641
    %v1252 = vadd.f32 %v1251, %v645
    %v1253 = vadd.f32 %v1252, %v649
    %v1254 = vadd.f32 %v1253, %v653
    %v1255 = vadd.f32 %v1254, %v657
    %v1256 = vadd.f32 %v1255, %v661
    %v1257 = vadd.f32 %v1256, %v665
    %vm1258 = vcmask 1040384
    %v1259 = vsel %vm1258, %v669, 0.0
    %v1260 = vadd.f32 %v1257, %v1259
    %v1261 = vrot.slane %v1260, 4
    %v1262 = vadd.f32 %v1260, %v1261
    %v1263 = vrot.slane %v1262, 2
    %v1264 = vadd.f32 %v1262, %v1263
    %v1265 = vrot.slane %v1264, 1
    %v1266 = vadd.f32 %v1264, %v1265
    %v1267 = vadd.f32 %v1192, %v1196
    %v1268 = vadd.f32 %v1267, %v1200
    %v1269 = vadd.f32 %v1268, %v1204
    %v1270 = vadd.f32 %v1269, %v1208
    %v1271 = vadd.f32 %v1270, %v1212
    %v1272 = vadd.f32 %v1271, %v1216
    %v1273 = vadd.f32 %v1272, %v1220
    %v1274 = vadd.f32 %v1273, %v1224
    %v1275 = vadd.f32 %v1274, %v1228
    %v1276 = vadd.f32 %v1275, %v1232
    %v1277 = vadd.f32 %v1276, %v1236
    %v1278 = vadd.f32 %v1277, %v1240
    %v1279 = vsel %vm1258, %v1244, 0.0
    %v1280 = vadd.f32 %v1278, %v1279
    %v1281 = vrot.slane %v1280, 4
    %v1282 = vadd.f32 %v1280, %v1281
    %v1283 = vrot.slane %v1282, 2
    %v1284 = vadd.f32 %v1282, %v1283
    %v1285 = vrot.slane %v1284, 1
    %v1286 = vadd.f32 %v1284, %v1285
    %v1287 = vadd.f32 %v1266, 0.0
    %v1288 = vadd.f32 %v1286, 0.0
    %v1289 = vmul.f32 %v617, %v617
    %v1290 = vmul.f32 %v1192, %v1192
    %v1291 = vmul.f32 %v621, %v621
    %v1292 = vmul.f32 %v1196, %v1196
    %v1293 = vmul.f32 %v625, %v625
    %v1294 = vmul.f32 %v1200, %v1200
    %v1295 = vmul.f32 %v629, %v629
    %v1296 = vmul.f32 %v1204, %v1204
    %v1297 = vmul.f32 %v633, %v633
    %v1298 = vmul.f32 %v1208, %v1208
    %v1299 = vmul.f32 %v637, %v637
    %v1300 = vmul.f32 %v1212, %v1212
    %v1301 = vmul.f32 %v641, %v641
    %v1302 = vmul.f32 %v1216, %v1216
    %v1303 = vmul.f32 %v645, %v645
    %v1304 = vmul.f32 %v1220, %v1220
    %v1305 = vmul.f32 %v649, %v649
    %v1306 = vmul.f32 %v1224, %v1224
    %v1307 = vmul.f32 %v653, %v653
    %v1308 = vmul.f32 %v1228, %v1228
    %v1309 = vmul.f32 %v657, %v657
    %v1310 = vmul.f32 %v1232, %v1232
    %v1311 = vmul.f32 %v661, %v661
    %v1312 = vmul.f32 %v1236, %v1236
    %v1313 = vmul.f32 %v665, %v665
    %v1314 = vmul.f32 %v1240, %v1240
    %v1315 = vmul.f32 %v669, %v669
    %v1316 = vmul.f32 %v1244, %v1244
    %v1317 = vadd.f32 %v1289, %v1291
    %v1318 = vadd.f32 %v1317, %v1293
    %v1319 = vadd.f32 %v1318, %v1295
    %v1320 = vadd.f32 %v1319, %v1297
    %v1321 = vadd.f32 %v1320, %v1299
    %v1322 = vadd.f32 %v1321, %v1301
    %v1323 = vadd.f32 %v1322, %v1303
    %v1324 = vadd.f32 %v1323, %v1305
    %v1325 = vadd.f32 %v1324, %v1307
    %v1326 = vadd.f32 %v1325, %v1309
    %v1327 = vadd.f32 %v1326, %v1311
    %v1328 = vadd.f32 %v1327, %v1313
    %v1329 = vsel %vm1258, %v1315, 0.0
    %v1330 = vadd.f32 %v1328, %v1329
    %v1331 = vrot.slane %v1330, 4
    %v1332 = vadd.f32 %v1330, %v1331
    %v1333 = vrot.slane %v1332, 2
    %v1334 = vadd.f32 %v1332, %v1333
    %v1335 = vrot.slane %v1334, 1
    %v1336 = vadd.f32 %v1334, %v1335
    %v1337 = vadd.f32 %v1290, %v1292
    %v1338 = vadd.f32 %v1337, %v1294
    %v1339 = vadd.f32 %v1338, %v1296
    %v1340 = vadd.f32 %v1339, %v1298
    %v1341 = vadd.f32 %v1340, %v1300
    %v1342 = vadd.f32 %v1341, %v1302
    %v1343 = vadd.f32 %v1342, %v1304
    %v1344 = vadd.f32 %v1343, %v1306
    %v1345 = vadd.f32 %v1344, %v1308
    %v1346 = vadd.f32 %v1345, %v1310
    %v1347 = vadd.f32 %v1346, %v1312
    %v1348 = vadd.f32 %v1347, %v1314
    %v1349 = vsel %vm1258, %v1316, 0.0
    %v1350 = vadd.f32 %v1348, %v1349
    %v1351 = vrot.slane %v1350, 4
    %v1352 = vadd.f32 %v1350, %v1351
    %v1353 = vrot.slane %v1352, 2
    %v1354 = vadd.f32 %v1352, %v1353
    %v1355 = vrot.slane %v1354, 1
    %v1356 = vadd.f32 %v1354, %v1355
    %v1357 = vadd.f32 %v1336, 0.0
    %v1358 = vadd.f32 %v1356, 0.0
    %v1359 = vmax.f32 %v617, %v625
    %v1360 = vmax.f32 %v621, %v629
    %v1361 = vmax.f32 %v1359, %v633
    %v1362 = vmax.f32 %v1360, %v637
    %v1363 = vmax.f32 %v1361, %v641
    %v1364 = vmax.f32 %v1362, %v645
    %v1365 = vmax.f32 %v1363, %v649
    %v1366 = vmax.f32 %v1364, %v653
    %v1367 = vmax.f32 %v1365, %v657
    %v1368 = vmax.f32 %v1366, %v661
    %v1369 = vmax.f32 %v1367, %v665
    %v1370 = vsel %vm1258, %v669, -inf
    %v1371 = vmax.f32 %v1368, %v1370
    %v1372 = vmax.f32 %v1369, %v1371
    %v1373 = vrot.slane %v1372, 4
    %v1374 = vmax.f32 %v1372, %v1373
    %v1375 = vrot.slane %v1374, 2
    %v1376 = vmax.f32 %v1374, %v1375
    %v1377 = vrot.slane %v1376, 1
    %v1378 = vmax.f32 %v1376, %v1377
    %v1379 = vmax.f32 %v1192, %v1200
    %v1380 = vmax.f32 %v1196, %v1204
    %v1381 = vmax.f32 %v1379, %v1208
    %v1382 = vmax.f32 %v1380, %v1212
    %v1383 = vmax.f32 %v1381, %v1216
    %v1384 = vmax.f32 %v1382, %v1220
    %v1385 = vmax.f32 %v1383, %v1224
    %v1386 = vmax.f32 %v1384, %v1228
    %v1387 = vmax.f32 %v1385, %v1232
    %v1388 = vmax.f32 %v1386, %v1236
    %v1389 = vmax.f32 %v1387, %v1240
    %v1390 = vsel %vm1258, %v1244, -inf
    %v1391 = vmax.f32 %v1388, %v1390
    %v1392 = vmax.f32 %v1389, %v1391
    %v1393 = vrot.slane %v1392, 4
    %v1394 = vmax.f32 %v1392, %v1393
    %v1395 = vrot.slane %v1394, 2
    %v1396 = vmax.f32 %v1394, %v1395
    %v1397 = vrot.slane %v1396, 1
    %v1398 = vmax.f32 %v1396, %v1397
    %v1399 = vmin.f32 %v617, %v625
    %v1400 = vmin.f32 %v621, %v629
    %v1401 = vmin.f32 %v1399, %v633
    %v1402 = vmin.f32 %v1400, %v637
    %v1403 = vmin.f32 %v1401, %v641
    %v1404 = vmin.f32 %v1402, %v645
    %v1405 = vmin.f32 %v1403, %v649
    %v1406 = vmin.f32 %v1404, %v653
    %v1407 = vmin.f32 %v1405, %v657
    %v1408 = vmin.f32 %v1406, %v661
    %v1409 = vmin.f32 %v1407, %v665
    %v1410 = vsel %vm1258, %v669, inf
    %v1411 = vmin.f32 %v1408, %v1410
    %v1412 = vmin.f32 %v1409, %v1411
    %v1413 = vrot.slane %v1412, 4
    %v1414 = vmin.f32 %v1412, %v1413
    %v1415 = vrot.slane %v1414, 2
    %v1416 = vmin.f32 %v1414, %v1415
    %v1417 = vrot.slane %v1416, 1
    %v1418 = vmin.f32 %v1416, %v1417
    %v1419 = vmin.f32 %v1192, %v1200
    %v1420 = vmin.f32 %v1196, %v1204
    %v1421 = vmin.f32 %v1419, %v1208
    %v1422 = vmin.f32 %v1420, %v1212
    %v1423 = vmin.f32 %v1421, %v1216
    %v1424 = vmin.f32 %v1422, %v1220
    %v1425 = vmin.f32 %v1423, %v1224
    %v1426 = vmin.f32 %v1424, %v1228
    %v1427 = vmin.f32 %v1425, %v1232
    %v1428 = vmin.f32 %v1426, %v1236
    %v1429 = vmin.f32 %v1427, %v1240
    %v1430 = vsel %vm1258, %v1244, inf
    %v1431 = vmin.f32 %v1428, %v1430
    %v1432 = vmin.f32 %v1429, %v1431
    %v1433 = vrot.slane %v1432, 4
    %v1434 = vmin.f32 %v1432, %v1433
    %v1435 = vrot.slane %v1434, 2
    %v1436 = vmin.f32 %v1434, %v1435
    %v1437 = vrot.slane %v1436, 1
    %v1438 = vmin.f32 %v1436, %v1437
    %s1439 = scalar_lea.vmem %s0, 112
    %v1440 = vld [vmem:[%s1439] sm:$0xff]
    %v1441 = vld [vmem:[%s1439 + $0x8] sm:$0xff]
    %v1442 = vld [vmem:[%s1439 + $0x10] sm:$0xff]
    %v1443 = vld [vmem:[%s1439 + $0x18] sm:$0xff]
    %v1444 = vld [vmem:[%s1439 + $0x20] sm:$0xff]
    %v1445 = vld [vmem:[%s1439 + $0x28] sm:$0xff]
    %v1446 = vld [vmem:[%s1439 + $0x30] sm:$0xff]
    %v1447 = vld [vmem:[%s1439 + $0x38] sm:$0xff]
    %v1448 = vld [vmem:[%s1439 + $0x40] sm:$0xff]
    %v1449 = vld [vmem:[%s1439 + $0x48] sm:$0xff]
    %v1450 = vld [vmem:[%s1439 + $0x50] sm:$0xff]
    %v1451 = vld [vmem:[%s1439 + $0x58] sm:$0xff]
    %v1452 = vld [vmem:[%s1439 + $0x60] sm:$0xff]
    %v1453 = vld [vmem:[%s1439 + $0x68] sm:$0x1]
    %v1455 = vsel %vm53, %v1440, 0
    %v1458 = vsel %vm53, %v1441, 0
    %v1461 = vsel %vm53, %v1442, 0
    %v1464 = vsel %vm53, %v1443, 0
    %v1467 = vsel %vm53, %v1444, 0
    %v1470 = vsel %vm53, %v1445, 0
    %v1473 = vsel %vm53, %v1446, 0
    %v1476 = vsel %vm53, %v1447, 0
    %v1479 = vsel %vm53, %v1448, 0
    %v1482 = vsel %vm53, %v1449, 0
    %v1485 = vsel %vm53, %v1450, 0
    %v1488 = vsel %vm53, %v1451, 0
    %v1491 = vsel %vm53, %v1452, 0
    %v1494 = vsel %vm53, %v1453, 0
    %1496 = vmatpush.msra.mxu0 0.0
    %1497 = vmatpush.msra.mxu0 0.0
    %1498 = vmatpush.msra.mxu0 0.0
    %1499 = vmatpush.msra.mxu0 0.0
    %1500 = vmatpush.msra.mxu0 0.0
    %1501 = vmatpush.msra.mxu0 0.0
    %1502 = vmatpush.msra.mxu0 0.0
    %1503 = vmatpush.msra.mxu0 0.0
    %1504 = vmatpush.msra.mxu0 0.0
    %1505 = vmatpush.msra.mxu0 0.0
    %1506 = vmatpush.msra.mxu0 0.0
    %1507 = vmatpush.msra.mxu0 0.0
    %1508 = vmatpush.msra.mxu0 0.0
    %v1509 = vand.u32 %v37, 4294901760
    %1510 = vmatpush.msra.mxu0 %v1509
    %v1511 = vand.u32 %v35, 4294901760
    %1512 = vmatpush.msra.mxu0 %v1511
    %v1513 = vand.u32 %v33, 4294901760
    %1514 = vmatpush.msra.mxu0 %v1513
    %v1515 = vand.u32 %v1455, 4294901760
    %v1516 = vsub.f32 %v1455, %v1515
    %v1517 = vand.u32 %v1516, 4294901760
    %v1518 = vsub.f32 %v1516, %v1517
    %v1519 = vand.u32 %v1518, 4294901760
    %1520 = vmatmul.f32.gmra.mxu0 %v1519
    %v1521 = vpop.f32.mrf.mxu0
    %v1522 = vadd.f32 0.0, %v1521
    %v1523 = vand.u32 %v1458, 4294901760
    %v1524 = vsub.f32 %v1458, %v1523
    %v1525 = vand.u32 %v1524, 4294901760
    %v1526 = vsub.f32 %v1524, %v1525
    %v1527 = vand.u32 %v1526, 4294901760
    %1528 = vmatmul.f32.gmra.mxu0 %v1527
    %v1529 = vpop.f32.mrf.mxu0
    %v1530 = vadd.f32 0.0, %v1529
    %v1531 = vand.u32 %v1461, 4294901760
    %v1532 = vsub.f32 %v1461, %v1531
    %v1533 = vand.u32 %v1532, 4294901760
    %v1534 = vsub.f32 %v1532, %v1533
    %v1535 = vand.u32 %v1534, 4294901760
    %1536 = vmatmul.f32.gmra.mxu0 %v1535
    %v1537 = vpop.f32.mrf.mxu0
    %v1538 = vadd.f32 0.0, %v1537
    %v1539 = vand.u32 %v1464, 4294901760
    %v1540 = vsub.f32 %v1464, %v1539
    %v1541 = vand.u32 %v1540, 4294901760
    %v1542 = vsub.f32 %v1540, %v1541
    %v1543 = vand.u32 %v1542, 4294901760
    %1544 = vmatmul.f32.gmra.mxu0 %v1543
    %v1545 = vpop.f32.mrf.mxu0
    %v1546 = vadd.f32 0.0, %v1545
    %v1547 = vand.u32 %v1467, 4294901760
    %v1548 = vsub.f32 %v1467, %v1547
    %v1549 = vand.u32 %v1548, 4294901760
    %v1550 = vsub.f32 %v1548, %v1549
    %v1551 = vand.u32 %v1550, 4294901760
    %1552 = vmatmul.f32.gmra.mxu0 %v1551
    %v1553 = vpop.f32.mrf.mxu0
    %v1554 = vadd.f32 0.0, %v1553
    %v1555 = vand.u32 %v1470, 4294901760
    %v1556 = vsub.f32 %v1470, %v1555
    %v1557 = vand.u32 %v1556, 4294901760
    %v1558 = vsub.f32 %v1556, %v1557
    %v1559 = vand.u32 %v1558, 4294901760
    %1560 = vmatmul.f32.gmra.mxu0 %v1559
    %v1561 = vpop.f32.mrf.mxu0
    %v1562 = vadd.f32 0.0, %v1561
    %v1563 = vand.u32 %v1473, 4294901760
    %v1564 = vsub.f32 %v1473, %v1563
    %v1565 = vand.u32 %v1564, 4294901760
    %v1566 = vsub.f32 %v1564, %v1565
    %v1567 = vand.u32 %v1566, 4294901760
    %1568 = vmatmul.f32.gmra.mxu0 %v1567
    %v1569 = vpop.f32.mrf.mxu0
    %v1570 = vadd.f32 0.0, %v1569
    %v1571 = vand.u32 %v1476, 4294901760
    %v1572 = vsub.f32 %v1476, %v1571
    %v1573 = vand.u32 %v1572, 4294901760
    %v1574 = vsub.f32 %v1572, %v1573
    %v1575 = vand.u32 %v1574, 4294901760
    %1576 = vmatmul.f32.gmra.mxu0 %v1575
    %v1577 = vpop.f32.mrf.mxu0
    %v1578 = vadd.f32 0.0, %v1577
    %v1579 = vand.u32 %v1479, 4294901760
    %v1580 = vsub.f32 %v1479, %v1579
    %v1581 = vand.u32 %v1580, 4294901760
    %v1582 = vsub.f32 %v1580, %v1581
    %v1583 = vand.u32 %v1582, 4294901760
    %1584 = vmatmul.f32.gmra.mxu0 %v1583
    %v1585 = vpop.f32.mrf.mxu0
    %v1586 = vadd.f32 0.0, %v1585
    %v1587 = vand.u32 %v1482, 4294901760
    %v1588 = vsub.f32 %v1482, %v1587
    %v1589 = vand.u32 %v1588, 4294901760
    %v1590 = vsub.f32 %v1588, %v1589
    %v1591 = vand.u32 %v1590, 4294901760
    %1592 = vmatmul.f32.gmra.mxu0 %v1591
    %v1593 = vpop.f32.mrf.mxu0
    %v1594 = vadd.f32 0.0, %v1593
    %v1595 = vand.u32 %v1485, 4294901760
    %v1596 = vsub.f32 %v1485, %v1595
    %v1597 = vand.u32 %v1596, 4294901760
    %v1598 = vsub.f32 %v1596, %v1597
    %v1599 = vand.u32 %v1598, 4294901760
    %1600 = vmatmul.f32.gmra.mxu0 %v1599
    %v1601 = vpop.f32.mrf.mxu0
    %v1602 = vadd.f32 0.0, %v1601
    %v1603 = vand.u32 %v1488, 4294901760
    %v1604 = vsub.f32 %v1488, %v1603
    %v1605 = vand.u32 %v1604, 4294901760
    %v1606 = vsub.f32 %v1604, %v1605
    %v1607 = vand.u32 %v1606, 4294901760
    %1608 = vmatmul.f32.gmra.mxu0 %v1607
    %v1609 = vpop.f32.mrf.mxu0
    %v1610 = vadd.f32 0.0, %v1609
    %v1611 = vand.u32 %v1491, 4294901760
    %v1612 = vsub.f32 %v1491, %v1611
    %v1613 = vand.u32 %v1612, 4294901760
    %v1614 = vsub.f32 %v1612, %v1613
    %v1615 = vand.u32 %v1614, 4294901760
    %1616 = vmatmul.f32.gmra.mxu0 %v1615
    %v1617 = vpop.f32.mrf.mxu0
    %v1618 = vadd.f32 0.0, %v1617
    %v1619 = vand.u32 %v1494, 4294901760
    %v1620 = vsub.f32 %v1494, %v1619
    %v1621 = vand.u32 %v1620, 4294901760
    %v1622 = vsub.f32 %v1620, %v1621
    %v1623 = vand.u32 %v1622, 4294901760
    %1624 = vmatmul.f32.gmra.mxu0 %v1623
    %v1625 = vpop.f32.mrf.mxu0
    %v1626 = vadd.f32 0.0, %v1625
    %1627 = vdwg.mxu0
    %1628 = vmatpush.msra.mxu0 0.0
    %1629 = vmatpush.msra.mxu0 0.0
    %1630 = vmatpush.msra.mxu0 0.0
    %1631 = vmatpush.msra.mxu0 0.0
    %1632 = vmatpush.msra.mxu0 0.0
    %1633 = vmatpush.msra.mxu0 0.0
    %1634 = vmatpush.msra.mxu0 0.0
    %1635 = vmatpush.msra.mxu0 0.0
    %1636 = vmatpush.msra.mxu0 0.0
    %1637 = vmatpush.msra.mxu0 0.0
    %1638 = vmatpush.msra.mxu0 0.0
    %1639 = vmatpush.msra.mxu0 0.0
    %1640 = vmatpush.msra.mxu0 0.0
    %v1641 = vand.u32 %v37, 4294901760
    %v1642 = vsub.f32 %v37, %v1641
    %v1643 = vand.u32 %v1642, 4294901760
    %v1644 = vsub.f32 %v1642, %v1643
    %v1645 = vand.u32 %v1644, 4294901760
    %1646 = vmatpush.msra.mxu0 %v1645
    %v1647 = vand.u32 %v35, 4294901760
    %v1648 = vsub.f32 %v35, %v1647
    %v1649 = vand.u32 %v1648, 4294901760
    %v1650 = vsub.f32 %v1648, %v1649
    %v1651 = vand.u32 %v1650, 4294901760
    %1652 = vmatpush.msra.mxu0 %v1651
    %v1653 = vand.u32 %v33, 4294901760
    %v1654 = vsub.f32 %v33, %v1653
    %v1655 = vand.u32 %v1654, 4294901760
    %v1656 = vsub.f32 %v1654, %v1655
    %v1657 = vand.u32 %v1656, 4294901760
    %1658 = vmatpush.msra.mxu0 %v1657
    %v1659 = vand.u32 %v1455, 4294901760
    %1660 = vmatmul.f32.gmra.mxu0 %v1659
    %v1661 = vpop.f32.mrf.mxu0
    %v1662 = vadd.f32 %v1522, %v1661
    %v1663 = vand.u32 %v1458, 4294901760
    %1664 = vmatmul.f32.gmra.mxu0 %v1663
    %v1665 = vpop.f32.mrf.mxu0
    %v1666 = vadd.f32 %v1530, %v1665
    %v1667 = vand.u32 %v1461, 4294901760
    %1668 = vmatmul.f32.gmra.mxu0 %v1667
    %v1669 = vpop.f32.mrf.mxu0
    %v1670 = vadd.f32 %v1538, %v1669
    %v1671 = vand.u32 %v1464, 4294901760
    %1672 = vmatmul.f32.gmra.mxu0 %v1671
    %v1673 = vpop.f32.mrf.mxu0
    %v1674 = vadd.f32 %v1546, %v1673
    %v1675 = vand.u32 %v1467, 4294901760
    %1676 = vmatmul.f32.gmra.mxu0 %v1675
    %v1677 = vpop.f32.mrf.mxu0
    %v1678 = vadd.f32 %v1554, %v1677
    %v1679 = vand.u32 %v1470, 4294901760
    %1680 = vmatmul.f32.gmra.mxu0 %v1679
    %v1681 = vpop.f32.mrf.mxu0
    %v1682 = vadd.f32 %v1562, %v1681
    %v1683 = vand.u32 %v1473, 4294901760
    %1684 = vmatmul.f32.gmra.mxu0 %v1683
    %v1685 = vpop.f32.mrf.mxu0
    %v1686 = vadd.f32 %v1570, %v1685
    %v1687 = vand.u32 %v1476, 4294901760
    %1688 = vmatmul.f32.gmra.mxu0 %v1687
    %v1689 = vpop.f32.mrf.mxu0
    %v1690 = vadd.f32 %v1578, %v1689
    %v1691 = vand.u32 %v1479, 4294901760
    %1692 = vmatmul.f32.gmra.mxu0 %v1691
    %v1693 = vpop.f32.mrf.mxu0
    %v1694 = vadd.f32 %v1586, %v1693
    %v1695 = vand.u32 %v1482, 4294901760
    %1696 = vmatmul.f32.gmra.mxu0 %v1695
    %v1697 = vpop.f32.mrf.mxu0
    %v1698 = vadd.f32 %v1594, %v1697
    %v1699 = vand.u32 %v1485, 4294901760
    %1700 = vmatmul.f32.gmra.mxu0 %v1699
    %v1701 = vpop.f32.mrf.mxu0
    %v1702 = vadd.f32 %v1602, %v1701
    %v1703 = vand.u32 %v1488, 4294901760
    %1704 = vmatmul.f32.gmra.mxu0 %v1703
    %v1705 = vpop.f32.mrf.mxu0
    %v1706 = vadd.f32 %v1610, %v1705
    %v1707 = vand.u32 %v1491, 4294901760
    %1708 = vmatmul.f32.gmra.mxu0 %v1707
    %v1709 = vpop.f32.mrf.mxu0
    %v1710 = vadd.f32 %v1618, %v1709
    %v1711 = vand.u32 %v1494, 4294901760
    %1712 = vmatmul.f32.gmra.mxu0 %v1711
    %v1713 = vpop.f32.mrf.mxu0
    %v1714 = vadd.f32 %v1626, %v1713
    %1715 = vdwg.mxu0
    %1716 = vmatpush.msra.mxu0 0.0
    %1717 = vmatpush.msra.mxu0 0.0
    %1718 = vmatpush.msra.mxu0 0.0
    %1719 = vmatpush.msra.mxu0 0.0
    %1720 = vmatpush.msra.mxu0 0.0
    %1721 = vmatpush.msra.mxu0 0.0
    %1722 = vmatpush.msra.mxu0 0.0
    %1723 = vmatpush.msra.mxu0 0.0
    %1724 = vmatpush.msra.mxu0 0.0
    %1725 = vmatpush.msra.mxu0 0.0
    %1726 = vmatpush.msra.mxu0 0.0
    %1727 = vmatpush.msra.mxu0 0.0
    %1728 = vmatpush.msra.mxu0 0.0
    %v1729 = vand.u32 %v37, 4294901760
    %v1730 = vsub.f32 %v37, %v1729
    %1731 = vmatpush.msra.mxu0 %v1730
    %v1732 = vand.u32 %v35, 4294901760
    %v1733 = vsub.f32 %v35, %v1732
    %1734 = vmatpush.msra.mxu0 %v1733
    %v1735 = vand.u32 %v33, 4294901760
    %v1736 = vsub.f32 %v33, %v1735
    %1737 = vmatpush.msra.mxu0 %v1736
    %v1738 = vand.u32 %v1455, 4294901760
    %v1739 = vsub.f32 %v1455, %v1738
    %1740 = vmatmul.f32.gmra.mxu0 %v1739
    %v1741 = vpop.f32.mrf.mxu0
    %v1742 = vadd.f32 %v1662, %v1741
    %v1743 = vand.u32 %v1458, 4294901760
    %v1744 = vsub.f32 %v1458, %v1743
    %1745 = vmatmul.f32.gmra.mxu0 %v1744
    %v1746 = vpop.f32.mrf.mxu0
    %v1747 = vadd.f32 %v1666, %v1746
    %v1748 = vand.u32 %v1461, 4294901760
    %v1749 = vsub.f32 %v1461, %v1748
    %1750 = vmatmul.f32.gmra.mxu0 %v1749
    %v1751 = vpop.f32.mrf.mxu0
    %v1752 = vadd.f32 %v1670, %v1751
    %v1753 = vand.u32 %v1464, 4294901760
    %v1754 = vsub.f32 %v1464, %v1753
    %1755 = vmatmul.f32.gmra.mxu0 %v1754
    %v1756 = vpop.f32.mrf.mxu0
    %v1757 = vadd.f32 %v1674, %v1756
    %v1758 = vand.u32 %v1467, 4294901760
    %v1759 = vsub.f32 %v1467, %v1758
    %1760 = vmatmul.f32.gmra.mxu0 %v1759
    %v1761 = vpop.f32.mrf.mxu0
    %v1762 = vadd.f32 %v1678, %v1761
    %v1763 = vand.u32 %v1470, 4294901760
    %v1764 = vsub.f32 %v1470, %v1763
    %1765 = vmatmul.f32.gmra.mxu0 %v1764
    %v1766 = vpop.f32.mrf.mxu0
    %v1767 = vadd.f32 %v1682, %v1766
    %v1768 = vand.u32 %v1473, 4294901760
    %v1769 = vsub.f32 %v1473, %v1768
    %1770 = vmatmul.f32.gmra.mxu0 %v1769
    %v1771 = vpop.f32.mrf.mxu0
    %v1772 = vadd.f32 %v1686, %v1771
    %v1773 = vand.u32 %v1476, 4294901760
    %v1774 = vsub.f32 %v1476, %v1773
    %1775 = vmatmul.f32.gmra.mxu0 %v1774
    %v1776 = vpop.f32.mrf.mxu0
    %v1777 = vadd.f32 %v1690, %v1776
    %v1778 = vand.u32 %v1479, 4294901760
    %v1779 = vsub.f32 %v1479, %v1778
    %1780 = vmatmul.f32.gmra.mxu0 %v1779
    %v1781 = vpop.f32.mrf.mxu0
    %v1782 = vadd.f32 %v1694, %v1781
    %v1783 = vand.u32 %v1482, 4294901760
    %v1784 = vsub.f32 %v1482, %v1783
    %1785 = vmatmul.f32.gmra.mxu0 %v1784
    %v1786 = vpop.f32.mrf.mxu0
    %v1787 = vadd.f32 %v1698, %v1786
    %v1788 = vand.u32 %v1485, 4294901760
    %v1789 = vsub.f32 %v1485, %v1788
    %1790 = vmatmul.f32.gmra.mxu0 %v1789
    %v1791 = vpop.f32.mrf.mxu0
    %v1792 = vadd.f32 %v1702, %v1791
    %v1793 = vand.u32 %v1488, 4294901760
    %v1794 = vsub.f32 %v1488, %v1793
    %1795 = vmatmul.f32.gmra.mxu0 %v1794
    %v1796 = vpop.f32.mrf.mxu0
    %v1797 = vadd.f32 %v1706, %v1796
    %v1798 = vand.u32 %v1491, 4294901760
    %v1799 = vsub.f32 %v1491, %v1798
    %1800 = vmatmul.f32.gmra.mxu0 %v1799
    %v1801 = vpop.f32.mrf.mxu0
    %v1802 = vadd.f32 %v1710, %v1801
    %v1803 = vand.u32 %v1494, 4294901760
    %v1804 = vsub.f32 %v1494, %v1803
    %1805 = vmatmul.f32.gmra.mxu0 %v1804
    %v1806 = vpop.f32.mrf.mxu0
    %v1807 = vadd.f32 %v1714, %v1806
    %1808 = vdwg.mxu0
    %1809 = vmatpush.msra.mxu0 0.0
    %1810 = vmatpush.msra.mxu0 0.0
    %1811 = vmatpush.msra.mxu0 0.0
    %1812 = vmatpush.msra.mxu0 0.0
    %1813 = vmatpush.msra.mxu0 0.0
    %1814 = vmatpush.msra.mxu0 0.0
    %1815 = vmatpush.msra.mxu0 0.0
    %1816 = vmatpush.msra.mxu0 0.0
    %1817 = vmatpush.msra.mxu0 0.0
    %1818 = vmatpush.msra.mxu0 0.0
    %1819 = vmatpush.msra.mxu0 0.0
    %1820 = vmatpush.msra.mxu0 0.0
    %1821 = vmatpush.msra.mxu0 0.0
    %v1822 = vand.u32 %v37, 4294901760
    %1823 = vmatpush.msra.mxu0 %v1822
    %v1824 = vand.u32 %v35, 4294901760
    %1825 = vmatpush.msra.mxu0 %v1824
    %v1826 = vand.u32 %v33, 4294901760
    %1827 = vmatpush.msra.mxu0 %v1826
    %v1828 = vand.u32 %v1455, 4294901760
    %v1829 = vsub.f32 %v1455, %v1828
    %v1830 = vand.u32 %v1829, 4294901760
    %1831 = vmatmul.f32.gmra.mxu0 %v1830
    %v1832 = vpop.f32.mrf.mxu0
    %v1833 = vadd.f32 %v1742, %v1832
    %v1834 = vand.u32 %v1458, 4294901760
    %v1835 = vsub.f32 %v1458, %v1834
    %v1836 = vand.u32 %v1835, 4294901760
    %1837 = vmatmul.f32.gmra.mxu0 %v1836
    %v1838 = vpop.f32.mrf.mxu0
    %v1839 = vadd.f32 %v1747, %v1838
    %v1840 = vand.u32 %v1461, 4294901760
    %v1841 = vsub.f32 %v1461, %v1840
    %v1842 = vand.u32 %v1841, 4294901760
    %1843 = vmatmul.f32.gmra.mxu0 %v1842
    %v1844 = vpop.f32.mrf.mxu0
    %v1845 = vadd.f32 %v1752, %v1844
    %v1846 = vand.u32 %v1464, 4294901760
    %v1847 = vsub.f32 %v1464, %v1846
    %v1848 = vand.u32 %v1847, 4294901760
    %1849 = vmatmul.f32.gmra.mxu0 %v1848
    %v1850 = vpop.f32.mrf.mxu0
    %v1851 = vadd.f32 %v1757, %v1850
    %v1852 = vand.u32 %v1467, 4294901760
    %v1853 = vsub.f32 %v1467, %v1852
    %v1854 = vand.u32 %v1853, 4294901760
    %1855 = vmatmul.f32.gmra.mxu0 %v1854
    %v1856 = vpop.f32.mrf.mxu0
    %v1857 = vadd.f32 %v1762, %v1856
    %v1858 = vand.u32 %v1470, 4294901760
    %v1859 = vsub.f32 %v1470, %v1858
    %v1860 = vand.u32 %v1859, 4294901760
    %1861 = vmatmul.f32.gmra.mxu0 %v1860
    %v1862 = vpop.f32.mrf.mxu0
    %v1863 = vadd.f32 %v1767, %v1862
    %v1864 = vand.u32 %v1473, 4294901760
    %v1865 = vsub.f32 %v1473, %v1864
    %v1866 = vand.u32 %v1865, 4294901760
    %1867 = vmatmul.f32.gmra.mxu0 %v1866
    %v1868 = vpop.f32.mrf.mxu0
    %v1869 = vadd.f32 %v1772, %v1868
    %v1870 = vand.u32 %v1476, 4294901760
    %v1871 = vsub.f32 %v1476, %v1870
    %v1872 = vand.u32 %v1871, 4294901760
    %1873 = vmatmul.f32.gmra.mxu0 %v1872
    %v1874 = vpop.f32.mrf.mxu0
    %v1875 = vadd.f32 %v1777, %v1874
    %v1876 = vand.u32 %v1479, 4294901760
    %v1877 = vsub.f32 %v1479, %v1876
    %v1878 = vand.u32 %v1877, 4294901760
    %1879 = vmatmul.f32.gmra.mxu0 %v1878
    %v1880 = vpop.f32.mrf.mxu0
    %v1881 = vadd.f32 %v1782, %v1880
    %v1882 = vand.u32 %v1482, 4294901760
    %v1883 = vsub.f32 %v1482, %v1882
    %v1884 = vand.u32 %v1883, 4294901760
    %1885 = vmatmul.f32.gmra.mxu0 %v1884
    %v1886 = vpop.f32.mrf.mxu0
    %v1887 = vadd.f32 %v1787, %v1886
    %v1888 = vand.u32 %v1485, 4294901760
    %v1889 = vsub.f32 %v1485, %v1888
    %v1890 = vand.u32 %v1889, 4294901760
    %1891 = vmatmul.f32.gmra.mxu0 %v1890
    %v1892 = vpop.f32.mrf.mxu0
    %v1893 = vadd.f32 %v1792, %v1892
    %v1894 = vand.u32 %v1488, 4294901760
    %v1895 = vsub.f32 %v1488, %v1894
    %v1896 = vand.u32 %v1895, 4294901760
    %1897 = vmatmul.f32.gmra.mxu0 %v1896
    %v1898 = vpop.f32.mrf.mxu0
    %v1899 = vadd.f32 %v1797, %v1898
    %v1900 = vand.u32 %v1491, 4294901760
    %v1901 = vsub.f32 %v1491, %v1900
    %v1902 = vand.u32 %v1901, 4294901760
    %1903 = vmatmul.f32.gmra.mxu0 %v1902
    %v1904 = vpop.f32.mrf.mxu0
    %v1905 = vadd.f32 %v1802, %v1904
    %v1906 = vand.u32 %v1494, 4294901760
    %v1907 = vsub.f32 %v1494, %v1906
    %v1908 = vand.u32 %v1907, 4294901760
    %1909 = vmatmul.f32.gmra.mxu0 %v1908
    %v1910 = vpop.f32.mrf.mxu0
    %v1911 = vadd.f32 %v1807, %v1910
    %1912 = vdwg.mxu0
    %1913 = vmatpush.msra.mxu0 0.0
    %1914 = vmatpush.msra.mxu0 0.0
    %1915 = vmatpush.msra.mxu0 0.0
    %1916 = vmatpush.msra.mxu0 0.0
    %1917 = vmatpush.msra.mxu0 0.0
    %1918 = vmatpush.msra.mxu0 0.0
    %1919 = vmatpush.msra.mxu0 0.0
    %1920 = vmatpush.msra.mxu0 0.0
    %1921 = vmatpush.msra.mxu0 0.0
    %1922 = vmatpush.msra.mxu0 0.0
    %1923 = vmatpush.msra.mxu0 0.0
    %1924 = vmatpush.msra.mxu0 0.0
    %1925 = vmatpush.msra.mxu0 0.0
    %v1926 = vand.u32 %v37, 4294901760
    %v1927 = vsub.f32 %v37, %v1926
    %v1928 = vand.u32 %v1927, 4294901760
    %1929 = vmatpush.msra.mxu0 %v1928
    %v1930 = vand.u32 %v35, 4294901760
    %v1931 = vsub.f32 %v35, %v1930
    %v1932 = vand.u32 %v1931, 4294901760
    %1933 = vmatpush.msra.mxu0 %v1932
    %v1934 = vand.u32 %v33, 4294901760
    %v1935 = vsub.f32 %v33, %v1934
    %v1936 = vand.u32 %v1935, 4294901760
    %1937 = vmatpush.msra.mxu0 %v1936
    %v1938 = vand.u32 %v1455, 4294901760
    %1939 = vmatmul.f32.gmra.mxu0 %v1938
    %v1940 = vpop.f32.mrf.mxu0
    %v1941 = vadd.f32 %v1833, %v1940
    %v1942 = vand.u32 %v1458, 4294901760
    %1943 = vmatmul.f32.gmra.mxu0 %v1942
    %v1944 = vpop.f32.mrf.mxu0
    %v1945 = vadd.f32 %v1839, %v1944
    %v1946 = vand.u32 %v1461, 4294901760
    %1947 = vmatmul.f32.gmra.mxu0 %v1946
    %v1948 = vpop.f32.mrf.mxu0
    %v1949 = vadd.f32 %v1845, %v1948
    %v1950 = vand.u32 %v1464, 4294901760
    %1951 = vmatmul.f32.gmra.mxu0 %v1950
    %v1952 = vpop.f32.mrf.mxu0
    %v1953 = vadd.f32 %v1851, %v1952
    %v1954 = vand.u32 %v1467, 4294901760
    %1955 = vmatmul.f32.gmra.mxu0 %v1954
    %v1956 = vpop.f32.mrf.mxu0
    %v1957 = vadd.f32 %v1857, %v1956
    %v1958 = vand.u32 %v1470, 4294901760
    %1959 = vmatmul.f32.gmra.mxu0 %v1958
    %v1960 = vpop.f32.mrf.mxu0
    %v1961 = vadd.f32 %v1863, %v1960
    %v1962 = vand.u32 %v1473, 4294901760
    %1963 = vmatmul.f32.gmra.mxu0 %v1962
    %v1964 = vpop.f32.mrf.mxu0
    %v1965 = vadd.f32 %v1869, %v1964
    %v1966 = vand.u32 %v1476, 4294901760
    %1967 = vmatmul.f32.gmra.mxu0 %v1966
    %v1968 = vpop.f32.mrf.mxu0
    %v1969 = vadd.f32 %v1875, %v1968
    %v1970 = vand.u32 %v1479, 4294901760
    %1971 = vmatmul.f32.gmra.mxu0 %v1970
    %v1972 = vpop.f32.mrf.mxu0
    %v1973 = vadd.f32 %v1881, %v1972
    %v1974 = vand.u32 %v1482, 4294901760
    %1975 = vmatmul.f32.gmra.mxu0 %v1974
    %v1976 = vpop.f32.mrf.mxu0
    %v1977 = vadd.f32 %v1887, %v1976
    %v1978 = vand.u32 %v1485, 4294901760
    %1979 = vmatmul.f32.gmra.mxu0 %v1978
    %v1980 = vpop.f32.mrf.mxu0
    %v1981 = vadd.f32 %v1893, %v1980
    %v1982 = vand.u32 %v1488, 4294901760
    %1983 = vmatmul.f32.gmra.mxu0 %v1982
    %v1984 = vpop.f32.mrf.mxu0
    %v1985 = vadd.f32 %v1899, %v1984
    %v1986 = vand.u32 %v1491, 4294901760
    %1987 = vmatmul.f32.gmra.mxu0 %v1986
    %v1988 = vpop.f32.mrf.mxu0
    %v1989 = vadd.f32 %v1905, %v1988
    %v1990 = vand.u32 %v1494, 4294901760
    %1991 = vmatmul.f32.gmra.mxu0 %v1990
    %v1992 = vpop.f32.mrf.mxu0
    %v1993 = vadd.f32 %v1911, %v1992
    %1994 = vdwg.mxu0
    %1995 = vmatpush.msra.mxu0 0.0
    %1996 = vmatpush.msra.mxu0 0.0
    %1997 = vmatpush.msra.mxu0 0.0
    %1998 = vmatpush.msra.mxu0 0.0
    %1999 = vmatpush.msra.mxu0 0.0
    %2000 = vmatpush.msra.mxu0 0.0
    %2001 = vmatpush.msra.mxu0 0.0
    %2002 = vmatpush.msra.mxu0 0.0
    %2003 = vmatpush.msra.mxu0 0.0
    %2004 = vmatpush.msra.mxu0 0.0
    %2005 = vmatpush.msra.mxu0 0.0
    %2006 = vmatpush.msra.mxu0 0.0
    %2007 = vmatpush.msra.mxu0 0.0
    %v2008 = vand.u32 %v37, 4294901760
    %2009 = vmatpush.msra.mxu0 %v2008
    %v2010 = vand.u32 %v35, 4294901760
    %2011 = vmatpush.msra.mxu0 %v2010
    %v2012 = vand.u32 %v33, 4294901760
    %2013 = vmatpush.msra.mxu0 %v2012
    %v2014 = vand.u32 %v1455, 4294901760
    %2015 = vmatmul.f32.gmra.mxu0 %v2014
    %v2016 = vpop.f32.mrf.mxu0
    %v2017 = vadd.f32 %v1941, %v2016
    %v2018 = vand.u32 %v1458, 4294901760
    %2019 = vmatmul.f32.gmra.mxu0 %v2018
    %v2020 = vpop.f32.mrf.mxu0
    %v2021 = vadd.f32 %v1945, %v2020
    %v2022 = vand.u32 %v1461, 4294901760
    %2023 = vmatmul.f32.gmra.mxu0 %v2022
    %v2024 = vpop.f32.mrf.mxu0
    %v2025 = vadd.f32 %v1949, %v2024
    %v2026 = vand.u32 %v1464, 4294901760
    %2027 = vmatmul.f32.gmra.mxu0 %v2026
    %v2028 = vpop.f32.mrf.mxu0
    %v2029 = vadd.f32 %v1953, %v2028
    %v2030 = vand.u32 %v1467, 4294901760
    %2031 = vmatmul.f32.gmra.mxu0 %v2030
    %v2032 = vpop.f32.mrf.mxu0
    %v2033 = vadd.f32 %v1957, %v2032
    %v2034 = vand.u32 %v1470, 4294901760
    %2035 = vmatmul.f32.gmra.mxu0 %v2034
    %v2036 = vpop.f32.mrf.mxu0
    %v2037 = vadd.f32 %v1961, %v2036
    %v2038 = vand.u32 %v1473, 4294901760
    %2039 = vmatmul.f32.gmra.mxu0 %v2038
    %v2040 = vpop.f32.mrf.mxu0
    %v2041 = vadd.f32 %v1965, %v2040
    %v2042 = vand.u32 %v1476, 4294901760
    %2043 = vmatmul.f32.gmra.mxu0 %v2042
    %v2044 = vpop.f32.mrf.mxu0
    %v2045 = vadd.f32 %v1969, %v2044
    %v2046 = vand.u32 %v1479, 4294901760
    %2047 = vmatmul.f32.gmra.mxu0 %v2046
    %v2048 = vpop.f32.mrf.mxu0
    %v2049 = vadd.f32 %v1973, %v2048
    %v2050 = vand.u32 %v1482, 4294901760
    %2051 = vmatmul.f32.gmra.mxu0 %v2050
    %v2052 = vpop.f32.mrf.mxu0
    %v2053 = vadd.f32 %v1977, %v2052
    %v2054 = vand.u32 %v1485, 4294901760
    %2055 = vmatmul.f32.gmra.mxu0 %v2054
    %v2056 = vpop.f32.mrf.mxu0
    %v2057 = vadd.f32 %v1981, %v2056
    %v2058 = vand.u32 %v1488, 4294901760
    %2059 = vmatmul.f32.gmra.mxu0 %v2058
    %v2060 = vpop.f32.mrf.mxu0
    %v2061 = vadd.f32 %v1985, %v2060
    %v2062 = vand.u32 %v1491, 4294901760
    %2063 = vmatmul.f32.gmra.mxu0 %v2062
    %v2064 = vpop.f32.mrf.mxu0
    %v2065 = vadd.f32 %v1989, %v2064
    %v2066 = vand.u32 %v1494, 4294901760
    %2067 = vmatmul.f32.gmra.mxu0 %v2066
    %v2068 = vpop.f32.mrf.mxu0
    %v2069 = vadd.f32 %v1993, %v2068
    %2070 = vdwg.mxu0
    %2071 = vmatpush.msra.mxu0 0.0
    %2072 = vmatpush.msra.mxu0 0.0
    %2073 = vmatpush.msra.mxu0 0.0
    %2074 = vmatpush.msra.mxu0 0.0
    %2075 = vmatpush.msra.mxu0 0.0
    %2076 = vmatpush.msra.mxu0 0.0
    %2077 = vmatpush.msra.mxu0 0.0
    %2078 = vmatpush.msra.mxu0 0.0
    %2079 = vmatpush.msra.mxu0 0.0
    %2080 = vmatpush.msra.mxu0 0.0
    %2081 = vmatpush.msra.mxu0 0.0
    %2082 = vmatpush.msra.mxu0 0.0
    %2083 = vmatpush.msra.mxu0 0.0
    %v2084 = vand.u32 %v38, 4294901760
    %2085 = vmatpush.msra.mxu0 %v2084
    %v2086 = vand.u32 %v36, 4294901760
    %2087 = vmatpush.msra.mxu0 %v2086
    %v2088 = vand.u32 %v34, 4294901760
    %2089 = vmatpush.msra.mxu0 %v2088
    %v2090 = vand.u32 %v1455, 4294901760
    %v2091 = vsub.f32 %v1455, %v2090
    %v2092 = vand.u32 %v2091, 4294901760
    %v2093 = vsub.f32 %v2091, %v2092
    %v2094 = vand.u32 %v2093, 4294901760
    %2095 = vmatmul.f32.gmra.mxu0 %v2094
    %v2096 = vpop.f32.mrf.mxu0
    %v2097 = vadd.f32 0.0, %v2096
    %v2098 = vand.u32 %v1458, 4294901760
    %v2099 = vsub.f32 %v1458, %v2098
    %v2100 = vand.u32 %v2099, 4294901760
    %v2101 = vsub.f32 %v2099, %v2100
    %v2102 = vand.u32 %v2101, 4294901760
    %2103 = vmatmul.f32.gmra.mxu0 %v2102
    %v2104 = vpop.f32.mrf.mxu0
    %v2105 = vadd.f32 0.0, %v2104
    %v2106 = vand.u32 %v1461, 4294901760
    %v2107 = vsub.f32 %v1461, %v2106
    %v2108 = vand.u32 %v2107, 4294901760
    %v2109 = vsub.f32 %v2107, %v2108
    %v2110 = vand.u32 %v2109, 4294901760
    %2111 = vmatmul.f32.gmra.mxu0 %v2110
    %v2112 = vpop.f32.mrf.mxu0
    %v2113 = vadd.f32 0.0, %v2112
    %v2114 = vand.u32 %v1464, 4294901760
    %v2115 = vsub.f32 %v1464, %v2114
    %v2116 = vand.u32 %v2115, 4294901760
    %v2117 = vsub.f32 %v2115, %v2116
    %v2118 = vand.u32 %v2117, 4294901760
    %2119 = vmatmul.f32.gmra.mxu0 %v2118
    %v2120 = vpop.f32.mrf.mxu0
    %v2121 = vadd.f32 0.0, %v2120
    %v2122 = vand.u32 %v1467, 4294901760
    %v2123 = vsub.f32 %v1467, %v2122
    %v2124 = vand.u32 %v2123, 4294901760
    %v2125 = vsub.f32 %v2123, %v2124
    %v2126 = vand.u32 %v2125, 4294901760
    %2127 = vmatmul.f32.gmra.mxu0 %v2126
    %v2128 = vpop.f32.mrf.mxu0
    %v2129 = vadd.f32 0.0, %v2128
    %v2130 = vand.u32 %v1470, 4294901760
    %v2131 = vsub.f32 %v1470, %v2130
    %v2132 = vand.u32 %v2131, 4294901760
    %v2133 = vsub.f32 %v2131, %v2132
    %v2134 = vand.u32 %v2133, 4294901760
    %2135 = vmatmul.f32.gmra.mxu0 %v2134
    %v2136 = vpop.f32.mrf.mxu0
    %v2137 = vadd.f32 0.0, %v2136
    %v2138 = vand.u32 %v1473, 4294901760
    %v2139 = vsub.f32 %v1473, %v2138
    %v2140 = vand.u32 %v2139, 4294901760
    %v2141 = vsub.f32 %v2139, %v2140
    %v2142 = vand.u32 %v2141, 4294901760
    %2143 = vmatmul.f32.gmra.mxu0 %v2142
    %v2144 = vpop.f32.mrf.mxu0
    %v2145 = vadd.f32 0.0, %v2144
    %v2146 = vand.u32 %v1476, 4294901760
    %v2147 = vsub.f32 %v1476, %v2146
    %v2148 = vand.u32 %v2147, 4294901760
    %v2149 = vsub.f32 %v2147, %v2148
    %v2150 = vand.u32 %v2149, 4294901760
    %2151 = vmatmul.f32.gmra.mxu0 %v2150
    %v2152 = vpop.f32.mrf.mxu0
    %v2153 = vadd.f32 0.0, %v2152
    %v2154 = vand.u32 %v1479, 4294901760
    %v2155 = vsub.f32 %v1479, %v2154
    %v2156 = vand.u32 %v2155, 4294901760
    %v2157 = vsub.f32 %v2155, %v2156
    %v2158 = vand.u32 %v2157, 4294901760
    %2159 = vmatmul.f32.gmra.mxu0 %v2158
    %v2160 = vpop.f32.mrf.mxu0
    %v2161 = vadd.f32 0.0, %v2160
    %v2162 = vand.u32 %v1482, 4294901760
    %v2163 = vsub.f32 %v1482, %v2162
    %v2164 = vand.u32 %v2163, 4294901760
    %v2165 = vsub.f32 %v2163, %v2164
    %v2166 = vand.u32 %v2165, 4294901760
    %2167 = vmatmul.f32.gmra.mxu0 %v2166
    %v2168 = vpop.f32.mrf.mxu0
    %v2169 = vadd.f32 0.0, %v2168
    %v2170 = vand.u32 %v1485, 4294901760
    %v2171 = vsub.f32 %v1485, %v2170
    %v2172 = vand.u32 %v2171, 4294901760
    %v2173 = vsub.f32 %v2171, %v2172
    %v2174 = vand.u32 %v2173, 4294901760
    %2175 = vmatmul.f32.gmra.mxu0 %v2174
    %v2176 = vpop.f32.mrf.mxu0
    %v2177 = vadd.f32 0.0, %v2176
    %v2178 = vand.u32 %v1488, 4294901760
    %v2179 = vsub.f32 %v1488, %v2178
    %v2180 = vand.u32 %v2179, 4294901760
    %v2181 = vsub.f32 %v2179, %v2180
    %v2182 = vand.u32 %v2181, 4294901760
    %2183 = vmatmul.f32.gmra.mxu0 %v2182
    %v2184 = vpop.f32.mrf.mxu0
    %v2185 = vadd.f32 0.0, %v2184
    %v2186 = vand.u32 %v1491, 4294901760
    %v2187 = vsub.f32 %v1491, %v2186
    %v2188 = vand.u32 %v2187, 4294901760
    %v2189 = vsub.f32 %v2187, %v2188
    %v2190 = vand.u32 %v2189, 4294901760
    %2191 = vmatmul.f32.gmra.mxu0 %v2190
    %v2192 = vpop.f32.mrf.mxu0
    %v2193 = vadd.f32 0.0, %v2192
    %v2194 = vand.u32 %v1494, 4294901760
    %v2195 = vsub.f32 %v1494, %v2194
    %v2196 = vand.u32 %v2195, 4294901760
    %v2197 = vsub.f32 %v2195, %v2196
    %v2198 = vand.u32 %v2197, 4294901760
    %2199 = vmatmul.f32.gmra.mxu0 %v2198
    %v2200 = vpop.f32.mrf.mxu0
    %v2201 = vadd.f32 0.0, %v2200
    %2202 = vdwg.mxu0
    %2203 = vmatpush.msra.mxu0 0.0
    %2204 = vmatpush.msra.mxu0 0.0
    %2205 = vmatpush.msra.mxu0 0.0
    %2206 = vmatpush.msra.mxu0 0.0
    %2207 = vmatpush.msra.mxu0 0.0
    %2208 = vmatpush.msra.mxu0 0.0
    %2209 = vmatpush.msra.mxu0 0.0
    %2210 = vmatpush.msra.mxu0 0.0
    %2211 = vmatpush.msra.mxu0 0.0
    %2212 = vmatpush.msra.mxu0 0.0
    %2213 = vmatpush.msra.mxu0 0.0
    %2214 = vmatpush.msra.mxu0 0.0
    %2215 = vmatpush.msra.mxu0 0.0
    %v2216 = vand.u32 %v38, 4294901760
    %v2217 = vsub.f32 %v38, %v2216
    %v2218 = vand.u32 %v2217, 4294901760
    %v2219 = vsub.f32 %v2217, %v2218
    %v2220 = vand.u32 %v2219, 4294901760
    %2221 = vmatpush.msra.mxu0 %v2220
    %v2222 = vand.u32 %v36, 4294901760
    %v2223 = vsub.f32 %v36, %v2222
    %v2224 = vand.u32 %v2223, 4294901760
    %v2225 = vsub.f32 %v2223, %v2224
    %v2226 = vand.u32 %v2225, 4294901760
    %2227 = vmatpush.msra.mxu0 %v2226
    %v2228 = vand.u32 %v34, 4294901760
    %v2229 = vsub.f32 %v34, %v2228
    %v2230 = vand.u32 %v2229, 4294901760
    %v2231 = vsub.f32 %v2229, %v2230
    %v2232 = vand.u32 %v2231, 4294901760
    %2233 = vmatpush.msra.mxu0 %v2232
    %v2234 = vand.u32 %v1455, 4294901760
    %2235 = vmatmul.f32.gmra.mxu0 %v2234
    %v2236 = vpop.f32.mrf.mxu0
    %v2237 = vadd.f32 %v2097, %v2236
    %v2238 = vand.u32 %v1458, 4294901760
    %2239 = vmatmul.f32.gmra.mxu0 %v2238
    %v2240 = vpop.f32.mrf.mxu0
    %v2241 = vadd.f32 %v2105, %v2240
    %v2242 = vand.u32 %v1461, 4294901760
    %2243 = vmatmul.f32.gmra.mxu0 %v2242
    %v2244 = vpop.f32.mrf.mxu0
    %v2245 = vadd.f32 %v2113, %v2244
    %v2246 = vand.u32 %v1464, 4294901760
    %2247 = vmatmul.f32.gmra.mxu0 %v2246
    %v2248 = vpop.f32.mrf.mxu0
    %v2249 = vadd.f32 %v2121, %v2248
    %v2250 = vand.u32 %v1467, 4294901760
    %2251 = vmatmul.f32.gmra.mxu0 %v2250
    %v2252 = vpop.f32.mrf.mxu0
    %v2253 = vadd.f32 %v2129, %v2252
    %v2254 = vand.u32 %v1470, 4294901760
    %2255 = vmatmul.f32.gmra.mxu0 %v2254
    %v2256 = vpop.f32.mrf.mxu0
    %v2257 = vadd.f32 %v2137, %v2256
    %v2258 = vand.u32 %v1473, 4294901760
    %2259 = vmatmul.f32.gmra.mxu0 %v2258
    %v2260 = vpop.f32.mrf.mxu0
    %v2261 = vadd.f32 %v2145, %v2260
    %v2262 = vand.u32 %v1476, 4294901760
    %2263 = vmatmul.f32.gmra.mxu0 %v2262
    %v2264 = vpop.f32.mrf.mxu0
    %v2265 = vadd.f32 %v2153, %v2264
    %v2266 = vand.u32 %v1479, 4294901760
    %2267 = vmatmul.f32.gmra.mxu0 %v2266
    %v2268 = vpop.f32.mrf.mxu0
    %v2269 = vadd.f32 %v2161, %v2268
    %v2270 = vand.u32 %v1482, 4294901760
    %2271 = vmatmul.f32.gmra.mxu0 %v2270
    %v2272 = vpop.f32.mrf.mxu0
    %v2273 = vadd.f32 %v2169, %v2272
    %v2274 = vand.u32 %v1485, 4294901760
    %2275 = vmatmul.f32.gmra.mxu0 %v2274
    %v2276 = vpop.f32.mrf.mxu0
    %v2277 = vadd.f32 %v2177, %v2276
    %v2278 = vand.u32 %v1488, 4294901760
    %2279 = vmatmul.f32.gmra.mxu0 %v2278
    %v2280 = vpop.f32.mrf.mxu0
    %v2281 = vadd.f32 %v2185, %v2280
    %v2282 = vand.u32 %v1491, 4294901760
    %2283 = vmatmul.f32.gmra.mxu0 %v2282
    %v2284 = vpop.f32.mrf.mxu0
    %v2285 = vadd.f32 %v2193, %v2284
    %v2286 = vand.u32 %v1494, 4294901760
    %2287 = vmatmul.f32.gmra.mxu0 %v2286
    %v2288 = vpop.f32.mrf.mxu0
    %v2289 = vadd.f32 %v2201, %v2288
    %2290 = vdwg.mxu0
    %2291 = vmatpush.msra.mxu0 0.0
    %2292 = vmatpush.msra.mxu0 0.0
    %2293 = vmatpush.msra.mxu0 0.0
    %2294 = vmatpush.msra.mxu0 0.0
    %2295 = vmatpush.msra.mxu0 0.0
    %2296 = vmatpush.msra.mxu0 0.0
    %2297 = vmatpush.msra.mxu0 0.0
    %2298 = vmatpush.msra.mxu0 0.0
    %2299 = vmatpush.msra.mxu0 0.0
    %2300 = vmatpush.msra.mxu0 0.0
    %2301 = vmatpush.msra.mxu0 0.0
    %2302 = vmatpush.msra.mxu0 0.0
    %2303 = vmatpush.msra.mxu0 0.0
    %v2304 = vand.u32 %v38, 4294901760
    %v2305 = vsub.f32 %v38, %v2304
    %2306 = vmatpush.msra.mxu0 %v2305
    %v2307 = vand.u32 %v36, 4294901760
    %v2308 = vsub.f32 %v36, %v2307
    %2309 = vmatpush.msra.mxu0 %v2308
    %v2310 = vand.u32 %v34, 4294901760
    %v2311 = vsub.f32 %v34, %v2310
    %2312 = vmatpush.msra.mxu0 %v2311
    %v2313 = vand.u32 %v1455, 4294901760
    %v2314 = vsub.f32 %v1455, %v2313
    %2315 = vmatmul.f32.gmra.mxu0 %v2314
    %v2316 = vpop.f32.mrf.mxu0
    %v2317 = vadd.f32 %v2237, %v2316
    %v2318 = vand.u32 %v1458, 4294901760
    %v2319 = vsub.f32 %v1458, %v2318
    %2320 = vmatmul.f32.gmra.mxu0 %v2319
    %v2321 = vpop.f32.mrf.mxu0
    %v2322 = vadd.f32 %v2241, %v2321
    %v2323 = vand.u32 %v1461, 4294901760
    %v2324 = vsub.f32 %v1461, %v2323
    %2325 = vmatmul.f32.gmra.mxu0 %v2324
    %v2326 = vpop.f32.mrf.mxu0
    %v2327 = vadd.f32 %v2245, %v2326
    %v2328 = vand.u32 %v1464, 4294901760
    %v2329 = vsub.f32 %v1464, %v2328
    %2330 = vmatmul.f32.gmra.mxu0 %v2329
    %v2331 = vpop.f32.mrf.mxu0
    %v2332 = vadd.f32 %v2249, %v2331
    %v2333 = vand.u32 %v1467, 4294901760
    %v2334 = vsub.f32 %v1467, %v2333
    %2335 = vmatmul.f32.gmra.mxu0 %v2334
    %v2336 = vpop.f32.mrf.mxu0
    %v2337 = vadd.f32 %v2253, %v2336
    %v2338 = vand.u32 %v1470, 4294901760
    %v2339 = vsub.f32 %v1470, %v2338
    %2340 = vmatmul.f32.gmra.mxu0 %v2339
    %v2341 = vpop.f32.mrf.mxu0
    %v2342 = vadd.f32 %v2257, %v2341
    %v2343 = vand.u32 %v1473, 4294901760
    %v2344 = vsub.f32 %v1473, %v2343
    %2345 = vmatmul.f32.gmra.mxu0 %v2344
    %v2346 = vpop.f32.mrf.mxu0
    %v2347 = vadd.f32 %v2261, %v2346
    %v2348 = vand.u32 %v1476, 4294901760
    %v2349 = vsub.f32 %v1476, %v2348
    %2350 = vmatmul.f32.gmra.mxu0 %v2349
    %v2351 = vpop.f32.mrf.mxu0
    %v2352 = vadd.f32 %v2265, %v2351
    %v2353 = vand.u32 %v1479, 4294901760
    %v2354 = vsub.f32 %v1479, %v2353
    %2355 = vmatmul.f32.gmra.mxu0 %v2354
    %v2356 = vpop.f32.mrf.mxu0
    %v2357 = vadd.f32 %v2269, %v2356
    %v2358 = vand.u32 %v1482, 4294901760
    %v2359 = vsub.f32 %v1482, %v2358
    %2360 = vmatmul.f32.gmra.mxu0 %v2359
    %v2361 = vpop.f32.mrf.mxu0
    %v2362 = vadd.f32 %v2273, %v2361
    %v2363 = vand.u32 %v1485, 4294901760
    %v2364 = vsub.f32 %v1485, %v2363
    %2365 = vmatmul.f32.gmra.mxu0 %v2364
    %v2366 = vpop.f32.mrf.mxu0
    %v2367 = vadd.f32 %v2277, %v2366
    %v2368 = vand.u32 %v1488, 4294901760
    %v2369 = vsub.f32 %v1488, %v2368
    %2370 = vmatmul.f32.gmra.mxu0 %v2369
    %v2371 = vpop.f32.mrf.mxu0
    %v2372 = vadd.f32 %v2281, %v2371
    %v2373 = vand.u32 %v1491, 4294901760
    %v2374 = vsub.f32 %v1491, %v2373
    %2375 = vmatmul.f32.gmra.mxu0 %v2374
    %v2376 = vpop.f32.mrf.mxu0
    %v2377 = vadd.f32 %v2285, %v2376
    %v2378 = vand.u32 %v1494, 4294901760
    %v2379 = vsub.f32 %v1494, %v2378
    %2380 = vmatmul.f32.gmra.mxu0 %v2379
    %v2381 = vpop.f32.mrf.mxu0
    %v2382 = vadd.f32 %v2289, %v2381
    %2383 = vdwg.mxu0
    %2384 = vmatpush.msra.mxu0 0.0
    %2385 = vmatpush.msra.mxu0 0.0
    %2386 = vmatpush.msra.mxu0 0.0
    %2387 = vmatpush.msra.mxu0 0.0
    %2388 = vmatpush.msra.mxu0 0.0
    %2389 = vmatpush.msra.mxu0 0.0
    %2390 = vmatpush.msra.mxu0 0.0
    %2391 = vmatpush.msra.mxu0 0.0
    %2392 = vmatpush.msra.mxu0 0.0
    %2393 = vmatpush.msra.mxu0 0.0
    %2394 = vmatpush.msra.mxu0 0.0
    %2395 = vmatpush.msra.mxu0 0.0
    %2396 = vmatpush.msra.mxu0 0.0
    %v2397 = vand.u32 %v38, 4294901760
    %2398 = vmatpush.msra.mxu0 %v2397
    %v2399 = vand.u32 %v36, 4294901760
    %2400 = vmatpush.msra.mxu0 %v2399
    %v2401 = vand.u32 %v34, 4294901760
    %2402 = vmatpush.msra.mxu0 %v2401
    %v2403 = vand.u32 %v1455, 4294901760
    %v2404 = vsub.f32 %v1455, %v2403
    %v2405 = vand.u32 %v2404, 4294901760
    %2406 = vmatmul.f32.gmra.mxu0 %v2405
    %v2407 = vpop.f32.mrf.mxu0
    %v2408 = vadd.f32 %v2317, %v2407
    %v2409 = vand.u32 %v1458, 4294901760
    %v2410 = vsub.f32 %v1458, %v2409
    %v2411 = vand.u32 %v2410, 4294901760
    %2412 = vmatmul.f32.gmra.mxu0 %v2411
    %v2413 = vpop.f32.mrf.mxu0
    %v2414 = vadd.f32 %v2322, %v2413
    %v2415 = vand.u32 %v1461, 4294901760
    %v2416 = vsub.f32 %v1461, %v2415
    %v2417 = vand.u32 %v2416, 4294901760
    %2418 = vmatmul.f32.gmra.mxu0 %v2417
    %v2419 = vpop.f32.mrf.mxu0
    %v2420 = vadd.f32 %v2327, %v2419
    %v2421 = vand.u32 %v1464, 4294901760
    %v2422 = vsub.f32 %v1464, %v2421
    %v2423 = vand.u32 %v2422, 4294901760
    %2424 = vmatmul.f32.gmra.mxu0 %v2423
    %v2425 = vpop.f32.mrf.mxu0
    %v2426 = vadd.f32 %v2332, %v2425
    %v2427 = vand.u32 %v1467, 4294901760
    %v2428 = vsub.f32 %v1467, %v2427
    %v2429 = vand.u32 %v2428, 4294901760
    %2430 = vmatmul.f32.gmra.mxu0 %v2429
    %v2431 = vpop.f32.mrf.mxu0
    %v2432 = vadd.f32 %v2337, %v2431
    %v2433 = vand.u32 %v1470, 4294901760
    %v2434 = vsub.f32 %v1470, %v2433
    %v2435 = vand.u32 %v2434, 4294901760
    %2436 = vmatmul.f32.gmra.mxu0 %v2435
    %v2437 = vpop.f32.mrf.mxu0
    %v2438 = vadd.f32 %v2342, %v2437
    %v2439 = vand.u32 %v1473, 4294901760
    %v2440 = vsub.f32 %v1473, %v2439
    %v2441 = vand.u32 %v2440, 4294901760
    %2442 = vmatmul.f32.gmra.mxu0 %v2441
    %v2443 = vpop.f32.mrf.mxu0
    %v2444 = vadd.f32 %v2347, %v2443
    %v2445 = vand.u32 %v1476, 4294901760
    %v2446 = vsub.f32 %v1476, %v2445
    %v2447 = vand.u32 %v2446, 4294901760
    %2448 = vmatmul.f32.gmra.mxu0 %v2447
    %v2449 = vpop.f32.mrf.mxu0
    %v2450 = vadd.f32 %v2352, %v2449
    %v2451 = vand.u32 %v1479, 4294901760
    %v2452 = vsub.f32 %v1479, %v2451
    %v2453 = vand.u32 %v2452, 4294901760
    %2454 = vmatmul.f32.gmra.mxu0 %v2453
    %v2455 = vpop.f32.mrf.mxu0
    %v2456 = vadd.f32 %v2357, %v2455
    %v2457 = vand.u32 %v1482, 4294901760
    %v2458 = vsub.f32 %v1482, %v2457
    %v2459 = vand.u32 %v2458, 4294901760
    %2460 = vmatmul.f32.gmra.mxu0 %v2459
    %v2461 = vpop.f32.mrf.mxu0
    %v2462 = vadd.f32 %v2362, %v2461
    %v2463 = vand.u32 %v1485, 4294901760
    %v2464 = vsub.f32 %v1485, %v2463
    %v2465 = vand.u32 %v2464, 4294901760
    %2466 = vmatmul.f32.gmra.mxu0 %v2465
    %v2467 = vpop.f32.mrf.mxu0
    %v2468 = vadd.f32 %v2367, %v2467
    %v2469 = vand.u32 %v1488, 4294901760
    %v2470 = vsub.f32 %v1488, %v2469
    %v2471 = vand.u32 %v2470, 4294901760
    %2472 = vmatmul.f32.gmra.mxu0 %v2471
    %v2473 = vpop.f32.mrf.mxu0
    %v2474 = vadd.f32 %v2372, %v2473
    %v2475 = vand.u32 %v1491, 4294901760
    %v2476 = vsub.f32 %v1491, %v2475
    %v2477 = vand.u32 %v2476, 4294901760
    %2478 = vmatmul.f32.gmra.mxu0 %v2477
    %v2479 = vpop.f32.mrf.mxu0
    %v2480 = vadd.f32 %v2377, %v2479
    %v2481 = vand.u32 %v1494, 4294901760
    %v2482 = vsub.f32 %v1494, %v2481
    %v2483 = vand.u32 %v2482, 4294901760
    %2484 = vmatmul.f32.gmra.mxu0 %v2483
    %v2485 = vpop.f32.mrf.mxu0
    %v2486 = vadd.f32 %v2382, %v2485
    %2487 = vdwg.mxu0
    %2488 = vmatpush.msra.mxu0 0.0
    %2489 = vmatpush.msra.mxu0 0.0
    %2490 = vmatpush.msra.mxu0 0.0
    %2491 = vmatpush.msra.mxu0 0.0
    %2492 = vmatpush.msra.mxu0 0.0
    %2493 = vmatpush.msra.mxu0 0.0
    %2494 = vmatpush.msra.mxu0 0.0
    %2495 = vmatpush.msra.mxu0 0.0
    %2496 = vmatpush.msra.mxu0 0.0
    %2497 = vmatpush.msra.mxu0 0.0
    %2498 = vmatpush.msra.mxu0 0.0
    %2499 = vmatpush.msra.mxu0 0.0
    %2500 = vmatpush.msra.mxu0 0.0
    %v2501 = vand.u32 %v38, 4294901760
    %v2502 = vsub.f32 %v38, %v2501
    %v2503 = vand.u32 %v2502, 4294901760
    %2504 = vmatpush.msra.mxu0 %v2503
    %v2505 = vand.u32 %v36, 4294901760
    %v2506 = vsub.f32 %v36, %v2505
    %v2507 = vand.u32 %v2506, 4294901760
    %2508 = vmatpush.msra.mxu0 %v2507
    %v2509 = vand.u32 %v34, 4294901760
    %v2510 = vsub.f32 %v34, %v2509
    %v2511 = vand.u32 %v2510, 4294901760
    %2512 = vmatpush.msra.mxu0 %v2511
    %v2513 = vand.u32 %v1455, 4294901760
    %2514 = vmatmul.f32.gmra.mxu0 %v2513
    %v2515 = vpop.f32.mrf.mxu0
    %v2516 = vadd.f32 %v2408, %v2515
    %v2517 = vand.u32 %v1458, 4294901760
    %2518 = vmatmul.f32.gmra.mxu0 %v2517
    %v2519 = vpop.f32.mrf.mxu0
    %v2520 = vadd.f32 %v2414, %v2519
    %v2521 = vand.u32 %v1461, 4294901760
    %2522 = vmatmul.f32.gmra.mxu0 %v2521
    %v2523 = vpop.f32.mrf.mxu0
    %v2524 = vadd.f32 %v2420, %v2523
    %v2525 = vand.u32 %v1464, 4294901760
    %2526 = vmatmul.f32.gmra.mxu0 %v2525
    %v2527 = vpop.f32.mrf.mxu0
    %v2528 = vadd.f32 %v2426, %v2527
    %v2529 = vand.u32 %v1467, 4294901760
    %2530 = vmatmul.f32.gmra.mxu0 %v2529
    %v2531 = vpop.f32.mrf.mxu0
    %v2532 = vadd.f32 %v2432, %v2531
    %v2533 = vand.u32 %v1470, 4294901760
    %2534 = vmatmul.f32.gmra.mxu0 %v2533
    %v2535 = vpop.f32.mrf.mxu0
    %v2536 = vadd.f32 %v2438, %v2535
    %v2537 = vand.u32 %v1473, 4294901760
    %2538 = vmatmul.f32.gmra.mxu0 %v2537
    %v2539 = vpop.f32.mrf.mxu0
    %v2540 = vadd.f32 %v2444, %v2539
    %v2541 = vand.u32 %v1476, 4294901760
    %2542 = vmatmul.f32.gmra.mxu0 %v2541
    %v2543 = vpop.f32.mrf.mxu0
    %v2544 = vadd.f32 %v2450, %v2543
    %v2545 = vand.u32 %v1479, 4294901760
    %2546 = vmatmul.f32.gmra.mxu0 %v2545
    %v2547 = vpop.f32.mrf.mxu0
    %v2548 = vadd.f32 %v2456, %v2547
    %v2549 = vand.u32 %v1482, 4294901760
    %2550 = vmatmul.f32.gmra.mxu0 %v2549
    %v2551 = vpop.f32.mrf.mxu0
    %v2552 = vadd.f32 %v2462, %v2551
    %v2553 = vand.u32 %v1485, 4294901760
    %2554 = vmatmul.f32.gmra.mxu0 %v2553
    %v2555 = vpop.f32.mrf.mxu0
    %v2556 = vadd.f32 %v2468, %v2555
    %v2557 = vand.u32 %v1488, 4294901760
    %2558 = vmatmul.f32.gmra.mxu0 %v2557
    %v2559 = vpop.f32.mrf.mxu0
    %v2560 = vadd.f32 %v2474, %v2559
    %v2561 = vand.u32 %v1491, 4294901760
    %2562 = vmatmul.f32.gmra.mxu0 %v2561
    %v2563 = vpop.f32.mrf.mxu0
    %v2564 = vadd.f32 %v2480, %v2563
    %v2565 = vand.u32 %v1494, 4294901760
    %2566 = vmatmul.f32.gmra.mxu0 %v2565
    %v2567 = vpop.f32.mrf.mxu0
    %v2568 = vadd.f32 %v2486, %v2567
    %2569 = vdwg.mxu0
    %2570 = vmatpush.msra.mxu0 0.0
    %2571 = vmatpush.msra.mxu0 0.0
    %2572 = vmatpush.msra.mxu0 0.0
    %2573 = vmatpush.msra.mxu0 0.0
    %2574 = vmatpush.msra.mxu0 0.0
    %2575 = vmatpush.msra.mxu0 0.0
    %2576 = vmatpush.msra.mxu0 0.0
    %2577 = vmatpush.msra.mxu0 0.0
    %2578 = vmatpush.msra.mxu0 0.0
    %2579 = vmatpush.msra.mxu0 0.0
    %2580 = vmatpush.msra.mxu0 0.0
    %2581 = vmatpush.msra.mxu0 0.0
    %2582 = vmatpush.msra.mxu0 0.0
    %v2583 = vand.u32 %v38, 4294901760
    %2584 = vmatpush.msra.mxu0 %v2583
    %v2585 = vand.u32 %v36, 4294901760
    %2586 = vmatpush.msra.mxu0 %v2585
    %v2587 = vand.u32 %v34, 4294901760
    %2588 = vmatpush.msra.mxu0 %v2587
    %v2589 = vand.u32 %v1455, 4294901760
    %2590 = vmatmul.f32.gmra.mxu0 %v2589
    %v2591 = vpop.f32.mrf.mxu0
    %v2592 = vadd.f32 %v2516, %v2591
    %v2593 = vand.u32 %v1458, 4294901760
    %2594 = vmatmul.f32.gmra.mxu0 %v2593
    %v2595 = vpop.f32.mrf.mxu0
    %v2596 = vadd.f32 %v2520, %v2595
    %v2597 = vand.u32 %v1461, 4294901760
    %2598 = vmatmul.f32.gmra.mxu0 %v2597
    %v2599 = vpop.f32.mrf.mxu0
    %v2600 = vadd.f32 %v2524, %v2599
    %v2601 = vand.u32 %v1464, 4294901760
    %2602 = vmatmul.f32.gmra.mxu0 %v2601
    %v2603 = vpop.f32.mrf.mxu0
    %v2604 = vadd.f32 %v2528, %v2603
    %v2605 = vand.u32 %v1467, 4294901760
    %2606 = vmatmul.f32.gmra.mxu0 %v2605
    %v2607 = vpop.f32.mrf.mxu0
    %v2608 = vadd.f32 %v2532, %v2607
    %v2609 = vand.u32 %v1470, 4294901760
    %2610 = vmatmul.f32.gmra.mxu0 %v2609
    %v2611 = vpop.f32.mrf.mxu0
    %v2612 = vadd.f32 %v2536, %v2611
    %v2613 = vand.u32 %v1473, 4294901760
    %2614 = vmatmul.f32.gmra.mxu0 %v2613
    %v2615 = vpop.f32.mrf.mxu0
    %v2616 = vadd.f32 %v2540, %v2615
    %v2617 = vand.u32 %v1476, 4294901760
    %2618 = vmatmul.f32.gmra.mxu0 %v2617
    %v2619 = vpop.f32.mrf.mxu0
    %v2620 = vadd.f32 %v2544, %v2619
    %v2621 = vand.u32 %v1479, 4294901760
    %2622 = vmatmul.f32.gmra.mxu0 %v2621
    %v2623 = vpop.f32.mrf.mxu0
    %v2624 = vadd.f32 %v2548, %v2623
    %v2625 = vand.u32 %v1482, 4294901760
    %2626 = vmatmul.f32.gmra.mxu0 %v2625
    %v2627 = vpop.f32.mrf.mxu0
    %v2628 = vadd.f32 %v2552, %v2627
    %v2629 = vand.u32 %v1485, 4294901760
    %2630 = vmatmul.f32.gmra.mxu0 %v2629
    %v2631 = vpop.f32.mrf.mxu0
    %v2632 = vadd.f32 %v2556, %v2631
    %v2633 = vand.u32 %v1488, 4294901760
    %2634 = vmatmul.f32.gmra.mxu0 %v2633
    %v2635 = vpop.f32.mrf.mxu0
    %v2636 = vadd.f32 %v2560, %v2635
    %v2637 = vand.u32 %v1491, 4294901760
    %2638 = vmatmul.f32.gmra.mxu0 %v2637
    %v2639 = vpop.f32.mrf.mxu0
    %v2640 = vadd.f32 %v2564, %v2639
    %v2641 = vand.u32 %v1494, 4294901760
    %2642 = vmatmul.f32.gmra.mxu0 %v2641
    %v2643 = vpop.f32.mrf.mxu0
    %v2644 = vadd.f32 %v2568, %v2643
    %2645 = vdwg.mxu0
    %v2646 = vadd.f32 %v2017, %v2021
    %v2647 = vadd.f32 %v2646, %v2025
    %v2648 = vadd.f32 %v2647, %v2029
    %v2649 = vadd.f32 %v2648, %v2033
    %v2650 = vadd.f32 %v2649, %v2037
    %v2651 = vadd.f32 %v2650, %v2041
    %v2652 = vadd.f32 %v2651, %v2045
    %v2653 = vadd.f32 %v2652, %v2049
    %v2654 = vadd.f32 %v2653, %v2053
    %v2655 = vadd.f32 %v2654, %v2057
    %v2656 = vadd.f32 %v2655, %v2061
    %v2657 = vadd.f32 %v2656, %v2065
    %v2658 = vsel %vm1258, %v2069, 0.0
    %v2659 = vadd.f32 %v2657, %v2658
    %v2660 = vrot.slane %v2659, 4
    %v2661 = vadd.f32 %v2659, %v2660
    %v2662 = vrot.slane %v2661, 2
    %v2663 = vadd.f32 %v2661, %v2662
    %v2664 = vrot.slane %v2663, 1
    %v2665 = vadd.f32 %v2663, %v2664
    %v2666 = vadd.f32 %v2592, %v2596
    %v2667 = vadd.f32 %v2666, %v2600
    %v2668 = vadd.f32 %v2667, %v2604
    %v2669 = vadd.f32 %v2668, %v2608
    %v2670 = vadd.f32 %v2669, %v2612
    %v2671 = vadd.f32 %v2670, %v2616
    %v2672 = vadd.f32 %v2671, %v2620
    %v2673 = vadd.f32 %v2672, %v2624
    %v2674 = vadd.f32 %v2673, %v2628
    %v2675 = vadd.f32 %v2674, %v2632
    %v2676 = vadd.f32 %v2675, %v2636
    %v2677 = vadd.f32 %v2676, %v2640
    %v2678 = vsel %vm1258, %v2644, 0.0
    %v2679 = vadd.f32 %v2677, %v2678
    %v2680 = vrot.slane %v2679, 4
    %v2681 = vadd.f32 %v2679, %v2680
    %v2682 = vrot.slane %v2681, 2
    %v2683 = vadd.f32 %v2681, %v2682
    %v2684 = vrot.slane %v2683, 1
    %v2685 = vadd.f32 %v2683, %v2684
    %v2686 = vadd.f32 %v1287, %v2665
    %v2687 = vadd.f32 %v1288, %v2685
    %v2688 = vmul.f32 %v2017, %v2017
    %v2689 = vmul.f32 %v2592, %v2592
    %v2690 = vmul.f32 %v2021, %v2021
    %v2691 = vmul.f32 %v2596, %v2596
    %v2692 = vmul.f32 %v2025, %v2025
    %v2693 = vmul.f32 %v2600, %v2600
    %v2694 = vmul.f32 %v2029, %v2029
    %v2695 = vmul.f32 %v2604, %v2604
    %v2696 = vmul.f32 %v2033, %v2033
    %v2697 = vmul.f32 %v2608, %v2608
    %v2698 = vmul.f32 %v2037, %v2037
    %v2699 = vmul.f32 %v2612, %v2612
    %v2700 = vmul.f32 %v2041, %v2041
    %v2701 = vmul.f32 %v2616, %v2616
    %v2702 = vmul.f32 %v2045, %v2045
    %v2703 = vmul.f32 %v2620, %v2620
    %v2704 = vmul.f32 %v2049, %v2049
    %v2705 = vmul.f32 %v2624, %v2624
    %v2706 = vmul.f32 %v2053, %v2053
    %v2707 = vmul.f32 %v2628, %v2628
    %v2708 = vmul.f32 %v2057, %v2057
    %v2709 = vmul.f32 %v2632, %v2632
    %v2710 = vmul.f32 %v2061, %v2061
    %v2711 = vmul.f32 %v2636, %v2636
    %v2712 = vmul.f32 %v2065, %v2065
    %v2713 = vmul.f32 %v2640, %v2640
    %v2714 = vmul.f32 %v2069, %v2069
    %v2715 = vmul.f32 %v2644, %v2644
    %v2716 = vadd.f32 %v2688, %v2690
    %v2717 = vadd.f32 %v2716, %v2692
    %v2718 = vadd.f32 %v2717, %v2694
    %v2719 = vadd.f32 %v2718, %v2696
    %v2720 = vadd.f32 %v2719, %v2698
    %v2721 = vadd.f32 %v2720, %v2700
    %v2722 = vadd.f32 %v2721, %v2702
    %v2723 = vadd.f32 %v2722, %v2704
    %v2724 = vadd.f32 %v2723, %v2706
    %v2725 = vadd.f32 %v2724, %v2708
    %v2726 = vadd.f32 %v2725, %v2710
    %v2727 = vadd.f32 %v2726, %v2712
    %v2728 = vsel %vm1258, %v2714, 0.0
    %v2729 = vadd.f32 %v2727, %v2728
    %v2730 = vrot.slane %v2729, 4
    %v2731 = vadd.f32 %v2729, %v2730
    %v2732 = vrot.slane %v2731, 2
    %v2733 = vadd.f32 %v2731, %v2732
    %v2734 = vrot.slane %v2733, 1
    %v2735 = vadd.f32 %v2733, %v2734
    %v2736 = vadd.f32 %v2689, %v2691
    %v2737 = vadd.f32 %v2736, %v2693
    %v2738 = vadd.f32 %v2737, %v2695
    %v2739 = vadd.f32 %v2738, %v2697
    %v2740 = vadd.f32 %v2739, %v2699
    %v2741 = vadd.f32 %v2740, %v2701
    %v2742 = vadd.f32 %v2741, %v2703
    %v2743 = vadd.f32 %v2742, %v2705
    %v2744 = vadd.f32 %v2743, %v2707
    %v2745 = vadd.f32 %v2744, %v2709
    %v2746 = vadd.f32 %v2745, %v2711
    %v2747 = vadd.f32 %v2746, %v2713
    %v2748 = vsel %vm1258, %v2715, 0.0
    %v2749 = vadd.f32 %v2747, %v2748
    %v2750 = vrot.slane %v2749, 4
    %v2751 = vadd.f32 %v2749, %v2750
    %v2752 = vrot.slane %v2751, 2
    %v2753 = vadd.f32 %v2751, %v2752
    %v2754 = vrot.slane %v2753, 1
    %v2755 = vadd.f32 %v2753, %v2754
    %v2756 = vadd.f32 %v1357, %v2735
    %v2757 = vadd.f32 %v1358, %v2755
    %v2758 = vmax.f32 %v2017, %v2025
    %v2759 = vmax.f32 %v2021, %v2029
    %v2760 = vmax.f32 %v2758, %v2033
    %v2761 = vmax.f32 %v2759, %v2037
    %v2762 = vmax.f32 %v2760, %v2041
    %v2763 = vmax.f32 %v2761, %v2045
    %v2764 = vmax.f32 %v2762, %v2049
    %v2765 = vmax.f32 %v2763, %v2053
    %v2766 = vmax.f32 %v2764, %v2057
    %v2767 = vmax.f32 %v2765, %v2061
    %v2768 = vmax.f32 %v2766, %v2065
    %v2769 = vsel %vm1258, %v2069, -inf
    %v2770 = vmax.f32 %v2767, %v2769
    %v2771 = vmax.f32 %v2768, %v2770
    %v2772 = vrot.slane %v2771, 4
    %v2773 = vmax.f32 %v2771, %v2772
    %v2774 = vrot.slane %v2773, 2
    %v2775 = vmax.f32 %v2773, %v2774
    %v2776 = vrot.slane %v2775, 1
    %v2777 = vmax.f32 %v2775, %v2776
    %v2778 = vmax.f32 %v2592, %v2600
    %v2779 = vmax.f32 %v2596, %v2604
    %v2780 = vmax.f32 %v2778, %v2608
    %v2781 = vmax.f32 %v2779, %v2612
    %v2782 = vmax.f32 %v2780, %v2616
    %v2783 = vmax.f32 %v2781, %v2620
    %v2784 = vmax.f32 %v2782, %v2624
    %v2785 = vmax.f32 %v2783, %v2628
    %v2786 = vmax.f32 %v2784, %v2632
    %v2787 = vmax.f32 %v2785, %v2636
    %v2788 = vmax.f32 %v2786, %v2640
    %v2789 = vsel %vm1258, %v2644, -inf
    %v2790 = vmax.f32 %v2787, %v2789
    %v2791 = vmax.f32 %v2788, %v2790
    %v2792 = vrot.slane %v2791, 4
    %v2793 = vmax.f32 %v2791, %v2792
    %v2794 = vrot.slane %v2793, 2
    %v2795 = vmax.f32 %v2793, %v2794
    %v2796 = vrot.slane %v2795, 1
    %v2797 = vmax.f32 %v2795, %v2796
    %v2798 = vmin.f32 %v2017, %v2025
    %v2799 = vmin.f32 %v2021, %v2029
    %v2800 = vmin.f32 %v2798, %v2033
    %v2801 = vmin.f32 %v2799, %v2037
    %v2802 = vmin.f32 %v2800, %v2041
    %v2803 = vmin.f32 %v2801, %v2045
    %v2804 = vmin.f32 %v2802, %v2049
    %v2805 = vmin.f32 %v2803, %v2053
    %v2806 = vmin.f32 %v2804, %v2057
    %v2807 = vmin.f32 %v2805, %v2061
    %v2808 = vmin.f32 %v2806, %v2065
    %v2809 = vsel %vm1258, %v2069, inf
    %v2810 = vmin.f32 %v2807, %v2809
    %v2811 = vmin.f32 %v2808, %v2810
    %v2812 = vrot.slane %v2811, 4
    %v2813 = vmin.f32 %v2811, %v2812
    %v2814 = vrot.slane %v2813, 2
    %v2815 = vmin.f32 %v2813, %v2814
    %v2816 = vrot.slane %v2815, 1
    %v2817 = vmin.f32 %v2815, %v2816
    %v2818 = vmin.f32 %v2592, %v2600
    %v2819 = vmin.f32 %v2596, %v2604
    %v2820 = vmin.f32 %v2818, %v2608
    %v2821 = vmin.f32 %v2819, %v2612
    %v2822 = vmin.f32 %v2820, %v2616
    %v2823 = vmin.f32 %v2821, %v2620
    %v2824 = vmin.f32 %v2822, %v2624
    %v2825 = vmin.f32 %v2823, %v2628
    %v2826 = vmin.f32 %v2824, %v2632
    %v2827 = vmin.f32 %v2825, %v2636
    %v2828 = vmin.f32 %v2826, %v2640
    %v2829 = vsel %vm1258, %v2644, inf
    %v2830 = vmin.f32 %v2827, %v2829
    %v2831 = vmin.f32 %v2828, %v2830
    %v2832 = vrot.slane %v2831, 4
    %v2833 = vmin.f32 %v2831, %v2832
    %v2834 = vrot.slane %v2833, 2
    %v2835 = vmin.f32 %v2833, %v2834
    %v2836 = vrot.slane %v2835, 1
    %v2837 = vmin.f32 %v2835, %v2836
    %v2838 = vmul.f32 %v2686, 0.004761905
    %v2839 = vmul.f32 %v2687, 0.004761905
    %v2840 = vmul.f32 %v2756, 0.004761905
    %v2841 = vmul.f32 %v2757, 0.004761905
    %v2842 = vmul.f32 %v2838, %v2838
    %v2843 = vmul.f32 %v2839, %v2839
    %v2844 = vsub.f32 %v2840, %v2842
    %v2845 = vsub.f32 %v2841, %v2843
    %v2846 = vld [vmem:[%s8] ss:$8 sm:$0x3]
    %s2847 = scalar_lea.vmem %s8, 1
    %v2848 = vld [vmem:[%s2847] ss:$8 sm:$0x3]
    %v2849 = vadd.f32 %v2844, 1e-05
    %v2850 = vadd.f32 %v2845, 1e-05
    %v2851 = vrsqrt.pop %v2849
    %v2852 = vmul.f32 %v2851, %v2849
    %v2853 = vmul.f32 %v2852, %v2851
    %v2854 = vmul.f32 0.5, %v2853
    %v2855 = vsub.f32 1.5, %v2854
    %v2856 = vmul.f32 %v2851, %v2855
    %vm2857 = vweird.f32 %v2849
    %vm2858 = vweird.f32 %v2851
    %vm2859 = vmor %vm2857, %vm2858
    %v2860 = vsel %vm2859, %v2851, %v2856
    %v2861 = vrsqrt.pop %v2850
    %v2862 = vmul.f32 %v2861, %v2850
    %v2863 = vmul.f32 %v2862, %v2861
    %v2864 = vmul.f32 0.5, %v2863
    %v2865 = vsub.f32 1.5, %v2864
    %v2866 = vmul.f32 %v2861, %v2865
    %vm2867 = vweird.f32 %v2850
    %vm2868 = vweird.f32 %v2861
    %vm2869 = vmor %vm2867, %vm2868
    %v2870 = vsel %vm2869, %v2861, %v2866
    %v2873 = vrot.slane %v2870, 7
    %v2874 = vsel %vm1258, %v2860, %v2873
    %v2876 = vmul.f32 %v2846, %v2874
    %v2878 = vperm.slane %v2876, 0
    %v2879 = vperm.slane %v2876, 1
    %v2882 = vmul.f32 %v2838, %v2878
    %v2883 = vmul.f32 %v2839, %v2879
    %v2886 = vrot.slane %v2883, 7
    %v2887 = vsel %vm1258, %v2882, %v2886
    %v2889 = vsub.f32 %v2848, %v2887
    %vm2890 = vcmp.ge.f32.partialorder %v2876, 0.0
    %v2891 = vmul.f32 %v1378, %v2878
    %v2892 = vmul.f32 %v1398, %v2879
    %v2893 = vmul.f32 %v1418, %v2878
    %v2894 = vmul.f32 %v1438, %v2879
    %v2897 = vrot.slane %v2892, 7
    %v2898 = vsel %vm1258, %v2891, %v2897
    %v2902 = vrot.slane %v2894, 7
    %v2903 = vsel %vm1258, %v2893, %v2902
    %v2905 = vsel %vm2890, %v2898, %v2903
    %v2906 = vadd.f32 %v2905, %v2889
    %v2907 = vmax.f32 %v2906, 0.0
    %v2908 = vlaneseq
    %vm2909 = vcmp.ge.s32.totalorder %v2908, 0
    %vm2910 = vcmp.lt.s32.totalorder %v2908, 256
    %vm2911 = vmand %vm2909, %vm2910
    %2912 = vst.msk [vmem:[#allocation2] ss:$2 sm:$0x3] %vm2911, %v2907
    %v2913 = vmul.f32 %v2777, %v2878
    %v2914 = vmul.f32 %v2797, %v2879
    %v2915 = vmul.f32 %v2817, %v2878
    %v2916 = vmul.f32 %v2837, %v2879
    %v2919 = vrot.slane %v2914, 7
    %v2920 = vsel %vm1258, %v2913, %v2919
    %v2924 = vrot.slane %v2916, 7
    %v2925 = vsel %vm1258, %v2915, %v2924
    %v2927 = vsel %vm2890, %v2920, %v2925
    %v2928 = vadd.f32 %v2927, %v2889
    %v2929 = vmax.f32 %v2928, 0.0
    %s2930 = scalar_lea.vmem [#allocation2], 1
    %2931 = vst.msk [vmem:[%s2930] ss:$2 sm:$0x3] %vm2911, %v2929
    %v2932 = vld [vmem:[%s5] sm:$0xff]
    %v2933 = vld [vmem:[%s5 + $0x8] sm:$0xff]
    %v2934 = vld [vmem:[%s5 + $0x10] sm:$0xff]
    %v2935 = vld [vmem:[%s5 + $0x18] sm:$0xff]
    %v2936 = vld [vmem:[%s5 + $0x20] sm:$0xff]
    %v2937 = vld [vmem:[%s5 + $0x28] sm:$0xff]
    %v2938 = vld [vmem:[%s5 + $0x30] sm:$0xff]
    %v2939 = vld [vmem:[%s5 + $0x38] sm:$0xff]
    %v2940 = vld [vmem:[%s5 + $0x40] sm:$0xf]
    %v2941 = vld [vmem:[%s5 + $0x48] sm:$0xf]
    %v2942 = vld [vmem:[%s1] sm:$0xff]
    %v2943 = vld [vmem:[%s1 + $0x8] sm:$0xff]
    %v2944 = vld [vmem:[%s1 + $0x10] sm:$0xff]
    %v2945 = vld [vmem:[%s1 + $0x18] sm:$0xff]
    %v2946 = vld [vmem:[%s1 + $0x20] sm:$0xff]
    %v2947 = vld [vmem:[%s1 + $0x28] sm:$0xff]
    %v2948 = vld [vmem:[%s1 + $0x30] sm:$0xff]
    %v2949 = vld [vmem:[%s1 + $0x38] sm:$0xff]
    %v2950 = vld [vmem:[%s1 + $0x40] sm:$0xff]
    %v2951 = vld [vmem:[%s1 + $0x48] sm:$0xff]
    %v2952 = vld [vmem:[%s1 + $0x50] sm:$0xff]
    %v2953 = vld [vmem:[%s1 + $0x58] sm:$0xff]
    %v2954 = vld [vmem:[%s1 + $0x60] sm:$0x3f]
    %vm2955 = vcmask 293888
    %v2957 = vsel %vm2955, %v2942, 0
    %v2960 = vsel %vm2955, %v2943, 0
    %v2963 = vsel %vm2955, %v2944, 0
    %v2966 = vsel %vm2955, %v2945, 0
    %v2969 = vsel %vm2955, %v2946, 0
    %v2972 = vsel %vm2955, %v2947, 0
    %v2975 = vsel %vm2955, %v2948, 0
    %v2978 = vsel %vm2955, %v2949, 0
    %v2981 = vsel %vm2955, %v2950, 0
    %v2984 = vsel %vm2955, %v2951, 0
    %v2987 = vsel %vm2955, %v2952, 0
    %v2990 = vsel %vm2955, %v2953, 0
    %v2993 = vsel %vm2955, %v2954, 0
    %vm2995 = vcmask 1043456
    %v2997 = vsel %vm2995, %v2940, 0
    %v3000 = vsel %vm2995, %v2941, 0
    %3002 = vmatpush.msra.mxu0 0.0
    %3003 = vmatpush.msra.mxu0 0.0
    %3004 = vmatpush.msra.mxu0 0.0
    %3005 = vmatpush.msra.mxu0 0.0
    %3006 = vmatpush.msra.mxu0 0.0
    %3007 = vmatpush.msra.mxu0 0.0
    %3008 = vmatpush.msra.mxu0 0.0
    %3009 = vmatpush.msra.mxu0 0.0
    %3010 = vmatpush.msra.mxu0 0.0
    %3011 = vmatpush.msra.mxu0 0.0
    %3012 = vmatpush.msra.mxu0 0.0
    %v3013 = vand.u32 %v2997, 4294901760
    %3014 = vmatpush.msra.mxu0 %v3013
    %v3015 = vand.u32 %v2938, 4294901760
    %3016 = vmatpush.msra.mxu0 %v3015
    %v3017 = vand.u32 %v2936, 4294901760
    %3018 = vmatpush.msra.mxu0 %v3017
    %v3019 = vand.u32 %v2934, 4294901760
    %3020 = vmatpush.msra.mxu0 %v3019
    %v3021 = vand.u32 %v2932, 4294901760
    %3022 = vmatpush.msra.mxu0 %v3021
    %v3023 = vand.u32 %v2957, 4294901760
    %v3024 = vsub.f32 %v2957, %v3023
    %v3025 = vand.u32 %v3024, 4294901760
    %v3026 = vsub.f32 %v3024, %v3025
    %v3027 = vand.u32 %v3026, 4294901760
    %3028 = vmatmul.f32.gmra.mxu0 %v3027
    %v3029 = vpop.f32.mrf.mxu0
    %v3030 = vadd.f32 0.0, %v3029
    %v3031 = vand.u32 %v2960, 4294901760
    %v3032 = vsub.f32 %v2960, %v3031
    %v3033 = vand.u32 %v3032, 4294901760
    %v3034 = vsub.f32 %v3032, %v3033
    %v3035 = vand.u32 %v3034, 4294901760
    %3036 = vmatmul.f32.gmra.mxu0 %v3035
    %v3037 = vpop.f32.mrf.mxu0
    %v3038 = vadd.f32 0.0, %v3037
    %v3039 = vand.u32 %v2963, 4294901760
    %v3040 = vsub.f32 %v2963, %v3039
    %v3041 = vand.u32 %v3040, 4294901760
    %v3042 = vsub.f32 %v3040, %v3041
    %v3043 = vand.u32 %v3042, 4294901760
    %3044 = vmatmul.f32.gmra.mxu0 %v3043
    %v3045 = vpop.f32.mrf.mxu0
    %v3046 = vadd.f32 0.0, %v3045
    %v3047 = vand.u32 %v2966, 4294901760
    %v3048 = vsub.f32 %v2966, %v3047
    %v3049 = vand.u32 %v3048, 4294901760
    %v3050 = vsub.f32 %v3048, %v3049
    %v3051 = vand.u32 %v3050, 4294901760
    %3052 = vmatmul.f32.gmra.mxu0 %v3051
    %v3053 = vpop.f32.mrf.mxu0
    %v3054 = vadd.f32 0.0, %v3053
    %v3055 = vand.u32 %v2969, 4294901760
    %v3056 = vsub.f32 %v2969, %v3055
    %v3057 = vand.u32 %v3056, 4294901760
    %v3058 = vsub.f32 %v3056, %v3057
    %v3059 = vand.u32 %v3058, 4294901760
    %3060 = vmatmul.f32.gmra.mxu0 %v3059
    %v3061 = vpop.f32.mrf.mxu0
    %v3062 = vadd.f32 0.0, %v3061
    %v3063 = vand.u32 %v2972, 4294901760
    %v3064 = vsub.f32 %v2972, %v3063
    %v3065 = vand.u32 %v3064, 4294901760
    %v3066 = vsub.f32 %v3064, %v3065
    %v3067 = vand.u32 %v3066, 4294901760
    %3068 = vmatmul.f32.gmra.mxu0 %v3067
    %v3069 = vpop.f32.mrf.mxu0
    %v3070 = vadd.f32 0.0, %v3069
    %v3071 = vand.u32 %v2975, 4294901760
    %v3072 = vsub.f32 %v2975, %v3071
    %v3073 = vand.u32 %v3072, 4294901760
    %v3074 = vsub.f32 %v3072, %v3073
    %v3075 = vand.u32 %v3074, 4294901760
    %3076 = vmatmul.f32.gmra.mxu0 %v3075
    %v3077 = vpop.f32.mrf.mxu0
    %v3078 = vadd.f32 0.0, %v3077
    %v3079 = vand.u32 %v2978, 4294901760
    %v3080 = vsub.f32 %v2978, %v3079
    %v3081 = vand.u32 %v3080, 4294901760
    %v3082 = vsub.f32 %v3080, %v3081
    %v3083 = vand.u32 %v3082, 4294901760
    %3084 = vmatmul.f32.gmra.mxu0 %v3083
    %v3085 = vpop.f32.mrf.mxu0
    %v3086 = vadd.f32 0.0, %v3085
    %v3087 = vand.u32 %v2981, 4294901760
    %v3088 = vsub.f32 %v2981, %v3087
    %v3089 = vand.u32 %v3088, 4294901760
    %v3090 = vsub.f32 %v3088, %v3089
    %v3091 = vand.u32 %v3090, 4294901760
    %3092 = vmatmul.f32.gmra.mxu0 %v3091
    %v3093 = vpop.f32.mrf.mxu0
    %v3094 = vadd.f32 0.0, %v3093
    %v3095 = vand.u32 %v2984, 4294901760
    %v3096 = vsub.f32 %v2984, %v3095
    %v3097 = vand.u32 %v3096, 4294901760
    %v3098 = vsub.f32 %v3096, %v3097
    %v3099 = vand.u32 %v3098, 4294901760
    %3100 = vmatmul.f32.gmra.mxu0 %v3099
    %v3101 = vpop.f32.mrf.mxu0
    %v3102 = vadd.f32 0.0, %v3101
    %v3103 = vand.u32 %v2987, 4294901760
    %v3104 = vsub.f32 %v2987, %v3103
    %v3105 = vand.u32 %v3104, 4294901760
    %v3106 = vsub.f32 %v3104, %v3105
    %v3107 = vand.u32 %v3106, 4294901760
    %3108 = vmatmul.f32.gmra.mxu0 %v3107
    %v3109 = vpop.f32.mrf.mxu0
    %v3110 = vadd.f32 0.0, %v3109
    %v3111 = vand.u32 %v2990, 4294901760
    %v3112 = vsub.f32 %v2990, %v3111
    %v3113 = vand.u32 %v3112, 4294901760
    %v3114 = vsub.f32 %v3112, %v3113
    %v3115 = vand.u32 %v3114, 4294901760
    %3116 = vmatmul.f32.gmra.mxu0 %v3115
    %v3117 = vpop.f32.mrf.mxu0
    %v3118 = vadd.f32 0.0, %v3117
    %v3119 = vand.u32 %v2993, 4294901760
    %v3120 = vsub.f32 %v2993, %v3119
    %v3121 = vand.u32 %v3120, 4294901760
    %v3122 = vsub.f32 %v3120, %v3121
    %v3123 = vand.u32 %v3122, 4294901760
    %3124 = vmatmul.f32.gmra.mxu0 %v3123
    %v3125 = vpop.f32.mrf.mxu0
    %v3126 = vadd.f32 0.0, %v3125
    %3127 = vdwg.mxu0
    %3128 = vmatpush.msra.mxu0 0.0
    %3129 = vmatpush.msra.mxu0 0.0
    %3130 = vmatpush.msra.mxu0 0.0
    %3131 = vmatpush.msra.mxu0 0.0
    %3132 = vmatpush.msra.mxu0 0.0
    %3133 = vmatpush.msra.mxu0 0.0
    %3134 = vmatpush.msra.mxu0 0.0
    %3135 = vmatpush.msra.mxu0 0.0
    %3136 = vmatpush.msra.mxu0 0.0
    %3137 = vmatpush.msra.mxu0 0.0
    %3138 = vmatpush.msra.mxu0 0.0
    %v3139 = vand.u32 %v2997, 4294901760
    %v3140 = vsub.f32 %v2997, %v3139
    %v3141 = vand.u32 %v3140, 4294901760
    %v3142 = vsub.f32 %v3140, %v3141
    %v3143 = vand.u32 %v3142, 4294901760
    %3144 = vmatpush.msra.mxu0 %v3143
    %v3145 = vand.u32 %v2938, 4294901760
    %v3146 = vsub.f32 %v2938, %v3145
    %v3147 = vand.u32 %v3146, 4294901760
    %v3148 = vsub.f32 %v3146, %v3147
    %v3149 = vand.u32 %v3148, 4294901760
    %3150 = vmatpush.msra.mxu0 %v3149
    %v3151 = vand.u32 %v2936, 4294901760
    %v3152 = vsub.f32 %v2936, %v3151
    %v3153 = vand.u32 %v3152, 4294901760
    %v3154 = vsub.f32 %v3152, %v3153
    %v3155 = vand.u32 %v3154, 4294901760
    %3156 = vmatpush.msra.mxu0 %v3155
    %v3157 = vand.u32 %v2934, 4294901760
    %v3158 = vsub.f32 %v2934, %v3157
    %v3159 = vand.u32 %v3158, 4294901760
    %v3160 = vsub.f32 %v3158, %v3159
    %v3161 = vand.u32 %v3160, 4294901760
    %3162 = vmatpush.msra.mxu0 %v3161
    %v3163 = vand.u32 %v2932, 4294901760
    %v3164 = vsub.f32 %v2932, %v3163
    %v3165 = vand.u32 %v3164, 4294901760
    %v3166 = vsub.f32 %v3164, %v3165
    %v3167 = vand.u32 %v3166, 4294901760
    %3168 = vmatpush.msra.mxu0 %v3167
    %v3169 = vand.u32 %v2957, 4294901760
    %3170 = vmatmul.f32.gmra.mxu0 %v3169
    %v3171 = vpop.f32.mrf.mxu0
    %v3172 = vadd.f32 %v3030, %v3171
    %v3173 = vand.u32 %v2960, 4294901760
    %3174 = vmatmul.f32.gmra.mxu0 %v3173
    %v3175 = vpop.f32.mrf.mxu0
    %v3176 = vadd.f32 %v3038, %v3175
    %v3177 = vand.u32 %v2963, 4294901760
    %3178 = vmatmul.f32.gmra.mxu0 %v3177
    %v3179 = vpop.f32.mrf.mxu0
    %v3180 = vadd.f32 %v3046, %v3179
    %v3181 = vand.u32 %v2966, 4294901760
    %3182 = vmatmul.f32.gmra.mxu0 %v3181
    %v3183 = vpop.f32.mrf.mxu0
    %v3184 = vadd.f32 %v3054, %v3183
    %v3185 = vand.u32 %v2969, 4294901760
    %3186 = vmatmul.f32.gmra.mxu0 %v3185
    %v3187 = vpop.f32.mrf.mxu0
    %v3188 = vadd.f32 %v3062, %v3187
    %v3189 = vand.u32 %v2972, 4294901760
    %3190 = vmatmul.f32.gmra.mxu0 %v3189
    %v3191 = vpop.f32.mrf.mxu0
    %v3192 = vadd.f32 %v3070, %v3191
    %v3193 = vand.u32 %v2975, 4294901760
    %3194 = vmatmul.f32.gmra.mxu0 %v3193
    %v3195 = vpop.f32.mrf.mxu0
    %v3196 = vadd.f32 %v3078, %v3195
    %v3197 = vand.u32 %v2978, 4294901760
    %3198 = vmatmul.f32.gmra.mxu0 %v3197
    %v3199 = vpop.f32.mrf.mxu0
    %v3200 = vadd.f32 %v3086, %v3199
    %v3201 = vand.u32 %v2981, 4294901760
    %3202 = vmatmul.f32.gmra.mxu0 %v3201
    %v3203 = vpop.f32.mrf.mxu0
    %v3204 = vadd.f32 %v3094, %v3203
    %v3205 = vand.u32 %v2984, 4294901760
    %3206 = vmatmul.f32.gmra.mxu0 %v3205
    %v3207 = vpop.f32.mrf.mxu0
    %v3208 = vadd.f32 %v3102, %v3207
    %v3209 = vand.u32 %v2987, 4294901760
    %3210 = vmatmul.f32.gmra.mxu0 %v3209
    %v3211 = vpop.f32.mrf.mxu0
    %v3212 = vadd.f32 %v3110, %v3211
    %v3213 = vand.u32 %v2990, 4294901760
    %3214 = vmatmul.f32.gmra.mxu0 %v3213
    %v3215 = vpop.f32.mrf.mxu0
    %v3216 = vadd.f32 %v3118, %v3215
    %v3217 = vand.u32 %v2993, 4294901760
    %3218 = vmatmul.f32.gmra.mxu0 %v3217
    %v3219 = vpop.f32.mrf.mxu0
    %v3220 = vadd.f32 %v3126, %v3219
    %3221 = vdwg.mxu0
    %3222 = vmatpush.msra.mxu0 0.0
    %3223 = vmatpush.msra.mxu0 0.0
    %3224 = vmatpush.msra.mxu0 0.0
    %3225 = vmatpush.msra.mxu0 0.0
    %3226 = vmatpush.msra.mxu0 0.0
    %3227 = vmatpush.msra.mxu0 0.0
    %3228 = vmatpush.msra.mxu0 0.0
    %3229 = vmatpush.msra.mxu0 0.0
    %3230 = vmatpush.msra.mxu0 0.0
    %3231 = vmatpush.msra.mxu0 0.0
    %3232 = vmatpush.msra.mxu0 0.0
    %v3233 = vand.u32 %v2997, 4294901760
    %v3234 = vsub.f32 %v2997, %v3233
    %3235 = vmatpush.msra.mxu0 %v3234
    %v3236 = vand.u32 %v2938, 4294901760
    %v3237 = vsub.f32 %v2938, %v3236
    %3238 = vmatpush.msra.mxu0 %v3237
    %v3239 = vand.u32 %v2936, 4294901760
    %v3240 = vsub.f32 %v2936, %v3239
    %3241 = vmatpush.msra.mxu0 %v3240
    %v3242 = vand.u32 %v2934, 4294901760
    %v3243 = vsub.f32 %v2934, %v3242
    %3244 = vmatpush.msra.mxu0 %v3243
    %v3245 = vand.u32 %v2932, 4294901760
    %v3246 = vsub.f32 %v2932, %v3245
    %3247 = vmatpush.msra.mxu0 %v3246
    %v3248 = vand.u32 %v2957, 4294901760
    %v3249 = vsub.f32 %v2957, %v3248
    %3250 = vmatmul.f32.gmra.mxu0 %v3249
    %v3251 = vpop.f32.mrf.mxu0
    %v3252 = vadd.f32 %v3172, %v3251
    %v3253 = vand.u32 %v2960, 4294901760
    %v3254 = vsub.f32 %v2960, %v3253
    %3255 = vmatmul.f32.gmra.mxu0 %v3254
    %v3256 = vpop.f32.mrf.mxu0
    %v3257 = vadd.f32 %v3176, %v3256
    %v3258 = vand.u32 %v2963, 4294901760
    %v3259 = vsub.f32 %v2963, %v3258
    %3260 = vmatmul.f32.gmra.mxu0 %v3259
    %v3261 = vpop.f32.mrf.mxu0
    %v3262 = vadd.f32 %v3180, %v3261
    %v3263 = vand.u32 %v2966, 4294901760
    %v3264 = vsub.f32 %v2966, %v3263
    %3265 = vmatmul.f32.gmra.mxu0 %v3264
    %v3266 = vpop.f32.mrf.mxu0
    %v3267 = vadd.f32 %v3184, %v3266
    %v3268 = vand.u32 %v2969, 4294901760
    %v3269 = vsub.f32 %v2969, %v3268
    %3270 = vmatmul.f32.gmra.mxu0 %v3269
    %v3271 = vpop.f32.mrf.mxu0
    %v3272 = vadd.f32 %v3188, %v3271
    %v3273 = vand.u32 %v2972, 4294901760
    %v3274 = vsub.f32 %v2972, %v3273
    %3275 = vmatmul.f32.gmra.mxu0 %v3274
    %v3276 = vpop.f32.mrf.mxu0
    %v3277 = vadd.f32 %v3192, %v3276
    %v3278 = vand.u32 %v2975, 4294901760
    %v3279 = vsub.f32 %v2975, %v3278
    %3280 = vmatmul.f32.gmra.mxu0 %v3279
    %v3281 = vpop.f32.mrf.mxu0
    %v3282 = vadd.f32 %v3196, %v3281
    %v3283 = vand.u32 %v2978, 4294901760
    %v3284 = vsub.f32 %v2978, %v3283
    %3285 = vmatmul.f32.gmra.mxu0 %v3284
    %v3286 = vpop.f32.mrf.mxu0
    %v3287 = vadd.f32 %v3200, %v3286
    %v3288 = vand.u32 %v2981, 4294901760
    %v3289 = vsub.f32 %v2981, %v3288
    %3290 = vmatmul.f32.gmra.mxu0 %v3289
    %v3291 = vpop.f32.mrf.mxu0
    %v3292 = vadd.f32 %v3204, %v3291
    %v3293 = vand.u32 %v2984, 4294901760
    %v3294 = vsub.f32 %v2984, %v3293
    %3295 = vmatmul.f32.gmra.mxu0 %v3294
    %v3296 = vpop.f32.mrf.mxu0
    %v3297 = vadd.f32 %v3208, %v3296
    %v3298 = vand.u32 %v2987, 4294901760
    %v3299 = vsub.f32 %v2987, %v3298
    %3300 = vmatmul.f32.gmra.mxu0 %v3299
    %v3301 = vpop.f32.mrf.mxu0
    %v3302 = vadd.f32 %v3212, %v3301
    %v3303 = vand.u32 %v2990, 4294901760
    %v3304 = vsub.f32 %v2990, %v3303
    %3305 = vmatmul.f32.gmra.mxu0 %v3304
    %v3306 = vpop.f32.mrf.mxu0
    %v3307 = vadd.f32 %v3216, %v3306
    %v3308 = vand.u32 %v2993, 4294901760
    %v3309 = vsub.f32 %v2993, %v3308
    %3310 = vmatmul.f32.gmra.mxu0 %v3309
    %v3311 = vpop.f32.mrf.mxu0
    %v3312 = vadd.f32 %v3220, %v3311
    %3313 = vdwg.mxu0
    %3314 = vmatpush.msra.mxu0 0.0
    %3315 = vmatpush.msra.mxu0 0.0
    %3316 = vmatpush.msra.mxu0 0.0
    %3317 = vmatpush.msra.mxu0 0.0
    %3318 = vmatpush.msra.mxu0 0.0
    %3319 = vmatpush.msra.mxu0 0.0
    %3320 = vmatpush.msra.mxu0 0.0
    %3321 = vmatpush.msra.mxu0 0.0
    %3322 = vmatpush.msra.mxu0 0.0
    %3323 = vmatpush.msra.mxu0 0.0
    %3324 = vmatpush.msra.mxu0 0.0
    %v3325 = vand.u32 %v2997, 4294901760
    %3326 = vmatpush.msra.mxu0 %v3325
    %v3327 = vand.u32 %v2938, 4294901760
    %3328 = vmatpush.msra.mxu0 %v3327
    %v3329 = vand.u32 %v2936, 4294901760
    %3330 = vmatpush.msra.mxu0 %v3329
    %v3331 = vand.u32 %v2934, 4294901760
    %3332 = vmatpush.msra.mxu0 %v3331
    %v3333 = vand.u32 %v2932, 4294901760
    %3334 = vmatpush.msra.mxu0 %v3333
    %v3335 = vand.u32 %v2957, 4294901760
    %v3336 = vsub.f32 %v2957, %v3335
    %v3337 = vand.u32 %v3336, 4294901760
    %3338 = vmatmul.f32.gmra.mxu0 %v3337
    %v3339 = vpop.f32.mrf.mxu0
    %v3340 = vadd.f32 %v3252, %v3339
    %v3341 = vand.u32 %v2960, 4294901760
    %v3342 = vsub.f32 %v2960, %v3341
    %v3343 = vand.u32 %v3342, 4294901760
    %3344 = vmatmul.f32.gmra.mxu0 %v3343
    %v3345 = vpop.f32.mrf.mxu0
    %v3346 = vadd.f32 %v3257, %v3345
    %v3347 = vand.u32 %v2963, 4294901760
    %v3348 = vsub.f32 %v2963, %v3347
    %v3349 = vand.u32 %v3348, 4294901760
    %3350 = vmatmul.f32.gmra.mxu0 %v3349
    %v3351 = vpop.f32.mrf.mxu0
    %v3352 = vadd.f32 %v3262, %v3351
    %v3353 = vand.u32 %v2966, 4294901760
    %v3354 = vsub.f32 %v2966, %v3353
    %v3355 = vand.u32 %v3354, 4294901760
    %3356 = vmatmul.f32.gmra.mxu0 %v3355
    %v3357 = vpop.f32.mrf.mxu0
    %v3358 = vadd.f32 %v3267, %v3357
    %v3359 = vand.u32 %v2969, 4294901760
    %v3360 = vsub.f32 %v2969, %v3359
    %v3361 = vand.u32 %v3360, 4294901760
    %3362 = vmatmul.f32.gmra.mxu0 %v3361
    %v3363 = vpop.f32.mrf.mxu0
    %v3364 = vadd.f32 %v3272, %v3363
    %v3365 = vand.u32 %v2972, 4294901760
    %v3366 = vsub.f32 %v2972, %v3365
    %v3367 = vand.u32 %v3366, 4294901760
    %3368 = vmatmul.f32.gmra.mxu0 %v3367
    %v3369 = vpop.f32.mrf.mxu0
    %v3370 = vadd.f32 %v3277, %v3369
    %v3371 = vand.u32 %v2975, 4294901760
    %v3372 = vsub.f32 %v2975, %v3371
    %v3373 = vand.u32 %v3372, 4294901760
    %3374 = vmatmul.f32.gmra.mxu0 %v3373
    %v3375 = vpop.f32.mrf.mxu0
    %v3376 = vadd.f32 %v3282, %v3375
    %v3377 = vand.u32 %v2978, 4294901760
    %v3378 = vsub.f32 %v2978, %v3377
    %v3379 = vand.u32 %v3378, 4294901760
    %3380 = vmatmul.f32.gmra.mxu0 %v3379
    %v3381 = vpop.f32.mrf.mxu0
    %v3382 = vadd.f32 %v3287, %v3381
    %v3383 = vand.u32 %v2981, 4294901760
    %v3384 = vsub.f32 %v2981, %v3383
    %v3385 = vand.u32 %v3384, 4294901760
    %3386 = vmatmul.f32.gmra.mxu0 %v3385
    %v3387 = vpop.f32.mrf.mxu0
    %v3388 = vadd.f32 %v3292, %v3387
    %v3389 = vand.u32 %v2984, 4294901760
    %v3390 = vsub.f32 %v2984, %v3389
    %v3391 = vand.u32 %v3390, 4294901760
    %3392 = vmatmul.f32.gmra.mxu0 %v3391
    %v3393 = vpop.f32.mrf.mxu0
    %v3394 = vadd.f32 %v3297, %v3393
    %v3395 = vand.u32 %v2987, 4294901760
    %v3396 = vsub.f32 %v2987, %v3395
    %v3397 = vand.u32 %v3396, 4294901760
    %3398 = vmatmul.f32.gmra.mxu0 %v3397
    %v3399 = vpop.f32.mrf.mxu0
    %v3400 = vadd.f32 %v3302, %v3399
    %v3401 = vand.u32 %v2990, 4294901760
    %v3402 = vsub.f32 %v2990, %v3401
    %v3403 = vand.u32 %v3402, 4294901760
    %3404 = vmatmul.f32.gmra.mxu0 %v3403
    %v3405 = vpop.f32.mrf.mxu0
    %v3406 = vadd.f32 %v3307, %v3405
    %v3407 = vand.u32 %v2993, 4294901760
    %v3408 = vsub.f32 %v2993, %v3407
    %v3409 = vand.u32 %v3408, 4294901760
    %3410 = vmatmul.f32.gmra.mxu0 %v3409
    %v3411 = vpop.f32.mrf.mxu0
    %v3412 = vadd.f32 %v3312, %v3411
    %3413 = vdwg.mxu0
    %3414 = vmatpush.msra.mxu0 0.0
    %3415 = vmatpush.msra.mxu0 0.0
    %3416 = vmatpush.msra.mxu0 0.0
    %3417 = vmatpush.msra.mxu0 0.0
    %3418 = vmatpush.msra.mxu0 0.0
    %3419 = vmatpush.msra.mxu0 0.0
    %3420 = vmatpush.msra.mxu0 0.0
    %3421 = vmatpush.msra.mxu0 0.0
    %3422 = vmatpush.msra.mxu0 0.0
    %3423 = vmatpush.msra.mxu0 0.0
    %3424 = vmatpush.msra.mxu0 0.0
    %v3425 = vand.u32 %v2997, 4294901760
    %v3426 = vsub.f32 %v2997, %v3425
    %v3427 = vand.u32 %v3426, 4294901760
    %3428 = vmatpush.msra.mxu0 %v3427
    %v3429 = vand.u32 %v2938, 4294901760
    %v3430 = vsub.f32 %v2938, %v3429
    %v3431 = vand.u32 %v3430, 4294901760
    %3432 = vmatpush.msra.mxu0 %v3431
    %v3433 = vand.u32 %v2936, 4294901760
    %v3434 = vsub.f32 %v2936, %v3433
    %v3435 = vand.u32 %v3434, 4294901760
    %3436 = vmatpush.msra.mxu0 %v3435
    %v3437 = vand.u32 %v2934, 4294901760
    %v3438 = vsub.f32 %v2934, %v3437
    %v3439 = vand.u32 %v3438, 4294901760
    %3440 = vmatpush.msra.mxu0 %v3439
    %v3441 = vand.u32 %v2932, 4294901760
    %v3442 = vsub.f32 %v2932, %v3441
    %v3443 = vand.u32 %v3442, 4294901760
    %3444 = vmatpush.msra.mxu0 %v3443
    %v3445 = vand.u32 %v2957, 4294901760
    %3446 = vmatmul.f32.gmra.mxu0 %v3445
    %v3447 = vpop.f32.mrf.mxu0
    %v3448 = vadd.f32 %v3340, %v3447
    %v3449 = vand.u32 %v2960, 4294901760
    %3450 = vmatmul.f32.gmra.mxu0 %v3449
    %v3451 = vpop.f32.mrf.mxu0
    %v3452 = vadd.f32 %v3346, %v3451
    %v3453 = vand.u32 %v2963, 4294901760
    %3454 = vmatmul.f32.gmra.mxu0 %v3453
    %v3455 = vpop.f32.mrf.mxu0
    %v3456 = vadd.f32 %v3352, %v3455
    %v3457 = vand.u32 %v2966, 4294901760
    %3458 = vmatmul.f32.gmra.mxu0 %v3457
    %v3459 = vpop.f32.mrf.mxu0
    %v3460 = vadd.f32 %v3358, %v3459
    %v3461 = vand.u32 %v2969, 4294901760
    %3462 = vmatmul.f32.gmra.mxu0 %v3461
    %v3463 = vpop.f32.mrf.mxu0
    %v3464 = vadd.f32 %v3364, %v3463
    %v3465 = vand.u32 %v2972, 4294901760
    %3466 = vmatmul.f32.gmra.mxu0 %v3465
    %v3467 = vpop.f32.mrf.mxu0
    %v3468 = vadd.f32 %v3370, %v3467
    %v3469 = vand.u32 %v2975, 4294901760
    %3470 = vmatmul.f32.gmra.mxu0 %v3469
    %v3471 = vpop.f32.mrf.mxu0
    %v3472 = vadd.f32 %v3376, %v3471
    %v3473 = vand.u32 %v2978, 4294901760
    %3474 = vmatmul.f32.gmra.mxu0 %v3473
    %v3475 = vpop.f32.mrf.mxu0
    %v3476 = vadd.f32 %v3382, %v3475
    %v3477 = vand.u32 %v2981, 4294901760
    %3478 = vmatmul.f32.gmra.mxu0 %v3477
    %v3479 = vpop.f32.mrf.mxu0
    %v3480 = vadd.f32 %v3388, %v3479
    %v3481 = vand.u32 %v2984, 4294901760
    %3482 = vmatmul.f32.gmra.mxu0 %v3481
    %v3483 = vpop.f32.mrf.mxu0
    %v3484 = vadd.f32 %v3394, %v3483
    %v3485 = vand.u32 %v2987, 4294901760
    %3486 = vmatmul.f32.gmra.mxu0 %v3485
    %v3487 = vpop.f32.mrf.mxu0
    %v3488 = vadd.f32 %v3400, %v3487
    %v3489 = vand.u32 %v2990, 4294901760
    %3490 = vmatmul.f32.gmra.mxu0 %v3489
    %v3491 = vpop.f32.mrf.mxu0
    %v3492 = vadd.f32 %v3406, %v3491
    %v3493 = vand.u32 %v2993, 4294901760
    %3494 = vmatmul.f32.gmra.mxu0 %v3493
    %v3495 = vpop.f32.mrf.mxu0
    %v3496 = vadd.f32 %v3412, %v3495
    %3497 = vdwg.mxu0
    %3498 = vmatpush.msra.mxu0 0.0
    %3499 = vmatpush.msra.mxu0 0.0
    %3500 = vmatpush.msra.mxu0 0.0
    %3501 = vmatpush.msra.mxu0 0.0
    %3502 = vmatpush.msra.mxu0 0.0
    %3503 = vmatpush.msra.mxu0 0.0
    %3504 = vmatpush.msra.mxu0 0.0
    %3505 = vmatpush.msra.mxu0 0.0
    %3506 = vmatpush.msra.mxu0 0.0
    %3507 = vmatpush.msra.mxu0 0.0
    %3508 = vmatpush.msra.mxu0 0.0
    %v3509 = vand.u32 %v2997, 4294901760
    %3510 = vmatpush.msra.mxu0 %v3509
    %v3511 = vand.u32 %v2938, 4294901760
    %3512 = vmatpush.msra.mxu0 %v3511
    %v3513 = vand.u32 %v2936, 4294901760
    %3514 = vmatpush.msra.mxu0 %v3513
    %v3515 = vand.u32 %v2934, 4294901760
    %3516 = vmatpush.msra.mxu0 %v3515
    %v3517 = vand.u32 %v2932, 4294901760
    %3518 = vmatpush.msra.mxu0 %v3517
    %v3519 = vand.u32 %v2957, 4294901760
    %3520 = vmatmul.f32.gmra.mxu0 %v3519
    %v3521 = vpop.f32.mrf.mxu0
    %v3522 = vadd.f32 %v3448, %v3521
    %v3523 = vand.u32 %v2960, 4294901760
    %3524 = vmatmul.f32.gmra.mxu0 %v3523
    %v3525 = vpop.f32.mrf.mxu0
    %v3526 = vadd.f32 %v3452, %v3525
    %v3527 = vand.u32 %v2963, 4294901760
    %3528 = vmatmul.f32.gmra.mxu0 %v3527
    %v3529 = vpop.f32.mrf.mxu0
    %v3530 = vadd.f32 %v3456, %v3529
    %v3531 = vand.u32 %v2966, 4294901760
    %3532 = vmatmul.f32.gmra.mxu0 %v3531
    %v3533 = vpop.f32.mrf.mxu0
    %v3534 = vadd.f32 %v3460, %v3533
    %v3535 = vand.u32 %v2969, 4294901760
    %3536 = vmatmul.f32.gmra.mxu0 %v3535
    %v3537 = vpop.f32.mrf.mxu0
    %v3538 = vadd.f32 %v3464, %v3537
    %v3539 = vand.u32 %v2972, 4294901760
    %3540 = vmatmul.f32.gmra.mxu0 %v3539
    %v3541 = vpop.f32.mrf.mxu0
    %v3542 = vadd.f32 %v3468, %v3541
    %v3543 = vand.u32 %v2975, 4294901760
    %3544 = vmatmul.f32.gmra.mxu0 %v3543
    %v3545 = vpop.f32.mrf.mxu0
    %v3546 = vadd.f32 %v3472, %v3545
    %v3547 = vand.u32 %v2978, 4294901760
    %3548 = vmatmul.f32.gmra.mxu0 %v3547
    %v3549 = vpop.f32.mrf.mxu0
    %v3550 = vadd.f32 %v3476, %v3549
    %v3551 = vand.u32 %v2981, 4294901760
    %3552 = vmatmul.f32.gmra.mxu0 %v3551
    %v3553 = vpop.f32.mrf.mxu0
    %v3554 = vadd.f32 %v3480, %v3553
    %v3555 = vand.u32 %v2984, 4294901760
    %3556 = vmatmul.f32.gmra.mxu0 %v3555
    %v3557 = vpop.f32.mrf.mxu0
    %v3558 = vadd.f32 %v3484, %v3557
    %v3559 = vand.u32 %v2987, 4294901760
    %3560 = vmatmul.f32.gmra.mxu0 %v3559
    %v3561 = vpop.f32.mrf.mxu0
    %v3562 = vadd.f32 %v3488, %v3561
    %v3563 = vand.u32 %v2990, 4294901760
    %3564 = vmatmul.f32.gmra.mxu0 %v3563
    %v3565 = vpop.f32.mrf.mxu0
    %v3566 = vadd.f32 %v3492, %v3565
    %v3567 = vand.u32 %v2993, 4294901760
    %3568 = vmatmul.f32.gmra.mxu0 %v3567
    %v3569 = vpop.f32.mrf.mxu0
    %v3570 = vadd.f32 %v3496, %v3569
    %3571 = vdwg.mxu0
    %3572 = vmatpush.msra.mxu0 0.0
    %3573 = vmatpush.msra.mxu0 0.0
    %3574 = vmatpush.msra.mxu0 0.0
    %3575 = vmatpush.msra.mxu0 0.0
    %3576 = vmatpush.msra.mxu0 0.0
    %3577 = vmatpush.msra.mxu0 0.0
    %3578 = vmatpush.msra.mxu0 0.0
    %3579 = vmatpush.msra.mxu0 0.0
    %3580 = vmatpush.msra.mxu0 0.0
    %3581 = vmatpush.msra.mxu0 0.0
    %3582 = vmatpush.msra.mxu0 0.0
    %v3583 = vand.u32 %v3000, 4294901760
    %3584 = vmatpush.msra.mxu0 %v3583
    %v3585 = vand.u32 %v2939, 4294901760
    %3586 = vmatpush.msra.mxu0 %v3585
    %v3587 = vand.u32 %v2937, 4294901760
    %3588 = vmatpush.msra.mxu0 %v3587
    %v3589 = vand.u32 %v2935, 4294901760
    %3590 = vmatpush.msra.mxu0 %v3589
    %v3591 = vand.u32 %v2933, 4294901760
    %3592 = vmatpush.msra.mxu0 %v3591
    %v3593 = vand.u32 %v2957, 4294901760
    %v3594 = vsub.f32 %v2957, %v3593
    %v3595 = vand.u32 %v3594, 4294901760
    %v3596 = vsub.f32 %v3594, %v3595
    %v3597 = vand.u32 %v3596, 4294901760
    %3598 = vmatmul.f32.gmra.mxu0 %v3597
    %v3599 = vpop.f32.mrf.mxu0
    %v3600 = vadd.f32 0.0, %v3599
    %v3601 = vand.u32 %v2960, 4294901760
    %v3602 = vsub.f32 %v2960, %v3601
    %v3603 = vand.u32 %v3602, 4294901760
    %v3604 = vsub.f32 %v3602, %v3603
    %v3605 = vand.u32 %v3604, 4294901760
    %3606 = vmatmul.f32.gmra.mxu0 %v3605
    %v3607 = vpop.f32.mrf.mxu0
    %v3608 = vadd.f32 0.0, %v3607
    %v3609 = vand.u32 %v2963, 4294901760
    %v3610 = vsub.f32 %v2963, %v3609
    %v3611 = vand.u32 %v3610, 4294901760
    %v3612 = vsub.f32 %v3610, %v3611
    %v3613 = vand.u32 %v3612, 4294901760
    %3614 = vmatmul.f32.gmra.mxu0 %v3613
    %v3615 = vpop.f32.mrf.mxu0
    %v3616 = vadd.f32 0.0, %v3615
    %v3617 = vand.u32 %v2966, 4294901760
    %v3618 = vsub.f32 %v2966, %v3617
    %v3619 = vand.u32 %v3618, 4294901760
    %v3620 = vsub.f32 %v3618, %v3619
    %v3621 = vand.u32 %v3620, 4294901760
    %3622 = vmatmul.f32.gmra.mxu0 %v3621
    %v3623 = vpop.f32.mrf.mxu0
    %v3624 = vadd.f32 0.0, %v3623
    %v3625 = vand.u32 %v2969, 4294901760
    %v3626 = vsub.f32 %v2969, %v3625
    %v3627 = vand.u32 %v3626, 4294901760
    %v3628 = vsub.f32 %v3626, %v3627
    %v3629 = vand.u32 %v3628, 4294901760
    %3630 = vmatmul.f32.gmra.mxu0 %v3629
    %v3631 = vpop.f32.mrf.mxu0
    %v3632 = vadd.f32 0.0, %v3631
    %v3633 = vand.u32 %v2972, 4294901760
    %v3634 = vsub.f32 %v2972, %v3633
    %v3635 = vand.u32 %v3634, 4294901760
    %v3636 = vsub.f32 %v3634, %v3635
    %v3637 = vand.u32 %v3636, 4294901760
    %3638 = vmatmul.f32.gmra.mxu0 %v3637
    %v3639 = vpop.f32.mrf.mxu0
    %v3640 = vadd.f32 0.0, %v3639
    %v3641 = vand.u32 %v2975, 4294901760
    %v3642 = vsub.f32 %v2975, %v3641
    %v3643 = vand.u32 %v3642, 4294901760
    %v3644 = vsub.f32 %v3642, %v3643
    %v3645 = vand.u32 %v3644, 4294901760
    %3646 = vmatmul.f32.gmra.mxu0 %v3645
    %v3647 = vpop.f32.mrf.mxu0
    %v3648 = vadd.f32 0.0, %v3647
    %v3649 = vand.u32 %v2978, 4294901760
    %v3650 = vsub.f32 %v2978, %v3649
    %v3651 = vand.u32 %v3650, 4294901760
    %v3652 = vsub.f32 %v3650, %v3651
    %v3653 = vand.u32 %v3652, 4294901760
    %3654 = vmatmul.f32.gmra.mxu0 %v3653
    %v3655 = vpop.f32.mrf.mxu0
    %v3656 = vadd.f32 0.0, %v3655
    %v3657 = vand.u32 %v2981, 4294901760
    %v3658 = vsub.f32 %v2981, %v3657
    %v3659 = vand.u32 %v3658, 4294901760
    %v3660 = vsub.f32 %v3658, %v3659
    %v3661 = vand.u32 %v3660, 4294901760
    %3662 = vmatmul.f32.gmra.mxu0 %v3661
    %v3663 = vpop.f32.mrf.mxu0
    %v3664 = vadd.f32 0.0, %v3663
    %v3665 = vand.u32 %v2984, 4294901760
    %v3666 = vsub.f32 %v2984, %v3665
    %v3667 = vand.u32 %v3666, 4294901760
    %v3668 = vsub.f32 %v3666, %v3667
    %v3669 = vand.u32 %v3668, 4294901760
    %3670 = vmatmul.f32.gmra.mxu0 %v3669
    %v3671 = vpop.f32.mrf.mxu0
    %v3672 = vadd.f32 0.0, %v3671
    %v3673 = vand.u32 %v2987, 4294901760
    %v3674 = vsub.f32 %v2987, %v3673
    %v3675 = vand.u32 %v3674, 4294901760
    %v3676 = vsub.f32 %v3674, %v3675
    %v3677 = vand.u32 %v3676, 4294901760
    %3678 = vmatmul.f32.gmra.mxu0 %v3677
    %v3679 = vpop.f32.mrf.mxu0
    %v3680 = vadd.f32 0.0, %v3679
    %v3681 = vand.u32 %v2990, 4294901760
    %v3682 = vsub.f32 %v2990, %v3681
    %v3683 = vand.u32 %v3682, 4294901760
    %v3684 = vsub.f32 %v3682, %v3683
    %v3685 = vand.u32 %v3684, 4294901760
    %3686 = vmatmul.f32.gmra.mxu0 %v3685
    %v3687 = vpop.f32.mrf.mxu0
    %v3688 = vadd.f32 0.0, %v3687
    %v3689 = vand.u32 %v2993, 4294901760
    %v3690 = vsub.f32 %v2993, %v3689
    %v3691 = vand.u32 %v3690, 4294901760
    %v3692 = vsub.f32 %v3690, %v3691
    %v3693 = vand.u32 %v3692, 4294901760
    %3694 = vmatmul.f32.gmra.mxu0 %v3693
    %v3695 = vpop.f32.mrf.mxu0
    %v3696 = vadd.f32 0.0, %v3695
    %3697 = vdwg.mxu0
    %3698 = vmatpush.msra.mxu0 0.0
    %3699 = vmatpush.msra.mxu0 0.0
    %3700 = vmatpush.msra.mxu0 0.0
    %3701 = vmatpush.msra.mxu0 0.0
    %3702 = vmatpush.msra.mxu0 0.0
    %3703 = vmatpush.msra.mxu0 0.0
    %3704 = vmatpush.msra.mxu0 0.0
    %3705 = vmatpush.msra.mxu0 0.0
    %3706 = vmatpush.msra.mxu0 0.0
    %3707 = vmatpush.msra.mxu0 0.0
    %3708 = vmatpush.msra.mxu0 0.0
    %v3709 = vand.u32 %v3000, 4294901760
    %v3710 = vsub.f32 %v3000, %v3709
    %v3711 = vand.u32 %v3710, 4294901760
    %v3712 = vsub.f32 %v3710, %v3711
    %v3713 = vand.u32 %v3712, 4294901760
    %3714 = vmatpush.msra.mxu0 %v3713
    %v3715 = vand.u32 %v2939, 4294901760
    %v3716 = vsub.f32 %v2939, %v3715
    %v3717 = vand.u32 %v3716, 4294901760
    %v3718 = vsub.f32 %v3716, %v3717
    %v3719 = vand.u32 %v3718, 4294901760
    %3720 = vmatpush.msra.mxu0 %v3719
    %v3721 = vand.u32 %v2937, 4294901760
    %v3722 = vsub.f32 %v2937, %v3721
    %v3723 = vand.u32 %v3722, 4294901760
    %v3724 = vsub.f32 %v3722, %v3723
    %v3725 = vand.u32 %v3724, 4294901760
    %3726 = vmatpush.msra.mxu0 %v3725
    %v3727 = vand.u32 %v2935, 4294901760
    %v3728 = vsub.f32 %v2935, %v3727
    %v3729 = vand.u32 %v3728, 4294901760
    %v3730 = vsub.f32 %v3728, %v3729
    %v3731 = vand.u32 %v3730, 4294901760
    %3732 = vmatpush.msra.mxu0 %v3731
    %v3733 = vand.u32 %v2933, 4294901760
    %v3734 = vsub.f32 %v2933, %v3733
    %v3735 = vand.u32 %v3734, 4294901760
    %v3736 = vsub.f32 %v3734, %v3735
    %v3737 = vand.u32 %v3736, 4294901760
    %3738 = vmatpush.msra.mxu0 %v3737
    %v3739 = vand.u32 %v2957, 4294901760
    %3740 = vmatmul.f32.gmra.mxu0 %v3739
    %v3741 = vpop.f32.mrf.mxu0
    %v3742 = vadd.f32 %v3600, %v3741
    %v3743 = vand.u32 %v2960, 4294901760
    %3744 = vmatmul.f32.gmra.mxu0 %v3743
    %v3745 = vpop.f32.mrf.mxu0
    %v3746 = vadd.f32 %v3608, %v3745
    %v3747 = vand.u32 %v2963, 4294901760
    %3748 = vmatmul.f32.gmra.mxu0 %v3747
    %v3749 = vpop.f32.mrf.mxu0
    %v3750 = vadd.f32 %v3616, %v3749
    %v3751 = vand.u32 %v2966, 4294901760
    %3752 = vmatmul.f32.gmra.mxu0 %v3751
    %v3753 = vpop.f32.mrf.mxu0
    %v3754 = vadd.f32 %v3624, %v3753
    %v3755 = vand.u32 %v2969, 4294901760
    %3756 = vmatmul.f32.gmra.mxu0 %v3755
    %v3757 = vpop.f32.mrf.mxu0
    %v3758 = vadd.f32 %v3632, %v3757
    %v3759 = vand.u32 %v2972, 4294901760
    %3760 = vmatmul.f32.gmra.mxu0 %v3759
    %v3761 = vpop.f32.mrf.mxu0
    %v3762 = vadd.f32 %v3640, %v3761
    %v3763 = vand.u32 %v2975, 4294901760
    %3764 = vmatmul.f32.gmra.mxu0 %v3763
    %v3765 = vpop.f32.mrf.mxu0
    %v3766 = vadd.f32 %v3648, %v3765
    %v3767 = vand.u32 %v2978, 4294901760
    %3768 = vmatmul.f32.gmra.mxu0 %v3767
    %v3769 = vpop.f32.mrf.mxu0
    %v3770 = vadd.f32 %v3656, %v3769
    %v3771 = vand.u32 %v2981, 4294901760
    %3772 = vmatmul.f32.gmra.mxu0 %v3771
    %v3773 = vpop.f32.mrf.mxu0
    %v3774 = vadd.f32 %v3664, %v3773
    %v3775 = vand.u32 %v2984, 4294901760
    %3776 = vmatmul.f32.gmra.mxu0 %v3775
    %v3777 = vpop.f32.mrf.mxu0
    %v3778 = vadd.f32 %v3672, %v3777
    %v3779 = vand.u32 %v2987, 4294901760
    %3780 = vmatmul.f32.gmra.mxu0 %v3779
    %v3781 = vpop.f32.mrf.mxu0
    %v3782 = vadd.f32 %v3680, %v3781
    %v3783 = vand.u32 %v2990, 4294901760
    %3784 = vmatmul.f32.gmra.mxu0 %v3783
    %v3785 = vpop.f32.mrf.mxu0
    %v3786 = vadd.f32 %v3688, %v3785
    %v3787 = vand.u32 %v2993, 4294901760
    %3788 = vmatmul.f32.gmra.mxu0 %v3787
    %v3789 = vpop.f32.mrf.mxu0
    %v3790 = vadd.f32 %v3696, %v3789
    %3791 = vdwg.mxu0
    %3792 = vmatpush.msra.mxu0 0.0
    %3793 = vmatpush.msra.mxu0 0.0
    %3794 = vmatpush.msra.mxu0 0.0
    %3795 = vmatpush.msra.mxu0 0.0
    %3796 = vmatpush.msra.mxu0 0.0
    %3797 = vmatpush.msra.mxu0 0.0
    %3798 = vmatpush.msra.mxu0 0.0
    %3799 = vmatpush.msra.mxu0 0.0
    %3800 = vmatpush.msra.mxu0 0.0
    %3801 = vmatpush.msra.mxu0 0.0
    %3802 = vmatpush.msra.mxu0 0.0
    %v3803 = vand.u32 %v3000, 4294901760
    %v3804 = vsub.f32 %v3000, %v3803
    %3805 = vmatpush.msra.mxu0 %v3804
    %v3806 = vand.u32 %v2939, 4294901760
    %v3807 = vsub.f32 %v2939, %v3806
    %3808 = vmatpush.msra.mxu0 %v3807
    %v3809 = vand.u32 %v2937, 4294901760
    %v3810 = vsub.f32 %v2937, %v3809
    %3811 = vmatpush.msra.mxu0 %v3810
    %v3812 = vand.u32 %v2935, 4294901760
    %v3813 = vsub.f32 %v2935, %v3812
    %3814 = vmatpush.msra.mxu0 %v3813
    %v3815 = vand.u32 %v2933, 4294901760
    %v3816 = vsub.f32 %v2933, %v3815
    %3817 = vmatpush.msra.mxu0 %v3816
    %v3818 = vand.u32 %v2957, 4294901760
    %v3819 = vsub.f32 %v2957, %v3818
    %3820 = vmatmul.f32.gmra.mxu0 %v3819
    %v3821 = vpop.f32.mrf.mxu0
    %v3822 = vadd.f32 %v3742, %v3821
    %v3823 = vand.u32 %v2960, 4294901760
    %v3824 = vsub.f32 %v2960, %v3823
    %3825 = vmatmul.f32.gmra.mxu0 %v3824
    %v3826 = vpop.f32.mrf.mxu0
    %v3827 = vadd.f32 %v3746, %v3826
    %v3828 = vand.u32 %v2963, 4294901760
    %v3829 = vsub.f32 %v2963, %v3828
    %3830 = vmatmul.f32.gmra.mxu0 %v3829
    %v3831 = vpop.f32.mrf.mxu0
    %v3832 = vadd.f32 %v3750, %v3831
    %v3833 = vand.u32 %v2966, 4294901760
    %v3834 = vsub.f32 %v2966, %v3833
    %3835 = vmatmul.f32.gmra.mxu0 %v3834
    %v3836 = vpop.f32.mrf.mxu0
    %v3837 = vadd.f32 %v3754, %v3836
    %v3838 = vand.u32 %v2969, 4294901760
    %v3839 = vsub.f32 %v2969, %v3838
    %3840 = vmatmul.f32.gmra.mxu0 %v3839
    %v3841 = vpop.f32.mrf.mxu0
    %v3842 = vadd.f32 %v3758, %v3841
    %v3843 = vand.u32 %v2972, 4294901760
    %v3844 = vsub.f32 %v2972, %v3843
    %3845 = vmatmul.f32.gmra.mxu0 %v3844
    %v3846 = vpop.f32.mrf.mxu0
    %v3847 = vadd.f32 %v3762, %v3846
    %v3848 = vand.u32 %v2975, 4294901760
    %v3849 = vsub.f32 %v2975, %v3848
    %3850 = vmatmul.f32.gmra.mxu0 %v3849
    %v3851 = vpop.f32.mrf.mxu0
    %v3852 = vadd.f32 %v3766, %v3851
    %v3853 = vand.u32 %v2978, 4294901760
    %v3854 = vsub.f32 %v2978, %v3853
    %3855 = vmatmul.f32.gmra.mxu0 %v3854
    %v3856 = vpop.f32.mrf.mxu0
    %v3857 = vadd.f32 %v3770, %v3856
    %v3858 = vand.u32 %v2981, 4294901760
    %v3859 = vsub.f32 %v2981, %v3858
    %3860 = vmatmul.f32.gmra.mxu0 %v3859
    %v3861 = vpop.f32.mrf.mxu0
    %v3862 = vadd.f32 %v3774, %v3861
    %v3863 = vand.u32 %v2984, 4294901760
    %v3864 = vsub.f32 %v2984, %v3863
    %3865 = vmatmul.f32.gmra.mxu0 %v3864
    %v3866 = vpop.f32.mrf.mxu0
    %v3867 = vadd.f32 %v3778, %v3866
    %v3868 = vand.u32 %v2987, 4294901760
    %v3869 = vsub.f32 %v2987, %v3868
    %3870 = vmatmul.f32.gmra.mxu0 %v3869
    %v3871 = vpop.f32.mrf.mxu0
    %v3872 = vadd.f32 %v3782, %v3871
    %v3873 = vand.u32 %v2990, 4294901760
    %v3874 = vsub.f32 %v2990, %v3873
    %3875 = vmatmul.f32.gmra.mxu0 %v3874
    %v3876 = vpop.f32.mrf.mxu0
    %v3877 = vadd.f32 %v3786, %v3876
    %v3878 = vand.u32 %v2993, 4294901760
    %v3879 = vsub.f32 %v2993, %v3878
    %3880 = vmatmul.f32.gmra.mxu0 %v3879
    %v3881 = vpop.f32.mrf.mxu0
    %v3882 = vadd.f32 %v3790, %v3881
    %3883 = vdwg.mxu0
    %3884 = vmatpush.msra.mxu0 0.0
    %3885 = vmatpush.msra.mxu0 0.0
    %3886 = vmatpush.msra.mxu0 0.0
    %3887 = vmatpush.msra.mxu0 0.0
    %3888 = vmatpush.msra.mxu0 0.0
    %3889 = vmatpush.msra.mxu0 0.0
    %3890 = vmatpush.msra.mxu0 0.0
    %3891 = vmatpush.msra.mxu0 0.0
    %3892 = vmatpush.msra.mxu0 0.0
    %3893 = vmatpush.msra.mxu0 0.0
    %3894 = vmatpush.msra.mxu0 0.0
    %v3895 = vand.u32 %v3000, 4294901760
    %3896 = vmatpush.msra.mxu0 %v3895
    %v3897 = vand.u32 %v2939, 4294901760
    %3898 = vmatpush.msra.mxu0 %v3897
    %v3899 = vand.u32 %v2937, 4294901760
    %3900 = vmatpush.msra.mxu0 %v3899
    %v3901 = vand.u32 %v2935, 4294901760
    %3902 = vmatpush.msra.mxu0 %v3901
    %v3903 = vand.u32 %v2933, 4294901760
    %3904 = vmatpush.msra.mxu0 %v3903
    %v3905 = vand.u32 %v2957, 4294901760
    %v3906 = vsub.f32 %v2957, %v3905
    %v3907 = vand.u32 %v3906, 4294901760
    %3908 = vmatmul.f32.gmra.mxu0 %v3907
    %v3909 = vpop.f32.mrf.mxu0
    %v3910 = vadd.f32 %v3822, %v3909
    %v3911 = vand.u32 %v2960, 4294901760
    %v3912 = vsub.f32 %v2960, %v3911
    %v3913 = vand.u32 %v3912, 4294901760
    %3914 = vmatmul.f32.gmra.mxu0 %v3913
    %v3915 = vpop.f32.mrf.mxu0
    %v3916 = vadd.f32 %v3827, %v3915
    %v3917 = vand.u32 %v2963, 4294901760
    %v3918 = vsub.f32 %v2963, %v3917
    %v3919 = vand.u32 %v3918, 4294901760
    %3920 = vmatmul.f32.gmra.mxu0 %v3919
    %v3921 = vpop.f32.mrf.mxu0
    %v3922 = vadd.f32 %v3832, %v3921
    %v3923 = vand.u32 %v2966, 4294901760
    %v3924 = vsub.f32 %v2966, %v3923
    %v3925 = vand.u32 %v3924, 4294901760
    %3926 = vmatmul.f32.gmra.mxu0 %v3925
    %v3927 = vpop.f32.mrf.mxu0
    %v3928 = vadd.f32 %v3837, %v3927
    %v3929 = vand.u32 %v2969, 4294901760
    %v3930 = vsub.f32 %v2969, %v3929
    %v3931 = vand.u32 %v3930, 4294901760
    %3932 = vmatmul.f32.gmra.mxu0 %v3931
    %v3933 = vpop.f32.mrf.mxu0
    %v3934 = vadd.f32 %v3842, %v3933
    %v3935 = vand.u32 %v2972, 4294901760
    %v3936 = vsub.f32 %v2972, %v3935
    %v3937 = vand.u32 %v3936, 4294901760
    %3938 = vmatmul.f32.gmra.mxu0 %v3937
    %v3939 = vpop.f32.mrf.mxu0
    %v3940 = vadd.f32 %v3847, %v3939
    %v3941 = vand.u32 %v2975, 4294901760
    %v3942 = vsub.f32 %v2975, %v3941
    %v3943 = vand.u32 %v3942, 4294901760
    %3944 = vmatmul.f32.gmra.mxu0 %v3943
    %v3945 = vpop.f32.mrf.mxu0
    %v3946 = vadd.f32 %v3852, %v3945
    %v3947 = vand.u32 %v2978, 4294901760
    %v3948 = vsub.f32 %v2978, %v3947
    %v3949 = vand.u32 %v3948, 4294901760
    %3950 = vmatmul.f32.gmra.mxu0 %v3949
    %v3951 = vpop.f32.mrf.mxu0
    %v3952 = vadd.f32 %v3857, %v3951
    %v3953 = vand.u32 %v2981, 4294901760
    %v3954 = vsub.f32 %v2981, %v3953
    %v3955 = vand.u32 %v3954, 4294901760
    %3956 = vmatmul.f32.gmra.mxu0 %v3955
    %v3957 = vpop.f32.mrf.mxu0
    %v3958 = vadd.f32 %v3862, %v3957
    %v3959 = vand.u32 %v2984, 4294901760
    %v3960 = vsub.f32 %v2984, %v3959
    %v3961 = vand.u32 %v3960, 4294901760
    %3962 = vmatmul.f32.gmra.mxu0 %v3961
    %v3963 = vpop.f32.mrf.mxu0
    %v3964 = vadd.f32 %v3867, %v3963
    %v3965 = vand.u32 %v2987, 4294901760
    %v3966 = vsub.f32 %v2987, %v3965
    %v3967 = vand.u32 %v3966, 4294901760
    %3968 = vmatmul.f32.gmra.mxu0 %v3967
    %v3969 = vpop.f32.mrf.mxu0
    %v3970 = vadd.f32 %v3872, %v3969
    %v3971 = vand.u32 %v2990, 4294901760
    %v3972 = vsub.f32 %v2990, %v3971
    %v3973 = vand.u32 %v3972, 4294901760
    %3974 = vmatmul.f32.gmra.mxu0 %v3973
    %v3975 = vpop.f32.mrf.mxu0
    %v3976 = vadd.f32 %v3877, %v3975
    %v3977 = vand.u32 %v2993, 4294901760
    %v3978 = vsub.f32 %v2993, %v3977
    %v3979 = vand.u32 %v3978, 4294901760
    %3980 = vmatmul.f32.gmra.mxu0 %v3979
    %v3981 = vpop.f32.mrf.mxu0
    %v3982 = vadd.f32 %v3882, %v3981
    %3983 = vdwg.mxu0
    %3984 = vmatpush.msra.mxu0 0.0
    %3985 = vmatpush.msra.mxu0 0.0
    %3986 = vmatpush.msra.mxu0 0.0
    %3987 = vmatpush.msra.mxu0 0.0
    %3988 = vmatpush.msra.mxu0 0.0
    %3989 = vmatpush.msra.mxu0 0.0
    %3990 = vmatpush.msra.mxu0 0.0
    %3991 = vmatpush.msra.mxu0 0.0
    %3992 = vmatpush.msra.mxu0 0.0
    %3993 = vmatpush.msra.mxu0 0.0
    %3994 = vmatpush.msra.mxu0 0.0
    %v3995 = vand.u32 %v3000, 4294901760
    %v3996 = vsub.f32 %v3000, %v3995
    %v3997 = vand.u32 %v3996, 4294901760
    %3998 = vmatpush.msra.mxu0 %v3997
    %v3999 = vand.u32 %v2939, 4294901760
    %v4000 = vsub.f32 %v2939, %v3999
    %v4001 = vand.u32 %v4000, 4294901760
    %4002 = vmatpush.msra.mxu0 %v4001
    %v4003 = vand.u32 %v2937, 4294901760
    %v4004 = vsub.f32 %v2937, %v4003
    %v4005 = vand.u32 %v4004, 4294901760
    %4006 = vmatpush.msra.mxu0 %v4005
    %v4007 = vand.u32 %v2935, 4294901760
    %v4008 = vsub.f32 %v2935, %v4007
    %v4009 = vand.u32 %v4008, 4294901760
    %4010 = vmatpush.msra.mxu0 %v4009
    %v4011 = vand.u32 %v2933, 4294901760
    %v4012 = vsub.f32 %v2933, %v4011
    %v4013 = vand.u32 %v4012, 4294901760
    %4014 = vmatpush.msra.mxu0 %v4013
    %v4015 = vand.u32 %v2957, 4294901760
    %4016 = vmatmul.f32.gmra.mxu0 %v4015
    %v4017 = vpop.f32.mrf.mxu0
    %v4018 = vadd.f32 %v3910, %v4017
    %v4019 = vand.u32 %v2960, 4294901760
    %4020 = vmatmul.f32.gmra.mxu0 %v4019
    %v4021 = vpop.f32.mrf.mxu0
    %v4022 = vadd.f32 %v3916, %v4021
    %v4023 = vand.u32 %v2963, 4294901760
    %4024 = vmatmul.f32.gmra.mxu0 %v4023
    %v4025 = vpop.f32.mrf.mxu0
    %v4026 = vadd.f32 %v3922, %v4025
    %v4027 = vand.u32 %v2966, 4294901760
    %4028 = vmatmul.f32.gmra.mxu0 %v4027
    %v4029 = vpop.f32.mrf.mxu0
    %v4030 = vadd.f32 %v3928, %v4029
    %v4031 = vand.u32 %v2969, 4294901760
    %4032 = vmatmul.f32.gmra.mxu0 %v4031
    %v4033 = vpop.f32.mrf.mxu0
    %v4034 = vadd.f32 %v3934, %v4033
    %v4035 = vand.u32 %v2972, 4294901760
    %4036 = vmatmul.f32.gmra.mxu0 %v4035
    %v4037 = vpop.f32.mrf.mxu0
    %v4038 = vadd.f32 %v3940, %v4037
    %v4039 = vand.u32 %v2975, 4294901760
    %4040 = vmatmul.f32.gmra.mxu0 %v4039
    %v4041 = vpop.f32.mrf.mxu0
    %v4042 = vadd.f32 %v3946, %v4041
    %v4043 = vand.u32 %v2978, 4294901760
    %4044 = vmatmul.f32.gmra.mxu0 %v4043
    %v4045 = vpop.f32.mrf.mxu0
    %v4046 = vadd.f32 %v3952, %v4045
    %v4047 = vand.u32 %v2981, 4294901760
    %4048 = vmatmul.f32.gmra.mxu0 %v4047
    %v4049 = vpop.f32.mrf.mxu0
    %v4050 = vadd.f32 %v3958, %v4049
    %v4051 = vand.u32 %v2984, 4294901760
    %4052 = vmatmul.f32.gmra.mxu0 %v4051
    %v4053 = vpop.f32.mrf.mxu0
    %v4054 = vadd.f32 %v3964, %v4053
    %v4055 = vand.u32 %v2987, 4294901760
    %4056 = vmatmul.f32.gmra.mxu0 %v4055
    %v4057 = vpop.f32.mrf.mxu0
    %v4058 = vadd.f32 %v3970, %v4057
    %v4059 = vand.u32 %v2990, 4294901760
    %4060 = vmatmul.f32.gmra.mxu0 %v4059
    %v4061 = vpop.f32.mrf.mxu0
    %v4062 = vadd.f32 %v3976, %v4061
    %v4063 = vand.u32 %v2993, 4294901760
    %4064 = vmatmul.f32.gmra.mxu0 %v4063
    %v4065 = vpop.f32.mrf.mxu0
    %v4066 = vadd.f32 %v3982, %v4065
    %4067 = vdwg.mxu0
    %4068 = vmatpush.msra.mxu0 0.0
    %4069 = vmatpush.msra.mxu0 0.0
    %4070 = vmatpush.msra.mxu0 0.0
    %4071 = vmatpush.msra.mxu0 0.0
    %4072 = vmatpush.msra.mxu0 0.0
    %4073 = vmatpush.msra.mxu0 0.0
    %4074 = vmatpush.msra.mxu0 0.0
    %4075 = vmatpush.msra.mxu0 0.0
    %4076 = vmatpush.msra.mxu0 0.0
    %4077 = vmatpush.msra.mxu0 0.0
    %4078 = vmatpush.msra.mxu0 0.0
    %v4079 = vand.u32 %v3000, 4294901760
    %4080 = vmatpush.msra.mxu0 %v4079
    %v4081 = vand.u32 %v2939, 4294901760
    %4082 = vmatpush.msra.mxu0 %v4081
    %v4083 = vand.u32 %v2937, 4294901760
    %4084 = vmatpush.msra.mxu0 %v4083
    %v4085 = vand.u32 %v2935, 4294901760
    %4086 = vmatpush.msra.mxu0 %v4085
    %v4087 = vand.u32 %v2933, 4294901760
    %4088 = vmatpush.msra.mxu0 %v4087
    %v4089 = vand.u32 %v2957, 4294901760
    %4090 = vmatmul.f32.gmra.mxu0 %v4089
    %v4091 = vpop.f32.mrf.mxu0
    %v4092 = vadd.f32 %v4018, %v4091
    %v4093 = vand.u32 %v2960, 4294901760
    %4094 = vmatmul.f32.gmra.mxu0 %v4093
    %v4095 = vpop.f32.mrf.mxu0
    %v4096 = vadd.f32 %v4022, %v4095
    %v4097 = vand.u32 %v2963, 4294901760
    %4098 = vmatmul.f32.gmra.mxu0 %v4097
    %v4099 = vpop.f32.mrf.mxu0
    %v4100 = vadd.f32 %v4026, %v4099
    %v4101 = vand.u32 %v2966, 4294901760
    %4102 = vmatmul.f32.gmra.mxu0 %v4101
    %v4103 = vpop.f32.mrf.mxu0
    %v4104 = vadd.f32 %v4030, %v4103
    %v4105 = vand.u32 %v2969, 4294901760
    %4106 = vmatmul.f32.gmra.mxu0 %v4105
    %v4107 = vpop.f32.mrf.mxu0
    %v4108 = vadd.f32 %v4034, %v4107
    %v4109 = vand.u32 %v2972, 4294901760
    %4110 = vmatmul.f32.gmra.mxu0 %v4109
    %v4111 = vpop.f32.mrf.mxu0
    %v4112 = vadd.f32 %v4038, %v4111
    %v4113 = vand.u32 %v2975, 4294901760
    %4114 = vmatmul.f32.gmra.mxu0 %v4113
    %v4115 = vpop.f32.mrf.mxu0
    %v4116 = vadd.f32 %v4042, %v4115
    %v4117 = vand.u32 %v2978, 4294901760
    %4118 = vmatmul.f32.gmra.mxu0 %v4117
    %v4119 = vpop.f32.mrf.mxu0
    %v4120 = vadd.f32 %v4046, %v4119
    %v4121 = vand.u32 %v2981, 4294901760
    %4122 = vmatmul.f32.gmra.mxu0 %v4121
    %v4123 = vpop.f32.mrf.mxu0
    %v4124 = vadd.f32 %v4050, %v4123
    %v4125 = vand.u32 %v2984, 4294901760
    %4126 = vmatmul.f32.gmra.mxu0 %v4125
    %v4127 = vpop.f32.mrf.mxu0
    %v4128 = vadd.f32 %v4054, %v4127
    %v4129 = vand.u32 %v2987, 4294901760
    %4130 = vmatmul.f32.gmra.mxu0 %v4129
    %v4131 = vpop.f32.mrf.mxu0
    %v4132 = vadd.f32 %v4058, %v4131
    %v4133 = vand.u32 %v2990, 4294901760
    %4134 = vmatmul.f32.gmra.mxu0 %v4133
    %v4135 = vpop.f32.mrf.mxu0
    %v4136 = vadd.f32 %v4062, %v4135
    %v4137 = vand.u32 %v2993, 4294901760
    %4138 = vmatmul.f32.gmra.mxu0 %v4137
    %v4139 = vpop.f32.mrf.mxu0
    %v4140 = vadd.f32 %v4066, %v4139
    %4141 = vdwg.mxu0
    %v4142 = vadd.f32 %v3522, %v3526
    %v4143 = vadd.f32 %v4142, %v3530
    %v4144 = vadd.f32 %v4143, %v3534
    %v4145 = vadd.f32 %v4144, %v3538
    %v4146 = vadd.f32 %v4145, %v3542
    %v4147 = vadd.f32 %v4146, %v3546
    %v4148 = vadd.f32 %v4147, %v3550
    %v4149 = vadd.f32 %v4148, %v3554
    %v4150 = vadd.f32 %v4149, %v3558
    %v4151 = vadd.f32 %v4150, %v3562
    %v4152 = vadd.f32 %v4151, %v3566
    %vm4153 = vcmask 1045504
    %v4154 = vsel %vm4153, %v3570, 0.0
    %v4155 = vadd.f32 %v4152, %v4154
    %v4156 = vrot.slane %v4155, 4
    %v4157 = vadd.f32 %v4155, %v4156
    %v4158 = vrot.slane %v4157, 2
    %v4159 = vadd.f32 %v4157, %v4158
    %v4160 = vrot.slane %v4159, 1
    %v4161 = vadd.f32 %v4159, %v4160
    %v4162 = vadd.f32 %v4092, %v4096
    %v4163 = vadd.f32 %v4162, %v4100
    %v4164 = vadd.f32 %v4163, %v4104
    %v4165 = vadd.f32 %v4164, %v4108
    %v4166 = vadd.f32 %v4165, %v4112
    %v4167 = vadd.f32 %v4166, %v4116
    %v4168 = vadd.f32 %v4167, %v4120
    %v4169 = vadd.f32 %v4168, %v4124
    %v4170 = vadd.f32 %v4169, %v4128
    %v4171 = vadd.f32 %v4170, %v4132
    %v4172 = vadd.f32 %v4171, %v4136
    %v4173 = vsel %vm4153, %v4140, 0.0
    %v4174 = vadd.f32 %v4172, %v4173
    %v4175 = vrot.slane %v4174, 4
    %v4176 = vadd.f32 %v4174, %v4175
    %v4177 = vrot.slane %v4176, 2
    %v4178 = vadd.f32 %v4176, %v4177
    %v4179 = vrot.slane %v4178, 1
    %v4180 = vadd.f32 %v4178, %v4179
    %v4181 = vadd.f32 %v4161, 0.0
    %v4182 = vadd.f32 %v4180, 0.0
    %v4183 = vmul.f32 %v3522, %v3522
    %v4184 = vmul.f32 %v4092, %v4092
    %v4185 = vmul.f32 %v3526, %v3526
    %v4186 = vmul.f32 %v4096, %v4096
    %v4187 = vmul.f32 %v3530, %v3530
    %v4188 = vmul.f32 %v4100, %v4100
    %v4189 = vmul.f32 %v3534, %v3534
    %v4190 = vmul.f32 %v4104, %v4104
    %v4191 = vmul.f32 %v3538, %v3538
    %v4192 = vmul.f32 %v4108, %v4108
    %v4193 = vmul.f32 %v3542, %v3542
    %v4194 = vmul.f32 %v4112, %v4112
    %v4195 = vmul.f32 %v3546, %v3546
    %v4196 = vmul.f32 %v4116, %v4116
    %v4197 = vmul.f32 %v3550, %v3550
    %v4198 = vmul.f32 %v4120, %v4120
    %v4199 = vmul.f32 %v3554, %v3554
    %v4200 = vmul.f32 %v4124, %v4124
    %v4201 = vmul.f32 %v3558, %v3558
    %v4202 = vmul.f32 %v4128, %v4128
    %v4203 = vmul.f32 %v3562, %v3562
    %v4204 = vmul.f32 %v4132, %v4132
    %v4205 = vmul.f32 %v3566, %v3566
    %v4206 = vmul.f32 %v4136, %v4136
    %v4207 = vmul.f32 %v3570, %v3570
    %v4208 = vmul.f32 %v4140, %v4140
    %v4209 = vadd.f32 %v4183, %v4185
    %v4210 = vadd.f32 %v4209, %v4187
    %v4211 = vadd.f32 %v4210, %v4189
    %v4212 = vadd.f32 %v4211, %v4191
    %v4213 = vadd.f32 %v4212, %v4193
    %v4214 = vadd.f32 %v4213, %v4195
    %v4215 = vadd.f32 %v4214, %v4197
    %v4216 = vadd.f32 %v4215, %v4199
    %v4217 = vadd.f32 %v4216, %v4201
    %v4218 = vadd.f32 %v4217, %v4203
    %v4219 = vadd.f32 %v4218, %v4205
    %v4220 = vsel %vm4153, %v4207, 0.0
    %v4221 = vadd.f32 %v4219, %v4220
    %v4222 = vrot.slane %v4221, 4
    %v4223 = vadd.f32 %v4221, %v4222
    %v4224 = vrot.slane %v4223, 2
    %v4225 = vadd.f32 %v4223, %v4224
    %v4226 = vrot.slane %v4225, 1
    %v4227 = vadd.f32 %v4225, %v4226
    %v4228 = vadd.f32 %v4184, %v4186
    %v4229 = vadd.f32 %v4228, %v4188
    %v4230 = vadd.f32 %v4229, %v4190
    %v4231 = vadd.f32 %v4230, %v4192
    %v4232 = vadd.f32 %v4231, %v4194
    %v4233 = vadd.f32 %v4232, %v4196
    %v4234 = vadd.f32 %v4233, %v4198
    %v4235 = vadd.f32 %v4234, %v4200
    %v4236 = vadd.f32 %v4235, %v4202
    %v4237 = vadd.f32 %v4236, %v4204
    %v4238 = vadd.f32 %v4237, %v4206
    %v4239 = vsel %vm4153, %v4208, 0.0
    %v4240 = vadd.f32 %v4238, %v4239
    %v4241 = vrot.slane %v4240, 4
    %v4242 = vadd.f32 %v4240, %v4241
    %v4243 = vrot.slane %v4242, 2
    %v4244 = vadd.f32 %v4242, %v4243
    %v4245 = vrot.slane %v4244, 1
    %v4246 = vadd.f32 %v4244, %v4245
    %v4247 = vadd.f32 %v4227, 0.0
    %v4248 = vadd.f32 %v4246, 0.0
    %v4249 = vmax.f32 %v3522, %v3530
    %v4250 = vmax.f32 %v3526, %v3534
    %v4251 = vmax.f32 %v4249, %v3538
    %v4252 = vmax.f32 %v4250, %v3542
    %v4253 = vmax.f32 %v4251, %v3546
    %v4254 = vmax.f32 %v4252, %v3550
    %v4255 = vmax.f32 %v4253, %v3554
    %v4256 = vmax.f32 %v4254, %v3558
    %v4257 = vmax.f32 %v4255, %v3562
    %v4258 = vmax.f32 %v4256, %v3566
    %v4259 = vsel %vm4153, %v3570, -inf
    %v4260 = vmax.f32 %v4257, %v4259
    %v4261 = vmax.f32 %v4260, %v4258
    %v4262 = vrot.slane %v4261, 4
    %v4263 = vmax.f32 %v4261, %v4262
    %v4264 = vrot.slane %v4263, 2
    %v4265 = vmax.f32 %v4263, %v4264
    %v4266 = vrot.slane %v4265, 1
    %v4267 = vmax.f32 %v4265, %v4266
    %v4268 = vmax.f32 %v4092, %v4100
    %v4269 = vmax.f32 %v4096, %v4104
    %v4270 = vmax.f32 %v4268, %v4108
    %v4271 = vmax.f32 %v4269, %v4112
    %v4272 = vmax.f32 %v4270, %v4116
    %v4273 = vmax.f32 %v4271, %v4120
    %v4274 = vmax.f32 %v4272, %v4124
    %v4275 = vmax.f32 %v4273, %v4128
    %v4276 = vmax.f32 %v4274, %v4132
    %v4277 = vmax.f32 %v4275, %v4136
    %v4278 = vsel %vm4153, %v4140, -inf
    %v4279 = vmax.f32 %v4276, %v4278
    %v4280 = vmax.f32 %v4279, %v4277
    %v4281 = vrot.slane %v4280, 4
    %v4282 = vmax.f32 %v4280, %v4281
    %v4283 = vrot.slane %v4282, 2
    %v4284 = vmax.f32 %v4282, %v4283
    %v4285 = vrot.slane %v4284, 1
    %v4286 = vmax.f32 %v4284, %v4285
    %v4287 = vmin.f32 %v3522, %v3530
    %v4288 = vmin.f32 %v3526, %v3534
    %v4289 = vmin.f32 %v4287, %v3538
    %v4290 = vmin.f32 %v4288, %v3542
    %v4291 = vmin.f32 %v4289, %v3546
    %v4292 = vmin.f32 %v4290, %v3550
    %v4293 = vmin.f32 %v4291, %v3554
    %v4294 = vmin.f32 %v4292, %v3558
    %v4295 = vmin.f32 %v4293, %v3562
    %v4296 = vmin.f32 %v4294, %v3566
    %v4297 = vsel %vm4153, %v3570, inf
    %v4298 = vmin.f32 %v4295, %v4297
    %v4299 = vmin.f32 %v4298, %v4296
    %v4300 = vrot.slane %v4299, 4
    %v4301 = vmin.f32 %v4299, %v4300
    %v4302 = vrot.slane %v4301, 2
    %v4303 = vmin.f32 %v4301, %v4302
    %v4304 = vrot.slane %v4303, 1
    %v4305 = vmin.f32 %v4303, %v4304
    %v4306 = vmin.f32 %v4092, %v4100
    %v4307 = vmin.f32 %v4096, %v4104
    %v4308 = vmin.f32 %v4306, %v4108
    %v4309 = vmin.f32 %v4307, %v4112
    %v4310 = vmin.f32 %v4308, %v4116
    %v4311 = vmin.f32 %v4309, %v4120
    %v4312 = vmin.f32 %v4310, %v4124
    %v4313 = vmin.f32 %v4311, %v4128
    %v4314 = vmin.f32 %v4312, %v4132
    %v4315 = vmin.f32 %v4313, %v4136
    %v4316 = vsel %vm4153, %v4140, inf
    %v4317 = vmin.f32 %v4314, %v4316
    %v4318 = vmin.f32 %v4317, %v4315
    %v4319 = vrot.slane %v4318, 4
    %v4320 = vmin.f32 %v4318, %v4319
    %v4321 = vrot.slane %v4320, 2
    %v4322 = vmin.f32 %v4320, %v4321
    %v4323 = vrot.slane %v4322, 1
    %v4324 = vmin.f32 %v4322, %v4323
    %s4325 = scalar_lea.vmem %s1, 104
    %v4326 = vld [vmem:[%s4325] sm:$0xff]
    %v4327 = vld [vmem:[%s4325 + $0x8] sm:$0xff]
    %v4328 = vld [vmem:[%s4325 + $0x10] sm:$0xff]
    %v4329 = vld [vmem:[%s4325 + $0x18] sm:$0xff]
    %v4330 = vld [vmem:[%s4325 + $0x20] sm:$0xff]
    %v4331 = vld [vmem:[%s4325 + $0x28] sm:$0xff]
    %v4332 = vld [vmem:[%s4325 + $0x30] sm:$0xff]
    %v4333 = vld [vmem:[%s4325 + $0x38] sm:$0xff]
    %v4334 = vld [vmem:[%s4325 + $0x40] sm:$0xff]
    %v4335 = vld [vmem:[%s4325 + $0x48] sm:$0xff]
    %v4336 = vld [vmem:[%s4325 + $0x50] sm:$0xff]
    %v4337 = vld [vmem:[%s4325 + $0x58] sm:$0xff]
    %v4338 = vld [vmem:[%s4325 + $0x60] sm:$0x3f]
    %v4340 = vsel %vm2955, %v4326, 0
    %v4343 = vsel %vm2955, %v4327, 0
    %v4346 = vsel %vm2955, %v4328, 0
    %v4349 = vsel %vm2955, %v4329, 0
    %v4352 = vsel %vm2955, %v4330, 0
    %v4355 = vsel %vm2955, %v4331, 0
    %v4358 = vsel %vm2955, %v4332, 0
    %v4361 = vsel %vm2955, %v4333, 0
    %v4364 = vsel %vm2955, %v4334, 0
    %v4367 = vsel %vm2955, %v4335, 0
    %v4370 = vsel %vm2955, %v4336, 0
    %v4373 = vsel %vm2955, %v4337, 0
    %v4376 = vsel %vm2955, %v4338, 0
    %4378 = vmatpush.msra.mxu0 0.0
    %4379 = vmatpush.msra.mxu0 0.0
    %4380 = vmatpush.msra.mxu0 0.0
    %4381 = vmatpush.msra.mxu0 0.0
    %4382 = vmatpush.msra.mxu0 0.0
    %4383 = vmatpush.msra.mxu0 0.0
    %4384 = vmatpush.msra.mxu0 0.0
    %4385 = vmatpush.msra.mxu0 0.0
    %4386 = vmatpush.msra.mxu0 0.0
    %4387 = vmatpush.msra.mxu0 0.0
    %4388 = vmatpush.msra.mxu0 0.0
    %v4389 = vand.u32 %v2997, 4294901760
    %4390 = vmatpush.msra.mxu0 %v4389
    %v4391 = vand.u32 %v2938, 4294901760
    %4392 = vmatpush.msra.mxu0 %v4391
    %v4393 = vand.u32 %v2936, 4294901760
    %4394 = vmatpush.msra.mxu0 %v4393
    %v4395 = vand.u32 %v2934, 4294901760
    %4396 = vmatpush.msra.mxu0 %v4395
    %v4397 = vand.u32 %v2932, 4294901760
    %4398 = vmatpush.msra.mxu0 %v4397
    %v4399 = vand.u32 %v4340, 4294901760
    %v4400 = vsub.f32 %v4340, %v4399
    %v4401 = vand.u32 %v4400, 4294901760
    %v4402 = vsub.f32 %v4400, %v4401
    %v4403 = vand.u32 %v4402, 4294901760
    %4404 = vmatmul.f32.gmra.mxu0 %v4403
    %v4405 = vpop.f32.mrf.mxu0
    %v4406 = vadd.f32 0.0, %v4405
    %v4407 = vand.u32 %v4343, 4294901760
    %v4408 = vsub.f32 %v4343, %v4407
    %v4409 = vand.u32 %v4408, 4294901760
    %v4410 = vsub.f32 %v4408, %v4409
    %v4411 = vand.u32 %v4410, 4294901760
    %4412 = vmatmul.f32.gmra.mxu0 %v4411
    %v4413 = vpop.f32.mrf.mxu0
    %v4414 = vadd.f32 0.0, %v4413
    %v4415 = vand.u32 %v4346, 4294901760
    %v4416 = vsub.f32 %v4346, %v4415
    %v4417 = vand.u32 %v4416, 4294901760
    %v4418 = vsub.f32 %v4416, %v4417
    %v4419 = vand.u32 %v4418, 4294901760
    %4420 = vmatmul.f32.gmra.mxu0 %v4419
    %v4421 = vpop.f32.mrf.mxu0
    %v4422 = vadd.f32 0.0, %v4421
    %v4423 = vand.u32 %v4349, 4294901760
    %v4424 = vsub.f32 %v4349, %v4423
    %v4425 = vand.u32 %v4424, 4294901760
    %v4426 = vsub.f32 %v4424, %v4425
    %v4427 = vand.u32 %v4426, 4294901760
    %4428 = vmatmul.f32.gmra.mxu0 %v4427
    %v4429 = vpop.f32.mrf.mxu0
    %v4430 = vadd.f32 0.0, %v4429
    %v4431 = vand.u32 %v4352, 4294901760
    %v4432 = vsub.f32 %v4352, %v4431
    %v4433 = vand.u32 %v4432, 4294901760
    %v4434 = vsub.f32 %v4432, %v4433
    %v4435 = vand.u32 %v4434, 4294901760
    %4436 = vmatmul.f32.gmra.mxu0 %v4435
    %v4437 = vpop.f32.mrf.mxu0
    %v4438 = vadd.f32 0.0, %v4437
    %v4439 = vand.u32 %v4355, 4294901760
    %v4440 = vsub.f32 %v4355, %v4439
    %v4441 = vand.u32 %v4440, 4294901760
    %v4442 = vsub.f32 %v4440, %v4441
    %v4443 = vand.u32 %v4442, 4294901760
    %4444 = vmatmul.f32.gmra.mxu0 %v4443
    %v4445 = vpop.f32.mrf.mxu0
    %v4446 = vadd.f32 0.0, %v4445
    %v4447 = vand.u32 %v4358, 4294901760
    %v4448 = vsub.f32 %v4358, %v4447
    %v4449 = vand.u32 %v4448, 4294901760
    %v4450 = vsub.f32 %v4448, %v4449
    %v4451 = vand.u32 %v4450, 4294901760
    %4452 = vmatmul.f32.gmra.mxu0 %v4451
    %v4453 = vpop.f32.mrf.mxu0
    %v4454 = vadd.f32 0.0, %v4453
    %v4455 = vand.u32 %v4361, 4294901760
    %v4456 = vsub.f32 %v4361, %v4455
    %v4457 = vand.u32 %v4456, 4294901760
    %v4458 = vsub.f32 %v4456, %v4457
    %v4459 = vand.u32 %v4458, 4294901760
    %4460 = vmatmul.f32.gmra.mxu0 %v4459
    %v4461 = vpop.f32.mrf.mxu0
    %v4462 = vadd.f32 0.0, %v4461
    %v4463 = vand.u32 %v4364, 4294901760
    %v4464 = vsub.f32 %v4364, %v4463
    %v4465 = vand.u32 %v4464, 4294901760
    %v4466 = vsub.f32 %v4464, %v4465
    %v4467 = vand.u32 %v4466, 4294901760
    %4468 = vmatmul.f32.gmra.mxu0 %v4467
    %v4469 = vpop.f32.mrf.mxu0
    %v4470 = vadd.f32 0.0, %v4469
    %v4471 = vand.u32 %v4367, 4294901760
    %v4472 = vsub.f32 %v4367, %v4471
    %v4473 = vand.u32 %v4472, 4294901760
    %v4474 = vsub.f32 %v4472, %v4473
    %v4475 = vand.u32 %v4474, 4294901760
    %4476 = vmatmul.f32.gmra.mxu0 %v4475
    %v4477 = vpop.f32.mrf.mxu0
    %v4478 = vadd.f32 0.0, %v4477
    %v4479 = vand.u32 %v4370, 4294901760
    %v4480 = vsub.f32 %v4370, %v4479
    %v4481 = vand.u32 %v4480, 4294901760
    %v4482 = vsub.f32 %v4480, %v4481
    %v4483 = vand.u32 %v4482, 4294901760
    %4484 = vmatmul.f32.gmra.mxu0 %v4483
    %v4485 = vpop.f32.mrf.mxu0
    %v4486 = vadd.f32 0.0, %v4485
    %v4487 = vand.u32 %v4373, 4294901760
    %v4488 = vsub.f32 %v4373, %v4487
    %v4489 = vand.u32 %v4488, 4294901760
    %v4490 = vsub.f32 %v4488, %v4489
    %v4491 = vand.u32 %v4490, 4294901760
    %4492 = vmatmul.f32.gmra.mxu0 %v4491
    %v4493 = vpop.f32.mrf.mxu0
    %v4494 = vadd.f32 0.0, %v4493
    %v4495 = vand.u32 %v4376, 4294901760
    %v4496 = vsub.f32 %v4376, %v4495
    %v4497 = vand.u32 %v4496, 4294901760
    %v4498 = vsub.f32 %v4496, %v4497
    %v4499 = vand.u32 %v4498, 4294901760
    %4500 = vmatmul.f32.gmra.mxu0 %v4499
    %v4501 = vpop.f32.mrf.mxu0
    %v4502 = vadd.f32 0.0, %v4501
    %4503 = vdwg.mxu0
    %4504 = vmatpush.msra.mxu0 0.0
    %4505 = vmatpush.msra.mxu0 0.0
    %4506 = vmatpush.msra.mxu0 0.0
    %4507 = vmatpush.msra.mxu0 0.0
    %4508 = vmatpush.msra.mxu0 0.0
    %4509 = vmatpush.msra.mxu0 0.0
    %4510 = vmatpush.msra.mxu0 0.0
    %4511 = vmatpush.msra.mxu0 0.0
    %4512 = vmatpush.msra.mxu0 0.0
    %4513 = vmatpush.msra.mxu0 0.0
    %4514 = vmatpush.msra.mxu0 0.0
    %v4515 = vand.u32 %v2997, 4294901760
    %v4516 = vsub.f32 %v2997, %v4515
    %v4517 = vand.u32 %v4516, 4294901760
    %v4518 = vsub.f32 %v4516, %v4517
    %v4519 = vand.u32 %v4518, 4294901760
    %4520 = vmatpush.msra.mxu0 %v4519
    %v4521 = vand.u32 %v2938, 4294901760
    %v4522 = vsub.f32 %v2938, %v4521
    %v4523 = vand.u32 %v4522, 4294901760
    %v4524 = vsub.f32 %v4522, %v4523
    %v4525 = vand.u32 %v4524, 4294901760
    %4526 = vmatpush.msra.mxu0 %v4525
    %v4527 = vand.u32 %v2936, 4294901760
    %v4528 = vsub.f32 %v2936, %v4527
    %v4529 = vand.u32 %v4528, 4294901760
    %v4530 = vsub.f32 %v4528, %v4529
    %v4531 = vand.u32 %v4530, 4294901760
    %4532 = vmatpush.msra.mxu0 %v4531
    %v4533 = vand.u32 %v2934, 4294901760
    %v4534 = vsub.f32 %v2934, %v4533
    %v4535 = vand.u32 %v4534, 4294901760
    %v4536 = vsub.f32 %v4534, %v4535
    %v4537 = vand.u32 %v4536, 4294901760
    %4538 = vmatpush.msra.mxu0 %v4537
    %v4539 = vand.u32 %v2932, 4294901760
    %v4540 = vsub.f32 %v2932, %v4539
    %v4541 = vand.u32 %v4540, 4294901760
    %v4542 = vsub.f32 %v4540, %v4541
    %v4543 = vand.u32 %v4542, 4294901760
    %4544 = vmatpush.msra.mxu0 %v4543
    %v4545 = vand.u32 %v4340, 4294901760
    %4546 = vmatmul.f32.gmra.mxu0 %v4545
    %v4547 = vpop.f32.mrf.mxu0
    %v4548 = vadd.f32 %v4406, %v4547
    %v4549 = vand.u32 %v4343, 4294901760
    %4550 = vmatmul.f32.gmra.mxu0 %v4549
    %v4551 = vpop.f32.mrf.mxu0
    %v4552 = vadd.f32 %v4414, %v4551
    %v4553 = vand.u32 %v4346, 4294901760
    %4554 = vmatmul.f32.gmra.mxu0 %v4553
    %v4555 = vpop.f32.mrf.mxu0
    %v4556 = vadd.f32 %v4422, %v4555
    %v4557 = vand.u32 %v4349, 4294901760
    %4558 = vmatmul.f32.gmra.mxu0 %v4557
    %v4559 = vpop.f32.mrf.mxu0
    %v4560 = vadd.f32 %v4430, %v4559
    %v4561 = vand.u32 %v4352, 4294901760
    %4562 = vmatmul.f32.gmra.mxu0 %v4561
    %v4563 = vpop.f32.mrf.mxu0
    %v4564 = vadd.f32 %v4438, %v4563
    %v4565 = vand.u32 %v4355, 4294901760
    %4566 = vmatmul.f32.gmra.mxu0 %v4565
    %v4567 = vpop.f32.mrf.mxu0
    %v4568 = vadd.f32 %v4446, %v4567
    %v4569 = vand.u32 %v4358, 4294901760
    %4570 = vmatmul.f32.gmra.mxu0 %v4569
    %v4571 = vpop.f32.mrf.mxu0
    %v4572 = vadd.f32 %v4454, %v4571
    %v4573 = vand.u32 %v4361, 4294901760
    %4574 = vmatmul.f32.gmra.mxu0 %v4573
    %v4575 = vpop.f32.mrf.mxu0
    %v4576 = vadd.f32 %v4462, %v4575
    %v4577 = vand.u32 %v4364, 4294901760
    %4578 = vmatmul.f32.gmra.mxu0 %v4577
    %v4579 = vpop.f32.mrf.mxu0
    %v4580 = vadd.f32 %v4470, %v4579
    %v4581 = vand.u32 %v4367, 4294901760
    %4582 = vmatmul.f32.gmra.mxu0 %v4581
    %v4583 = vpop.f32.mrf.mxu0
    %v4584 = vadd.f32 %v4478, %v4583
    %v4585 = vand.u32 %v4370, 4294901760
    %4586 = vmatmul.f32.gmra.mxu0 %v4585
    %v4587 = vpop.f32.mrf.mxu0
    %v4588 = vadd.f32 %v4486, %v4587
    %v4589 = vand.u32 %v4373, 4294901760
    %4590 = vmatmul.f32.gmra.mxu0 %v4589
    %v4591 = vpop.f32.mrf.mxu0
    %v4592 = vadd.f32 %v4494, %v4591
    %v4593 = vand.u32 %v4376, 4294901760
    %4594 = vmatmul.f32.gmra.mxu0 %v4593
    %v4595 = vpop.f32.mrf.mxu0
    %v4596 = vadd.f32 %v4502, %v4595
    %4597 = vdwg.mxu0
    %4598 = vmatpush.msra.mxu0 0.0
    %4599 = vmatpush.msra.mxu0 0.0
    %4600 = vmatpush.msra.mxu0 0.0
    %4601 = vmatpush.msra.mxu0 0.0
    %4602 = vmatpush.msra.mxu0 0.0
    %4603 = vmatpush.msra.mxu0 0.0
    %4604 = vmatpush.msra.mxu0 0.0
    %4605 = vmatpush.msra.mxu0 0.0
    %4606 = vmatpush.msra.mxu0 0.0
    %4607 = vmatpush.msra.mxu0 0.0
    %4608 = vmatpush.msra.mxu0 0.0
    %v4609 = vand.u32 %v2997, 4294901760
    %v4610 = vsub.f32 %v2997, %v4609
    %4611 = vmatpush.msra.mxu0 %v4610
    %v4612 = vand.u32 %v2938, 4294901760
    %v4613 = vsub.f32 %v2938, %v4612
    %4614 = vmatpush.msra.mxu0 %v4613
    %v4615 = vand.u32 %v2936, 4294901760
    %v4616 = vsub.f32 %v2936, %v4615
    %4617 = vmatpush.msra.mxu0 %v4616
    %v4618 = vand.u32 %v2934, 4294901760
    %v4619 = vsub.f32 %v2934, %v4618
    %4620 = vmatpush.msra.mxu0 %v4619
    %v4621 = vand.u32 %v2932, 4294901760
    %v4622 = vsub.f32 %v2932, %v4621
    %4623 = vmatpush.msra.mxu0 %v4622
    %v4624 = vand.u32 %v4340, 4294901760
    %v4625 = vsub.f32 %v4340, %v4624
    %4626 = vmatmul.f32.gmra.mxu0 %v4625
    %v4627 = vpop.f32.mrf.mxu0
    %v4628 = vadd.f32 %v4548, %v4627
    %v4629 = vand.u32 %v4343, 4294901760
    %v4630 = vsub.f32 %v4343, %v4629
    %4631 = vmatmul.f32.gmra.mxu0 %v4630
    %v4632 = vpop.f32.mrf.mxu0
    %v4633 = vadd.f32 %v4552, %v4632
    %v4634 = vand.u32 %v4346, 4294901760
    %v4635 = vsub.f32 %v4346, %v4634
    %4636 = vmatmul.f32.gmra.mxu0 %v4635
    %v4637 = vpop.f32.mrf.mxu0
    %v4638 = vadd.f32 %v4556, %v4637
    %v4639 = vand.u32 %v4349, 4294901760
    %v4640 = vsub.f32 %v4349, %v4639
    %4641 = vmatmul.f32.gmra.mxu0 %v4640
    %v4642 = vpop.f32.mrf.mxu0
    %v4643 = vadd.f32 %v4560, %v4642
    %v4644 = vand.u32 %v4352, 4294901760
    %v4645 = vsub.f32 %v4352, %v4644
    %4646 = vmatmul.f32.gmra.mxu0 %v4645
    %v4647 = vpop.f32.mrf.mxu0
    %v4648 = vadd.f32 %v4564, %v4647
    %v4649 = vand.u32 %v4355, 4294901760
    %v4650 = vsub.f32 %v4355, %v4649
    %4651 = vmatmul.f32.gmra.mxu0 %v4650
    %v4652 = vpop.f32.mrf.mxu0
    %v4653 = vadd.f32 %v4568, %v4652
    %v4654 = vand.u32 %v4358, 4294901760
    %v4655 = vsub.f32 %v4358, %v4654
    %4656 = vmatmul.f32.gmra.mxu0 %v4655
    %v4657 = vpop.f32.mrf.mxu0
    %v4658 = vadd.f32 %v4572, %v4657
    %v4659 = vand.u32 %v4361, 4294901760
    %v4660 = vsub.f32 %v4361, %v4659
    %4661 = vmatmul.f32.gmra.mxu0 %v4660
    %v4662 = vpop.f32.mrf.mxu0
    %v4663 = vadd.f32 %v4576, %v4662
    %v4664 = vand.u32 %v4364, 4294901760
    %v4665 = vsub.f32 %v4364, %v4664
    %4666 = vmatmul.f32.gmra.mxu0 %v4665
    %v4667 = vpop.f32.mrf.mxu0
    %v4668 = vadd.f32 %v4580, %v4667
    %v4669 = vand.u32 %v4367, 4294901760
    %v4670 = vsub.f32 %v4367, %v4669
    %4671 = vmatmul.f32.gmra.mxu0 %v4670
    %v4672 = vpop.f32.mrf.mxu0
    %v4673 = vadd.f32 %v4584, %v4672
    %v4674 = vand.u32 %v4370, 4294901760
    %v4675 = vsub.f32 %v4370, %v4674
    %4676 = vmatmul.f32.gmra.mxu0 %v4675
    %v4677 = vpop.f32.mrf.mxu0
    %v4678 = vadd.f32 %v4588, %v4677
    %v4679 = vand.u32 %v4373, 4294901760
    %v4680 = vsub.f32 %v4373, %v4679
    %4681 = vmatmul.f32.gmra.mxu0 %v4680
    %v4682 = vpop.f32.mrf.mxu0
    %v4683 = vadd.f32 %v4592, %v4682
    %v4684 = vand.u32 %v4376, 4294901760
    %v4685 = vsub.f32 %v4376, %v4684
    %4686 = vmatmul.f32.gmra.mxu0 %v4685
    %v4687 = vpop.f32.mrf.mxu0
    %v4688 = vadd.f32 %v4596, %v4687
    %4689 = vdwg.mxu0
    %4690 = vmatpush.msra.mxu0 0.0
    %4691 = vmatpush.msra.mxu0 0.0
    %4692 = vmatpush.msra.mxu0 0.0
    %4693 = vmatpush.msra.mxu0 0.0
    %4694 = vmatpush.msra.mxu0 0.0
    %4695 = vmatpush.msra.mxu0 0.0
    %4696 = vmatpush.msra.mxu0 0.0
    %4697 = vmatpush.msra.mxu0 0.0
    %4698 = vmatpush.msra.mxu0 0.0
    %4699 = vmatpush.msra.mxu0 0.0
    %4700 = vmatpush.msra.mxu0 0.0
    %v4701 = vand.u32 %v2997, 4294901760
    %4702 = vmatpush.msra.mxu0 %v4701
    %v4703 = vand.u32 %v2938, 4294901760
    %4704 = vmatpush.msra.mxu0 %v4703
    %v4705 = vand.u32 %v2936, 4294901760
    %4706 = vmatpush.msra.mxu0 %v4705
    %v4707 = vand.u32 %v2934, 4294901760
    %4708 = vmatpush.msra.mxu0 %v4707
    %v4709 = vand.u32 %v2932, 4294901760
    %4710 = vmatpush.msra.mxu0 %v4709
    %v4711 = vand.u32 %v4340, 4294901760
    %v4712 = vsub.f32 %v4340, %v4711
    %v4713 = vand.u32 %v4712, 4294901760
    %4714 = vmatmul.f32.gmra.mxu0 %v4713
    %v4715 = vpop.f32.mrf.mxu0
    %v4716 = vadd.f32 %v4628, %v4715
    %v4717 = vand.u32 %v4343, 4294901760
    %v4718 = vsub.f32 %v4343, %v4717
    %v4719 = vand.u32 %v4718, 4294901760
    %4720 = vmatmul.f32.gmra.mxu0 %v4719
    %v4721 = vpop.f32.mrf.mxu0
    %v4722 = vadd.f32 %v4633, %v4721
    %v4723 = vand.u32 %v4346, 4294901760
    %v4724 = vsub.f32 %v4346, %v4723
    %v4725 = vand.u32 %v4724, 4294901760
    %4726 = vmatmul.f32.gmra.mxu0 %v4725
    %v4727 = vpop.f32.mrf.mxu0
    %v4728 = vadd.f32 %v4638, %v4727
    %v4729 = vand.u32 %v4349, 4294901760
    %v4730 = vsub.f32 %v4349, %v4729
    %v4731 = vand.u32 %v4730, 4294901760
    %4732 = vmatmul.f32.gmra.mxu0 %v4731
    %v4733 = vpop.f32.mrf.mxu0
    %v4734 = vadd.f32 %v4643, %v4733
    %v4735 = vand.u32 %v4352, 4294901760
    %v4736 = vsub.f32 %v4352, %v4735
    %v4737 = vand.u32 %v4736, 4294901760
    %4738 = vmatmul.f32.gmra.mxu0 %v4737
    %v4739 = vpop.f32.mrf.mxu0
    %v4740 = vadd.f32 %v4648, %v4739
    %v4741 = vand.u32 %v4355, 4294901760
    %v4742 = vsub.f32 %v4355, %v4741
    %v4743 = vand.u32 %v4742, 4294901760
    %4744 = vmatmul.f32.gmra.mxu0 %v4743
    %v4745 = vpop.f32.mrf.mxu0
    %v4746 = vadd.f32 %v4653, %v4745
    %v4747 = vand.u32 %v4358, 4294901760
    %v4748 = vsub.f32 %v4358, %v4747
    %v4749 = vand.u32 %v4748, 4294901760
    %4750 = vmatmul.f32.gmra.mxu0 %v4749
    %v4751 = vpop.f32.mrf.mxu0
    %v4752 = vadd.f32 %v4658, %v4751
    %v4753 = vand.u32 %v4361, 4294901760
    %v4754 = vsub.f32 %v4361, %v4753
    %v4755 = vand.u32 %v4754, 4294901760
    %4756 = vmatmul.f32.gmra.mxu0 %v4755
    %v4757 = vpop.f32.mrf.mxu0
    %v4758 = vadd.f32 %v4663, %v4757
    %v4759 = vand.u32 %v4364, 4294901760
    %v4760 = vsub.f32 %v4364, %v4759
    %v4761 = vand.u32 %v4760, 4294901760
    %4762 = vmatmul.f32.gmra.mxu0 %v4761
    %v4763 = vpop.f32.mrf.mxu0
    %v4764 = vadd.f32 %v4668, %v4763
    %v4765 = vand.u32 %v4367, 4294901760
    %v4766 = vsub.f32 %v4367, %v4765
    %v4767 = vand.u32 %v4766, 4294901760
    %4768 = vmatmul.f32.gmra.mxu0 %v4767
    %v4769 = vpop.f32.mrf.mxu0
    %v4770 = vadd.f32 %v4673, %v4769
    %v4771 = vand.u32 %v4370, 4294901760
    %v4772 = vsub.f32 %v4370, %v4771
    %v4773 = vand.u32 %v4772, 4294901760
    %4774 = vmatmul.f32.gmra.mxu0 %v4773
    %v4775 = vpop.f32.mrf.mxu0
    %v4776 = vadd.f32 %v4678, %v4775
    %v4777 = vand.u32 %v4373, 4294901760
    %v4778 = vsub.f32 %v4373, %v4777
    %v4779 = vand.u32 %v4778, 4294901760
    %4780 = vmatmul.f32.gmra.mxu0 %v4779
    %v4781 = vpop.f32.mrf.mxu0
    %v4782 = vadd.f32 %v4683, %v4781
    %v4783 = vand.u32 %v4376, 4294901760
    %v4784 = vsub.f32 %v4376, %v4783
    %v4785 = vand.u32 %v4784, 4294901760
    %4786 = vmatmul.f32.gmra.mxu0 %v4785
    %v4787 = vpop.f32.mrf.mxu0
    %v4788 = vadd.f32 %v4688, %v4787
    %4789 = vdwg.mxu0
    %4790 = vmatpush.msra.mxu0 0.0
    %4791 = vmatpush.msra.mxu0 0.0
    %4792 = vmatpush.msra.mxu0 0.0
    %4793 = vmatpush.msra.mxu0 0.0
    %4794 = vmatpush.msra.mxu0 0.0
    %4795 = vmatpush.msra.mxu0 0.0
    %4796 = vmatpush.msra.mxu0 0.0
    %4797 = vmatpush.msra.mxu0 0.0
    %4798 = vmatpush.msra.mxu0 0.0
    %4799 = vmatpush.msra.mxu0 0.0
    %4800 = vmatpush.msra.mxu0 0.0
    %v4801 = vand.u32 %v2997, 4294901760
    %v4802 = vsub.f32 %v2997, %v4801
    %v4803 = vand.u32 %v4802, 4294901760
    %4804 = vmatpush.msra.mxu0 %v4803
    %v4805 = vand.u32 %v2938, 4294901760
    %v4806 = vsub.f32 %v2938, %v4805
    %v4807 = vand.u32 %v4806, 4294901760
    %4808 = vmatpush.msra.mxu0 %v4807
    %v4809 = vand.u32 %v2936, 4294901760
    %v4810 = vsub.f32 %v2936, %v4809
    %v4811 = vand.u32 %v4810, 4294901760
    %4812 = vmatpush.msra.mxu0 %v4811
    %v4813 = vand.u32 %v2934, 4294901760
    %v4814 = vsub.f32 %v2934, %v4813
    %v4815 = vand.u32 %v4814, 4294901760
    %4816 = vmatpush.msra.mxu0 %v4815
    %v4817 = vand.u32 %v2932, 4294901760
    %v4818 = vsub.f32 %v2932, %v4817
    %v4819 = vand.u32 %v4818, 4294901760
    %4820 = vmatpush.msra.mxu0 %v4819
    %v4821 = vand.u32 %v4340, 4294901760
    %4822 = vmatmul.f32.gmra.mxu0 %v4821
    %v4823 = vpop.f32.mrf.mxu0
    %v4824 = vadd.f32 %v4716, %v4823
    %v4825 = vand.u32 %v4343, 4294901760
    %4826 = vmatmul.f32.gmra.mxu0 %v4825
    %v4827 = vpop.f32.mrf.mxu0
    %v4828 = vadd.f32 %v4722, %v4827
    %v4829 = vand.u32 %v4346, 4294901760
    %4830 = vmatmul.f32.gmra.mxu0 %v4829
    %v4831 = vpop.f32.mrf.mxu0
    %v4832 = vadd.f32 %v4728, %v4831
    %v4833 = vand.u32 %v4349, 4294901760
    %4834 = vmatmul.f32.gmra.mxu0 %v4833
    %v4835 = vpop.f32.mrf.mxu0
    %v4836 = vadd.f32 %v4734, %v4835
    %v4837 = vand.u32 %v4352, 4294901760
    %4838 = vmatmul.f32.gmra.mxu0 %v4837
    %v4839 = vpop.f32.mrf.mxu0
    %v4840 = vadd.f32 %v4740, %v4839
    %v4841 = vand.u32 %v4355, 4294901760
    %4842 = vmatmul.f32.gmra.mxu0 %v4841
    %v4843 = vpop.f32.mrf.mxu0
    %v4844 = vadd.f32 %v4746, %v4843
    %v4845 = vand.u32 %v4358, 4294901760
    %4846 = vmatmul.f32.gmra.mxu0 %v4845
    %v4847 = vpop.f32.mrf.mxu0
    %v4848 = vadd.f32 %v4752, %v4847
    %v4849 = vand.u32 %v4361, 4294901760
    %4850 = vmatmul.f32.gmra.mxu0 %v4849
    %v4851 = vpop.f32.mrf.mxu0
    %v4852 = vadd.f32 %v4758, %v4851
    %v4853 = vand.u32 %v4364, 4294901760
    %4854 = vmatmul.f32.gmra.mxu0 %v4853
    %v4855 = vpop.f32.mrf.mxu0
    %v4856 = vadd.f32 %v4764, %v4855
    %v4857 = vand.u32 %v4367, 4294901760
    %4858 = vmatmul.f32.gmra.mxu0 %v4857
    %v4859 = vpop.f32.mrf.mxu0
    %v4860 = vadd.f32 %v4770, %v4859
    %v4861 = vand.u32 %v4370, 4294901760
    %4862 = vmatmul.f32.gmra.mxu0 %v4861
    %v4863 = vpop.f32.mrf.mxu0
    %v4864 = vadd.f32 %v4776, %v4863
    %v4865 = vand.u32 %v4373, 4294901760
    %4866 = vmatmul.f32.gmra.mxu0 %v4865
    %v4867 = vpop.f32.mrf.mxu0
    %v4868 = vadd.f32 %v4782, %v4867
    %v4869 = vand.u32 %v4376, 4294901760
    %4870 = vmatmul.f32.gmra.mxu0 %v4869
    %v4871 = vpop.f32.mrf.mxu0
    %v4872 = vadd.f32 %v4788, %v4871
    %4873 = vdwg.mxu0
    %4874 = vmatpush.msra.mxu0 0.0
    %4875 = vmatpush.msra.mxu0 0.0
    %4876 = vmatpush.msra.mxu0 0.0
    %4877 = vmatpush.msra.mxu0 0.0
    %4878 = vmatpush.msra.mxu0 0.0
    %4879 = vmatpush.msra.mxu0 0.0
    %4880 = vmatpush.msra.mxu0 0.0
    %4881 = vmatpush.msra.mxu0 0.0
    %4882 = vmatpush.msra.mxu0 0.0
    %4883 = vmatpush.msra.mxu0 0.0
    %4884 = vmatpush.msra.mxu0 0.0
    %v4885 = vand.u32 %v2997, 4294901760
    %4886 = vmatpush.msra.mxu0 %v4885
    %v4887 = vand.u32 %v2938, 4294901760
    %4888 = vmatpush.msra.mxu0 %v4887
    %v4889 = vand.u32 %v2936, 4294901760
    %4890 = vmatpush.msra.mxu0 %v4889
    %v4891 = vand.u32 %v2934, 4294901760
    %4892 = vmatpush.msra.mxu0 %v4891
    %v4893 = vand.u32 %v2932, 4294901760
    %4894 = vmatpush.msra.mxu0 %v4893
    %v4895 = vand.u32 %v4340, 4294901760
    %4896 = vmatmul.f32.gmra.mxu0 %v4895
    %v4897 = vpop.f32.mrf.mxu0
    %v4898 = vadd.f32 %v4824, %v4897
    %v4899 = vand.u32 %v4343, 4294901760
    %4900 = vmatmul.f32.gmra.mxu0 %v4899
    %v4901 = vpop.f32.mrf.mxu0
    %v4902 = vadd.f32 %v4828, %v4901
    %v4903 = vand.u32 %v4346, 4294901760
    %4904 = vmatmul.f32.gmra.mxu0 %v4903
    %v4905 = vpop.f32.mrf.mxu0
    %v4906 = vadd.f32 %v4832, %v4905
    %v4907 = vand.u32 %v4349, 4294901760
    %4908 = vmatmul.f32.gmra.mxu0 %v4907
    %v4909 = vpop.f32.mrf.mxu0
    %v4910 = vadd.f32 %v4836, %v4909
    %v4911 = vand.u32 %v4352, 4294901760
    %4912 = vmatmul.f32.gmra.mxu0 %v4911
    %v4913 = vpop.f32.mrf.mxu0
    %v4914 = vadd.f32 %v4840, %v4913
    %v4915 = vand.u32 %v4355, 4294901760
    %4916 = vmatmul.f32.gmra.mxu0 %v4915
    %v4917 = vpop.f32.mrf.mxu0
    %v4918 = vadd.f32 %v4844, %v4917
    %v4919 = vand.u32 %v4358, 4294901760
    %4920 = vmatmul.f32.gmra.mxu0 %v4919
    %v4921 = vpop.f32.mrf.mxu0
    %v4922 = vadd.f32 %v4848, %v4921
    %v4923 = vand.u32 %v4361, 4294901760
    %4924 = vmatmul.f32.gmra.mxu0 %v4923
    %v4925 = vpop.f32.mrf.mxu0
    %v4926 = vadd.f32 %v4852, %v4925
    %v4927 = vand.u32 %v4364, 4294901760
    %4928 = vmatmul.f32.gmra.mxu0 %v4927
    %v4929 = vpop.f32.mrf.mxu0
    %v4930 = vadd.f32 %v4856, %v4929
    %v4931 = vand.u32 %v4367, 4294901760
    %4932 = vmatmul.f32.gmra.mxu0 %v4931
    %v4933 = vpop.f32.mrf.mxu0
    %v4934 = vadd.f32 %v4860, %v4933
    %v4935 = vand.u32 %v4370, 4294901760
    %4936 = vmatmul.f32.gmra.mxu0 %v4935
    %v4937 = vpop.f32.mrf.mxu0
    %v4938 = vadd.f32 %v4864, %v4937
    %v4939 = vand.u32 %v4373, 4294901760
    %4940 = vmatmul.f32.gmra.mxu0 %v4939
    %v4941 = vpop.f32.mrf.mxu0
    %v4942 = vadd.f32 %v4868, %v4941
    %v4943 = vand.u32 %v4376, 4294901760
    %4944 = vmatmul.f32.gmra.mxu0 %v4943
    %v4945 = vpop.f32.mrf.mxu0
    %v4946 = vadd.f32 %v4872, %v4945
    %4947 = vdwg.mxu0
    %4948 = vmatpush.msra.mxu0 0.0
    %4949 = vmatpush.msra.mxu0 0.0
    %4950 = vmatpush.msra.mxu0 0.0
    %4951 = vmatpush.msra.mxu0 0.0
    %4952 = vmatpush.msra.mxu0 0.0
    %4953 = vmatpush.msra.mxu0 0.0
    %4954 = vmatpush.msra.mxu0 0.0
    %4955 = vmatpush.msra.mxu0 0.0
    %4956 = vmatpush.msra.mxu0 0.0
    %4957 = vmatpush.msra.mxu0 0.0
    %4958 = vmatpush.msra.mxu0 0.0
    %v4959 = vand.u32 %v3000, 4294901760
    %4960 = vmatpush.msra.mxu0 %v4959
    %v4961 = vand.u32 %v2939, 4294901760
    %4962 = vmatpush.msra.mxu0 %v4961
    %v4963 = vand.u32 %v2937, 4294901760
    %4964 = vmatpush.msra.mxu0 %v4963
    %v4965 = vand.u32 %v2935, 4294901760
    %4966 = vmatpush.msra.mxu0 %v4965
    %v4967 = vand.u32 %v2933, 4294901760
    %4968 = vmatpush.msra.mxu0 %v4967
    %v4969 = vand.u32 %v4340, 4294901760
    %v4970 = vsub.f32 %v4340, %v4969
    %v4971 = vand.u32 %v4970, 4294901760
    %v4972 = vsub.f32 %v4970, %v4971
    %v4973 = vand.u32 %v4972, 4294901760
    %4974 = vmatmul.f32.gmra.mxu0 %v4973
    %v4975 = vpop.f32.mrf.mxu0
    %v4976 = vadd.f32 0.0, %v4975
    %v4977 = vand.u32 %v4343, 4294901760
    %v4978 = vsub.f32 %v4343, %v4977
    %v4979 = vand.u32 %v4978, 4294901760
    %v4980 = vsub.f32 %v4978, %v4979
    %v4981 = vand.u32 %v4980, 4294901760
    %4982 = vmatmul.f32.gmra.mxu0 %v4981
    %v4983 = vpop.f32.mrf.mxu0
    %v4984 = vadd.f32 0.0, %v4983
    %v4985 = vand.u32 %v4346, 4294901760
    %v4986 = vsub.f32 %v4346, %v4985
    %v4987 = vand.u32 %v4986, 4294901760
    %v4988 = vsub.f32 %v4986, %v4987
    %v4989 = vand.u32 %v4988, 4294901760
    %4990 = vmatmul.f32.gmra.mxu0 %v4989
    %v4991 = vpop.f32.mrf.mxu0
    %v4992 = vadd.f32 0.0, %v4991
    %v4993 = vand.u32 %v4349, 4294901760
    %v4994 = vsub.f32 %v4349, %v4993
    %v4995 = vand.u32 %v4994, 4294901760
    %v4996 = vsub.f32 %v4994, %v4995
    %v4997 = vand.u32 %v4996, 4294901760
    %4998 = vmatmul.f32.gmra.mxu0 %v4997
    %v4999 = vpop.f32.mrf.mxu0
    %v5000 = vadd.f32 0.0, %v4999
    %v5001 = vand.u32 %v4352, 4294901760
    %v5002 = vsub.f32 %v4352, %v5001
    %v5003 = vand.u32 %v5002, 4294901760
    %v5004 = vsub.f32 %v5002, %v5003
    %v5005 = vand.u32 %v5004, 4294901760
    %5006 = vmatmul.f32.gmra.mxu0 %v5005
    %v5007 = vpop.f32.mrf.mxu0
    %v5008 = vadd.f32 0.0, %v5007
    %v5009 = vand.u32 %v4355, 4294901760
    %v5010 = vsub.f32 %v4355, %v5009
    %v5011 = vand.u32 %v5010, 4294901760
    %v5012 = vsub.f32 %v5010, %v5011
    %v5013 = vand.u32 %v5012, 4294901760
    %5014 = vmatmul.f32.gmra.mxu0 %v5013
    %v5015 = vpop.f32.mrf.mxu0
    %v5016 = vadd.f32 0.0, %v5015
    %v5017 = vand.u32 %v4358, 4294901760
    %v5018 = vsub.f32 %v4358, %v5017
    %v5019 = vand.u32 %v5018, 4294901760
    %v5020 = vsub.f32 %v5018, %v5019
    %v5021 = vand.u32 %v5020, 4294901760
    %5022 = vmatmul.f32.gmra.mxu0 %v5021
    %v5023 = vpop.f32.mrf.mxu0
    %v5024 = vadd.f32 0.0, %v5023
    %v5025 = vand.u32 %v4361, 4294901760
    %v5026 = vsub.f32 %v4361, %v5025
    %v5027 = vand.u32 %v5026, 4294901760
    %v5028 = vsub.f32 %v5026, %v5027
    %v5029 = vand.u32 %v5028, 4294901760
    %5030 = vmatmul.f32.gmra.mxu0 %v5029
    %v5031 = vpop.f32.mrf.mxu0
    %v5032 = vadd.f32 0.0, %v5031
    %v5033 = vand.u32 %v4364, 4294901760
    %v5034 = vsub.f32 %v4364, %v5033
    %v5035 = vand.u32 %v5034, 4294901760
    %v5036 = vsub.f32 %v5034, %v5035
    %v5037 = vand.u32 %v5036, 4294901760
    %5038 = vmatmul.f32.gmra.mxu0 %v5037
    %v5039 = vpop.f32.mrf.mxu0
    %v5040 = vadd.f32 0.0, %v5039
    %v5041 = vand.u32 %v4367, 4294901760
    %v5042 = vsub.f32 %v4367, %v5041
    %v5043 = vand.u32 %v5042, 4294901760
    %v5044 = vsub.f32 %v5042, %v5043
    %v5045 = vand.u32 %v5044, 4294901760
    %5046 = vmatmul.f32.gmra.mxu0 %v5045
    %v5047 = vpop.f32.mrf.mxu0
    %v5048 = vadd.f32 0.0, %v5047
    %v5049 = vand.u32 %v4370, 4294901760
    %v5050 = vsub.f32 %v4370, %v5049
    %v5051 = vand.u32 %v5050, 4294901760
    %v5052 = vsub.f32 %v5050, %v5051
    %v5053 = vand.u32 %v5052, 4294901760
    %5054 = vmatmul.f32.gmra.mxu0 %v5053
    %v5055 = vpop.f32.mrf.mxu0
    %v5056 = vadd.f32 0.0, %v5055
    %v5057 = vand.u32 %v4373, 4294901760
    %v5058 = vsub.f32 %v4373, %v5057
    %v5059 = vand.u32 %v5058, 4294901760
    %v5060 = vsub.f32 %v5058, %v5059
    %v5061 = vand.u32 %v5060, 4294901760
    %5062 = vmatmul.f32.gmra.mxu0 %v5061
    %v5063 = vpop.f32.mrf.mxu0
    %v5064 = vadd.f32 0.0, %v5063
    %v5065 = vand.u32 %v4376, 4294901760
    %v5066 = vsub.f32 %v4376, %v5065
    %v5067 = vand.u32 %v5066, 4294901760
    %v5068 = vsub.f32 %v5066, %v5067
    %v5069 = vand.u32 %v5068, 4294901760
    %5070 = vmatmul.f32.gmra.mxu0 %v5069
    %v5071 = vpop.f32.mrf.mxu0
    %v5072 = vadd.f32 0.0, %v5071
    %5073 = vdwg.mxu0
    %5074 = vmatpush.msra.mxu0 0.0
    %5075 = vmatpush.msra.mxu0 0.0
    %5076 = vmatpush.msra.mxu0 0.0
    %5077 = vmatpush.msra.mxu0 0.0
    %5078 = vmatpush.msra.mxu0 0.0
    %5079 = vmatpush.msra.mxu0 0.0
    %5080 = vmatpush.msra.mxu0 0.0
    %5081 = vmatpush.msra.mxu0 0.0
    %5082 = vmatpush.msra.mxu0 0.0
    %5083 = vmatpush.msra.mxu0 0.0
    %5084 = vmatpush.msra.mxu0 0.0
    %v5085 = vand.u32 %v3000, 4294901760
    %v5086 = vsub.f32 %v3000, %v5085
    %v5087 = vand.u32 %v5086, 4294901760
    %v5088 = vsub.f32 %v5086, %v5087
    %v5089 = vand.u32 %v5088, 4294901760
    %5090 = vmatpush.msra.mxu0 %v5089
    %v5091 = vand.u32 %v2939, 4294901760
    %v5092 = vsub.f32 %v2939, %v5091
    %v5093 = vand.u32 %v5092, 4294901760
    %v5094 = vsub.f32 %v5092, %v5093
    %v5095 = vand.u32 %v5094, 4294901760
    %5096 = vmatpush.msra.mxu0 %v5095
    %v5097 = vand.u32 %v2937, 4294901760
    %v5098 = vsub.f32 %v2937, %v5097
    %v5099 = vand.u32 %v5098, 4294901760
    %v5100 = vsub.f32 %v5098, %v5099
    %v5101 = vand.u32 %v5100, 4294901760
    %5102 = vmatpush.msra.mxu0 %v5101
    %v5103 = vand.u32 %v2935, 4294901760
    %v5104 = vsub.f32 %v2935, %v5103
    %v5105 = vand.u32 %v5104, 4294901760
    %v5106 = vsub.f32 %v5104, %v5105
    %v5107 = vand.u32 %v5106, 4294901760
    %5108 = vmatpush.msra.mxu0 %v5107
    %v5109 = vand.u32 %v2933, 4294901760
    %v5110 = vsub.f32 %v2933, %v5109
    %v5111 = vand.u32 %v5110, 4294901760
    %v5112 = vsub.f32 %v5110, %v5111
    %v5113 = vand.u32 %v5112, 4294901760
    %5114 = vmatpush.msra.mxu0 %v5113
    %v5115 = vand.u32 %v4340, 4294901760
    %5116 = vmatmul.f32.gmra.mxu0 %v5115
    %v5117 = vpop.f32.mrf.mxu0
    %v5118 = vadd.f32 %v4976, %v5117
    %v5119 = vand.u32 %v4343, 4294901760
    %5120 = vmatmul.f32.gmra.mxu0 %v5119
    %v5121 = vpop.f32.mrf.mxu0
    %v5122 = vadd.f32 %v4984, %v5121
    %v5123 = vand.u32 %v4346, 4294901760
    %5124 = vmatmul.f32.gmra.mxu0 %v5123
    %v5125 = vpop.f32.mrf.mxu0
    %v5126 = vadd.f32 %v4992, %v5125
    %v5127 = vand.u32 %v4349, 4294901760
    %5128 = vmatmul.f32.gmra.mxu0 %v5127
    %v5129 = vpop.f32.mrf.mxu0
    %v5130 = vadd.f32 %v5000, %v5129
    %v5131 = vand.u32 %v4352, 4294901760
    %5132 = vmatmul.f32.gmra.mxu0 %v5131
    %v5133 = vpop.f32.mrf.mxu0
    %v5134 = vadd.f32 %v5008, %v5133
    %v5135 = vand.u32 %v4355, 4294901760
    %5136 = vmatmul.f32.gmra.mxu0 %v5135
    %v5137 = vpop.f32.mrf.mxu0
    %v5138 = vadd.f32 %v5016, %v5137
    %v5139 = vand.u32 %v4358, 4294901760
    %5140 = vmatmul.f32.gmra.mxu0 %v5139
    %v5141 = vpop.f32.mrf.mxu0
    %v5142 = vadd.f32 %v5024, %v5141
    %v5143 = vand.u32 %v4361, 4294901760
    %5144 = vmatmul.f32.gmra.mxu0 %v5143
    %v5145 = vpop.f32.mrf.mxu0
    %v5146 = vadd.f32 %v5032, %v5145
    %v5147 = vand.u32 %v4364, 4294901760
    %5148 = vmatmul.f32.gmra.mxu0 %v5147
    %v5149 = vpop.f32.mrf.mxu0
    %v5150 = vadd.f32 %v5040, %v5149
    %v5151 = vand.u32 %v4367, 4294901760
    %5152 = vmatmul.f32.gmra.mxu0 %v5151
    %v5153 = vpop.f32.mrf.mxu0
    %v5154 = vadd.f32 %v5048, %v5153
    %v5155 = vand.u32 %v4370, 4294901760
    %5156 = vmatmul.f32.gmra.mxu0 %v5155
    %v5157 = vpop.f32.mrf.mxu0
    %v5158 = vadd.f32 %v5056, %v5157
    %v5159 = vand.u32 %v4373, 4294901760
    %5160 = vmatmul.f32.gmra.mxu0 %v5159
    %v5161 = vpop.f32.mrf.mxu0
    %v5162 = vadd.f32 %v5064, %v5161
    %v5163 = vand.u32 %v4376, 4294901760
    %5164 = vmatmul.f32.gmra.mxu0 %v5163
    %v5165 = vpop.f32.mrf.mxu0
    %v5166 = vadd.f32 %v5072, %v5165
    %5167 = vdwg.mxu0
    %5168 = vmatpush.msra.mxu0 0.0
    %5169 = vmatpush.msra.mxu0 0.0
    %5170 = vmatpush.msra.mxu0 0.0
    %5171 = vmatpush.msra.mxu0 0.0
    %5172 = vmatpush.msra.mxu0 0.0
    %5173 = vmatpush.msra.mxu0 0.0
    %5174 = vmatpush.msra.mxu0 0.0
    %5175 = vmatpush.msra.mxu0 0.0
    %5176 = vmatpush.msra.mxu0 0.0
    %5177 = vmatpush.msra.mxu0 0.0
    %5178 = vmatpush.msra.mxu0 0.0
    %v5179 = vand.u32 %v3000, 4294901760
    %v5180 = vsub.f32 %v3000, %v5179
    %5181 = vmatpush.msra.mxu0 %v5180
    %v5182 = vand.u32 %v2939, 4294901760
    %v5183 = vsub.f32 %v2939, %v5182
    %5184 = vmatpush.msra.mxu0 %v5183
    %v5185 = vand.u32 %v2937, 4294901760
    %v5186 = vsub.f32 %v2937, %v5185
    %5187 = vmatpush.msra.mxu0 %v5186
    %v5188 = vand.u32 %v2935, 4294901760
    %v5189 = vsub.f32 %v2935, %v5188
    %5190 = vmatpush.msra.mxu0 %v5189
    %v5191 = vand.u32 %v2933, 4294901760
    %v5192 = vsub.f32 %v2933, %v5191
    %5193 = vmatpush.msra.mxu0 %v5192
    %v5194 = vand.u32 %v4340, 4294901760
    %v5195 = vsub.f32 %v4340, %v5194
    %5196 = vmatmul.f32.gmra.mxu0 %v5195
    %v5197 = vpop.f32.mrf.mxu0
    %v5198 = vadd.f32 %v5118, %v5197
    %v5199 = vand.u32 %v4343, 4294901760
    %v5200 = vsub.f32 %v4343, %v5199
    %5201 = vmatmul.f32.gmra.mxu0 %v5200
    %v5202 = vpop.f32.mrf.mxu0
    %v5203 = vadd.f32 %v5122, %v5202
    %v5204 = vand.u32 %v4346, 4294901760
    %v5205 = vsub.f32 %v4346, %v5204
    %5206 = vmatmul.f32.gmra.mxu0 %v5205
    %v5207 = vpop.f32.mrf.mxu0
    %v5208 = vadd.f32 %v5126, %v5207
    %v5209 = vand.u32 %v4349, 4294901760
    %v5210 = vsub.f32 %v4349, %v5209
    %5211 = vmatmul.f32.gmra.mxu0 %v5210
    %v5212 = vpop.f32.mrf.mxu0
    %v5213 = vadd.f32 %v5130, %v5212
    %v5214 = vand.u32 %v4352, 4294901760
    %v5215 = vsub.f32 %v4352, %v5214
    %5216 = vmatmul.f32.gmra.mxu0 %v5215
    %v5217 = vpop.f32.mrf.mxu0
    %v5218 = vadd.f32 %v5134, %v5217
    %v5219 = vand.u32 %v4355, 4294901760
    %v5220 = vsub.f32 %v4355, %v5219
    %5221 = vmatmul.f32.gmra.mxu0 %v5220
    %v5222 = vpop.f32.mrf.mxu0
    %v5223 = vadd.f32 %v5138, %v5222
    %v5224 = vand.u32 %v4358, 4294901760
    %v5225 = vsub.f32 %v4358, %v5224
    %5226 = vmatmul.f32.gmra.mxu0 %v5225
    %v5227 = vpop.f32.mrf.mxu0
    %v5228 = vadd.f32 %v5142, %v5227
    %v5229 = vand.u32 %v4361, 4294901760
    %v5230 = vsub.f32 %v4361, %v5229
    %5231 = vmatmul.f32.gmra.mxu0 %v5230
    %v5232 = vpop.f32.mrf.mxu0
    %v5233 = vadd.f32 %v5146, %v5232
    %v5234 = vand.u32 %v4364, 4294901760
    %v5235 = vsub.f32 %v4364, %v5234
    %5236 = vmatmul.f32.gmra.mxu0 %v5235
    %v5237 = vpop.f32.mrf.mxu0
    %v5238 = vadd.f32 %v5150, %v5237
    %v5239 = vand.u32 %v4367, 4294901760
    %v5240 = vsub.f32 %v4367, %v5239
    %5241 = vmatmul.f32.gmra.mxu0 %v5240
    %v5242 = vpop.f32.mrf.mxu0
    %v5243 = vadd.f32 %v5154, %v5242
    %v5244 = vand.u32 %v4370, 4294901760
    %v5245 = vsub.f32 %v4370, %v5244
    %5246 = vmatmul.f32.gmra.mxu0 %v5245
    %v5247 = vpop.f32.mrf.mxu0
    %v5248 = vadd.f32 %v5158, %v5247
    %v5249 = vand.u32 %v4373, 4294901760
    %v5250 = vsub.f32 %v4373, %v5249
    %5251 = vmatmul.f32.gmra.mxu0 %v5250
    %v5252 = vpop.f32.mrf.mxu0
    %v5253 = vadd.f32 %v5162, %v5252
    %v5254 = vand.u32 %v4376, 4294901760
    %v5255 = vsub.f32 %v4376, %v5254
    %5256 = vmatmul.f32.gmra.mxu0 %v5255
    %v5257 = vpop.f32.mrf.mxu0
    %v5258 = vadd.f32 %v5166, %v5257
    %5259 = vdwg.mxu0
    %5260 = vmatpush.msra.mxu0 0.0
    %5261 = vmatpush.msra.mxu0 0.0
    %5262 = vmatpush.msra.mxu0 0.0
    %5263 = vmatpush.msra.mxu0 0.0
    %5264 = vmatpush.msra.mxu0 0.0
    %5265 = vmatpush.msra.mxu0 0.0
    %5266 = vmatpush.msra.mxu0 0.0
    %5267 = vmatpush.msra.mxu0 0.0
    %5268 = vmatpush.msra.mxu0 0.0
    %5269 = vmatpush.msra.mxu0 0.0
    %5270 = vmatpush.msra.mxu0 0.0
    %v5271 = vand.u32 %v3000, 4294901760
    %5272 = vmatpush.msra.mxu0 %v5271
    %v5273 = vand.u32 %v2939, 4294901760
    %5274 = vmatpush.msra.mxu0 %v5273
    %v5275 = vand.u32 %v2937, 4294901760
    %5276 = vmatpush.msra.mxu0 %v5275
    %v5277 = vand.u32 %v2935, 4294901760
    %5278 = vmatpush.msra.mxu0 %v5277
    %v5279 = vand.u32 %v2933, 4294901760
    %5280 = vmatpush.msra.mxu0 %v5279
    %v5281 = vand.u32 %v4340, 4294901760
    %v5282 = vsub.f32 %v4340, %v5281
    %v5283 = vand.u32 %v5282, 4294901760
    %5284 = vmatmul.f32.gmra.mxu0 %v5283
    %v5285 = vpop.f32.mrf.mxu0
    %v5286 = vadd.f32 %v5198, %v5285
    %v5287 = vand.u32 %v4343, 4294901760
    %v5288 = vsub.f32 %v4343, %v5287
    %v5289 = vand.u32 %v5288, 4294901760
    %5290 = vmatmul.f32.gmra.mxu0 %v5289
    %v5291 = vpop.f32.mrf.mxu0
    %v5292 = vadd.f32 %v5203, %v5291
    %v5293 = vand.u32 %v4346, 4294901760
    %v5294 = vsub.f32 %v4346, %v5293
    %v5295 = vand.u32 %v5294, 4294901760
    %5296 = vmatmul.f32.gmra.mxu0 %v5295
    %v5297 = vpop.f32.mrf.mxu0
    %v5298 = vadd.f32 %v5208, %v5297
    %v5299 = vand.u32 %v4349, 4294901760
    %v5300 = vsub.f32 %v4349, %v5299
    %v5301 = vand.u32 %v5300, 4294901760
    %5302 = vmatmul.f32.gmra.mxu0 %v5301
    %v5303 = vpop.f32.mrf.mxu0
    %v5304 = vadd.f32 %v5213, %v5303
    %v5305 = vand.u32 %v4352, 4294901760
    %v5306 = vsub.f32 %v4352, %v5305
    %v5307 = vand.u32 %v5306, 4294901760
    %5308 = vmatmul.f32.gmra.mxu0 %v5307
    %v5309 = vpop.f32.mrf.mxu0
    %v5310 = vadd.f32 %v5218, %v5309
    %v5311 = vand.u32 %v4355, 4294901760
    %v5312 = vsub.f32 %v4355, %v5311
    %v5313 = vand.u32 %v5312, 4294901760
    %5314 = vmatmul.f32.gmra.mxu0 %v5313
    %v5315 = vpop.f32.mrf.mxu0
    %v5316 = vadd.f32 %v5223, %v5315
    %v5317 = vand.u32 %v4358, 4294901760
    %v5318 = vsub.f32 %v4358, %v5317
    %v5319 = vand.u32 %v5318, 4294901760
    %5320 = vmatmul.f32.gmra.mxu0 %v5319
    %v5321 = vpop.f32.mrf.mxu0
    %v5322 = vadd.f32 %v5228, %v5321
    %v5323 = vand.u32 %v4361, 4294901760
    %v5324 = vsub.f32 %v4361, %v5323
    %v5325 = vand.u32 %v5324, 4294901760
    %5326 = vmatmul.f32.gmra.mxu0 %v5325
    %v5327 = vpop.f32.mrf.mxu0
    %v5328 = vadd.f32 %v5233, %v5327
    %v5329 = vand.u32 %v4364, 4294901760
    %v5330 = vsub.f32 %v4364, %v5329
    %v5331 = vand.u32 %v5330, 4294901760
    %5332 = vmatmul.f32.gmra.mxu0 %v5331
    %v5333 = vpop.f32.mrf.mxu0
    %v5334 = vadd.f32 %v5238, %v5333
    %v5335 = vand.u32 %v4367, 4294901760
    %v5336 = vsub.f32 %v4367, %v5335
    %v5337 = vand.u32 %v5336, 4294901760
    %5338 = vmatmul.f32.gmra.mxu0 %v5337
    %v5339 = vpop.f32.mrf.mxu0
    %v5340 = vadd.f32 %v5243, %v5339
    %v5341 = vand.u32 %v4370, 4294901760
    %v5342 = vsub.f32 %v4370, %v5341
    %v5343 = vand.u32 %v5342, 4294901760
    %5344 = vmatmul.f32.gmra.mxu0 %v5343
    %v5345 = vpop.f32.mrf.mxu0
    %v5346 = vadd.f32 %v5248, %v5345
    %v5347 = vand.u32 %v4373, 4294901760
    %v5348 = vsub.f32 %v4373, %v5347
    %v5349 = vand.u32 %v5348, 4294901760
    %5350 = vmatmul.f32.gmra.mxu0 %v5349
    %v5351 = vpop.f32.mrf.mxu0
    %v5352 = vadd.f32 %v5253, %v5351
    %v5353 = vand.u32 %v4376, 4294901760
    %v5354 = vsub.f32 %v4376, %v5353
    %v5355 = vand.u32 %v5354, 4294901760
    %5356 = vmatmul.f32.gmra.mxu0 %v5355
    %v5357 = vpop.f32.mrf.mxu0
    %v5358 = vadd.f32 %v5258, %v5357
    %5359 = vdwg.mxu0
    %5360 = vmatpush.msra.mxu0 0.0
    %5361 = vmatpush.msra.mxu0 0.0
    %5362 = vmatpush.msra.mxu0 0.0
    %5363 = vmatpush.msra.mxu0 0.0
    %5364 = vmatpush.msra.mxu0 0.0
    %5365 = vmatpush.msra.mxu0 0.0
    %5366 = vmatpush.msra.mxu0 0.0
    %5367 = vmatpush.msra.mxu0 0.0
    %5368 = vmatpush.msra.mxu0 0.0
    %5369 = vmatpush.msra.mxu0 0.0
    %5370 = vmatpush.msra.mxu0 0.0
    %v5371 = vand.u32 %v3000, 4294901760
    %v5372 = vsub.f32 %v3000, %v5371
    %v5373 = vand.u32 %v5372, 4294901760
    %5374 = vmatpush.msra.mxu0 %v5373
    %v5375 = vand.u32 %v2939, 4294901760
    %v5376 = vsub.f32 %v2939, %v5375
    %v5377 = vand.u32 %v5376, 4294901760
    %5378 = vmatpush.msra.mxu0 %v5377
    %v5379 = vand.u32 %v2937, 4294901760
    %v5380 = vsub.f32 %v2937, %v5379
    %v5381 = vand.u32 %v5380, 4294901760
    %5382 = vmatpush.msra.mxu0 %v5381
    %v5383 = vand.u32 %v2935, 4294901760
    %v5384 = vsub.f32 %v2935, %v5383
    %v5385 = vand.u32 %v5384, 4294901760
    %5386 = vmatpush.msra.mxu0 %v5385
    %v5387 = vand.u32 %v2933, 4294901760
    %v5388 = vsub.f32 %v2933, %v5387
    %v5389 = vand.u32 %v5388, 4294901760
    %5390 = vmatpush.msra.mxu0 %v5389
    %v5391 = vand.u32 %v4340, 4294901760
    %5392 = vmatmul.f32.gmra.mxu0 %v5391
    %v5393 = vpop.f32.mrf.mxu0
    %v5394 = vadd.f32 %v5286, %v5393
    %v5395 = vand.u32 %v4343, 4294901760
    %5396 = vmatmul.f32.gmra.mxu0 %v5395
    %v5397 = vpop.f32.mrf.mxu0
    %v5398 = vadd.f32 %v5292, %v5397
    %v5399 = vand.u32 %v4346, 4294901760
    %5400 = vmatmul.f32.gmra.mxu0 %v5399
    %v5401 = vpop.f32.mrf.mxu0
    %v5402 = vadd.f32 %v5298, %v5401
    %v5403 = vand.u32 %v4349, 4294901760
    %5404 = vmatmul.f32.gmra.mxu0 %v5403
    %v5405 = vpop.f32.mrf.mxu0
    %v5406 = vadd.f32 %v5304, %v5405
    %v5407 = vand.u32 %v4352, 4294901760
    %5408 = vmatmul.f32.gmra.mxu0 %v5407
    %v5409 = vpop.f32.mrf.mxu0
    %v5410 = vadd.f32 %v5310, %v5409
    %v5411 = vand.u32 %v4355, 4294901760
    %5412 = vmatmul.f32.gmra.mxu0 %v5411
    %v5413 = vpop.f32.mrf.mxu0
    %v5414 = vadd.f32 %v5316, %v5413
    %v5415 = vand.u32 %v4358, 4294901760
    %5416 = vmatmul.f32.gmra.mxu0 %v5415
    %v5417 = vpop.f32.mrf.mxu0
    %v5418 = vadd.f32 %v5322, %v5417
    %v5419 = vand.u32 %v4361, 4294901760
    %5420 = vmatmul.f32.gmra.mxu0 %v5419
    %v5421 = vpop.f32.mrf.mxu0
    %v5422 = vadd.f32 %v5328, %v5421
    %v5423 = vand.u32 %v4364, 4294901760
    %5424 = vmatmul.f32.gmra.mxu0 %v5423
    %v5425 = vpop.f32.mrf.mxu0
    %v5426 = vadd.f32 %v5334, %v5425
    %v5427 = vand.u32 %v4367, 4294901760
    %5428 = vmatmul.f32.gmra.mxu0 %v5427
    %v5429 = vpop.f32.mrf.mxu0
    %v5430 = vadd.f32 %v5340, %v5429
    %v5431 = vand.u32 %v4370, 4294901760
    %5432 = vmatmul.f32.gmra.mxu0 %v5431
    %v5433 = vpop.f32.mrf.mxu0
    %v5434 = vadd.f32 %v5346, %v5433
    %v5435 = vand.u32 %v4373, 4294901760
    %5436 = vmatmul.f32.gmra.mxu0 %v5435
    %v5437 = vpop.f32.mrf.mxu0
    %v5438 = vadd.f32 %v5352, %v5437
    %v5439 = vand.u32 %v4376, 4294901760
    %5440 = vmatmul.f32.gmra.mxu0 %v5439
    %v5441 = vpop.f32.mrf.mxu0
    %v5442 = vadd.f32 %v5358, %v5441
    %5443 = vdwg.mxu0
    %5444 = vmatpush.msra.mxu0 0.0
    %5445 = vmatpush.msra.mxu0 0.0
    %5446 = vmatpush.msra.mxu0 0.0
    %5447 = vmatpush.msra.mxu0 0.0
    %5448 = vmatpush.msra.mxu0 0.0
    %5449 = vmatpush.msra.mxu0 0.0
    %5450 = vmatpush.msra.mxu0 0.0
    %5451 = vmatpush.msra.mxu0 0.0
    %5452 = vmatpush.msra.mxu0 0.0
    %5453 = vmatpush.msra.mxu0 0.0
    %5454 = vmatpush.msra.mxu0 0.0
    %v5455 = vand.u32 %v3000, 4294901760
    %5456 = vmatpush.msra.mxu0 %v5455
    %v5457 = vand.u32 %v2939, 4294901760
    %5458 = vmatpush.msra.mxu0 %v5457
    %v5459 = vand.u32 %v2937, 4294901760
    %5460 = vmatpush.msra.mxu0 %v5459
    %v5461 = vand.u32 %v2935, 4294901760
    %5462 = vmatpush.msra.mxu0 %v5461
    %v5463 = vand.u32 %v2933, 4294901760
    %5464 = vmatpush.msra.mxu0 %v5463
    %v5465 = vand.u32 %v4340, 4294901760
    %5466 = vmatmul.f32.gmra.mxu0 %v5465
    %v5467 = vpop.f32.mrf.mxu0
    %v5468 = vadd.f32 %v5394, %v5467
    %v5469 = vand.u32 %v4343, 4294901760
    %5470 = vmatmul.f32.gmra.mxu0 %v5469
    %v5471 = vpop.f32.mrf.mxu0
    %v5472 = vadd.f32 %v5398, %v5471
    %v5473 = vand.u32 %v4346, 4294901760
    %5474 = vmatmul.f32.gmra.mxu0 %v5473
    %v5475 = vpop.f32.mrf.mxu0
    %v5476 = vadd.f32 %v5402, %v5475
    %v5477 = vand.u32 %v4349, 4294901760
    %5478 = vmatmul.f32.gmra.mxu0 %v5477
    %v5479 = vpop.f32.mrf.mxu0
    %v5480 = vadd.f32 %v5406, %v5479
    %v5481 = vand.u32 %v4352, 4294901760
    %5482 = vmatmul.f32.gmra.mxu0 %v5481
    %v5483 = vpop.f32.mrf.mxu0
    %v5484 = vadd.f32 %v5410, %v5483
    %v5485 = vand.u32 %v4355, 4294901760
    %5486 = vmatmul.f32.gmra.mxu0 %v5485
    %v5487 = vpop.f32.mrf.mxu0
    %v5488 = vadd.f32 %v5414, %v5487
    %v5489 = vand.u32 %v4358, 4294901760
    %5490 = vmatmul.f32.gmra.mxu0 %v5489
    %v5491 = vpop.f32.mrf.mxu0
    %v5492 = vadd.f32 %v5418, %v5491
    %v5493 = vand.u32 %v4361, 4294901760
    %5494 = vmatmul.f32.gmra.mxu0 %v5493
    %v5495 = vpop.f32.mrf.mxu0
    %v5496 = vadd.f32 %v5422, %v5495
    %v5497 = vand.u32 %v4364, 4294901760
    %5498 = vmatmul.f32.gmra.mxu0 %v5497
    %v5499 = vpop.f32.mrf.mxu0
    %v5500 = vadd.f32 %v5426, %v5499
    %v5501 = vand.u32 %v4367, 4294901760
    %5502 = vmatmul.f32.gmra.mxu0 %v5501
    %v5503 = vpop.f32.mrf.mxu0
    %v5504 = vadd.f32 %v5430, %v5503
    %v5505 = vand.u32 %v4370, 4294901760
    %5506 = vmatmul.f32.gmra.mxu0 %v5505
    %v5507 = vpop.f32.mrf.mxu0
    %v5508 = vadd.f32 %v5434, %v5507
    %v5509 = vand.u32 %v4373, 4294901760
    %5510 = vmatmul.f32.gmra.mxu0 %v5509
    %v5511 = vpop.f32.mrf.mxu0
    %v5512 = vadd.f32 %v5438, %v5511
    %v5513 = vand.u32 %v4376, 4294901760
    %5514 = vmatmul.f32.gmra.mxu0 %v5513
    %v5515 = vpop.f32.mrf.mxu0
    %v5516 = vadd.f32 %v5442, %v5515
    %5517 = vdwg.mxu0
    %v5518 = vadd.f32 %v4898, %v4902
    %v5519 = vadd.f32 %v5518, %v4906
    %v5520 = vadd.f32 %v5519, %v4910
    %v5521 = vadd.f32 %v5520, %v4914
    %v5522 = vadd.f32 %v5521, %v4918
    %v5523 = vadd.f32 %v5522, %v4922
    %v5524 = vadd.f32 %v5523, %v4926
    %v5525 = vadd.f32 %v5524, %v4930
    %v5526 = vadd.f32 %v5525, %v4934
    %v5527 = vadd.f32 %v5526, %v4938
    %v5528 = vadd.f32 %v5527, %v4942
    %v5529 = vsel %vm4153, %v4946, 0.0
    %v5530 = vadd.f32 %v5528, %v5529
    %v5531 = vrot.slane %v5530, 4
    %v5532 = vadd.f32 %v5530, %v5531
    %v5533 = vrot.slane %v5532, 2
    %v5534 = vadd.f32 %v5532, %v5533
    %v5535 = vrot.slane %v5534, 1
    %v5536 = vadd.f32 %v5534, %v5535
    %v5537 = vadd.f32 %v5468, %v5472
    %v5538 = vadd.f32 %v5537, %v5476
    %v5539 = vadd.f32 %v5538, %v5480
    %v5540 = vadd.f32 %v5539, %v5484
    %v5541 = vadd.f32 %v5540, %v5488
    %v5542 = vadd.f32 %v5541, %v5492
    %v5543 = vadd.f32 %v5542, %v5496
    %v5544 = vadd.f32 %v5543, %v5500
    %v5545 = vadd.f32 %v5544, %v5504
    %v5546 = vadd.f32 %v5545, %v5508
    %v5547 = vadd.f32 %v5546, %v5512
    %v5548 = vsel %vm4153, %v5516, 0.0
    %v5549 = vadd.f32 %v5547, %v5548
    %v5550 = vrot.slane %v5549, 4
    %v5551 = vadd.f32 %v5549, %v5550
    %v5552 = vrot.slane %v5551, 2
    %v5553 = vadd.f32 %v5551, %v5552
    %v5554 = vrot.slane %v5553, 1
    %v5555 = vadd.f32 %v5553, %v5554
    %v5556 = vadd.f32 %v4181, %v5536
    %v5557 = vadd.f32 %v4182, %v5555
    %v5558 = vmul.f32 %v4898, %v4898
    %v5559 = vmul.f32 %v5468, %v5468
    %v5560 = vmul.f32 %v4902, %v4902
    %v5561 = vmul.f32 %v5472, %v5472
    %v5562 = vmul.f32 %v4906, %v4906
    %v5563 = vmul.f32 %v5476, %v5476
    %v5564 = vmul.f32 %v4910, %v4910
    %v5565 = vmul.f32 %v5480, %v5480
    %v5566 = vmul.f32 %v4914, %v4914
    %v5567 = vmul.f32 %v5484, %v5484
    %v5568 = vmul.f32 %v4918, %v4918
    %v5569 = vmul.f32 %v5488, %v5488
    %v5570 = vmul.f32 %v4922, %v4922
    %v5571 = vmul.f32 %v5492, %v5492
    %v5572 = vmul.f32 %v4926, %v4926
    %v5573 = vmul.f32 %v5496, %v5496
    %v5574 = vmul.f32 %v4930, %v4930
    %v5575 = vmul.f32 %v5500, %v5500
    %v5576 = vmul.f32 %v4934, %v4934
    %v5577 = vmul.f32 %v5504, %v5504
    %v5578 = vmul.f32 %v4938, %v4938
    %v5579 = vmul.f32 %v5508, %v5508
    %v5580 = vmul.f32 %v4942, %v4942
    %v5581 = vmul.f32 %v5512, %v5512
    %v5582 = vmul.f32 %v4946, %v4946
    %v5583 = vmul.f32 %v5516, %v5516
    %v5584 = vadd.f32 %v5558, %v5560
    %v5585 = vadd.f32 %v5584, %v5562
    %v5586 = vadd.f32 %v5585, %v5564
    %v5587 = vadd.f32 %v5586, %v5566
    %v5588 = vadd.f32 %v5587, %v5568
    %v5589 = vadd.f32 %v5588, %v5570
    %v5590 = vadd.f32 %v5589, %v5572
    %v5591 = vadd.f32 %v5590, %v5574
    %v5592 = vadd.f32 %v5591, %v5576
    %v5593 = vadd.f32 %v5592, %v5578
    %v5594 = vadd.f32 %v5593, %v5580
    %v5595 = vsel %vm4153, %v5582, 0.0
    %v5596 = vadd.f32 %v5594, %v5595
    %v5597 = vrot.slane %v5596, 4
    %v5598 = vadd.f32 %v5596, %v5597
    %v5599 = vrot.slane %v5598, 2
    %v5600 = vadd.f32 %v5598, %v5599
    %v5601 = vrot.slane %v5600, 1
    %v5602 = vadd.f32 %v5600, %v5601
    %v5603 = vadd.f32 %v5559, %v5561
    %v5604 = vadd.f32 %v5603, %v5563
    %v5605 = vadd.f32 %v5604, %v5565
    %v5606 = vadd.f32 %v5605, %v5567
    %v5607 = vadd.f32 %v5606, %v5569
    %v5608 = vadd.f32 %v5607, %v5571
    %v5609 = vadd.f32 %v5608, %v5573
    %v5610 = vadd.f32 %v5609, %v5575
    %v5611 = vadd.f32 %v5610, %v5577
    %v5612 = vadd.f32 %v5611, %v5579
    %v5613 = vadd.f32 %v5612, %v5581
    %v5614 = vsel %vm4153, %v5583, 0.0
    %v5615 = vadd.f32 %v5613, %v5614
    %v5616 = vrot.slane %v5615, 4
    %v5617 = vadd.f32 %v5615, %v5616
    %v5618 = vrot.slane %v5617, 2
    %v5619 = vadd.f32 %v5617, %v5618
    %v5620 = vrot.slane %v5619, 1
    %v5621 = vadd.f32 %v5619, %v5620
    %v5622 = vadd.f32 %v4247, %v5602
    %v5623 = vadd.f32 %v4248, %v5621
    %v5624 = vmax.f32 %v4898, %v4906
    %v5625 = vmax.f32 %v4902, %v4910
    %v5626 = vmax.f32 %v5624, %v4914
    %v5627 = vmax.f32 %v5625, %v4918
    %v5628 = vmax.f32 %v5626, %v4922
    %v5629 = vmax.f32 %v5627, %v4926
    %v5630 = vmax.f32 %v5628, %v4930
    %v5631 = vmax.f32 %v5629, %v4934
    %v5632 = vmax.f32 %v5630, %v4938
    %v5633 = vmax.f32 %v5631, %v4942
    %v5634 = vsel %vm4153, %v4946, -inf
    %v5635 = vmax.f32 %v5632, %v5634
    %v5636 = vmax.f32 %v5635, %v5633
    %v5637 = vrot.slane %v5636, 4
    %v5638 = vmax.f32 %v5636, %v5637
    %v5639 = vrot.slane %v5638, 2
    %v5640 = vmax.f32 %v5638, %v5639
    %v5641 = vrot.slane %v5640, 1
    %v5642 = vmax.f32 %v5640, %v5641
    %v5643 = vmax.f32 %v5468, %v5476
    %v5644 = vmax.f32 %v5472, %v5480
    %v5645 = vmax.f32 %v5643, %v5484
    %v5646 = vmax.f32 %v5644, %v5488
    %v5647 = vmax.f32 %v5645, %v5492
    %v5648 = vmax.f32 %v5646, %v5496
    %v5649 = vmax.f32 %v5647, %v5500
    %v5650 = vmax.f32 %v5648, %v5504
    %v5651 = vmax.f32 %v5649, %v5508
    %v5652 = vmax.f32 %v5650, %v5512
    %v5653 = vsel %vm4153, %v5516, -inf
    %v5654 = vmax.f32 %v5651, %v5653
    %v5655 = vmax.f32 %v5654, %v5652
    %v5656 = vrot.slane %v5655, 4
    %v5657 = vmax.f32 %v5655, %v5656
    %v5658 = vrot.slane %v5657, 2
    %v5659 = vmax.f32 %v5657, %v5658
    %v5660 = vrot.slane %v5659, 1
    %v5661 = vmax.f32 %v5659, %v5660
    %v5662 = vmin.f32 %v4898, %v4906
    %v5663 = vmin.f32 %v4902, %v4910
    %v5664 = vmin.f32 %v5662, %v4914
    %v5665 = vmin.f32 %v5663, %v4918
    %v5666 = vmin.f32 %v5664, %v4922
    %v5667 = vmin.f32 %v5665, %v4926
    %v5668 = vmin.f32 %v5666, %v4930
    %v5669 = vmin.f32 %v5667, %v4934
    %v5670 = vmin.f32 %v5668, %v4938
    %v5671 = vmin.f32 %v5669, %v4942
    %v5672 = vsel %vm4153, %v4946, inf
    %v5673 = vmin.f32 %v5670, %v5672
    %v5674 = vmin.f32 %v5673, %v5671
    %v5675 = vrot.slane %v5674, 4
    %v5676 = vmin.f32 %v5674, %v5675
    %v5677 = vrot.slane %v5676, 2
    %v5678 = vmin.f32 %v5676, %v5677
    %v5679 = vrot.slane %v5678, 1
    %v5680 = vmin.f32 %v5678, %v5679
    %v5681 = vmin.f32 %v5468, %v5476
    %v5682 = vmin.f32 %v5472, %v5480
    %v5683 = vmin.f32 %v5681, %v5484
    %v5684 = vmin.f32 %v5682, %v5488
    %v5685 = vmin.f32 %v5683, %v5492
    %v5686 = vmin.f32 %v5684, %v5496
    %v5687 = vmin.f32 %v5685, %v5500
    %v5688 = vmin.f32 %v5686, %v5504
    %v5689 = vmin.f32 %v5687, %v5508
    %v5690 = vmin.f32 %v5688, %v5512
    %v5691 = vsel %vm4153, %v5516, inf
    %v5692 = vmin.f32 %v5689, %v5691
    %v5693 = vmin.f32 %v5692, %v5690
    %v5694 = vrot.slane %v5693, 4
    %v5695 = vmin.f32 %v5693, %v5694
    %v5696 = vrot.slane %v5695, 2
    %v5697 = vmin.f32 %v5695, %v5696
    %v5698 = vrot.slane %v5697, 1
    %v5699 = vmin.f32 %v5697, %v5698
    %v5700 = vmul.f32 %v5556, 0.004901961
    %v5701 = vmul.f32 %v5557, 0.004901961
    %v5702 = vmul.f32 %v5622, 0.004901961
    %v5703 = vmul.f32 %v5623, 0.004901961
    %v5704 = vmul.f32 %v5700, %v5700
    %v5705 = vmul.f32 %v5701, %v5701
    %v5706 = vsub.f32 %v5702, %v5704
    %v5707 = vsub.f32 %v5703, %v5705
    %s5708 = scalar_lea.vmem %s8, 2
    %v5709 = vld [vmem:[%s5708] ss:$8 sm:$0x3]
    %s5710 = scalar_lea.vmem %s8, 3
    %v5711 = vld [vmem:[%s5710] ss:$8 sm:$0x3]
    %v5712 = vadd.f32 %v5706, 1e-05
    %v5713 = vadd.f32 %v5707, 1e-05
    %v5714 = vrsqrt.pop %v5712
    %v5715 = vmul.f32 %v5714, %v5712
    %v5716 = vmul.f32 %v5715, %v5714
    %v5717 = vmul.f32 0.5, %v5716
    %v5718 = vsub.f32 1.5, %v5717
    %v5719 = vmul.f32 %v5714, %v5718
    %vm5720 = vweird.f32 %v5712
    %vm5721 = vweird.f32 %v5714
    %vm5722 = vmor %vm5720, %vm5721
    %v5723 = vsel %vm5722, %v5714, %v5719
    %v5724 = vrsqrt.pop %v5713
    %v5725 = vmul.f32 %v5724, %v5713
    %v5726 = vmul.f32 %v5725, %v5724
    %v5727 = vmul.f32 0.5, %v5726
    %v5728 = vsub.f32 1.5, %v5727
    %v5729 = vmul.f32 %v5724, %v5728
    %vm5730 = vweird.f32 %v5713
    %vm5731 = vweird.f32 %v5724
    %vm5732 = vmor %vm5730, %vm5731
    %v5733 = vsel %vm5732, %v5724, %v5729
    %v5736 = vrot.slane %v5733, 7
    %v5737 = vsel %vm1258, %v5723, %v5736
    %v5739 = vmul.f32 %v5709, %v5737
    %v5741 = vperm.slane %v5739, 0
    %v5742 = vperm.slane %v5739, 1
    %v5745 = vmul.f32 %v5700, %v5741
    %v5746 = vmul.f32 %v5701, %v5742
    %v5749 = vrot.slane %v5746, 7
    %v5750 = vsel %vm1258, %v5745, %v5749
    %v5752 = vsub.f32 %v5711, %v5750
    %vm5753 = vcmp.ge.f32.partialorder %v5739, 0.0
    %v5754 = vmul.f32 %v4267, %v5741
    %v5755 = vmul.f32 %v4286, %v5742
    %v5756 = vmul.f32 %v4305, %v5741
    %v5757 = vmul.f32 %v4324, %v5742
    %v5760 = vrot.slane %v5755, 7
    %v5761 = vsel %vm1258, %v5754, %v5760
    %v5765 = vrot.slane %v5757, 7
    %v5766 = vsel %vm1258, %v5756, %v5765
    %v5768 = vsel %vm5753, %v5761, %v5766
    %v5769 = vadd.f32 %v5768, %v5752
    %v5770 = vmax.f32 %v5769, 0.0
    %s5771 = scalar_lea.vmem [#allocation2], 4
    %5772 = vst.msk [vmem:[%s5771] ss:$2 sm:$0x3] %vm2911, %v5770
    %v5773 = vmul.f32 %v5642, %v5741
    %v5774 = vmul.f32 %v5661, %v5742
    %v5775 = vmul.f32 %v5680, %v5741
    %v5776 = vmul.f32 %v5699, %v5742
    %v5779 = vrot.slane %v5774, 7
    %v5780 = vsel %vm1258, %v5773, %v5779
    %v5784 = vrot.slane %v5776, 7
    %v5785 = vsel %vm1258, %v5775, %v5784
    %v5787 = vsel %vm5753, %v5780, %v5785
    %v5788 = vadd.f32 %v5787, %v5752
    %v5789 = vmax.f32 %v5788, 0.0
    %s5790 = scalar_lea.vmem [#allocation2], 5
    %5791 = vst.msk [vmem:[%s5790] ss:$2 sm:$0x3] %vm2911, %v5789
    %v5792 = vld [vmem:[%s6] sm:$0xff]
    %v5793 = vld [vmem:[%s6 + $0x8] sm:$0xff]
    %v5794 = vld [vmem:[%s6 + $0x10] sm:$0xff]
    %v5795 = vld [vmem:[%s6 + $0x18] sm:$0xff]
    %v5796 = vld [vmem:[%s6 + $0x20] sm:$0xff]
    %v5797 = vld [vmem:[%s6 + $0x28] sm:$0xff]
    %v5798 = vld [vmem:[%s6 + $0x30] sm:$0xff]
    %v5799 = vld [vmem:[%s6 + $0x38] sm:$0xff]
    %v5800 = vld [vmem:[%s6 + $0x40] sm:$0xff]
    %v5801 = vld [vmem:[%s6 + $0x48] sm:$0xff]
    %v5802 = vld [vmem:[%s6 + $0x50] sm:$0xff]
    %v5803 = vld [vmem:[%s6 + $0x58] sm:$0xff]
    %v5804 = vld [vmem:[%s2] sm:$0xff]
    %v5805 = vld [vmem:[%s2 + $0x8] sm:$0xff]
    %v5806 = vld [vmem:[%s2 + $0x10] sm:$0xff]
    %v5807 = vld [vmem:[%s2 + $0x18] sm:$0xff]
    %v5808 = vld [vmem:[%s2 + $0x20] sm:$0xff]
    %v5809 = vld [vmem:[%s2 + $0x28] sm:$0xff]
    %v5810 = vld [vmem:[%s2 + $0x30] sm:$0xff]
    %v5811 = vld [vmem:[%s2 + $0x38] sm:$0xff]
    %v5812 = vld [vmem:[%s2 + $0x40] sm:$0xff]
    %v5813 = vld [vmem:[%s2 + $0x48] sm:$0xff]
    %v5814 = vld [vmem:[%s2 + $0x50] sm:$0xff]
    %v5815 = vld [vmem:[%s2 + $0x58] sm:$0xff]
    %v5816 = vld [vmem:[%s2 + $0x60] sm:$0x7]
    %vm5817 = vcmask 392192
    %v5819 = vsel %vm5817, %v5804, 0
    %v5822 = vsel %vm5817, %v5805, 0
    %v5825 = vsel %vm5817, %v5806, 0
    %v5828 = vsel %vm5817, %v5807, 0
    %v5831 = vsel %vm5817, %v5808, 0
    %v5834 = vsel %vm5817, %v5809, 0
    %v5837 = vsel %vm5817, %v5810, 0
    %v5840 = vsel %vm5817, %v5811, 0
    %v5843 = vsel %vm5817, %v5812, 0
    %v5846 = vsel %vm5817, %v5813, 0
    %v5849 = vsel %vm5817, %v5814, 0
    %v5852 = vsel %vm5817, %v5815, 0
    %v5855 = vsel %vm5817, %v5816, 0
    %5857 = vmatpush.msra.mxu0 0.0
    %5858 = vmatpush.msra.mxu0 0.0
    %5859 = vmatpush.msra.mxu0 0.0
    %5860 = vmatpush.msra.mxu0 0.0
    %5861 = vmatpush.msra.mxu0 0.0
    %5862 = vmatpush.msra.mxu0 0.0
    %5863 = vmatpush.msra.mxu0 0.0
    %5864 = vmatpush.msra.mxu0 0.0
    %5865 = vmatpush.msra.mxu0 0.0
    %5866 = vmatpush.msra.mxu0 0.0
    %v5867 = vand.u32 %v5802, 4294901760
    %5868 = vmatpush.msra.mxu0 %v5867
    %v5869 = vand.u32 %v5800, 4294901760
    %5870 = vmatpush.msra.mxu0 %v5869
    %v5871 = vand.u32 %v5798, 4294901760
    %5872 = vmatpush.msra.mxu0 %v5871
    %v5873 = vand.u32 %v5796, 4294901760
    %5874 = vmatpush.msra.mxu0 %v5873
    %v5875 = vand.u32 %v5794, 4294901760
    %5876 = vmatpush.msra.mxu0 %v5875
    %v5877 = vand.u32 %v5792, 4294901760
    %5878 = vmatpush.msra.mxu0 %v5877
    %v5879 = vand.u32 %v5819, 4294901760
    %v5880 = vsub.f32 %v5819, %v5879
    %v5881 = vand.u32 %v5880, 4294901760
    %v5882 = vsub.f32 %v5880, %v5881
    %v5883 = vand.u32 %v5882, 4294901760
    %5884 = vmatmul.f32.gmra.mxu0 %v5883
    %v5885 = vpop.f32.mrf.mxu0
    %v5886 = vadd.f32 0.0, %v5885
    %v5887 = vand.u32 %v5822, 4294901760
    %v5888 = vsub.f32 %v5822, %v5887
    %v5889 = vand.u32 %v5888, 4294901760
    %v5890 = vsub.f32 %v5888, %v5889
    %v5891 = vand.u32 %v5890, 4294901760
    %5892 = vmatmul.f32.gmra.mxu0 %v5891
    %v5893 = vpop.f32.mrf.mxu0
    %v5894 = vadd.f32 0.0, %v5893
    %v5895 = vand.u32 %v5825, 4294901760
    %v5896 = vsub.f32 %v5825, %v5895
    %v5897 = vand.u32 %v5896, 4294901760
    %v5898 = vsub.f32 %v5896, %v5897
    %v5899 = vand.u32 %v5898, 4294901760
    %5900 = vmatmul.f32.gmra.mxu0 %v5899
    %v5901 = vpop.f32.mrf.mxu0
    %v5902 = vadd.f32 0.0, %v5901
    %v5903 = vand.u32 %v5828, 4294901760
    %v5904 = vsub.f32 %v5828, %v5903
    %v5905 = vand.u32 %v5904, 4294901760
    %v5906 = vsub.f32 %v5904, %v5905
    %v5907 = vand.u32 %v5906, 4294901760
    %5908 = vmatmul.f32.gmra.mxu0 %v5907
    %v5909 = vpop.f32.mrf.mxu0
    %v5910 = vadd.f32 0.0, %v5909
    %v5911 = vand.u32 %v5831, 4294901760
    %v5912 = vsub.f32 %v5831, %v5911
    %v5913 = vand.u32 %v5912, 4294901760
    %v5914 = vsub.f32 %v5912, %v5913
    %v5915 = vand.u32 %v5914, 4294901760
    %5916 = vmatmul.f32.gmra.mxu0 %v5915
    %v5917 = vpop.f32.mrf.mxu0
    %v5918 = vadd.f32 0.0, %v5917
    %v5919 = vand.u32 %v5834, 4294901760
    %v5920 = vsub.f32 %v5834, %v5919
    %v5921 = vand.u32 %v5920, 4294901760
    %v5922 = vsub.f32 %v5920, %v5921
    %v5923 = vand.u32 %v5922, 4294901760
    %5924 = vmatmul.f32.gmra.mxu0 %v5923
    %v5925 = vpop.f32.mrf.mxu0
    %v5926 = vadd.f32 0.0, %v5925
    %v5927 = vand.u32 %v5837, 4294901760
    %v5928 = vsub.f32 %v5837, %v5927
    %v5929 = vand.u32 %v5928, 4294901760
    %v5930 = vsub.f32 %v5928, %v5929
    %v5931 = vand.u32 %v5930, 4294901760
    %5932 = vmatmul.f32.gmra.mxu0 %v5931
    %v5933 = vpop.f32.mrf.mxu0
    %v5934 = vadd.f32 0.0, %v5933
    %v5935 = vand.u32 %v5840, 4294901760
    %v5936 = vsub.f32 %v5840, %v5935
    %v5937 = vand.u32 %v5936, 4294901760
    %v5938 = vsub.f32 %v5936, %v5937
    %v5939 = vand.u32 %v5938, 4294901760
    %5940 = vmatmul.f32.gmra.mxu0 %v5939
    %v5941 = vpop.f32.mrf.mxu0
    %v5942 = vadd.f32 0.0, %v5941
    %v5943 = vand.u32 %v5843, 4294901760
    %v5944 = vsub.f32 %v5843, %v5943
    %v5945 = vand.u32 %v5944, 4294901760
    %v5946 = vsub.f32 %v5944, %v5945
    %v5947 = vand.u32 %v5946, 4294901760
    %5948 = vmatmul.f32.gmra.mxu0 %v5947
    %v5949 = vpop.f32.mrf.mxu0
    %v5950 = vadd.f32 0.0, %v5949
    %v5951 = vand.u32 %v5846, 4294901760
    %v5952 = vsub.f32 %v5846, %v5951
    %v5953 = vand.u32 %v5952, 4294901760
    %v5954 = vsub.f32 %v5952, %v5953
    %v5955 = vand.u32 %v5954, 4294901760
    %5956 = vmatmul.f32.gmra.mxu0 %v5955
    %v5957 = vpop.f32.mrf.mxu0
    %v5958 = vadd.f32 0.0, %v5957
    %v5959 = vand.u32 %v5849, 4294901760
    %v5960 = vsub.f32 %v5849, %v5959
    %v5961 = vand.u32 %v5960, 4294901760
    %v5962 = vsub.f32 %v5960, %v5961
    %v5963 = vand.u32 %v5962, 4294901760
    %5964 = vmatmul.f32.gmra.mxu0 %v5963
    %v5965 = vpop.f32.mrf.mxu0
    %v5966 = vadd.f32 0.0, %v5965
    %v5967 = vand.u32 %v5852, 4294901760
    %v5968 = vsub.f32 %v5852, %v5967
    %v5969 = vand.u32 %v5968, 4294901760
    %v5970 = vsub.f32 %v5968, %v5969
    %v5971 = vand.u32 %v5970, 4294901760
    %5972 = vmatmul.f32.gmra.mxu0 %v5971
    %v5973 = vpop.f32.mrf.mxu0
    %v5974 = vadd.f32 0.0, %v5973
    %v5975 = vand.u32 %v5855, 4294901760
    %v5976 = vsub.f32 %v5855, %v5975
    %v5977 = vand.u32 %v5976, 4294901760
    %v5978 = vsub.f32 %v5976, %v5977
    %v5979 = vand.u32 %v5978, 4294901760
    %5980 = vmatmul.f32.gmra.mxu0 %v5979
    %v5981 = vpop.f32.mrf.mxu0
    %v5982 = vadd.f32 0.0, %v5981
    %5983 = vdwg.mxu0
    %5984 = vmatpush.msra.mxu0 0.0
    %5985 = vmatpush.msra.mxu0 0.0
    %5986 = vmatpush.msra.mxu0 0.0
    %5987 = vmatpush.msra.mxu0 0.0
    %5988 = vmatpush.msra.mxu0 0.0
    %5989 = vmatpush.msra.mxu0 0.0
    %5990 = vmatpush.msra.mxu0 0.0
    %5991 = vmatpush.msra.mxu0 0.0
    %5992 = vmatpush.msra.mxu0 0.0
    %5993 = vmatpush.msra.mxu0 0.0
    %v5994 = vand.u32 %v5802, 4294901760
    %v5995 = vsub.f32 %v5802, %v5994
    %v5996 = vand.u32 %v5995, 4294901760
    %v5997 = vsub.f32 %v5995, %v5996
    %v5998 = vand.u32 %v5997, 4294901760
    %5999 = vmatpush.msra.mxu0 %v5998
    %v6000 = vand.u32 %v5800, 4294901760
    %v6001 = vsub.f32 %v5800, %v6000
    %v6002 = vand.u32 %v6001, 4294901760
    %v6003 = vsub.f32 %v6001, %v6002
    %v6004 = vand.u32 %v6003, 4294901760
    %6005 = vmatpush.msra.mxu0 %v6004
    %v6006 = vand.u32 %v5798, 4294901760
    %v6007 = vsub.f32 %v5798, %v6006
    %v6008 = vand.u32 %v6007, 4294901760
    %v6009 = vsub.f32 %v6007, %v6008
    %v6010 = vand.u32 %v6009, 4294901760
    %6011 = vmatpush.msra.mxu0 %v6010
    %v6012 = vand.u32 %v5796, 4294901760
    %v6013 = vsub.f32 %v5796, %v6012
    %v6014 = vand.u32 %v6013, 4294901760
    %v6015 = vsub.f32 %v6013, %v6014
    %v6016 = vand.u32 %v6015, 4294901760
    %6017 = vmatpush.msra.mxu0 %v6016
    %v6018 = vand.u32 %v5794, 4294901760
    %v6019 = vsub.f32 %v5794, %v6018
    %v6020 = vand.u32 %v6019, 4294901760
    %v6021 = vsub.f32 %v6019, %v6020
    %v6022 = vand.u32 %v6021, 4294901760
    %6023 = vmatpush.msra.mxu0 %v6022
    %v6024 = vand.u32 %v5792, 4294901760
    %v6025 = vsub.f32 %v5792, %v6024
    %v6026 = vand.u32 %v6025, 4294901760
    %v6027 = vsub.f32 %v6025, %v6026
    %v6028 = vand.u32 %v6027, 4294901760
    %6029 = vmatpush.msra.mxu0 %v6028
    %v6030 = vand.u32 %v5819, 4294901760
    %6031 = vmatmul.f32.gmra.mxu0 %v6030
    %v6032 = vpop.f32.mrf.mxu0
    %v6033 = vadd.f32 %v5886, %v6032
    %v6034 = vand.u32 %v5822, 4294901760
    %6035 = vmatmul.f32.gmra.mxu0 %v6034
    %v6036 = vpop.f32.mrf.mxu0
    %v6037 = vadd.f32 %v5894, %v6036
    %v6038 = vand.u32 %v5825, 4294901760
    %6039 = vmatmul.f32.gmra.mxu0 %v6038
    %v6040 = vpop.f32.mrf.mxu0
    %v6041 = vadd.f32 %v5902, %v6040
    %v6042 = vand.u32 %v5828, 4294901760
    %6043 = vmatmul.f32.gmra.mxu0 %v6042
    %v6044 = vpop.f32.mrf.mxu0
    %v6045 = vadd.f32 %v5910, %v6044
    %v6046 = vand.u32 %v5831, 4294901760
    %6047 = vmatmul.f32.gmra.mxu0 %v6046
    %v6048 = vpop.f32.mrf.mxu0
    %v6049 = vadd.f32 %v5918, %v6048
    %v6050 = vand.u32 %v5834, 4294901760
    %6051 = vmatmul.f32.gmra.mxu0 %v6050
    %v6052 = vpop.f32.mrf.mxu0
    %v6053 = vadd.f32 %v5926, %v6052
    %v6054 = vand.u32 %v5837, 4294901760
    %6055 = vmatmul.f32.gmra.mxu0 %v6054
    %v6056 = vpop.f32.mrf.mxu0
    %v6057 = vadd.f32 %v5934, %v6056
    %v6058 = vand.u32 %v5840, 4294901760
    %6059 = vmatmul.f32.gmra.mxu0 %v6058
    %v6060 = vpop.f32.mrf.mxu0
    %v6061 = vadd.f32 %v5942, %v6060
    %v6062 = vand.u32 %v5843, 4294901760
    %6063 = vmatmul.f32.gmra.mxu0 %v6062
    %v6064 = vpop.f32.mrf.mxu0
    %v6065 = vadd.f32 %v5950, %v6064
    %v6066 = vand.u32 %v5846, 4294901760
    %6067 = vmatmul.f32.gmra.mxu0 %v6066
    %v6068 = vpop.f32.mrf.mxu0
    %v6069 = vadd.f32 %v5958, %v6068
    %v6070 = vand.u32 %v5849, 4294901760
    %6071 = vmatmul.f32.gmra.mxu0 %v6070
    %v6072 = vpop.f32.mrf.mxu0
    %v6073 = vadd.f32 %v5966, %v6072
    %v6074 = vand.u32 %v5852, 4294901760
    %6075 = vmatmul.f32.gmra.mxu0 %v6074
    %v6076 = vpop.f32.mrf.mxu0
    %v6077 = vadd.f32 %v5974, %v6076
    %v6078 = vand.u32 %v5855, 4294901760
    %6079 = vmatmul.f32.gmra.mxu0 %v6078
    %v6080 = vpop.f32.mrf.mxu0
    %v6081 = vadd.f32 %v5982, %v6080
    %6082 = vdwg.mxu0
    %6083 = vmatpush.msra.mxu0 0.0
    %6084 = vmatpush.msra.mxu0 0.0
    %6085 = vmatpush.msra.mxu0 0.0
    %6086 = vmatpush.msra.mxu0 0.0
    %6087 = vmatpush.msra.mxu0 0.0
    %6088 = vmatpush.msra.mxu0 0.0
    %6089 = vmatpush.msra.mxu0 0.0
    %6090 = vmatpush.msra.mxu0 0.0
    %6091 = vmatpush.msra.mxu0 0.0
    %6092 = vmatpush.msra.mxu0 0.0
    %v6093 = vand.u32 %v5802, 4294901760
    %v6094 = vsub.f32 %v5802, %v6093
    %6095 = vmatpush.msra.mxu0 %v6094
    %v6096 = vand.u32 %v5800, 4294901760
    %v6097 = vsub.f32 %v5800, %v6096
    %6098 = vmatpush.msra.mxu0 %v6097
    %v6099 = vand.u32 %v5798, 4294901760
    %v6100 = vsub.f32 %v5798, %v6099
    %6101 = vmatpush.msra.mxu0 %v6100
    %v6102 = vand.u32 %v5796, 4294901760
    %v6103 = vsub.f32 %v5796, %v6102
    %6104 = vmatpush.msra.mxu0 %v6103
    %v6105 = vand.u32 %v5794, 4294901760
    %v6106 = vsub.f32 %v5794, %v6105
    %6107 = vmatpush.msra.mxu0 %v6106
    %v6108 = vand.u32 %v5792, 4294901760
    %v6109 = vsub.f32 %v5792, %v6108
    %6110 = vmatpush.msra.mxu0 %v6109
    %v6111 = vand.u32 %v5819, 4294901760
    %v6112 = vsub.f32 %v5819, %v6111
    %6113 = vmatmul.f32.gmra.mxu0 %v6112
    %v6114 = vpop.f32.mrf.mxu0
    %v6115 = vadd.f32 %v6033, %v6114
    %v6116 = vand.u32 %v5822, 4294901760
    %v6117 = vsub.f32 %v5822, %v6116
    %6118 = vmatmul.f32.gmra.mxu0 %v6117
    %v6119 = vpop.f32.mrf.mxu0
    %v6120 = vadd.f32 %v6037, %v6119
    %v6121 = vand.u32 %v5825, 4294901760
    %v6122 = vsub.f32 %v5825, %v6121
    %6123 = vmatmul.f32.gmra.mxu0 %v6122
    %v6124 = vpop.f32.mrf.mxu0
    %v6125 = vadd.f32 %v6041, %v6124
    %v6126 = vand.u32 %v5828, 4294901760
    %v6127 = vsub.f32 %v5828, %v6126
    %6128 = vmatmul.f32.gmra.mxu0 %v6127
    %v6129 = vpop.f32.mrf.mxu0
    %v6130 = vadd.f32 %v6045, %v6129
    %v6131 = vand.u32 %v5831, 4294901760
    %v6132 = vsub.f32 %v5831, %v6131
    %6133 = vmatmul.f32.gmra.mxu0 %v6132
    %v6134 = vpop.f32.mrf.mxu0
    %v6135 = vadd.f32 %v6049, %v6134
    %v6136 = vand.u32 %v5834, 4294901760
    %v6137 = vsub.f32 %v5834, %v6136
    %6138 = vmatmul.f32.gmra.mxu0 %v6137
    %v6139 = vpop.f32.mrf.mxu0
    %v6140 = vadd.f32 %v6053, %v6139
    %v6141 = vand.u32 %v5837, 4294901760
    %v6142 = vsub.f32 %v5837, %v6141
    %6143 = vmatmul.f32.gmra.mxu0 %v6142
    %v6144 = vpop.f32.mrf.mxu0
    %v6145 = vadd.f32 %v6057, %v6144
    %v6146 = vand.u32 %v5840, 4294901760
    %v6147 = vsub.f32 %v5840, %v6146
    %6148 = vmatmul.f32.gmra.mxu0 %v6147
    %v6149 = vpop.f32.mrf.mxu0
    %v6150 = vadd.f32 %v6061, %v6149
    %v6151 = vand.u32 %v5843, 4294901760
    %v6152 = vsub.f32 %v5843, %v6151
    %6153 = vmatmul.f32.gmra.mxu0 %v6152
    %v6154 = vpop.f32.mrf.mxu0
    %v6155 = vadd.f32 %v6065, %v6154
    %v6156 = vand.u32 %v5846, 4294901760
    %v6157 = vsub.f32 %v5846, %v6156
    %6158 = vmatmul.f32.gmra.mxu0 %v6157
    %v6159 = vpop.f32.mrf.mxu0
    %v6160 = vadd.f32 %v6069, %v6159
    %v6161 = vand.u32 %v5849, 4294901760
    %v6162 = vsub.f32 %v5849, %v6161
    %6163 = vmatmul.f32.gmra.mxu0 %v6162
    %v6164 = vpop.f32.mrf.mxu0
    %v6165 = vadd.f32 %v6073, %v6164
    %v6166 = vand.u32 %v5852, 4294901760
    %v6167 = vsub.f32 %v5852, %v6166
    %6168 = vmatmul.f32.gmra.mxu0 %v6167
    %v6169 = vpop.f32.mrf.mxu0
    %v6170 = vadd.f32 %v6077, %v6169
    %v6171 = vand.u32 %v5855, 4294901760
    %v6172 = vsub.f32 %v5855, %v6171
    %6173 = vmatmul.f32.gmra.mxu0 %v6172
    %v6174 = vpop.f32.mrf.mxu0
    %v6175 = vadd.f32 %v6081, %v6174
    %6176 = vdwg.mxu0
    %6177 = vmatpush.msra.mxu0 0.0
    %6178 = vmatpush.msra.mxu0 0.0
    %6179 = vmatpush.msra.mxu0 0.0
    %6180 = vmatpush.msra.mxu0 0.0
    %6181 = vmatpush.msra.mxu0 0.0
    %6182 = vmatpush.msra.mxu0 0.0
    %6183 = vmatpush.msra.mxu0 0.0
    %6184 = vmatpush.msra.mxu0 0.0
    %6185 = vmatpush.msra.mxu0 0.0
    %6186 = vmatpush.msra.mxu0 0.0
    %v6187 = vand.u32 %v5802, 4294901760
    %6188 = vmatpush.msra.mxu0 %v6187
    %v6189 = vand.u32 %v5800, 4294901760
    %6190 = vmatpush.msra.mxu0 %v6189
    %v6191 = vand.u32 %v5798, 4294901760
    %6192 = vmatpush.msra.mxu0 %v6191
    %v6193 = vand.u32 %v5796, 4294901760
    %6194 = vmatpush.msra.mxu0 %v6193
    %v6195 = vand.u32 %v5794, 4294901760
    %6196 = vmatpush.msra.mxu0 %v6195
    %v6197 = vand.u32 %v5792, 4294901760
    %6198 = vmatpush.msra.mxu0 %v6197
    %v6199 = vand.u32 %v5819, 4294901760
    %v6200 = vsub.f32 %v5819, %v6199
    %v6201 = vand.u32 %v6200, 4294901760
    %6202 = vmatmul.f32.gmra.mxu0 %v6201
    %v6203 = vpop.f32.mrf.mxu0
    %v6204 = vadd.f32 %v6115, %v6203
    %v6205 = vand.u32 %v5822, 4294901760
    %v6206 = vsub.f32 %v5822, %v6205
    %v6207 = vand.u32 %v6206, 4294901760
    %6208 = vmatmul.f32.gmra.mxu0 %v6207
    %v6209 = vpop.f32.mrf.mxu0
    %v6210 = vadd.f32 %v6120, %v6209
    %v6211 = vand.u32 %v5825, 4294901760
    %v6212 = vsub.f32 %v5825, %v6211
    %v6213 = vand.u32 %v6212, 4294901760
    %6214 = vmatmul.f32.gmra.mxu0 %v6213
    %v6215 = vpop.f32.mrf.mxu0
    %v6216 = vadd.f32 %v6125, %v6215
    %v6217 = vand.u32 %v5828, 4294901760
    %v6218 = vsub.f32 %v5828, %v6217
    %v6219 = vand.u32 %v6218, 4294901760
    %6220 = vmatmul.f32.gmra.mxu0 %v6219
    %v6221 = vpop.f32.mrf.mxu0
    %v6222 = vadd.f32 %v6130, %v6221
    %v6223 = vand.u32 %v5831, 4294901760
    %v6224 = vsub.f32 %v5831, %v6223
    %v6225 = vand.u32 %v6224, 4294901760
    %6226 = vmatmul.f32.gmra.mxu0 %v6225
    %v6227 = vpop.f32.mrf.mxu0
    %v6228 = vadd.f32 %v6135, %v6227
    %v6229 = vand.u32 %v5834, 4294901760
    %v6230 = vsub.f32 %v5834, %v6229
    %v6231 = vand.u32 %v6230, 4294901760
    %6232 = vmatmul.f32.gmra.mxu0 %v6231
    %v6233 = vpop.f32.mrf.mxu0
    %v6234 = vadd.f32 %v6140, %v6233
    %v6235 = vand.u32 %v5837, 4294901760
    %v6236 = vsub.f32 %v5837, %v6235
    %v6237 = vand.u32 %v6236, 4294901760
    %6238 = vmatmul.f32.gmra.mxu0 %v6237
    %v6239 = vpop.f32.mrf.mxu0
    %v6240 = vadd.f32 %v6145, %v6239
    %v6241 = vand.u32 %v5840, 4294901760
    %v6242 = vsub.f32 %v5840, %v6241
    %v6243 = vand.u32 %v6242, 4294901760
    %6244 = vmatmul.f32.gmra.mxu0 %v6243
    %v6245 = vpop.f32.mrf.mxu0
    %v6246 = vadd.f32 %v6150, %v6245
    %v6247 = vand.u32 %v5843, 4294901760
    %v6248 = vsub.f32 %v5843, %v6247
    %v6249 = vand.u32 %v6248, 4294901760
    %6250 = vmatmul.f32.gmra.mxu0 %v6249
    %v6251 = vpop.f32.mrf.mxu0
    %v6252 = vadd.f32 %v6155, %v6251
    %v6253 = vand.u32 %v5846, 4294901760
    %v6254 = vsub.f32 %v5846, %v6253
    %v6255 = vand.u32 %v6254, 4294901760
    %6256 = vmatmul.f32.gmra.mxu0 %v6255
    %v6257 = vpop.f32.mrf.mxu0
    %v6258 = vadd.f32 %v6160, %v6257
    %v6259 = vand.u32 %v5849, 4294901760
    %v6260 = vsub.f32 %v5849, %v6259
    %v6261 = vand.u32 %v6260, 4294901760
    %6262 = vmatmul.f32.gmra.mxu0 %v6261
    %v6263 = vpop.f32.mrf.mxu0
    %v6264 = vadd.f32 %v6165, %v6263
    %v6265 = vand.u32 %v5852, 4294901760
    %v6266 = vsub.f32 %v5852, %v6265
    %v6267 = vand.u32 %v6266, 4294901760
    %6268 = vmatmul.f32.gmra.mxu0 %v6267
    %v6269 = vpop.f32.mrf.mxu0
    %v6270 = vadd.f32 %v6170, %v6269
    %v6271 = vand.u32 %v5855, 4294901760
    %v6272 = vsub.f32 %v5855, %v6271
    %v6273 = vand.u32 %v6272, 4294901760
    %6274 = vmatmul.f32.gmra.mxu0 %v6273
    %v6275 = vpop.f32.mrf.mxu0
    %v6276 = vadd.f32 %v6175, %v6275
    %6277 = vdwg.mxu0
    %6278 = vmatpush.msra.mxu0 0.0
    %6279 = vmatpush.msra.mxu0 0.0
    %6280 = vmatpush.msra.mxu0 0.0
    %6281 = vmatpush.msra.mxu0 0.0
    %6282 = vmatpush.msra.mxu0 0.0
    %6283 = vmatpush.msra.mxu0 0.0
    %6284 = vmatpush.msra.mxu0 0.0
    %6285 = vmatpush.msra.mxu0 0.0
    %6286 = vmatpush.msra.mxu0 0.0
    %6287 = vmatpush.msra.mxu0 0.0
    %v6288 = vand.u32 %v5802, 4294901760
    %v6289 = vsub.f32 %v5802, %v6288
    %v6290 = vand.u32 %v6289, 4294901760
    %6291 = vmatpush.msra.mxu0 %v6290
    %v6292 = vand.u32 %v5800, 4294901760
    %v6293 = vsub.f32 %v5800, %v6292
    %v6294 = vand.u32 %v6293, 4294901760
    %6295 = vmatpush.msra.mxu0 %v6294
    %v6296 = vand.u32 %v5798, 4294901760
    %v6297 = vsub.f32 %v5798, %v6296
    %v6298 = vand.u32 %v6297, 4294901760
    %6299 = vmatpush.msra.mxu0 %v6298
    %v6300 = vand.u32 %v5796, 4294901760
    %v6301 = vsub.f32 %v5796, %v6300
    %v6302 = vand.u32 %v6301, 4294901760
    %6303 = vmatpush.msra.mxu0 %v6302
    %v6304 = vand.u32 %v5794, 4294901760
    %v6305 = vsub.f32 %v5794, %v6304
    %v6306 = vand.u32 %v6305, 4294901760
    %6307 = vmatpush.msra.mxu0 %v6306
    %v6308 = vand.u32 %v5792, 4294901760
    %v6309 = vsub.f32 %v5792, %v6308
    %v6310 = vand.u32 %v6309, 4294901760
    %6311 = vmatpush.msra.mxu0 %v6310
    %v6312 = vand.u32 %v5819, 4294901760
    %6313 = vmatmul.f32.gmra.mxu0 %v6312
    %v6314 = vpop.f32.mrf.mxu0
    %v6315 = vadd.f32 %v6204, %v6314
    %v6316 = vand.u32 %v5822, 4294901760
    %6317 = vmatmul.f32.gmra.mxu0 %v6316
    %v6318 = vpop.f32.mrf.mxu0
    %v6319 = vadd.f32 %v6210, %v6318
    %v6320 = vand.u32 %v5825, 4294901760
    %6321 = vmatmul.f32.gmra.mxu0 %v6320
    %v6322 = vpop.f32.mrf.mxu0
    %v6323 = vadd.f32 %v6216, %v6322
    %v6324 = vand.u32 %v5828, 4294901760
    %6325 = vmatmul.f32.gmra.mxu0 %v6324
    %v6326 = vpop.f32.mrf.mxu0
    %v6327 = vadd.f32 %v6222, %v6326
    %v6328 = vand.u32 %v5831, 4294901760
    %6329 = vmatmul.f32.gmra.mxu0 %v6328
    %v6330 = vpop.f32.mrf.mxu0
    %v6331 = vadd.f32 %v6228, %v6330
    %v6332 = vand.u32 %v5834, 4294901760
    %6333 = vmatmul.f32.gmra.mxu0 %v6332
    %v6334 = vpop.f32.mrf.mxu0
    %v6335 = vadd.f32 %v6234, %v6334
    %v6336 = vand.u32 %v5837, 4294901760
    %6337 = vmatmul.f32.gmra.mxu0 %v6336
    %v6338 = vpop.f32.mrf.mxu0
    %v6339 = vadd.f32 %v6240, %v6338
    %v6340 = vand.u32 %v5840, 4294901760
    %6341 = vmatmul.f32.gmra.mxu0 %v6340
    %v6342 = vpop.f32.mrf.mxu0
    %v6343 = vadd.f32 %v6246, %v6342
    %v6344 = vand.u32 %v5843, 4294901760
    %6345 = vmatmul.f32.gmra.mxu0 %v6344
    %v6346 = vpop.f32.mrf.mxu0
    %v6347 = vadd.f32 %v6252, %v6346
    %v6348 = vand.u32 %v5846, 4294901760
    %6349 = vmatmul.f32.gmra.mxu0 %v6348
    %v6350 = vpop.f32.mrf.mxu0
    %v6351 = vadd.f32 %v6258, %v6350
    %v6352 = vand.u32 %v5849, 4294901760
    %6353 = vmatmul.f32.gmra.mxu0 %v6352
    %v6354 = vpop.f32.mrf.mxu0
    %v6355 = vadd.f32 %v6264, %v6354
    %v6356 = vand.u32 %v5852, 4294901760
    %6357 = vmatmul.f32.gmra.mxu0 %v6356
    %v6358 = vpop.f32.mrf.mxu0
    %v6359 = vadd.f32 %v6270, %v6358
    %v6360 = vand.u32 %v5855, 4294901760
    %6361 = vmatmul.f32.gmra.mxu0 %v6360
    %v6362 = vpop.f32.mrf.mxu0
    %v6363 = vadd.f32 %v6276, %v6362
    %6364 = vdwg.mxu0
    %6365 = vmatpush.msra.mxu0 0.0
    %6366 = vmatpush.msra.mxu0 0.0
    %6367 = vmatpush.msra.mxu0 0.0
    %6368 = vmatpush.msra.mxu0 0.0
    %6369 = vmatpush.msra.mxu0 0.0
    %6370 = vmatpush.msra.mxu0 0.0
    %6371 = vmatpush.msra.mxu0 0.0
    %6372 = vmatpush.msra.mxu0 0.0
    %6373 = vmatpush.msra.mxu0 0.0
    %6374 = vmatpush.msra.mxu0 0.0
    %v6375 = vand.u32 %v5802, 4294901760
    %6376 = vmatpush.msra.mxu0 %v6375
    %v6377 = vand.u32 %v5800, 4294901760
    %6378 = vmatpush.msra.mxu0 %v6377
    %v6379 = vand.u32 %v5798, 4294901760
    %6380 = vmatpush.msra.mxu0 %v6379
    %v6381 = vand.u32 %v5796, 4294901760
    %6382 = vmatpush.msra.mxu0 %v6381
    %v6383 = vand.u32 %v5794, 4294901760
    %6384 = vmatpush.msra.mxu0 %v6383
    %v6385 = vand.u32 %v5792, 4294901760
    %6386 = vmatpush.msra.mxu0 %v6385
    %v6387 = vand.u32 %v5819, 4294901760
    %6388 = vmatmul.f32.gmra.mxu0 %v6387
    %v6389 = vpop.f32.mrf.mxu0
    %v6390 = vadd.f32 %v6315, %v6389
    %v6391 = vand.u32 %v5822, 4294901760
    %6392 = vmatmul.f32.gmra.mxu0 %v6391
    %v6393 = vpop.f32.mrf.mxu0
    %v6394 = vadd.f32 %v6319, %v6393
    %v6395 = vand.u32 %v5825, 4294901760
    %6396 = vmatmul.f32.gmra.mxu0 %v6395
    %v6397 = vpop.f32.mrf.mxu0
    %v6398 = vadd.f32 %v6323, %v6397
    %v6399 = vand.u32 %v5828, 4294901760
    %6400 = vmatmul.f32.gmra.mxu0 %v6399
    %v6401 = vpop.f32.mrf.mxu0
    %v6402 = vadd.f32 %v6327, %v6401
    %v6403 = vand.u32 %v5831, 4294901760
    %6404 = vmatmul.f32.gmra.mxu0 %v6403
    %v6405 = vpop.f32.mrf.mxu0
    %v6406 = vadd.f32 %v6331, %v6405
    %v6407 = vand.u32 %v5834, 4294901760
    %6408 = vmatmul.f32.gmra.mxu0 %v6407
    %v6409 = vpop.f32.mrf.mxu0
    %v6410 = vadd.f32 %v6335, %v6409
    %v6411 = vand.u32 %v5837, 4294901760
    %6412 = vmatmul.f32.gmra.mxu0 %v6411
    %v6413 = vpop.f32.mrf.mxu0
    %v6414 = vadd.f32 %v6339, %v6413
    %v6415 = vand.u32 %v5840, 4294901760
    %6416 = vmatmul.f32.gmra.mxu0 %v6415
    %v6417 = vpop.f32.mrf.mxu0
    %v6418 = vadd.f32 %v6343, %v6417
    %v6419 = vand.u32 %v5843, 4294901760
    %6420 = vmatmul.f32.gmra.mxu0 %v6419
    %v6421 = vpop.f32.mrf.mxu0
    %v6422 = vadd.f32 %v6347, %v6421
    %v6423 = vand.u32 %v5846, 4294901760
    %6424 = vmatmul.f32.gmra.mxu0 %v6423
    %v6425 = vpop.f32.mrf.mxu0
    %v6426 = vadd.f32 %v6351, %v6425
    %v6427 = vand.u32 %v5849, 4294901760
    %6428 = vmatmul.f32.gmra.mxu0 %v6427
    %v6429 = vpop.f32.mrf.mxu0
    %v6430 = vadd.f32 %v6355, %v6429
    %v6431 = vand.u32 %v5852, 4294901760
    %6432 = vmatmul.f32.gmra.mxu0 %v6431
    %v6433 = vpop.f32.mrf.mxu0
    %v6434 = vadd.f32 %v6359, %v6433
    %v6435 = vand.u32 %v5855, 4294901760
    %6436 = vmatmul.f32.gmra.mxu0 %v6435
    %v6437 = vpop.f32.mrf.mxu0
    %v6438 = vadd.f32 %v6363, %v6437
    %6439 = vdwg.mxu0
    %6440 = vmatpush.msra.mxu0 0.0
    %6441 = vmatpush.msra.mxu0 0.0
    %6442 = vmatpush.msra.mxu0 0.0
    %6443 = vmatpush.msra.mxu0 0.0
    %6444 = vmatpush.msra.mxu0 0.0
    %6445 = vmatpush.msra.mxu0 0.0
    %6446 = vmatpush.msra.mxu0 0.0
    %6447 = vmatpush.msra.mxu0 0.0
    %6448 = vmatpush.msra.mxu0 0.0
    %6449 = vmatpush.msra.mxu0 0.0
    %v6450 = vand.u32 %v5803, 4294901760
    %6451 = vmatpush.msra.mxu0 %v6450
    %v6452 = vand.u32 %v5801, 4294901760
    %6453 = vmatpush.msra.mxu0 %v6452
    %v6454 = vand.u32 %v5799, 4294901760
    %6455 = vmatpush.msra.mxu0 %v6454
    %v6456 = vand.u32 %v5797, 4294901760
    %6457 = vmatpush.msra.mxu0 %v6456
    %v6458 = vand.u32 %v5795, 4294901760
    %6459 = vmatpush.msra.mxu0 %v6458
    %v6460 = vand.u32 %v5793, 4294901760
    %6461 = vmatpush.msra.mxu0 %v6460
    %v6462 = vand.u32 %v5819, 4294901760
    %v6463 = vsub.f32 %v5819, %v6462
    %v6464 = vand.u32 %v6463, 4294901760
    %v6465 = vsub.f32 %v6463, %v6464
    %v6466 = vand.u32 %v6465, 4294901760
    %6467 = vmatmul.f32.gmra.mxu0 %v6466
    %v6468 = vpop.f32.mrf.mxu0
    %v6469 = vadd.f32 0.0, %v6468
    %v6470 = vand.u32 %v5822, 4294901760
    %v6471 = vsub.f32 %v5822, %v6470
    %v6472 = vand.u32 %v6471, 4294901760
    %v6473 = vsub.f32 %v6471, %v6472
    %v6474 = vand.u32 %v6473, 4294901760
    %6475 = vmatmul.f32.gmra.mxu0 %v6474
    %v6476 = vpop.f32.mrf.mxu0
    %v6477 = vadd.f32 0.0, %v6476
    %v6478 = vand.u32 %v5825, 4294901760
    %v6479 = vsub.f32 %v5825, %v6478
    %v6480 = vand.u32 %v6479, 4294901760
    %v6481 = vsub.f32 %v6479, %v6480
    %v6482 = vand.u32 %v6481, 4294901760
    %6483 = vmatmul.f32.gmra.mxu0 %v6482
    %v6484 = vpop.f32.mrf.mxu0
    %v6485 = vadd.f32 0.0, %v6484
    %v6486 = vand.u32 %v5828, 4294901760
    %v6487 = vsub.f32 %v5828, %v6486
    %v6488 = vand.u32 %v6487, 4294901760
    %v6489 = vsub.f32 %v6487, %v6488
    %v6490 = vand.u32 %v6489, 4294901760
    %6491 = vmatmul.f32.gmra.mxu0 %v6490
    %v6492 = vpop.f32.mrf.mxu0
    %v6493 = vadd.f32 0.0, %v6492
    %v6494 = vand.u32 %v5831, 4294901760
    %v6495 = vsub.f32 %v5831, %v6494
    %v6496 = vand.u32 %v6495, 4294901760
    %v6497 = vsub.f32 %v6495, %v6496
    %v6498 = vand.u32 %v6497, 4294901760
    %6499 = vmatmul.f32.gmra.mxu0 %v6498
    %v6500 = vpop.f32.mrf.mxu0
    %v6501 = vadd.f32 0.0, %v6500
    %v6502 = vand.u32 %v5834, 4294901760
    %v6503 = vsub.f32 %v5834, %v6502
    %v6504 = vand.u32 %v6503, 4294901760
    %v6505 = vsub.f32 %v6503, %v6504
    %v6506 = vand.u32 %v6505, 4294901760
    %6507 = vmatmul.f32.gmra.mxu0 %v6506
    %v6508 = vpop.f32.mrf.mxu0
    %v6509 = vadd.f32 0.0, %v6508
    %v6510 = vand.u32 %v5837, 4294901760
    %v6511 = vsub.f32 %v5837, %v6510
    %v6512 = vand.u32 %v6511, 4294901760
    %v6513 = vsub.f32 %v6511, %v6512
    %v6514 = vand.u32 %v6513, 4294901760
    %6515 = vmatmul.f32.gmra.mxu0 %v6514
    %v6516 = vpop.f32.mrf.mxu0
    %v6517 = vadd.f32 0.0, %v6516
    %v6518 = vand.u32 %v5840, 4294901760
    %v6519 = vsub.f32 %v5840, %v6518
    %v6520 = vand.u32 %v6519, 4294901760
    %v6521 = vsub.f32 %v6519, %v6520
    %v6522 = vand.u32 %v6521, 4294901760
    %6523 = vmatmul.f32.gmra.mxu0 %v6522
    %v6524 = vpop.f32.mrf.mxu0
    %v6525 = vadd.f32 0.0, %v6524
    %v6526 = vand.u32 %v5843, 4294901760
    %v6527 = vsub.f32 %v5843, %v6526
    %v6528 = vand.u32 %v6527, 4294901760
    %v6529 = vsub.f32 %v6527, %v6528
    %v6530 = vand.u32 %v6529, 4294901760
    %6531 = vmatmul.f32.gmra.mxu0 %v6530
    %v6532 = vpop.f32.mrf.mxu0
    %v6533 = vadd.f32 0.0, %v6532
    %v6534 = vand.u32 %v5846, 4294901760
    %v6535 = vsub.f32 %v5846, %v6534
    %v6536 = vand.u32 %v6535, 4294901760
    %v6537 = vsub.f32 %v6535, %v6536
    %v6538 = vand.u32 %v6537, 4294901760
    %6539 = vmatmul.f32.gmra.mxu0 %v6538
    %v6540 = vpop.f32.mrf.mxu0
    %v6541 = vadd.f32 0.0, %v6540
    %v6542 = vand.u32 %v5849, 4294901760
    %v6543 = vsub.f32 %v5849, %v6542
    %v6544 = vand.u32 %v6543, 4294901760
    %v6545 = vsub.f32 %v6543, %v6544
    %v6546 = vand.u32 %v6545, 4294901760
    %6547 = vmatmul.f32.gmra.mxu0 %v6546
    %v6548 = vpop.f32.mrf.mxu0
    %v6549 = vadd.f32 0.0, %v6548
    %v6550 = vand.u32 %v5852, 4294901760
    %v6551 = vsub.f32 %v5852, %v6550
    %v6552 = vand.u32 %v6551, 4294901760
    %v6553 = vsub.f32 %v6551, %v6552
    %v6554 = vand.u32 %v6553, 4294901760
    %6555 = vmatmul.f32.gmra.mxu0 %v6554
    %v6556 = vpop.f32.mrf.mxu0
    %v6557 = vadd.f32 0.0, %v6556
    %v6558 = vand.u32 %v5855, 4294901760
    %v6559 = vsub.f32 %v5855, %v6558
    %v6560 = vand.u32 %v6559, 4294901760
    %v6561 = vsub.f32 %v6559, %v6560
    %v6562 = vand.u32 %v6561, 4294901760
    %6563 = vmatmul.f32.gmra.mxu0 %v6562
    %v6564 = vpop.f32.mrf.mxu0
    %v6565 = vadd.f32 0.0, %v6564
    %6566 = vdwg.mxu0
    %6567 = vmatpush.msra.mxu0 0.0
    %6568 = vmatpush.msra.mxu0 0.0
    %6569 = vmatpush.msra.mxu0 0.0
    %6570 = vmatpush.msra.mxu0 0.0
    %6571 = vmatpush.msra.mxu0 0.0
    %6572 = vmatpush.msra.mxu0 0.0
    %6573 = vmatpush.msra.mxu0 0.0
    %6574 = vmatpush.msra.mxu0 0.0
    %6575 = vmatpush.msra.mxu0 0.0
    %6576 = vmatpush.msra.mxu0 0.0
    %v6577 = vand.u32 %v5803, 4294901760
    %v6578 = vsub.f32 %v5803, %v6577
    %v6579 = vand.u32 %v6578, 4294901760
    %v6580 = vsub.f32 %v6578, %v6579
    %v6581 = vand.u32 %v6580, 4294901760
    %6582 = vmatpush.msra.mxu0 %v6581
    %v6583 = vand.u32 %v5801, 4294901760
    %v6584 = vsub.f32 %v5801, %v6583
    %v6585 = vand.u32 %v6584, 4294901760
    %v6586 = vsub.f32 %v6584, %v6585
    %v6587 = vand.u32 %v6586, 4294901760
    %6588 = vmatpush.msra.mxu0 %v6587
    %v6589 = vand.u32 %v5799, 4294901760
    %v6590 = vsub.f32 %v5799, %v6589
    %v6591 = vand.u32 %v6590, 4294901760
    %v6592 = vsub.f32 %v6590, %v6591
    %v6593 = vand.u32 %v6592, 4294901760
    %6594 = vmatpush.msra.mxu0 %v6593
    %v6595 = vand.u32 %v5797, 4294901760
    %v6596 = vsub.f32 %v5797, %v6595
    %v6597 = vand.u32 %v6596, 4294901760
    %v6598 = vsub.f32 %v6596, %v6597
    %v6599 = vand.u32 %v6598, 4294901760
    %6600 = vmatpush.msra.mxu0 %v6599
    %v6601 = vand.u32 %v5795, 4294901760
    %v6602 = vsub.f32 %v5795, %v6601
    %v6603 = vand.u32 %v6602, 4294901760
    %v6604 = vsub.f32 %v6602, %v6603
    %v6605 = vand.u32 %v6604, 4294901760
    %6606 = vmatpush.msra.mxu0 %v6605
    %v6607 = vand.u32 %v5793, 4294901760
    %v6608 = vsub.f32 %v5793, %v6607
    %v6609 = vand.u32 %v6608, 4294901760
    %v6610 = vsub.f32 %v6608, %v6609
    %v6611 = vand.u32 %v6610, 4294901760
    %6612 = vmatpush.msra.mxu0 %v6611
    %v6613 = vand.u32 %v5819, 4294901760
    %6614 = vmatmul.f32.gmra.mxu0 %v6613
    %v6615 = vpop.f32.mrf.mxu0
    %v6616 = vadd.f32 %v6469, %v6615
    %v6617 = vand.u32 %v5822, 4294901760
    %6618 = vmatmul.f32.gmra.mxu0 %v6617
    %v6619 = vpop.f32.mrf.mxu0
    %v6620 = vadd.f32 %v6477, %v6619
    %v6621 = vand.u32 %v5825, 4294901760
    %6622 = vmatmul.f32.gmra.mxu0 %v6621
    %v6623 = vpop.f32.mrf.mxu0
    %v6624 = vadd.f32 %v6485, %v6623
    %v6625 = vand.u32 %v5828, 4294901760
    %6626 = vmatmul.f32.gmra.mxu0 %v6625
    %v6627 = vpop.f32.mrf.mxu0
    %v6628 = vadd.f32 %v6493, %v6627
    %v6629 = vand.u32 %v5831, 4294901760
    %6630 = vmatmul.f32.gmra.mxu0 %v6629
    %v6631 = vpop.f32.mrf.mxu0
    %v6632 = vadd.f32 %v6501, %v6631
    %v6633 = vand.u32 %v5834, 4294901760
    %6634 = vmatmul.f32.gmra.mxu0 %v6633
    %v6635 = vpop.f32.mrf.mxu0
    %v6636 = vadd.f32 %v6509, %v6635
    %v6637 = vand.u32 %v5837, 4294901760
    %6638 = vmatmul.f32.gmra.mxu0 %v6637
    %v6639 = vpop.f32.mrf.mxu0
    %v6640 = vadd.f32 %v6517, %v6639
    %v6641 = vand.u32 %v5840, 4294901760
    %6642 = vmatmul.f32.gmra.mxu0 %v6641
    %v6643 = vpop.f32.mrf.mxu0
    %v6644 = vadd.f32 %v6525, %v6643
    %v6645 = vand.u32 %v5843, 4294901760
    %6646 = vmatmul.f32.gmra.mxu0 %v6645
    %v6647 = vpop.f32.mrf.mxu0
    %v6648 = vadd.f32 %v6533, %v6647
    %v6649 = vand.u32 %v5846, 4294901760
    %6650 = vmatmul.f32.gmra.mxu0 %v6649
    %v6651 = vpop.f32.mrf.mxu0
    %v6652 = vadd.f32 %v6541, %v6651
    %v6653 = vand.u32 %v5849, 4294901760
    %6654 = vmatmul.f32.gmra.mxu0 %v6653
    %v6655 = vpop.f32.mrf.mxu0
    %v6656 = vadd.f32 %v6549, %v6655
    %v6657 = vand.u32 %v5852, 4294901760
    %6658 = vmatmul.f32.gmra.mxu0 %v6657
    %v6659 = vpop.f32.mrf.mxu0
    %v6660 = vadd.f32 %v6557, %v6659
    %v6661 = vand.u32 %v5855, 4294901760
    %6662 = vmatmul.f32.gmra.mxu0 %v6661
    %v6663 = vpop.f32.mrf.mxu0
    %v6664 = vadd.f32 %v6565, %v6663
    %6665 = vdwg.mxu0
    %6666 = vmatpush.msra.mxu0 0.0
    %6667 = vmatpush.msra.mxu0 0.0
    %6668 = vmatpush.msra.mxu0 0.0
    %6669 = vmatpush.msra.mxu0 0.0
    %6670 = vmatpush.msra.mxu0 0.0
    %6671 = vmatpush.msra.mxu0 0.0
    %6672 = vmatpush.msra.mxu0 0.0
    %6673 = vmatpush.msra.mxu0 0.0
    %6674 = vmatpush.msra.mxu0 0.0
    %6675 = vmatpush.msra.mxu0 0.0
    %v6676 = vand.u32 %v5803, 4294901760
    %v6677 = vsub.f32 %v5803, %v6676
    %6678 = vmatpush.msra.mxu0 %v6677
    %v6679 = vand.u32 %v5801, 4294901760
    %v6680 = vsub.f32 %v5801, %v6679
    %6681 = vmatpush.msra.mxu0 %v6680
    %v6682 = vand.u32 %v5799, 4294901760
    %v6683 = vsub.f32 %v5799, %v6682
    %6684 = vmatpush.msra.mxu0 %v6683
    %v6685 = vand.u32 %v5797, 4294901760
    %v6686 = vsub.f32 %v5797, %v6685
    %6687 = vmatpush.msra.mxu0 %v6686
    %v6688 = vand.u32 %v5795, 4294901760
    %v6689 = vsub.f32 %v5795, %v6688
    %6690 = vmatpush.msra.mxu0 %v6689
    %v6691 = vand.u32 %v5793, 4294901760
    %v6692 = vsub.f32 %v5793, %v6691
    %6693 = vmatpush.msra.mxu0 %v6692
    %v6694 = vand.u32 %v5819, 4294901760
    %v6695 = vsub.f32 %v5819, %v6694
    %6696 = vmatmul.f32.gmra.mxu0 %v6695
    %v6697 = vpop.f32.mrf.mxu0
    %v6698 = vadd.f32 %v6616, %v6697
    %v6699 = vand.u32 %v5822, 4294901760
    %v6700 = vsub.f32 %v5822, %v6699
    %6701 = vmatmul.f32.gmra.mxu0 %v6700
    %v6702 = vpop.f32.mrf.mxu0
    %v6703 = vadd.f32 %v6620, %v6702
    %v6704 = vand.u32 %v5825, 4294901760
    %v6705 = vsub.f32 %v5825, %v6704
    %6706 = vmatmul.f32.gmra.mxu0 %v6705
    %v6707 = vpop.f32.mrf.mxu0
    %v6708 = vadd.f32 %v6624, %v6707
    %v6709 = vand.u32 %v5828, 4294901760
    %v6710 = vsub.f32 %v5828, %v6709
    %6711 = vmatmul.f32.gmra.mxu0 %v6710
    %v6712 = vpop.f32.mrf.mxu0
    %v6713 = vadd.f32 %v6628, %v6712
    %v6714 = vand.u32 %v5831, 4294901760
    %v6715 = vsub.f32 %v5831, %v6714
    %6716 = vmatmul.f32.gmra.mxu0 %v6715
    %v6717 = vpop.f32.mrf.mxu0
    %v6718 = vadd.f32 %v6632, %v6717
    %v6719 = vand.u32 %v5834, 4294901760
    %v6720 = vsub.f32 %v5834, %v6719
    %6721 = vmatmul.f32.gmra.mxu0 %v6720
    %v6722 = vpop.f32.mrf.mxu0
    %v6723 = vadd.f32 %v6636, %v6722
    %v6724 = vand.u32 %v5837, 4294901760
    %v6725 = vsub.f32 %v5837, %v6724
    %6726 = vmatmul.f32.gmra.mxu0 %v6725
    %v6727 = vpop.f32.mrf.mxu0
    %v6728 = vadd.f32 %v6640, %v6727
    %v6729 = vand.u32 %v5840, 4294901760
    %v6730 = vsub.f32 %v5840, %v6729
    %6731 = vmatmul.f32.gmra.mxu0 %v6730
    %v6732 = vpop.f32.mrf.mxu0
    %v6733 = vadd.f32 %v6644, %v6732
    %v6734 = vand.u32 %v5843, 4294901760
    %v6735 = vsub.f32 %v5843, %v6734
    %6736 = vmatmul.f32.gmra.mxu0 %v6735
    %v6737 = vpop.f32.mrf.mxu0
    %v6738 = vadd.f32 %v6648, %v6737
    %v6739 = vand.u32 %v5846, 4294901760
    %v6740 = vsub.f32 %v5846, %v6739
    %6741 = vmatmul.f32.gmra.mxu0 %v6740
    %v6742 = vpop.f32.mrf.mxu0
    %v6743 = vadd.f32 %v6652, %v6742
    %v6744 = vand.u32 %v5849, 4294901760
    %v6745 = vsub.f32 %v5849, %v6744
    %6746 = vmatmul.f32.gmra.mxu0 %v6745
    %v6747 = vpop.f32.mrf.mxu0
    %v6748 = vadd.f32 %v6656, %v6747
    %v6749 = vand.u32 %v5852, 4294901760
    %v6750 = vsub.f32 %v5852, %v6749
    %6751 = vmatmul.f32.gmra.mxu0 %v6750
    %v6752 = vpop.f32.mrf.mxu0
    %v6753 = vadd.f32 %v6660, %v6752
    %v6754 = vand.u32 %v5855, 4294901760
    %v6755 = vsub.f32 %v5855, %v6754
    %6756 = vmatmul.f32.gmra.mxu0 %v6755
    %v6757 = vpop.f32.mrf.mxu0
    %v6758 = vadd.f32 %v6664, %v6757
    %6759 = vdwg.mxu0
    %6760 = vmatpush.msra.mxu0 0.0
    %6761 = vmatpush.msra.mxu0 0.0
    %6762 = vmatpush.msra.mxu0 0.0
    %6763 = vmatpush.msra.mxu0 0.0
    %6764 = vmatpush.msra.mxu0 0.0
    %6765 = vmatpush.msra.mxu0 0.0
    %6766 = vmatpush.msra.mxu0 0.0
    %6767 = vmatpush.msra.mxu0 0.0
    %6768 = vmatpush.msra.mxu0 0.0
    %6769 = vmatpush.msra.mxu0 0.0
    %v6770 = vand.u32 %v5803, 4294901760
    %6771 = vmatpush.msra.mxu0 %v6770
    %v6772 = vand.u32 %v5801, 4294901760
    %6773 = vmatpush.msra.mxu0 %v6772
    %v6774 = vand.u32 %v5799, 4294901760
    %6775 = vmatpush.msra.mxu0 %v6774
    %v6776 = vand.u32 %v5797, 4294901760
    %6777 = vmatpush.msra.mxu0 %v6776
    %v6778 = vand.u32 %v5795, 4294901760
    %6779 = vmatpush.msra.mxu0 %v6778
    %v6780 = vand.u32 %v5793, 4294901760
    %6781 = vmatpush.msra.mxu0 %v6780
    %v6782 = vand.u32 %v5819, 4294901760
    %v6783 = vsub.f32 %v5819, %v6782
    %v6784 = vand.u32 %v6783, 4294901760
    %6785 = vmatmul.f32.gmra.mxu0 %v6784
    %v6786 = vpop.f32.mrf.mxu0
    %v6787 = vadd.f32 %v6698, %v6786
    %v6788 = vand.u32 %v5822, 4294901760
    %v6789 = vsub.f32 %v5822, %v6788
    %v6790 = vand.u32 %v6789, 4294901760
    %6791 = vmatmul.f32.gmra.mxu0 %v6790
    %v6792 = vpop.f32.mrf.mxu0
    %v6793 = vadd.f32 %v6703, %v6792
    %v6794 = vand.u32 %v5825, 4294901760
    %v6795 = vsub.f32 %v5825, %v6794
    %v6796 = vand.u32 %v6795, 4294901760
    %6797 = vmatmul.f32.gmra.mxu0 %v6796
    %v6798 = vpop.f32.mrf.mxu0
    %v6799 = vadd.f32 %v6708, %v6798
    %v6800 = vand.u32 %v5828, 4294901760
    %v6801 = vsub.f32 %v5828, %v6800
    %v6802 = vand.u32 %v6801, 4294901760
    %6803 = vmatmul.f32.gmra.mxu0 %v6802
    %v6804 = vpop.f32.mrf.mxu0
    %v6805 = vadd.f32 %v6713, %v6804
    %v6806 = vand.u32 %v5831, 4294901760
    %v6807 = vsub.f32 %v5831, %v6806
    %v6808 = vand.u32 %v6807, 4294901760
    %6809 = vmatmul.f32.gmra.mxu0 %v6808
    %v6810 = vpop.f32.mrf.mxu0
    %v6811 = vadd.f32 %v6718, %v6810
    %v6812 = vand.u32 %v5834, 4294901760
    %v6813 = vsub.f32 %v5834, %v6812
    %v6814 = vand.u32 %v6813, 4294901760
    %6815 = vmatmul.f32.gmra.mxu0 %v6814
    %v6816 = vpop.f32.mrf.mxu0
    %v6817 = vadd.f32 %v6723, %v6816
    %v6818 = vand.u32 %v5837, 4294901760
    %v6819 = vsub.f32 %v5837, %v6818
    %v6820 = vand.u32 %v6819, 4294901760
    %6821 = vmatmul.f32.gmra.mxu0 %v6820
    %v6822 = vpop.f32.mrf.mxu0
    %v6823 = vadd.f32 %v6728, %v6822
    %v6824 = vand.u32 %v5840, 4294901760
    %v6825 = vsub.f32 %v5840, %v6824
    %v6826 = vand.u32 %v6825, 4294901760
    %6827 = vmatmul.f32.gmra.mxu0 %v6826
    %v6828 = vpop.f32.mrf.mxu0
    %v6829 = vadd.f32 %v6733, %v6828
    %v6830 = vand.u32 %v5843, 4294901760
    %v6831 = vsub.f32 %v5843, %v6830
    %v6832 = vand.u32 %v6831, 4294901760
    %6833 = vmatmul.f32.gmra.mxu0 %v6832
    %v6834 = vpop.f32.mrf.mxu0
    %v6835 = vadd.f32 %v6738, %v6834
    %v6836 = vand.u32 %v5846, 4294901760
    %v6837 = vsub.f32 %v5846, %v6836
    %v6838 = vand.u32 %v6837, 4294901760
    %6839 = vmatmul.f32.gmra.mxu0 %v6838
    %v6840 = vpop.f32.mrf.mxu0
    %v6841 = vadd.f32 %v6743, %v6840
    %v6842 = vand.u32 %v5849, 4294901760
    %v6843 = vsub.f32 %v5849, %v6842
    %v6844 = vand.u32 %v6843, 4294901760
    %6845 = vmatmul.f32.gmra.mxu0 %v6844
    %v6846 = vpop.f32.mrf.mxu0
    %v6847 = vadd.f32 %v6748, %v6846
    %v6848 = vand.u32 %v5852, 4294901760
    %v6849 = vsub.f32 %v5852, %v6848
    %v6850 = vand.u32 %v6849, 4294901760
    %6851 = vmatmul.f32.gmra.mxu0 %v6850
    %v6852 = vpop.f32.mrf.mxu0
    %v6853 = vadd.f32 %v6753, %v6852
    %v6854 = vand.u32 %v5855, 4294901760
    %v6855 = vsub.f32 %v5855, %v6854
    %v6856 = vand.u32 %v6855, 4294901760
    %6857 = vmatmul.f32.gmra.mxu0 %v6856
    %v6858 = vpop.f32.mrf.mxu0
    %v6859 = vadd.f32 %v6758, %v6858
    %6860 = vdwg.mxu0
    %6861 = vmatpush.msra.mxu0 0.0
    %6862 = vmatpush.msra.mxu0 0.0
    %6863 = vmatpush.msra.mxu0 0.0
    %6864 = vmatpush.msra.mxu0 0.0
    %6865 = vmatpush.msra.mxu0 0.0
    %6866 = vmatpush.msra.mxu0 0.0
    %6867 = vmatpush.msra.mxu0 0.0
    %6868 = vmatpush.msra.mxu0 0.0
    %6869 = vmatpush.msra.mxu0 0.0
    %6870 = vmatpush.msra.mxu0 0.0
    %v6871 = vand.u32 %v5803, 4294901760
    %v6872 = vsub.f32 %v5803, %v6871
    %v6873 = vand.u32 %v6872, 4294901760
    %6874 = vmatpush.msra.mxu0 %v6873
    %v6875 = vand.u32 %v5801, 4294901760
    %v6876 = vsub.f32 %v5801, %v6875
    %v6877 = vand.u32 %v6876, 4294901760
    %6878 = vmatpush.msra.mxu0 %v6877
    %v6879 = vand.u32 %v5799, 4294901760
    %v6880 = vsub.f32 %v5799, %v6879
    %v6881 = vand.u32 %v6880, 4294901760
    %6882 = vmatpush.msra.mxu0 %v6881
    %v6883 = vand.u32 %v5797, 4294901760
    %v6884 = vsub.f32 %v5797, %v6883
    %v6885 = vand.u32 %v6884, 4294901760
    %6886 = vmatpush.msra.mxu0 %v6885
    %v6887 = vand.u32 %v5795, 4294901760
    %v6888 = vsub.f32 %v5795, %v6887
    %v6889 = vand.u32 %v6888, 4294901760
    %6890 = vmatpush.msra.mxu0 %v6889
    %v6891 = vand.u32 %v5793, 4294901760
    %v6892 = vsub.f32 %v5793, %v6891
    %v6893 = vand.u32 %v6892, 4294901760
    %6894 = vmatpush.msra.mxu0 %v6893
    %v6895 = vand.u32 %v5819, 4294901760
    %6896 = vmatmul.f32.gmra.mxu0 %v6895
    %v6897 = vpop.f32.mrf.mxu0
    %v6898 = vadd.f32 %v6787, %v6897
    %v6899 = vand.u32 %v5822, 4294901760
    %6900 = vmatmul.f32.gmra.mxu0 %v6899
    %v6901 = vpop.f32.mrf.mxu0
    %v6902 = vadd.f32 %v6793, %v6901
    %v6903 = vand.u32 %v5825, 4294901760
    %6904 = vmatmul.f32.gmra.mxu0 %v6903
    %v6905 = vpop.f32.mrf.mxu0
    %v6906 = vadd.f32 %v6799, %v6905
    %v6907 = vand.u32 %v5828, 4294901760
    %6908 = vmatmul.f32.gmra.mxu0 %v6907
    %v6909 = vpop.f32.mrf.mxu0
    %v6910 = vadd.f32 %v6805, %v6909
    %v6911 = vand.u32 %v5831, 4294901760
    %6912 = vmatmul.f32.gmra.mxu0 %v6911
    %v6913 = vpop.f32.mrf.mxu0
    %v6914 = vadd.f32 %v6811, %v6913
    %v6915 = vand.u32 %v5834, 4294901760
    %6916 = vmatmul.f32.gmra.mxu0 %v6915
    %v6917 = vpop.f32.mrf.mxu0
    %v6918 = vadd.f32 %v6817, %v6917
    %v6919 = vand.u32 %v5837, 4294901760
    %6920 = vmatmul.f32.gmra.mxu0 %v6919
    %v6921 = vpop.f32.mrf.mxu0
    %v6922 = vadd.f32 %v6823, %v6921
    %v6923 = vand.u32 %v5840, 4294901760
    %6924 = vmatmul.f32.gmra.mxu0 %v6923
    %v6925 = vpop.f32.mrf.mxu0
    %v6926 = vadd.f32 %v6829, %v6925
    %v6927 = vand.u32 %v5843, 4294901760
    %6928 = vmatmul.f32.gmra.mxu0 %v6927
    %v6929 = vpop.f32.mrf.mxu0
    %v6930 = vadd.f32 %v6835, %v6929
    %v6931 = vand.u32 %v5846, 4294901760
    %6932 = vmatmul.f32.gmra.mxu0 %v6931
    %v6933 = vpop.f32.mrf.mxu0
    %v6934 = vadd.f32 %v6841, %v6933
    %v6935 = vand.u32 %v5849, 4294901760
    %6936 = vmatmul.f32.gmra.mxu0 %v6935
    %v6937 = vpop.f32.mrf.mxu0
    %v6938 = vadd.f32 %v6847, %v6937
    %v6939 = vand.u32 %v5852, 4294901760
    %6940 = vmatmul.f32.gmra.mxu0 %v6939
    %v6941 = vpop.f32.mrf.mxu0
    %v6942 = vadd.f32 %v6853, %v6941
    %v6943 = vand.u32 %v5855, 4294901760
    %6944 = vmatmul.f32.gmra.mxu0 %v6943
    %v6945 = vpop.f32.mrf.mxu0
    %v6946 = vadd.f32 %v6859, %v6945
    %6947 = vdwg.mxu0
    %6948 = vmatpush.msra.mxu0 0.0
    %6949 = vmatpush.msra.mxu0 0.0
    %6950 = vmatpush.msra.mxu0 0.0
    %6951 = vmatpush.msra.mxu0 0.0
    %6952 = vmatpush.msra.mxu0 0.0
    %6953 = vmatpush.msra.mxu0 0.0
    %6954 = vmatpush.msra.mxu0 0.0
    %6955 = vmatpush.msra.mxu0 0.0
    %6956 = vmatpush.msra.mxu0 0.0
    %6957 = vmatpush.msra.mxu0 0.0
    %v6958 = vand.u32 %v5803, 4294901760
    %6959 = vmatpush.msra.mxu0 %v6958
    %v6960 = vand.u32 %v5801, 4294901760
    %6961 = vmatpush.msra.mxu0 %v6960
    %v6962 = vand.u32 %v5799, 4294901760
    %6963 = vmatpush.msra.mxu0 %v6962
    %v6964 = vand.u32 %v5797, 4294901760
    %6965 = vmatpush.msra.mxu0 %v6964
    %v6966 = vand.u32 %v5795, 4294901760
    %6967 = vmatpush.msra.mxu0 %v6966
    %v6968 = vand.u32 %v5793, 4294901760
    %6969 = vmatpush.msra.mxu0 %v6968
    %v6970 = vand.u32 %v5819, 4294901760
    %6971 = vmatmul.f32.gmra.mxu0 %v6970
    %v6972 = vpop.f32.mrf.mxu0
    %v6973 = vadd.f32 %v6898, %v6972
    %v6974 = vand.u32 %v5822, 4294901760
    %6975 = vmatmul.f32.gmra.mxu0 %v6974
    %v6976 = vpop.f32.mrf.mxu0
    %v6977 = vadd.f32 %v6902, %v6976
    %v6978 = vand.u32 %v5825, 4294901760
    %6979 = vmatmul.f32.gmra.mxu0 %v6978
    %v6980 = vpop.f32.mrf.mxu0
    %v6981 = vadd.f32 %v6906, %v6980
    %v6982 = vand.u32 %v5828, 4294901760
    %6983 = vmatmul.f32.gmra.mxu0 %v6982
    %v6984 = vpop.f32.mrf.mxu0
    %v6985 = vadd.f32 %v6910, %v6984
    %v6986 = vand.u32 %v5831, 4294901760
    %6987 = vmatmul.f32.gmra.mxu0 %v6986
    %v6988 = vpop.f32.mrf.mxu0
    %v6989 = vadd.f32 %v6914, %v6988
    %v6990 = vand.u32 %v5834, 4294901760
    %6991 = vmatmul.f32.gmra.mxu0 %v6990
    %v6992 = vpop.f32.mrf.mxu0
    %v6993 = vadd.f32 %v6918, %v6992
    %v6994 = vand.u32 %v5837, 4294901760
    %6995 = vmatmul.f32.gmra.mxu0 %v6994
    %v6996 = vpop.f32.mrf.mxu0
    %v6997 = vadd.f32 %v6922, %v6996
    %v6998 = vand.u32 %v5840, 4294901760
    %6999 = vmatmul.f32.gmra.mxu0 %v6998
    %v7000 = vpop.f32.mrf.mxu0
    %v7001 = vadd.f32 %v6926, %v7000
    %v7002 = vand.u32 %v5843, 4294901760
    %7003 = vmatmul.f32.gmra.mxu0 %v7002
    %v7004 = vpop.f32.mrf.mxu0
    %v7005 = vadd.f32 %v6930, %v7004
    %v7006 = vand.u32 %v5846, 4294901760
    %7007 = vmatmul.f32.gmra.mxu0 %v7006
    %v7008 = vpop.f32.mrf.mxu0
    %v7009 = vadd.f32 %v6934, %v7008
    %v7010 = vand.u32 %v5849, 4294901760
    %7011 = vmatmul.f32.gmra.mxu0 %v7010
    %v7012 = vpop.f32.mrf.mxu0
    %v7013 = vadd.f32 %v6938, %v7012
    %v7014 = vand.u32 %v5852, 4294901760
    %7015 = vmatmul.f32.gmra.mxu0 %v7014
    %v7016 = vpop.f32.mrf.mxu0
    %v7017 = vadd.f32 %v6942, %v7016
    %v7018 = vand.u32 %v5855, 4294901760
    %7019 = vmatmul.f32.gmra.mxu0 %v7018
    %v7020 = vpop.f32.mrf.mxu0
    %v7021 = vadd.f32 %v6946, %v7020
    %7022 = vdwg.mxu0
    %v7023 = vadd.f32 %v6390, %v6394
    %v7024 = vadd.f32 %v7023, %v6398
    %v7025 = vadd.f32 %v7024, %v6402
    %v7026 = vadd.f32 %v7025, %v6406
    %v7027 = vadd.f32 %v7026, %v6410
    %v7028 = vadd.f32 %v7027, %v6414
    %v7029 = vadd.f32 %v7028, %v6418
    %v7030 = vadd.f32 %v7029, %v6422
    %v7031 = vadd.f32 %v7030, %v6426
    %v7032 = vadd.f32 %v7031, %v6430
    %v7033 = vadd.f32 %v7032, %v6434
    %vm7034 = vcmask 1042432
    %v7035 = vsel %vm7034, %v6438, 0.0
    %v7036 = vadd.f32 %v7033, %v7035
    %v7037 = vrot.slane %v7036, 4
    %v7038 = vadd.f32 %v7036, %v7037
    %v7039 = vrot.slane %v7038, 2
    %v7040 = vadd.f32 %v7038, %v7039
    %v7041 = vrot.slane %v7040, 1
    %v7042 = vadd.f32 %v7040, %v7041
    %v7043 = vadd.f32 %v6973, %v6977
    %v7044 = vadd.f32 %v7043, %v6981
    %v7045 = vadd.f32 %v7044, %v6985
    %v7046 = vadd.f32 %v7045, %v6989
    %v7047 = vadd.f32 %v7046, %v6993
    %v7048 = vadd.f32 %v7047, %v6997
    %v7049 = vadd.f32 %v7048, %v7001
    %v7050 = vadd.f32 %v7049, %v7005
    %v7051 = vadd.f32 %v7050, %v7009
    %v7052 = vadd.f32 %v7051, %v7013
    %v7053 = vadd.f32 %v7052, %v7017
    %v7054 = vsel %vm7034, %v7021, 0.0
    %v7055 = vadd.f32 %v7053, %v7054
    %v7056 = vrot.slane %v7055, 4
    %v7057 = vadd.f32 %v7055, %v7056
    %v7058 = vrot.slane %v7057, 2
    %v7059 = vadd.f32 %v7057, %v7058
    %v7060 = vrot.slane %v7059, 1
    %v7061 = vadd.f32 %v7059, %v7060
    %v7062 = vadd.f32 %v7042, 0.0
    %v7063 = vadd.f32 %v7061, 0.0
    %v7064 = vmul.f32 %v6390, %v6390
    %v7065 = vmul.f32 %v6973, %v6973
    %v7066 = vmul.f32 %v6394, %v6394
    %v7067 = vmul.f32 %v6977, %v6977
    %v7068 = vmul.f32 %v6398, %v6398
    %v7069 = vmul.f32 %v6981, %v6981
    %v7070 = vmul.f32 %v6402, %v6402
    %v7071 = vmul.f32 %v6985, %v6985
    %v7072 = vmul.f32 %v6406, %v6406
    %v7073 = vmul.f32 %v6989, %v6989
    %v7074 = vmul.f32 %v6410, %v6410
    %v7075 = vmul.f32 %v6993, %v6993
    %v7076 = vmul.f32 %v6414, %v6414
    %v7077 = vmul.f32 %v6997, %v6997
    %v7078 = vmul.f32 %v6418, %v6418
    %v7079 = vmul.f32 %v7001, %v7001
    %v7080 = vmul.f32 %v6422, %v6422
    %v7081 = vmul.f32 %v7005, %v7005
    %v7082 = vmul.f32 %v6426, %v6426
    %v7083 = vmul.f32 %v7009, %v7009
    %v7084 = vmul.f32 %v6430, %v6430
    %v7085 = vmul.f32 %v7013, %v7013
    %v7086 = vmul.f32 %v6434, %v6434
    %v7087 = vmul.f32 %v7017, %v7017
    %v7088 = vmul.f32 %v6438, %v6438
    %v7089 = vmul.f32 %v7021, %v7021
    %v7090 = vadd.f32 %v7064, %v7066
    %v7091 = vadd.f32 %v7090, %v7068
    %v7092 = vadd.f32 %v7091, %v7070
    %v7093 = vadd.f32 %v7092, %v7072
    %v7094 = vadd.f32 %v7093, %v7074
    %v7095 = vadd.f32 %v7094, %v7076
    %v7096 = vadd.f32 %v7095, %v7078
    %v7097 = vadd.f32 %v7096, %v7080
    %v7098 = vadd.f32 %v7097, %v7082
    %v7099 = vadd.f32 %v7098, %v7084
    %v7100 = vadd.f32 %v7099, %v7086
    %v7101 = vsel %vm7034, %v7088, 0.0
    %v7102 = vadd.f32 %v7100, %v7101
    %v7103 = vrot.slane %v7102, 4
    %v7104 = vadd.f32 %v7102, %v7103
    %v7105 = vrot.slane %v7104, 2
    %v7106 = vadd.f32 %v7104, %v7105
    %v7107 = vrot.slane %v7106, 1
    %v7108 = vadd.f32 %v7106, %v7107
    %v7109 = vadd.f32 %v7065, %v7067
    %v7110 = vadd.f32 %v7109, %v7069
    %v7111 = vadd.f32 %v7110, %v7071
    %v7112 = vadd.f32 %v7111, %v7073
    %v7113 = vadd.f32 %v7112, %v7075
    %v7114 = vadd.f32 %v7113, %v7077
    %v7115 = vadd.f32 %v7114, %v7079
    %v7116 = vadd.f32 %v7115, %v7081
    %v7117 = vadd.f32 %v7116, %v7083
    %v7118 = vadd.f32 %v7117, %v7085
    %v7119 = vadd.f32 %v7118, %v7087
    %v7120 = vsel %vm7034, %v7089, 0.0
    %v7121 = vadd.f32 %v7119, %v7120
    %v7122 = vrot.slane %v7121, 4
    %v7123 = vadd.f32 %v7121, %v7122
    %v7124 = vrot.slane %v7123, 2
    %v7125 = vadd.f32 %v7123, %v7124
    %v7126 = vrot.slane %v7125, 1
    %v7127 = vadd.f32 %v7125, %v7126
    %v7128 = vadd.f32 %v7108, 0.0
    %v7129 = vadd.f32 %v7127, 0.0
    %v7130 = vmax.f32 %v6390, %v6398
    %v7131 = vmax.f32 %v6394, %v6402
    %v7132 = vmax.f32 %v7130, %v6406
    %v7133 = vmax.f32 %v7131, %v6410
    %v7134 = vmax.f32 %v7132, %v6414
    %v7135 = vmax.f32 %v7133, %v6418
    %v7136 = vmax.f32 %v7134, %v6422
    %v7137 = vmax.f32 %v7135, %v6426
    %v7138 = vmax.f32 %v7136, %v6430
    %v7139 = vmax.f32 %v7137, %v6434
    %v7140 = vsel %vm7034, %v6438, -inf
    %v7141 = vmax.f32 %v7138, %v7140
    %v7142 = vmax.f32 %v7141, %v7139
    %v7143 = vrot.slane %v7142, 4
    %v7144 = vmax.f32 %v7142, %v7143
    %v7145 = vrot.slane %v7144, 2
    %v7146 = vmax.f32 %v7144, %v7145
    %v7147 = vrot.slane %v7146, 1
    %v7148 = vmax.f32 %v7146, %v7147
    %v7149 = vmax.f32 %v6973, %v6981
    %v7150 = vmax.f32 %v6977, %v6985
    %v7151 = vmax.f32 %v7149, %v6989
    %v7152 = vmax.f32 %v7150, %v6993
    %v7153 = vmax.f32 %v7151, %v6997
    %v7154 = vmax.f32 %v7152, %v7001
    %v7155 = vmax.f32 %v7153, %v7005
    %v7156 = vmax.f32 %v7154, %v7009
    %v7157 = vmax.f32 %v7155, %v7013
    %v7158 = vmax.f32 %v7156, %v7017
    %v7159 = vsel %vm7034, %v7021, -inf
    %v7160 = vmax.f32 %v7157, %v7159
    %v7161 = vmax.f32 %v7160, %v7158
    %v7162 = vrot.slane %v7161, 4
    %v7163 = vmax.f32 %v7161, %v7162
    %v7164 = vrot.slane %v7163, 2
    %v7165 = vmax.f32 %v7163, %v7164
    %v7166 = vrot.slane %v7165, 1
    %v7167 = vmax.f32 %v7165, %v7166
    %v7168 = vmin.f32 %v6390, %v6398
    %v7169 = vmin.f32 %v6394, %v6402
    %v7170 = vmin.f32 %v7168, %v6406
    %v7171 = vmin.f32 %v7169, %v6410
    %v7172 = vmin.f32 %v7170, %v6414
    %v7173 = vmin.f32 %v7171, %v6418
    %v7174 = vmin.f32 %v7172, %v6422
    %v7175 = vmin.f32 %v7173, %v6426
    %v7176 = vmin.f32 %v7174, %v6430
    %v7177 = vmin.f32 %v7175, %v6434
    %v7178 = vsel %vm7034, %v6438, inf
    %v7179 = vmin.f32 %v7176, %v7178
    %v7180 = vmin.f32 %v7179, %v7177
    %v7181 = vrot.slane %v7180, 4
    %v7182 = vmin.f32 %v7180, %v7181
    %v7183 = vrot.slane %v7182, 2
    %v7184 = vmin.f32 %v7182, %v7183
    %v7185 = vrot.slane %v7184, 1
    %v7186 = vmin.f32 %v7184, %v7185
    %v7187 = vmin.f32 %v6973, %v6981
    %v7188 = vmin.f32 %v6977, %v6985
    %v7189 = vmin.f32 %v7187, %v6989
    %v7190 = vmin.f32 %v7188, %v6993
    %v7191 = vmin.f32 %v7189, %v6997
    %v7192 = vmin.f32 %v7190, %v7001
    %v7193 = vmin.f32 %v7191, %v7005
    %v7194 = vmin.f32 %v7192, %v7009
    %v7195 = vmin.f32 %v7193, %v7013
    %v7196 = vmin.f32 %v7194, %v7017
    %v7197 = vsel %vm7034, %v7021, inf
    %v7198 = vmin.f32 %v7195, %v7197
    %v7199 = vmin.f32 %v7198, %v7196
    %v7200 = vrot.slane %v7199, 4
    %v7201 = vmin.f32 %v7199, %v7200
    %v7202 = vrot.slane %v7201, 2
    %v7203 = vmin.f32 %v7201, %v7202
    %v7204 = vrot.slane %v7203, 1
    %v7205 = vmin.f32 %v7203, %v7204
    %s7206 = scalar_lea.vmem %s2, 104
    %v7207 = vld [vmem:[%s7206] sm:$0xff]
    %v7208 = vld [vmem:[%s7206 + $0x8] sm:$0xff]
    %v7209 = vld [vmem:[%s7206 + $0x10] sm:$0xff]
    %v7210 = vld [vmem:[%s7206 + $0x18] sm:$0xff]
    %v7211 = vld [vmem:[%s7206 + $0x20] sm:$0xff]
    %v7212 = vld [vmem:[%s7206 + $0x28] sm:$0xff]
    %v7213 = vld [vmem:[%s7206 + $0x30] sm:$0xff]
    %v7214 = vld [vmem:[%s7206 + $0x38] sm:$0xff]
    %v7215 = vld [vmem:[%s7206 + $0x40] sm:$0xff]
    %v7216 = vld [vmem:[%s7206 + $0x48] sm:$0xff]
    %v7217 = vld [vmem:[%s7206 + $0x50] sm:$0xff]
    %v7218 = vld [vmem:[%s7206 + $0x58] sm:$0xff]
    %v7219 = vld [vmem:[%s7206 + $0x60] sm:$0x7]
    %v7221 = vsel %vm5817, %v7207, 0
    %v7224 = vsel %vm5817, %v7208, 0
    %v7227 = vsel %vm5817, %v7209, 0
    %v7230 = vsel %vm5817, %v7210, 0
    %v7233 = vsel %vm5817, %v7211, 0
    %v7236 = vsel %vm5817, %v7212, 0
    %v7239 = vsel %vm5817, %v7213, 0
    %v7242 = vsel %vm5817, %v7214, 0
    %v7245 = vsel %vm5817, %v7215, 0
    %v7248 = vsel %vm5817, %v7216, 0
    %v7251 = vsel %vm5817, %v7217, 0
    %v7254 = vsel %vm5817, %v7218, 0
    %v7257 = vsel %vm5817, %v7219, 0
    %7259 = vmatpush.msra.mxu0 0.0
    %7260 = vmatpush.msra.mxu0 0.0
    %7261 = vmatpush.msra.mxu0 0.0
    %7262 = vmatpush.msra.mxu0 0.0
    %7263 = vmatpush.msra.mxu0 0.0
    %7264 = vmatpush.msra.mxu0 0.0
    %7265 = vmatpush.msra.mxu0 0.0
    %7266 = vmatpush.msra.mxu0 0.0
    %7267 = vmatpush.msra.mxu0 0.0
    %7268 = vmatpush.msra.mxu0 0.0
    %v7269 = vand.u32 %v5802, 4294901760
    %7270 = vmatpush.msra.mxu0 %v7269
    %v7271 = vand.u32 %v5800, 4294901760
    %7272 = vmatpush.msra.mxu0 %v7271
    %v7273 = vand.u32 %v5798, 4294901760
    %7274 = vmatpush.msra.mxu0 %v7273
    %v7275 = vand.u32 %v5796, 4294901760
    %7276 = vmatpush.msra.mxu0 %v7275
    %v7277 = vand.u32 %v5794, 4294901760
    %7278 = vmatpush.msra.mxu0 %v7277
    %v7279 = vand.u32 %v5792, 4294901760
    %7280 = vmatpush.msra.mxu0 %v7279
    %v7281 = vand.u32 %v7221, 4294901760
    %v7282 = vsub.f32 %v7221, %v7281
    %v7283 = vand.u32 %v7282, 4294901760
    %v7284 = vsub.f32 %v7282, %v7283
    %v7285 = vand.u32 %v7284, 4294901760
    %7286 = vmatmul.f32.gmra.mxu0 %v7285
    %v7287 = vpop.f32.mrf.mxu0
    %v7288 = vadd.f32 0.0, %v7287
    %v7289 = vand.u32 %v7224, 4294901760
    %v7290 = vsub.f32 %v7224, %v7289
    %v7291 = vand.u32 %v7290, 4294901760
    %v7292 = vsub.f32 %v7290, %v7291
    %v7293 = vand.u32 %v7292, 4294901760
    %7294 = vmatmul.f32.gmra.mxu0 %v7293
    %v7295 = vpop.f32.mrf.mxu0
    %v7296 = vadd.f32 0.0, %v7295
    %v7297 = vand.u32 %v7227, 4294901760
    %v7298 = vsub.f32 %v7227, %v7297
    %v7299 = vand.u32 %v7298, 4294901760
    %v7300 = vsub.f32 %v7298, %v7299
    %v7301 = vand.u32 %v7300, 4294901760
    %7302 = vmatmul.f32.gmra.mxu0 %v7301
    %v7303 = vpop.f32.mrf.mxu0
    %v7304 = vadd.f32 0.0, %v7303
    %v7305 = vand.u32 %v7230, 4294901760
    %v7306 = vsub.f32 %v7230, %v7305
    %v7307 = vand.u32 %v7306, 4294901760
    %v7308 = vsub.f32 %v7306, %v7307
    %v7309 = vand.u32 %v7308, 4294901760
    %7310 = vmatmul.f32.gmra.mxu0 %v7309
    %v7311 = vpop.f32.mrf.mxu0
    %v7312 = vadd.f32 0.0, %v7311
    %v7313 = vand.u32 %v7233, 4294901760
    %v7314 = vsub.f32 %v7233, %v7313
    %v7315 = vand.u32 %v7314, 4294901760
    %v7316 = vsub.f32 %v7314, %v7315
    %v7317 = vand.u32 %v7316, 4294901760
    %7318 = vmatmul.f32.gmra.mxu0 %v7317
    %v7319 = vpop.f32.mrf.mxu0
    %v7320 = vadd.f32 0.0, %v7319
    %v7321 = vand.u32 %v7236, 4294901760
    %v7322 = vsub.f32 %v7236, %v7321
    %v7323 = vand.u32 %v7322, 4294901760
    %v7324 = vsub.f32 %v7322, %v7323
    %v7325 = vand.u32 %v7324, 4294901760
    %7326 = vmatmul.f32.gmra.mxu0 %v7325
    %v7327 = vpop.f32.mrf.mxu0
    %v7328 = vadd.f32 0.0, %v7327
    %v7329 = vand.u32 %v7239, 4294901760
    %v7330 = vsub.f32 %v7239, %v7329
    %v7331 = vand.u32 %v7330, 4294901760
    %v7332 = vsub.f32 %v7330, %v7331
    %v7333 = vand.u32 %v7332, 4294901760
    %7334 = vmatmul.f32.gmra.mxu0 %v7333
    %v7335 = vpop.f32.mrf.mxu0
    %v7336 = vadd.f32 0.0, %v7335
    %v7337 = vand.u32 %v7242, 4294901760
    %v7338 = vsub.f32 %v7242, %v7337
    %v7339 = vand.u32 %v7338, 4294901760
    %v7340 = vsub.f32 %v7338, %v7339
    %v7341 = vand.u32 %v7340, 4294901760
    %7342 = vmatmul.f32.gmra.mxu0 %v7341
    %v7343 = vpop.f32.mrf.mxu0
    %v7344 = vadd.f32 0.0, %v7343
    %v7345 = vand.u32 %v7245, 4294901760
    %v7346 = vsub.f32 %v7245, %v7345
    %v7347 = vand.u32 %v7346, 4294901760
    %v7348 = vsub.f32 %v7346, %v7347
    %v7349 = vand.u32 %v7348, 4294901760
    %7350 = vmatmul.f32.gmra.mxu0 %v7349
    %v7351 = vpop.f32.mrf.mxu0
    %v7352 = vadd.f32 0.0, %v7351
    %v7353 = vand.u32 %v7248, 4294901760
    %v7354 = vsub.f32 %v7248, %v7353
    %v7355 = vand.u32 %v7354, 4294901760
    %v7356 = vsub.f32 %v7354, %v7355
    %v7357 = vand.u32 %v7356, 4294901760
    %7358 = vmatmul.f32.gmra.mxu0 %v7357
    %v7359 = vpop.f32.mrf.mxu0
    %v7360 = vadd.f32 0.0, %v7359
    %v7361 = vand.u32 %v7251, 4294901760
    %v7362 = vsub.f32 %v7251, %v7361
    %v7363 = vand.u32 %v7362, 4294901760
    %v7364 = vsub.f32 %v7362, %v7363
    %v7365 = vand.u32 %v7364, 4294901760
    %7366 = vmatmul.f32.gmra.mxu0 %v7365
    %v7367 = vpop.f32.mrf.mxu0
    %v7368 = vadd.f32 0.0, %v7367
    %v7369 = vand.u32 %v7254, 4294901760
    %v7370 = vsub.f32 %v7254, %v7369
    %v7371 = vand.u32 %v7370, 4294901760
    %v7372 = vsub.f32 %v7370, %v7371
    %v7373 = vand.u32 %v7372, 4294901760
    %7374 = vmatmul.f32.gmra.mxu0 %v7373
    %v7375 = vpop.f32.mrf.mxu0
    %v7376 = vadd.f32 0.0, %v7375
    %v7377 = vand.u32 %v7257, 4294901760
    %v7378 = vsub.f32 %v7257, %v7377
    %v7379 = vand.u32 %v7378, 4294901760
    %v7380 = vsub.f32 %v7378, %v7379
    %v7381 = vand.u32 %v7380, 4294901760
    %7382 = vmatmul.f32.gmra.mxu0 %v7381
    %v7383 = vpop.f32.mrf.mxu0
    %v7384 = vadd.f32 0.0, %v7383
    %7385 = vdwg.mxu0
    %7386 = vmatpush.msra.mxu0 0.0
    %7387 = vmatpush.msra.mxu0 0.0
    %7388 = vmatpush.msra.mxu0 0.0
    %7389 = vmatpush.msra.mxu0 0.0
    %7390 = vmatpush.msra.mxu0 0.0
    %7391 = vmatpush.msra.mxu0 0.0
    %7392 = vmatpush.msra.mxu0 0.0
    %7393 = vmatpush.msra.mxu0 0.0
    %7394 = vmatpush.msra.mxu0 0.0
    %7395 = vmatpush.msra.mxu0 0.0
    %v7396 = vand.u32 %v5802, 4294901760
    %v7397 = vsub.f32 %v5802, %v7396
    %v7398 = vand.u32 %v7397, 4294901760
    %v7399 = vsub.f32 %v7397, %v7398
    %v7400 = vand.u32 %v7399, 4294901760
    %7401 = vmatpush.msra.mxu0 %v7400
    %v7402 = vand.u32 %v5800, 4294901760
    %v7403 = vsub.f32 %v5800, %v7402
    %v7404 = vand.u32 %v7403, 4294901760
    %v7405 = vsub.f32 %v7403, %v7404
    %v7406 = vand.u32 %v7405, 4294901760
    %7407 = vmatpush.msra.mxu0 %v7406
    %v7408 = vand.u32 %v5798, 4294901760
    %v7409 = vsub.f32 %v5798, %v7408
    %v7410 = vand.u32 %v7409, 4294901760
    %v7411 = vsub.f32 %v7409, %v7410
    %v7412 = vand.u32 %v7411, 4294901760
    %7413 = vmatpush.msra.mxu0 %v7412
    %v7414 = vand.u32 %v5796, 4294901760
    %v7415 = vsub.f32 %v5796, %v7414
    %v7416 = vand.u32 %v7415, 4294901760
    %v7417 = vsub.f32 %v7415, %v7416
    %v7418 = vand.u32 %v7417, 4294901760
    %7419 = vmatpush.msra.mxu0 %v7418
    %v7420 = vand.u32 %v5794, 4294901760
    %v7421 = vsub.f32 %v5794, %v7420
    %v7422 = vand.u32 %v7421, 4294901760
    %v7423 = vsub.f32 %v7421, %v7422
    %v7424 = vand.u32 %v7423, 4294901760
    %7425 = vmatpush.msra.mxu0 %v7424
    %v7426 = vand.u32 %v5792, 4294901760
    %v7427 = vsub.f32 %v5792, %v7426
    %v7428 = vand.u32 %v7427, 4294901760
    %v7429 = vsub.f32 %v7427, %v7428
    %v7430 = vand.u32 %v7429, 4294901760
    %7431 = vmatpush.msra.mxu0 %v7430
    %v7432 = vand.u32 %v7221, 4294901760
    %7433 = vmatmul.f32.gmra.mxu0 %v7432
    %v7434 = vpop.f32.mrf.mxu0
    %v7435 = vadd.f32 %v7288, %v7434
    %v7436 = vand.u32 %v7224, 4294901760
    %7437 = vmatmul.f32.gmra.mxu0 %v7436
    %v7438 = vpop.f32.mrf.mxu0
    %v7439 = vadd.f32 %v7296, %v7438
    %v7440 = vand.u32 %v7227, 4294901760
    %7441 = vmatmul.f32.gmra.mxu0 %v7440
    %v7442 = vpop.f32.mrf.mxu0
    %v7443 = vadd.f32 %v7304, %v7442
    %v7444 = vand.u32 %v7230, 4294901760
    %7445 = vmatmul.f32.gmra.mxu0 %v7444
    %v7446 = vpop.f32.mrf.mxu0
    %v7447 = vadd.f32 %v7312, %v7446
    %v7448 = vand.u32 %v7233, 4294901760
    %7449 = vmatmul.f32.gmra.mxu0 %v7448
    %v7450 = vpop.f32.mrf.mxu0
    %v7451 = vadd.f32 %v7320, %v7450
    %v7452 = vand.u32 %v7236, 4294901760
    %7453 = vmatmul.f32.gmra.mxu0 %v7452
    %v7454 = vpop.f32.mrf.mxu0
    %v7455 = vadd.f32 %v7328, %v7454
    %v7456 = vand.u32 %v7239, 4294901760
    %7457 = vmatmul.f32.gmra.mxu0 %v7456
    %v7458 = vpop.f32.mrf.mxu0
    %v7459 = vadd.f32 %v7336, %v7458
    %v7460 = vand.u32 %v7242, 4294901760
    %7461 = vmatmul.f32.gmra.mxu0 %v7460
    %v7462 = vpop.f32.mrf.mxu0
    %v7463 = vadd.f32 %v7344, %v7462
    %v7464 = vand.u32 %v7245, 4294901760
    %7465 = vmatmul.f32.gmra.mxu0 %v7464
    %v7466 = vpop.f32.mrf.mxu0
    %v7467 = vadd.f32 %v7352, %v7466
    %v7468 = vand.u32 %v7248, 4294901760
    %7469 = vmatmul.f32.gmra.mxu0 %v7468
    %v7470 = vpop.f32.mrf.mxu0
    %v7471 = vadd.f32 %v7360, %v7470
    %v7472 = vand.u32 %v7251, 4294901760
    %7473 = vmatmul.f32.gmra.mxu0 %v7472
    %v7474 = vpop.f32.mrf.mxu0
    %v7475 = vadd.f32 %v7368, %v7474
    %v7476 = vand.u32 %v7254, 4294901760
    %7477 = vmatmul.f32.gmra.mxu0 %v7476
    %v7478 = vpop.f32.mrf.mxu0
    %v7479 = vadd.f32 %v7376, %v7478
    %v7480 = vand.u32 %v7257, 4294901760
    %7481 = vmatmul.f32.gmra.mxu0 %v7480
    %v7482 = vpop.f32.mrf.mxu0
    %v7483 = vadd.f32 %v7384, %v7482
    %7484 = vdwg.mxu0
    %7485 = vmatpush.msra.mxu0 0.0
    %7486 = vmatpush.msra.mxu0 0.0
    %7487 = vmatpush.msra.mxu0 0.0
    %7488 = vmatpush.msra.mxu0 0.0
    %7489 = vmatpush.msra.mxu0 0.0
    %7490 = vmatpush.msra.mxu0 0.0
    %7491 = vmatpush.msra.mxu0 0.0
    %7492 = vmatpush.msra.mxu0 0.0
    %7493 = vmatpush.msra.mxu0 0.0
    %7494 = vmatpush.msra.mxu0 0.0
    %v7495 = vand.u32 %v5802, 4294901760
    %v7496 = vsub.f32 %v5802, %v7495
    %7497 = vmatpush.msra.mxu0 %v7496
    %v7498 = vand.u32 %v5800, 4294901760
    %v7499 = vsub.f32 %v5800, %v7498
    %7500 = vmatpush.msra.mxu0 %v7499
    %v7501 = vand.u32 %v5798, 4294901760
    %v7502 = vsub.f32 %v5798, %v7501
    %7503 = vmatpush.msra.mxu0 %v7502
    %v7504 = vand.u32 %v5796, 4294901760
    %v7505 = vsub.f32 %v5796, %v7504
    %7506 = vmatpush.msra.mxu0 %v7505
    %v7507 = vand.u32 %v5794, 4294901760
    %v7508 = vsub.f32 %v5794, %v7507
    %7509 = vmatpush.msra.mxu0 %v7508
    %v7510 = vand.u32 %v5792, 4294901760
    %v7511 = vsub.f32 %v5792, %v7510
    %7512 = vmatpush.msra.mxu0 %v7511
    %v7513 = vand.u32 %v7221, 4294901760
    %v7514 = vsub.f32 %v7221, %v7513
    %7515 = vmatmul.f32.gmra.mxu0 %v7514
    %v7516 = vpop.f32.mrf.mxu0
    %v7517 = vadd.f32 %v7435, %v7516
    %v7518 = vand.u32 %v7224, 4294901760
    %v7519 = vsub.f32 %v7224, %v7518
    %7520 = vmatmul.f32.gmra.mxu0 %v7519
    %v7521 = vpop.f32.mrf.mxu0
    %v7522 = vadd.f32 %v7439, %v7521
    %v7523 = vand.u32 %v7227, 4294901760
    %v7524 = vsub.f32 %v7227, %v7523
    %7525 = vmatmul.f32.gmra.mxu0 %v7524
    %v7526 = vpop.f32.mrf.mxu0
    %v7527 = vadd.f32 %v7443, %v7526
    %v7528 = vand.u32 %v7230, 4294901760
    %v7529 = vsub.f32 %v7230, %v7528
    %7530 = vmatmul.f32.gmra.mxu0 %v7529
    %v7531 = vpop.f32.mrf.mxu0
    %v7532 = vadd.f32 %v7447, %v7531
    %v7533 = vand.u32 %v7233, 4294901760
    %v7534 = vsub.f32 %v7233, %v7533
    %7535 = vmatmul.f32.gmra.mxu0 %v7534
    %v7536 = vpop.f32.mrf.mxu0
    %v7537 = vadd.f32 %v7451, %v7536
    %v7538 = vand.u32 %v7236, 4294901760
    %v7539 = vsub.f32 %v7236, %v7538
    %7540 = vmatmul.f32.gmra.mxu0 %v7539
    %v7541 = vpop.f32.mrf.mxu0
    %v7542 = vadd.f32 %v7455, %v7541
    %v7543 = vand.u32 %v7239, 4294901760
    %v7544 = vsub.f32 %v7239, %v7543
    %7545 = vmatmul.f32.gmra.mxu0 %v7544
    %v7546 = vpop.f32.mrf.mxu0
    %v7547 = vadd.f32 %v7459, %v7546
    %v7548 = vand.u32 %v7242, 4294901760
    %v7549 = vsub.f32 %v7242, %v7548
    %7550 = vmatmul.f32.gmra.mxu0 %v7549
    %v7551 = vpop.f32.mrf.mxu0
    %v7552 = vadd.f32 %v7463, %v7551
    %v7553 = vand.u32 %v7245, 4294901760
    %v7554 = vsub.f32 %v7245, %v7553
    %7555 = vmatmul.f32.gmra.mxu0 %v7554
    %v7556 = vpop.f32.mrf.mxu0
    %v7557 = vadd.f32 %v7467, %v7556
    %v7558 = vand.u32 %v7248, 4294901760
    %v7559 = vsub.f32 %v7248, %v7558
    %7560 = vmatmul.f32.gmra.mxu0 %v7559
    %v7561 = vpop.f32.mrf.mxu0
    %v7562 = vadd.f32 %v7471, %v7561
    %v7563 = vand.u32 %v7251, 4294901760
    %v7564 = vsub.f32 %v7251, %v7563
    %7565 = vmatmul.f32.gmra.mxu0 %v7564
    %v7566 = vpop.f32.mrf.mxu0
    %v7567 = vadd.f32 %v7475, %v7566
    %v7568 = vand.u32 %v7254, 4294901760
    %v7569 = vsub.f32 %v7254, %v7568
    %7570 = vmatmul.f32.gmra.mxu0 %v7569
    %v7571 = vpop.f32.mrf.mxu0
    %v7572 = vadd.f32 %v7479, %v7571
    %v7573 = vand.u32 %v7257, 4294901760
    %v7574 = vsub.f32 %v7257, %v7573
    %7575 = vmatmul.f32.gmra.mxu0 %v7574
    %v7576 = vpop.f32.mrf.mxu0
    %v7577 = vadd.f32 %v7483, %v7576
    %7578 = vdwg.mxu0
    %7579 = vmatpush.msra.mxu0 0.0
    %7580 = vmatpush.msra.mxu0 0.0
    %7581 = vmatpush.msra.mxu0 0.0
    %7582 = vmatpush.msra.mxu0 0.0
    %7583 = vmatpush.msra.mxu0 0.0
    %7584 = vmatpush.msra.mxu0 0.0
    %7585 = vmatpush.msra.mxu0 0.0
    %7586 = vmatpush.msra.mxu0 0.0
    %7587 = vmatpush.msra.mxu0 0.0
    %7588 = vmatpush.msra.mxu0 0.0
    %v7589 = vand.u32 %v5802, 4294901760
    %7590 = vmatpush.msra.mxu0 %v7589
    %v7591 = vand.u32 %v5800, 4294901760
    %7592 = vmatpush.msra.mxu0 %v7591
    %v7593 = vand.u32 %v5798, 4294901760
    %7594 = vmatpush.msra.mxu0 %v7593
    %v7595 = vand.u32 %v5796, 4294901760
    %7596 = vmatpush.msra.mxu0 %v7595
    %v7597 = vand.u32 %v5794, 4294901760
    %7598 = vmatpush.msra.mxu0 %v7597
    %v7599 = vand.u32 %v5792, 4294901760
    %7600 = vmatpush.msra.mxu0 %v7599
    %v7601 = vand.u32 %v7221, 4294901760
    %v7602 = vsub.f32 %v7221, %v7601
    %v7603 = vand.u32 %v7602, 4294901760
    %7604 = vmatmul.f32.gmra.mxu0 %v7603
    %v7605 = vpop.f32.mrf.mxu0
    %v7606 = vadd.f32 %v7517, %v7605
    %v7607 = vand.u32 %v7224, 4294901760
    %v7608 = vsub.f32 %v7224, %v7607
    %v7609 = vand.u32 %v7608, 4294901760
    %7610 = vmatmul.f32.gmra.mxu0 %v7609
    %v7611 = vpop.f32.mrf.mxu0
    %v7612 = vadd.f32 %v7522, %v7611
    %v7613 = vand.u32 %v7227, 4294901760
    %v7614 = vsub.f32 %v7227, %v7613
    %v7615 = vand.u32 %v7614, 4294901760
    %7616 = vmatmul.f32.gmra.mxu0 %v7615
    %v7617 = vpop.f32.mrf.mxu0
    %v7618 = vadd.f32 %v7527, %v7617
    %v7619 = vand.u32 %v7230, 4294901760
    %v7620 = vsub.f32 %v7230, %v7619
    %v7621 = vand.u32 %v7620, 4294901760
    %7622 = vmatmul.f32.gmra.mxu0 %v7621
    %v7623 = vpop.f32.mrf.mxu0
    %v7624 = vadd.f32 %v7532, %v7623
    %v7625 = vand.u32 %v7233, 4294901760
    %v7626 = vsub.f32 %v7233, %v7625
    %v7627 = vand.u32 %v7626, 4294901760
    %7628 = vmatmul.f32.gmra.mxu0 %v7627
    %v7629 = vpop.f32.mrf.mxu0
    %v7630 = vadd.f32 %v7537, %v7629
    %v7631 = vand.u32 %v7236, 4294901760
    %v7632 = vsub.f32 %v7236, %v7631
    %v7633 = vand.u32 %v7632, 4294901760
    %7634 = vmatmul.f32.gmra.mxu0 %v7633
    %v7635 = vpop.f32.mrf.mxu0
    %v7636 = vadd.f32 %v7542, %v7635
    %v7637 = vand.u32 %v7239, 4294901760
    %v7638 = vsub.f32 %v7239, %v7637
    %v7639 = vand.u32 %v7638, 4294901760
    %7640 = vmatmul.f32.gmra.mxu0 %v7639
    %v7641 = vpop.f32.mrf.mxu0
    %v7642 = vadd.f32 %v7547, %v7641
    %v7643 = vand.u32 %v7242, 4294901760
    %v7644 = vsub.f32 %v7242, %v7643
    %v7645 = vand.u32 %v7644, 4294901760
    %7646 = vmatmul.f32.gmra.mxu0 %v7645
    %v7647 = vpop.f32.mrf.mxu0
    %v7648 = vadd.f32 %v7552, %v7647
    %v7649 = vand.u32 %v7245, 4294901760
    %v7650 = vsub.f32 %v7245, %v7649
    %v7651 = vand.u32 %v7650, 4294901760
    %7652 = vmatmul.f32.gmra.mxu0 %v7651
    %v7653 = vpop.f32.mrf.mxu0
    %v7654 = vadd.f32 %v7557, %v7653
    %v7655 = vand.u32 %v7248, 4294901760
    %v7656 = vsub.f32 %v7248, %v7655
    %v7657 = vand.u32 %v7656, 4294901760
    %7658 = vmatmul.f32.gmra.mxu0 %v7657
    %v7659 = vpop.f32.mrf.mxu0
    %v7660 = vadd.f32 %v7562, %v7659
    %v7661 = vand.u32 %v7251, 4294901760
    %v7662 = vsub.f32 %v7251, %v7661
    %v7663 = vand.u32 %v7662, 4294901760
    %7664 = vmatmul.f32.gmra.mxu0 %v7663
    %v7665 = vpop.f32.mrf.mxu0
    %v7666 = vadd.f32 %v7567, %v7665
    %v7667 = vand.u32 %v7254, 4294901760
    %v7668 = vsub.f32 %v7254, %v7667
    %v7669 = vand.u32 %v7668, 4294901760
    %7670 = vmatmul.f32.gmra.mxu0 %v7669
    %v7671 = vpop.f32.mrf.mxu0
    %v7672 = vadd.f32 %v7572, %v7671
    %v7673 = vand.u32 %v7257, 4294901760
    %v7674 = vsub.f32 %v7257, %v7673
    %v7675 = vand.u32 %v7674, 4294901760
    %7676 = vmatmul.f32.gmra.mxu0 %v7675
    %v7677 = vpop.f32.mrf.mxu0
    %v7678 = vadd.f32 %v7577, %v7677
    %7679 = vdwg.mxu0
    %7680 = vmatpush.msra.mxu0 0.0
    %7681 = vmatpush.msra.mxu0 0.0
    %7682 = vmatpush.msra.mxu0 0.0
    %7683 = vmatpush.msra.mxu0 0.0
    %7684 = vmatpush.msra.mxu0 0.0
    %7685 = vmatpush.msra.mxu0 0.0
    %7686 = vmatpush.msra.mxu0 0.0
    %7687 = vmatpush.msra.mxu0 0.0
    %7688 = vmatpush.msra.mxu0 0.0
    %7689 = vmatpush.msra.mxu0 0.0
    %v7690 = vand.u32 %v5802, 4294901760
    %v7691 = vsub.f32 %v5802, %v7690
    %v7692 = vand.u32 %v7691, 4294901760
    %7693 = vmatpush.msra.mxu0 %v7692
    %v7694 = vand.u32 %v5800, 4294901760
    %v7695 = vsub.f32 %v5800, %v7694
    %v7696 = vand.u32 %v7695, 4294901760
    %7697 = vmatpush.msra.mxu0 %v7696
    %v7698 = vand.u32 %v5798, 4294901760
    %v7699 = vsub.f32 %v5798, %v7698
    %v7700 = vand.u32 %v7699, 4294901760
    %7701 = vmatpush.msra.mxu0 %v7700
    %v7702 = vand.u32 %v5796, 4294901760
    %v7703 = vsub.f32 %v5796, %v7702
    %v7704 = vand.u32 %v7703, 4294901760
    %7705 = vmatpush.msra.mxu0 %v7704
    %v7706 = vand.u32 %v5794, 4294901760
    %v7707 = vsub.f32 %v5794, %v7706
    %v7708 = vand.u32 %v7707, 4294901760
    %7709 = vmatpush.msra.mxu0 %v7708
    %v7710 = vand.u32 %v5792, 4294901760
    %v7711 = vsub.f32 %v5792, %v7710
    %v7712 = vand.u32 %v7711, 4294901760
    %7713 = vmatpush.msra.mxu0 %v7712
    %v7714 = vand.u32 %v7221, 4294901760
    %7715 = vmatmul.f32.gmra.mxu0 %v7714
    %v7716 = vpop.f32.mrf.mxu0
    %v7717 = vadd.f32 %v7606, %v7716
    %v7718 = vand.u32 %v7224, 4294901760
    %7719 = vmatmul.f32.gmra.mxu0 %v7718
    %v7720 = vpop.f32.mrf.mxu0
    %v7721 = vadd.f32 %v7612, %v7720
    %v7722 = vand.u32 %v7227, 4294901760
    %7723 = vmatmul.f32.gmra.mxu0 %v7722
    %v7724 = vpop.f32.mrf.mxu0
    %v7725 = vadd.f32 %v7618, %v7724
    %v7726 = vand.u32 %v7230, 4294901760
    %7727 = vmatmul.f32.gmra.mxu0 %v7726
    %v7728 = vpop.f32.mrf.mxu0
    %v7729 = vadd.f32 %v7624, %v7728
    %v7730 = vand.u32 %v7233, 4294901760
    %7731 = vmatmul.f32.gmra.mxu0 %v7730
    %v7732 = vpop.f32.mrf.mxu0
    %v7733 = vadd.f32 %v7630, %v7732
    %v7734 = vand.u32 %v7236, 4294901760
    %7735 = vmatmul.f32.gmra.mxu0 %v7734
    %v7736 = vpop.f32.mrf.mxu0
    %v7737 = vadd.f32 %v7636, %v7736
    %v7738 = vand.u32 %v7239, 4294901760
    %7739 = vmatmul.f32.gmra.mxu0 %v7738
    %v7740 = vpop.f32.mrf.mxu0
    %v7741 = vadd.f32 %v7642, %v7740
    %v7742 = vand.u32 %v7242, 4294901760
    %7743 = vmatmul.f32.gmra.mxu0 %v7742
    %v7744 = vpop.f32.mrf.mxu0
    %v7745 = vadd.f32 %v7648, %v7744
    %v7746 = vand.u32 %v7245, 4294901760
    %7747 = vmatmul.f32.gmra.mxu0 %v7746
    %v7748 = vpop.f32.mrf.mxu0
    %v7749 = vadd.f32 %v7654, %v7748
    %v7750 = vand.u32 %v7248, 4294901760
    %7751 = vmatmul.f32.gmra.mxu0 %v7750
    %v7752 = vpop.f32.mrf.mxu0
    %v7753 = vadd.f32 %v7660, %v7752
    %v7754 = vand.u32 %v7251, 4294901760
    %7755 = vmatmul.f32.gmra.mxu0 %v7754
    %v7756 = vpop.f32.mrf.mxu0
    %v7757 = vadd.f32 %v7666, %v7756
    %v7758 = vand.u32 %v7254, 4294901760
    %7759 = vmatmul.f32.gmra.mxu0 %v7758
    %v7760 = vpop.f32.mrf.mxu0
    %v7761 = vadd.f32 %v7672, %v7760
    %v7762 = vand.u32 %v7257, 4294901760
    %7763 = vmatmul.f32.gmra.mxu0 %v7762
    %v7764 = vpop.f32.mrf.mxu0
    %v7765 = vadd.f32 %v7678, %v7764
    %7766 = vdwg.mxu0
    %7767 = vmatpush.msra.mxu0 0.0
    %7768 = vmatpush.msra.mxu0 0.0
    %7769 = vmatpush.msra.mxu0 0.0
    %7770 = vmatpush.msra.mxu0 0.0
    %7771 = vmatpush.msra.mxu0 0.0
    %7772 = vmatpush.msra.mxu0 0.0
    %7773 = vmatpush.msra.mxu0 0.0
    %7774 = vmatpush.msra.mxu0 0.0
    %7775 = vmatpush.msra.mxu0 0.0
    %7776 = vmatpush.msra.mxu0 0.0
    %v7777 = vand.u32 %v5802, 4294901760
    %7778 = vmatpush.msra.mxu0 %v7777
    %v7779 = vand.u32 %v5800, 4294901760
    %7780 = vmatpush.msra.mxu0 %v7779
    %v7781 = vand.u32 %v5798, 4294901760
    %7782 = vmatpush.msra.mxu0 %v7781
    %v7783 = vand.u32 %v5796, 4294901760
    %7784 = vmatpush.msra.mxu0 %v7783
    %v7785 = vand.u32 %v5794, 4294901760
    %7786 = vmatpush.msra.mxu0 %v7785
    %v7787 = vand.u32 %v5792, 4294901760
    %7788 = vmatpush.msra.mxu0 %v7787
    %v7789 = vand.u32 %v7221, 4294901760
    %7790 = vmatmul.f32.gmra.mxu0 %v7789
    %v7791 = vpop.f32.mrf.mxu0
    %v7792 = vadd.f32 %v7717, %v7791
    %v7793 = vand.u32 %v7224, 4294901760
    %7794 = vmatmul.f32.gmra.mxu0 %v7793
    %v7795 = vpop.f32.mrf.mxu0
    %v7796 = vadd.f32 %v7721, %v7795
    %v7797 = vand.u32 %v7227, 4294901760
    %7798 = vmatmul.f32.gmra.mxu0 %v7797
    %v7799 = vpop.f32.mrf.mxu0
    %v7800 = vadd.f32 %v7725, %v7799
    %v7801 = vand.u32 %v7230, 4294901760
    %7802 = vmatmul.f32.gmra.mxu0 %v7801
    %v7803 = vpop.f32.mrf.mxu0
    %v7804 = vadd.f32 %v7729, %v7803
    %v7805 = vand.u32 %v7233, 4294901760
    %7806 = vmatmul.f32.gmra.mxu0 %v7805
    %v7807 = vpop.f32.mrf.mxu0
    %v7808 = vadd.f32 %v7733, %v7807
    %v7809 = vand.u32 %v7236, 4294901760
    %7810 = vmatmul.f32.gmra.mxu0 %v7809
    %v7811 = vpop.f32.mrf.mxu0
    %v7812 = vadd.f32 %v7737, %v7811
    %v7813 = vand.u32 %v7239, 4294901760
    %7814 = vmatmul.f32.gmra.mxu0 %v7813
    %v7815 = vpop.f32.mrf.mxu0
    %v7816 = vadd.f32 %v7741, %v7815
    %v7817 = vand.u32 %v7242, 4294901760
    %7818 = vmatmul.f32.gmra.mxu0 %v7817
    %v7819 = vpop.f32.mrf.mxu0
    %v7820 = vadd.f32 %v7745, %v7819
    %v7821 = vand.u32 %v7245, 4294901760
    %7822 = vmatmul.f32.gmra.mxu0 %v7821
    %v7823 = vpop.f32.mrf.mxu0
    %v7824 = vadd.f32 %v7749, %v7823
    %v7825 = vand.u32 %v7248, 4294901760
    %7826 = vmatmul.f32.gmra.mxu0 %v7825
    %v7827 = vpop.f32.mrf.mxu0
    %v7828 = vadd.f32 %v7753, %v7827
    %v7829 = vand.u32 %v7251, 4294901760
    %7830 = vmatmul.f32.gmra.mxu0 %v7829
    %v7831 = vpop.f32.mrf.mxu0
    %v7832 = vadd.f32 %v7757, %v7831
    %v7833 = vand.u32 %v7254, 4294901760
    %7834 = vmatmul.f32.gmra.mxu0 %v7833
    %v7835 = vpop.f32.mrf.mxu0
    %v7836 = vadd.f32 %v7761, %v7835
    %v7837 = vand.u32 %v7257, 4294901760
    %7838 = vmatmul.f32.gmra.mxu0 %v7837
    %v7839 = vpop.f32.mrf.mxu0
    %v7840 = vadd.f32 %v7765, %v7839
    %7841 = vdwg.mxu0
    %7842 = vmatpush.msra.mxu0 0.0
    %7843 = vmatpush.msra.mxu0 0.0
    %7844 = vmatpush.msra.mxu0 0.0
    %7845 = vmatpush.msra.mxu0 0.0
    %7846 = vmatpush.msra.mxu0 0.0
    %7847 = vmatpush.msra.mxu0 0.0
    %7848 = vmatpush.msra.mxu0 0.0
    %7849 = vmatpush.msra.mxu0 0.0
    %7850 = vmatpush.msra.mxu0 0.0
    %7851 = vmatpush.msra.mxu0 0.0
    %v7852 = vand.u32 %v5803, 4294901760
    %7853 = vmatpush.msra.mxu0 %v7852
    %v7854 = vand.u32 %v5801, 4294901760
    %7855 = vmatpush.msra.mxu0 %v7854
    %v7856 = vand.u32 %v5799, 4294901760
    %7857 = vmatpush.msra.mxu0 %v7856
    %v7858 = vand.u32 %v5797, 4294901760
    %7859 = vmatpush.msra.mxu0 %v7858
    %v7860 = vand.u32 %v5795, 4294901760
    %7861 = vmatpush.msra.mxu0 %v7860
    %v7862 = vand.u32 %v5793, 4294901760
    %7863 = vmatpush.msra.mxu0 %v7862
    %v7864 = vand.u32 %v7221, 4294901760
    %v7865 = vsub.f32 %v7221, %v7864
    %v7866 = vand.u32 %v7865, 4294901760
    %v7867 = vsub.f32 %v7865, %v7866
    %v7868 = vand.u32 %v7867, 4294901760
    %7869 = vmatmul.f32.gmra.mxu0 %v7868
    %v7870 = vpop.f32.mrf.mxu0
    %v7871 = vadd.f32 0.0, %v7870
    %v7872 = vand.u32 %v7224, 4294901760
    %v7873 = vsub.f32 %v7224, %v7872
    %v7874 = vand.u32 %v7873, 4294901760
    %v7875 = vsub.f32 %v7873, %v7874
    %v7876 = vand.u32 %v7875, 4294901760
    %7877 = vmatmul.f32.gmra.mxu0 %v7876
    %v7878 = vpop.f32.mrf.mxu0
    %v7879 = vadd.f32 0.0, %v7878
    %v7880 = vand.u32 %v7227, 4294901760
    %v7881 = vsub.f32 %v7227, %v7880
    %v7882 = vand.u32 %v7881, 4294901760
    %v7883 = vsub.f32 %v7881, %v7882
    %v7884 = vand.u32 %v7883, 4294901760
    %7885 = vmatmul.f32.gmra.mxu0 %v7884
    %v7886 = vpop.f32.mrf.mxu0
    %v7887 = vadd.f32 0.0, %v7886
    %v7888 = vand.u32 %v7230, 4294901760
    %v7889 = vsub.f32 %v7230, %v7888
    %v7890 = vand.u32 %v7889, 4294901760
    %v7891 = vsub.f32 %v7889, %v7890
    %v7892 = vand.u32 %v7891, 4294901760
    %7893 = vmatmul.f32.gmra.mxu0 %v7892
    %v7894 = vpop.f32.mrf.mxu0
    %v7895 = vadd.f32 0.0, %v7894
    %v7896 = vand.u32 %v7233, 4294901760
    %v7897 = vsub.f32 %v7233, %v7896
    %v7898 = vand.u32 %v7897, 4294901760
    %v7899 = vsub.f32 %v7897, %v7898
    %v7900 = vand.u32 %v7899, 4294901760
    %7901 = vmatmul.f32.gmra.mxu0 %v7900
    %v7902 = vpop.f32.mrf.mxu0
    %v7903 = vadd.f32 0.0, %v7902
    %v7904 = vand.u32 %v7236, 4294901760
    %v7905 = vsub.f32 %v7236, %v7904
    %v7906 = vand.u32 %v7905, 4294901760
    %v7907 = vsub.f32 %v7905, %v7906
    %v7908 = vand.u32 %v7907, 4294901760
    %7909 = vmatmul.f32.gmra.mxu0 %v7908
    %v7910 = vpop.f32.mrf.mxu0
    %v7911 = vadd.f32 0.0, %v7910
    %v7912 = vand.u32 %v7239, 4294901760
    %v7913 = vsub.f32 %v7239, %v7912
    %v7914 = vand.u32 %v7913, 4294901760
    %v7915 = vsub.f32 %v7913, %v7914
    %v7916 = vand.u32 %v7915, 4294901760
    %7917 = vmatmul.f32.gmra.mxu0 %v7916
    %v7918 = vpop.f32.mrf.mxu0
    %v7919 = vadd.f32 0.0, %v7918
    %v7920 = vand.u32 %v7242, 4294901760
    %v7921 = vsub.f32 %v7242, %v7920
    %v7922 = vand.u32 %v7921, 4294901760
    %v7923 = vsub.f32 %v7921, %v7922
    %v7924 = vand.u32 %v7923, 4294901760
    %7925 = vmatmul.f32.gmra.mxu0 %v7924
    %v7926 = vpop.f32.mrf.mxu0
    %v7927 = vadd.f32 0.0, %v7926
    %v7928 = vand.u32 %v7245, 4294901760
    %v7929 = vsub.f32 %v7245, %v7928
    %v7930 = vand.u32 %v7929, 4294901760
    %v7931 = vsub.f32 %v7929, %v7930
    %v7932 = vand.u32 %v7931, 4294901760
    %7933 = vmatmul.f32.gmra.mxu0 %v7932
    %v7934 = vpop.f32.mrf.mxu0
    %v7935 = vadd.f32 0.0, %v7934
    %v7936 = vand.u32 %v7248, 4294901760
    %v7937 = vsub.f32 %v7248, %v7936
    %v7938 = vand.u32 %v7937, 4294901760
    %v7939 = vsub.f32 %v7937, %v7938
    %v7940 = vand.u32 %v7939, 4294901760
    %7941 = vmatmul.f32.gmra.mxu0 %v7940
    %v7942 = vpop.f32.mrf.mxu0
    %v7943 = vadd.f32 0.0, %v7942
    %v7944 = vand.u32 %v7251, 4294901760
    %v7945 = vsub.f32 %v7251, %v7944
    %v7946 = vand.u32 %v7945, 4294901760
    %v7947 = vsub.f32 %v7945, %v7946
    %v7948 = vand.u32 %v7947, 4294901760
    %7949 = vmatmul.f32.gmra.mxu0 %v7948
    %v7950 = vpop.f32.mrf.mxu0
    %v7951 = vadd.f32 0.0, %v7950
    %v7952 = vand.u32 %v7254, 4294901760
    %v7953 = vsub.f32 %v7254, %v7952
    %v7954 = vand.u32 %v7953, 4294901760
    %v7955 = vsub.f32 %v7953, %v7954
    %v7956 = vand.u32 %v7955, 4294901760
    %7957 = vmatmul.f32.gmra.mxu0 %v7956
    %v7958 = vpop.f32.mrf.mxu0
    %v7959 = vadd.f32 0.0, %v7958
    %v7960 = vand.u32 %v7257, 4294901760
    %v7961 = vsub.f32 %v7257, %v7960
    %v7962 = vand.u32 %v7961, 4294901760
    %v7963 = vsub.f32 %v7961, %v7962
    %v7964 = vand.u32 %v7963, 4294901760
    %7965 = vmatmul.f32.gmra.mxu0 %v7964
    %v7966 = vpop.f32.mrf.mxu0
    %v7967 = vadd.f32 0.0, %v7966
    %7968 = vdwg.mxu0
    %7969 = vmatpush.msra.mxu0 0.0
    %7970 = vmatpush.msra.mxu0 0.0
    %7971 = vmatpush.msra.mxu0 0.0
    %7972 = vmatpush.msra.mxu0 0.0
    %7973 = vmatpush.msra.mxu0 0.0
    %7974 = vmatpush.msra.mxu0 0.0
    %7975 = vmatpush.msra.mxu0 0.0
    %7976 = vmatpush.msra.mxu0 0.0
    %7977 = vmatpush.msra.mxu0 0.0
    %7978 = vmatpush.msra.mxu0 0.0
    %v7979 = vand.u32 %v5803, 4294901760
    %v7980 = vsub.f32 %v5803, %v7979
    %v7981 = vand.u32 %v7980, 4294901760
    %v7982 = vsub.f32 %v7980, %v7981
    %v7983 = vand.u32 %v7982, 4294901760
    %7984 = vmatpush.msra.mxu0 %v7983
    %v7985 = vand.u32 %v5801, 4294901760
    %v7986 = vsub.f32 %v5801, %v7985
    %v7987 = vand.u32 %v7986, 4294901760
    %v7988 = vsub.f32 %v7986, %v7987
    %v7989 = vand.u32 %v7988, 4294901760
    %7990 = vmatpush.msra.mxu0 %v7989
    %v7991 = vand.u32 %v5799, 4294901760
    %v7992 = vsub.f32 %v5799, %v7991
    %v7993 = vand.u32 %v7992, 4294901760
    %v7994 = vsub.f32 %v7992, %v7993
    %v7995 = vand.u32 %v7994, 4294901760
    %7996 = vmatpush.msra.mxu0 %v7995
    %v7997 = vand.u32 %v5797, 4294901760
    %v7998 = vsub.f32 %v5797, %v7997
    %v7999 = vand.u32 %v7998, 4294901760
    %v8000 = vsub.f32 %v7998, %v7999
    %v8001 = vand.u32 %v8000, 4294901760
    %8002 = vmatpush.msra.mxu0 %v8001
    %v8003 = vand.u32 %v5795, 4294901760
    %v8004 = vsub.f32 %v5795, %v8003
    %v8005 = vand.u32 %v8004, 4294901760
    %v8006 = vsub.f32 %v8004, %v8005
    %v8007 = vand.u32 %v8006, 4294901760
    %8008 = vmatpush.msra.mxu0 %v8007
    %v8009 = vand.u32 %v5793, 4294901760
    %v8010 = vsub.f32 %v5793, %v8009
    %v8011 = vand.u32 %v8010, 4294901760
    %v8012 = vsub.f32 %v8010, %v8011
    %v8013 = vand.u32 %v8012, 4294901760
    %8014 = vmatpush.msra.mxu0 %v8013
    %v8015 = vand.u32 %v7221, 4294901760
    %8016 = vmatmul.f32.gmra.mxu0 %v8015
    %v8017 = vpop.f32.mrf.mxu0
    %v8018 = vadd.f32 %v7871, %v8017
    %v8019 = vand.u32 %v7224, 4294901760
    %8020 = vmatmul.f32.gmra.mxu0 %v8019
    %v8021 = vpop.f32.mrf.mxu0
    %v8022 = vadd.f32 %v7879, %v8021
    %v8023 = vand.u32 %v7227, 4294901760
    %8024 = vmatmul.f32.gmra.mxu0 %v8023
    %v8025 = vpop.f32.mrf.mxu0
    %v8026 = vadd.f32 %v7887, %v8025
    %v8027 = vand.u32 %v7230, 4294901760
    %8028 = vmatmul.f32.gmra.mxu0 %v8027
    %v8029 = vpop.f32.mrf.mxu0
    %v8030 = vadd.f32 %v7895, %v8029
    %v8031 = vand.u32 %v7233, 4294901760
    %8032 = vmatmul.f32.gmra.mxu0 %v8031
    %v8033 = vpop.f32.mrf.mxu0
    %v8034 = vadd.f32 %v7903, %v8033
    %v8035 = vand.u32 %v7236, 4294901760
    %8036 = vmatmul.f32.gmra.mxu0 %v8035
    %v8037 = vpop.f32.mrf.mxu0
    %v8038 = vadd.f32 %v7911, %v8037
    %v8039 = vand.u32 %v7239, 4294901760
    %8040 = vmatmul.f32.gmra.mxu0 %v8039
    %v8041 = vpop.f32.mrf.mxu0
    %v8042 = vadd.f32 %v7919, %v8041
    %v8043 = vand.u32 %v7242, 4294901760
    %8044 = vmatmul.f32.gmra.mxu0 %v8043
    %v8045 = vpop.f32.mrf.mxu0
    %v8046 = vadd.f32 %v7927, %v8045
    %v8047 = vand.u32 %v7245, 4294901760
    %8048 = vmatmul.f32.gmra.mxu0 %v8047
    %v8049 = vpop.f32.mrf.mxu0
    %v8050 = vadd.f32 %v7935, %v8049
    %v8051 = vand.u32 %v7248, 4294901760
    %8052 = vmatmul.f32.gmra.mxu0 %v8051
    %v8053 = vpop.f32.mrf.mxu0
    %v8054 = vadd.f32 %v7943, %v8053
    %v8055 = vand.u32 %v7251, 4294901760
    %8056 = vmatmul.f32.gmra.mxu0 %v8055
    %v8057 = vpop.f32.mrf.mxu0
    %v8058 = vadd.f32 %v7951, %v8057
    %v8059 = vand.u32 %v7254, 4294901760
    %8060 = vmatmul.f32.gmra.mxu0 %v8059
    %v8061 = vpop.f32.mrf.mxu0
    %v8062 = vadd.f32 %v7959, %v8061
    %v8063 = vand.u32 %v7257, 4294901760
    %8064 = vmatmul.f32.gmra.mxu0 %v8063
    %v8065 = vpop.f32.mrf.mxu0
    %v8066 = vadd.f32 %v7967, %v8065
    %8067 = vdwg.mxu0
    %8068 = vmatpush.msra.mxu0 0.0
    %8069 = vmatpush.msra.mxu0 0.0
    %8070 = vmatpush.msra.mxu0 0.0
    %8071 = vmatpush.msra.mxu0 0.0
    %8072 = vmatpush.msra.mxu0 0.0
    %8073 = vmatpush.msra.mxu0 0.0
    %8074 = vmatpush.msra.mxu0 0.0
    %8075 = vmatpush.msra.mxu0 0.0
    %8076 = vmatpush.msra.mxu0 0.0
    %8077 = vmatpush.msra.mxu0 0.0
    %v8078 = vand.u32 %v5803, 4294901760
    %v8079 = vsub.f32 %v5803, %v8078
    %8080 = vmatpush.msra.mxu0 %v8079
    %v8081 = vand.u32 %v5801, 4294901760
    %v8082 = vsub.f32 %v5801, %v8081
    %8083 = vmatpush.msra.mxu0 %v8082
    %v8084 = vand.u32 %v5799, 4294901760
    %v8085 = vsub.f32 %v5799, %v8084
    %8086 = vmatpush.msra.mxu0 %v8085
    %v8087 = vand.u32 %v5797, 4294901760
    %v8088 = vsub.f32 %v5797, %v8087
    %8089 = vmatpush.msra.mxu0 %v8088
    %v8090 = vand.u32 %v5795, 4294901760
    %v8091 = vsub.f32 %v5795, %v8090
    %8092 = vmatpush.msra.mxu0 %v8091
    %v8093 = vand.u32 %v5793, 4294901760
    %v8094 = vsub.f32 %v5793, %v8093
    %8095 = vmatpush.msra.mxu0 %v8094
    %v8096 = vand.u32 %v7221, 4294901760
    %v8097 = vsub.f32 %v7221, %v8096
    %8098 = vmatmul.f32.gmra.mxu0 %v8097
    %v8099 = vpop.f32.mrf.mxu0
    %v8100 = vadd.f32 %v8018, %v8099
    %v8101 = vand.u32 %v7224, 4294901760
    %v8102 = vsub.f32 %v7224, %v8101
    %8103 = vmatmul.f32.gmra.mxu0 %v8102
    %v8104 = vpop.f32.mrf.mxu0
    %v8105 = vadd.f32 %v8022, %v8104
    %v8106 = vand.u32 %v7227, 4294901760
    %v8107 = vsub.f32 %v7227, %v8106
    %8108 = vmatmul.f32.gmra.mxu0 %v8107
    %v8109 = vpop.f32.mrf.mxu0
    %v8110 = vadd.f32 %v8026, %v8109
    %v8111 = vand.u32 %v7230, 4294901760
    %v8112 = vsub.f32 %v7230, %v8111
    %8113 = vmatmul.f32.gmra.mxu0 %v8112
    %v8114 = vpop.f32.mrf.mxu0
    %v8115 = vadd.f32 %v8030, %v8114
    %v8116 = vand.u32 %v7233, 4294901760
    %v8117 = vsub.f32 %v7233, %v8116
    %8118 = vmatmul.f32.gmra.mxu0 %v8117
    %v8119 = vpop.f32.mrf.mxu0
    %v8120 = vadd.f32 %v8034, %v8119
    %v8121 = vand.u32 %v7236, 4294901760
    %v8122 = vsub.f32 %v7236, %v8121
    %8123 = vmatmul.f32.gmra.mxu0 %v8122
    %v8124 = vpop.f32.mrf.mxu0
    %v8125 = vadd.f32 %v8038, %v8124
    %v8126 = vand.u32 %v7239, 4294901760
    %v8127 = vsub.f32 %v7239, %v8126
    %8128 = vmatmul.f32.gmra.mxu0 %v8127
    %v8129 = vpop.f32.mrf.mxu0
    %v8130 = vadd.f32 %v8042, %v8129
    %v8131 = vand.u32 %v7242, 4294901760
    %v8132 = vsub.f32 %v7242, %v8131
    %8133 = vmatmul.f32.gmra.mxu0 %v8132
    %v8134 = vpop.f32.mrf.mxu0
    %v8135 = vadd.f32 %v8046, %v8134
    %v8136 = vand.u32 %v7245, 4294901760
    %v8137 = vsub.f32 %v7245, %v8136
    %8138 = vmatmul.f32.gmra.mxu0 %v8137
    %v8139 = vpop.f32.mrf.mxu0
    %v8140 = vadd.f32 %v8050, %v8139
    %v8141 = vand.u32 %v7248, 4294901760
    %v8142 = vsub.f32 %v7248, %v8141
    %8143 = vmatmul.f32.gmra.mxu0 %v8142
    %v8144 = vpop.f32.mrf.mxu0
    %v8145 = vadd.f32 %v8054, %v8144
    %v8146 = vand.u32 %v7251, 4294901760
    %v8147 = vsub.f32 %v7251, %v8146
    %8148 = vmatmul.f32.gmra.mxu0 %v8147
    %v8149 = vpop.f32.mrf.mxu0
    %v8150 = vadd.f32 %v8058, %v8149
    %v8151 = vand.u32 %v7254, 4294901760
    %v8152 = vsub.f32 %v7254, %v8151
    %8153 = vmatmul.f32.gmra.mxu0 %v8152
    %v8154 = vpop.f32.mrf.mxu0
    %v8155 = vadd.f32 %v8062, %v8154
    %v8156 = vand.u32 %v7257, 4294901760
    %v8157 = vsub.f32 %v7257, %v8156
    %8158 = vmatmul.f32.gmra.mxu0 %v8157
    %v8159 = vpop.f32.mrf.mxu0
    %v8160 = vadd.f32 %v8066, %v8159
    %8161 = vdwg.mxu0
    %8162 = vmatpush.msra.mxu0 0.0
    %8163 = vmatpush.msra.mxu0 0.0
    %8164 = vmatpush.msra.mxu0 0.0
    %8165 = vmatpush.msra.mxu0 0.0
    %8166 = vmatpush.msra.mxu0 0.0
    %8167 = vmatpush.msra.mxu0 0.0
    %8168 = vmatpush.msra.mxu0 0.0
    %8169 = vmatpush.msra.mxu0 0.0
    %8170 = vmatpush.msra.mxu0 0.0
    %8171 = vmatpush.msra.mxu0 0.0
    %v8172 = vand.u32 %v5803, 4294901760
    %8173 = vmatpush.msra.mxu0 %v8172
    %v8174 = vand.u32 %v5801, 4294901760
    %8175 = vmatpush.msra.mxu0 %v8174
    %v8176 = vand.u32 %v5799, 4294901760
    %8177 = vmatpush.msra.mxu0 %v8176
    %v8178 = vand.u32 %v5797, 4294901760
    %8179 = vmatpush.msra.mxu0 %v8178
    %v8180 = vand.u32 %v5795, 4294901760
    %8181 = vmatpush.msra.mxu0 %v8180
    %v8182 = vand.u32 %v5793, 4294901760
    %8183 = vmatpush.msra.mxu0 %v8182
    %v8184 = vand.u32 %v7221, 4294901760
    %v8185 = vsub.f32 %v7221, %v8184
    %v8186 = vand.u32 %v8185, 4294901760
    %8187 = vmatmul.f32.gmra.mxu0 %v8186
    %v8188 = vpop.f32.mrf.mxu0
    %v8189 = vadd.f32 %v8100, %v8188
    %v8190 = vand.u32 %v7224, 4294901760
    %v8191 = vsub.f32 %v7224, %v8190
    %v8192 = vand.u32 %v8191, 4294901760
    %8193 = vmatmul.f32.gmra.mxu0 %v8192
    %v8194 = vpop.f32.mrf.mxu0
    %v8195 = vadd.f32 %v8105, %v8194
    %v8196 = vand.u32 %v7227, 4294901760
    %v8197 = vsub.f32 %v7227, %v8196
    %v8198 = vand.u32 %v8197, 4294901760
    %8199 = vmatmul.f32.gmra.mxu0 %v8198
    %v8200 = vpop.f32.mrf.mxu0
    %v8201 = vadd.f32 %v8110, %v8200
    %v8202 = vand.u32 %v7230, 4294901760
    %v8203 = vsub.f32 %v7230, %v8202
    %v8204 = vand.u32 %v8203, 4294901760
    %8205 = vmatmul.f32.gmra.mxu0 %v8204
    %v8206 = vpop.f32.mrf.mxu0
    %v8207 = vadd.f32 %v8115, %v8206
    %v8208 = vand.u32 %v7233, 4294901760
    %v8209 = vsub.f32 %v7233, %v8208
    %v8210 = vand.u32 %v8209, 4294901760
    %8211 = vmatmul.f32.gmra.mxu0 %v8210
    %v8212 = vpop.f32.mrf.mxu0
    %v8213 = vadd.f32 %v8120, %v8212
    %v8214 = vand.u32 %v7236, 4294901760
    %v8215 = vsub.f32 %v7236, %v8214
    %v8216 = vand.u32 %v8215, 4294901760
    %8217 = vmatmul.f32.gmra.mxu0 %v8216
    %v8218 = vpop.f32.mrf.mxu0
    %v8219 = vadd.f32 %v8125, %v8218
    %v8220 = vand.u32 %v7239, 4294901760
    %v8221 = vsub.f32 %v7239, %v8220
    %v8222 = vand.u32 %v8221, 4294901760
    %8223 = vmatmul.f32.gmra.mxu0 %v8222
    %v8224 = vpop.f32.mrf.mxu0
    %v8225 = vadd.f32 %v8130, %v8224
    %v8226 = vand.u32 %v7242, 4294901760
    %v8227 = vsub.f32 %v7242, %v8226
    %v8228 = vand.u32 %v8227, 4294901760
    %8229 = vmatmul.f32.gmra.mxu0 %v8228
    %v8230 = vpop.f32.mrf.mxu0
    %v8231 = vadd.f32 %v8135, %v8230
    %v8232 = vand.u32 %v7245, 4294901760
    %v8233 = vsub.f32 %v7245, %v8232
    %v8234 = vand.u32 %v8233, 4294901760
    %8235 = vmatmul.f32.gmra.mxu0 %v8234
    %v8236 = vpop.f32.mrf.mxu0
    %v8237 = vadd.f32 %v8140, %v8236
    %v8238 = vand.u32 %v7248, 4294901760
    %v8239 = vsub.f32 %v7248, %v8238
    %v8240 = vand.u32 %v8239, 4294901760
    %8241 = vmatmul.f32.gmra.mxu0 %v8240
    %v8242 = vpop.f32.mrf.mxu0
    %v8243 = vadd.f32 %v8145, %v8242
    %v8244 = vand.u32 %v7251, 4294901760
    %v8245 = vsub.f32 %v7251, %v8244
    %v8246 = vand.u32 %v8245, 4294901760
    %8247 = vmatmul.f32.gmra.mxu0 %v8246
    %v8248 = vpop.f32.mrf.mxu0
    %v8249 = vadd.f32 %v8150, %v8248
    %v8250 = vand.u32 %v7254, 4294901760
    %v8251 = vsub.f32 %v7254, %v8250
    %v8252 = vand.u32 %v8251, 4294901760
    %8253 = vmatmul.f32.gmra.mxu0 %v8252
    %v8254 = vpop.f32.mrf.mxu0
    %v8255 = vadd.f32 %v8155, %v8254
    %v8256 = vand.u32 %v7257, 4294901760
    %v8257 = vsub.f32 %v7257, %v8256
    %v8258 = vand.u32 %v8257, 4294901760
    %8259 = vmatmul.f32.gmra.mxu0 %v8258
    %v8260 = vpop.f32.mrf.mxu0
    %v8261 = vadd.f32 %v8160, %v8260
    %8262 = vdwg.mxu0
    %8263 = vmatpush.msra.mxu0 0.0
    %8264 = vmatpush.msra.mxu0 0.0
    %8265 = vmatpush.msra.mxu0 0.0
    %8266 = vmatpush.msra.mxu0 0.0
    %8267 = vmatpush.msra.mxu0 0.0
    %8268 = vmatpush.msra.mxu0 0.0
    %8269 = vmatpush.msra.mxu0 0.0
    %8270 = vmatpush.msra.mxu0 0.0
    %8271 = vmatpush.msra.mxu0 0.0
    %8272 = vmatpush.msra.mxu0 0.0
    %v8273 = vand.u32 %v5803, 4294901760
    %v8274 = vsub.f32 %v5803, %v8273
    %v8275 = vand.u32 %v8274, 4294901760
    %8276 = vmatpush.msra.mxu0 %v8275
    %v8277 = vand.u32 %v5801, 4294901760
    %v8278 = vsub.f32 %v5801, %v8277
    %v8279 = vand.u32 %v8278, 4294901760
    %8280 = vmatpush.msra.mxu0 %v8279
    %v8281 = vand.u32 %v5799, 4294901760
    %v8282 = vsub.f32 %v5799, %v8281
    %v8283 = vand.u32 %v8282, 4294901760
    %8284 = vmatpush.msra.mxu0 %v8283
    %v8285 = vand.u32 %v5797, 4294901760
    %v8286 = vsub.f32 %v5797, %v8285
    %v8287 = vand.u32 %v8286, 4294901760
    %8288 = vmatpush.msra.mxu0 %v8287
    %v8289 = vand.u32 %v5795, 4294901760
    %v8290 = vsub.f32 %v5795, %v8289
    %v8291 = vand.u32 %v8290, 4294901760
    %8292 = vmatpush.msra.mxu0 %v8291
    %v8293 = vand.u32 %v5793, 4294901760
    %v8294 = vsub.f32 %v5793, %v8293
    %v8295 = vand.u32 %v8294, 4294901760
    %8296 = vmatpush.msra.mxu0 %v8295
    %v8297 = vand.u32 %v7221, 4294901760
    %8298 = vmatmul.f32.gmra.mxu0 %v8297
    %v8299 = vpop.f32.mrf.mxu0
    %v8300 = vadd.f32 %v8189, %v8299
    %v8301 = vand.u32 %v7224, 4294901760
    %8302 = vmatmul.f32.gmra.mxu0 %v8301
    %v8303 = vpop.f32.mrf.mxu0
    %v8304 = vadd.f32 %v8195, %v8303
    %v8305 = vand.u32 %v7227, 4294901760
    %8306 = vmatmul.f32.gmra.mxu0 %v8305
    %v8307 = vpop.f32.mrf.mxu0
    %v8308 = vadd.f32 %v8201, %v8307
    %v8309 = vand.u32 %v7230, 4294901760
    %8310 = vmatmul.f32.gmra.mxu0 %v8309
    %v8311 = vpop.f32.mrf.mxu0
    %v8312 = vadd.f32 %v8207, %v8311
    %v8313 = vand.u32 %v7233, 4294901760
    %8314 = vmatmul.f32.gmra.mxu0 %v8313
    %v8315 = vpop.f32.mrf.mxu0
    %v8316 = vadd.f32 %v8213, %v8315
    %v8317 = vand.u32 %v7236, 4294901760
    %8318 = vmatmul.f32.gmra.mxu0 %v8317
    %v8319 = vpop.f32.mrf.mxu0
    %v8320 = vadd.f32 %v8219, %v8319
    %v8321 = vand.u32 %v7239, 4294901760
    %8322 = vmatmul.f32.gmra.mxu0 %v8321
    %v8323 = vpop.f32.mrf.mxu0
    %v8324 = vadd.f32 %v8225, %v8323
    %v8325 = vand.u32 %v7242, 4294901760
    %8326 = vmatmul.f32.gmra.mxu0 %v8325
    %v8327 = vpop.f32.mrf.mxu0
    %v8328 = vadd.f32 %v8231, %v8327
    %v8329 = vand.u32 %v7245, 4294901760
    %8330 = vmatmul.f32.gmra.mxu0 %v8329
    %v8331 = vpop.f32.mrf.mxu0
    %v8332 = vadd.f32 %v8237, %v8331
    %v8333 = vand.u32 %v7248, 4294901760
    %8334 = vmatmul.f32.gmra.mxu0 %v8333
    %v8335 = vpop.f32.mrf.mxu0
    %v8336 = vadd.f32 %v8243, %v8335
    %v8337 = vand.u32 %v7251, 4294901760
    %8338 = vmatmul.f32.gmra.mxu0 %v8337
    %v8339 = vpop.f32.mrf.mxu0
    %v8340 = vadd.f32 %v8249, %v8339
    %v8341 = vand.u32 %v7254, 4294901760
    %8342 = vmatmul.f32.gmra.mxu0 %v8341
    %v8343 = vpop.f32.mrf.mxu0
    %v8344 = vadd.f32 %v8255, %v8343
    %v8345 = vand.u32 %v7257, 4294901760
    %8346 = vmatmul.f32.gmra.mxu0 %v8345
    %v8347 = vpop.f32.mrf.mxu0
    %v8348 = vadd.f32 %v8261, %v8347
    %8349 = vdwg.mxu0
    %8350 = vmatpush.msra.mxu0 0.0
    %8351 = vmatpush.msra.mxu0 0.0
    %8352 = vmatpush.msra.mxu0 0.0
    %8353 = vmatpush.msra.mxu0 0.0
    %8354 = vmatpush.msra.mxu0 0.0
    %8355 = vmatpush.msra.mxu0 0.0
    %8356 = vmatpush.msra.mxu0 0.0
    %8357 = vmatpush.msra.mxu0 0.0
    %8358 = vmatpush.msra.mxu0 0.0
    %8359 = vmatpush.msra.mxu0 0.0
    %v8360 = vand.u32 %v5803, 4294901760
    %8361 = vmatpush.msra.mxu0 %v8360
    %v8362 = vand.u32 %v5801, 4294901760
    %8363 = vmatpush.msra.mxu0 %v8362
    %v8364 = vand.u32 %v5799, 4294901760
    %8365 = vmatpush.msra.mxu0 %v8364
    %v8366 = vand.u32 %v5797, 4294901760
    %8367 = vmatpush.msra.mxu0 %v8366
    %v8368 = vand.u32 %v5795, 4294901760
    %8369 = vmatpush.msra.mxu0 %v8368
    %v8370 = vand.u32 %v5793, 4294901760
    %8371 = vmatpush.msra.mxu0 %v8370
    %v8372 = vand.u32 %v7221, 4294901760
    %8373 = vmatmul.f32.gmra.mxu0 %v8372
    %v8374 = vpop.f32.mrf.mxu0
    %v8375 = vadd.f32 %v8300, %v8374
    %v8376 = vand.u32 %v7224, 4294901760
    %8377 = vmatmul.f32.gmra.mxu0 %v8376
    %v8378 = vpop.f32.mrf.mxu0
    %v8379 = vadd.f32 %v8304, %v8378
    %v8380 = vand.u32 %v7227, 4294901760
    %8381 = vmatmul.f32.gmra.mxu0 %v8380
    %v8382 = vpop.f32.mrf.mxu0
    %v8383 = vadd.f32 %v8308, %v8382
    %v8384 = vand.u32 %v7230, 4294901760
    %8385 = vmatmul.f32.gmra.mxu0 %v8384
    %v8386 = vpop.f32.mrf.mxu0
    %v8387 = vadd.f32 %v8312, %v8386
    %v8388 = vand.u32 %v7233, 4294901760
    %8389 = vmatmul.f32.gmra.mxu0 %v8388
    %v8390 = vpop.f32.mrf.mxu0
    %v8391 = vadd.f32 %v8316, %v8390
    %v8392 = vand.u32 %v7236, 4294901760
    %8393 = vmatmul.f32.gmra.mxu0 %v8392
    %v8394 = vpop.f32.mrf.mxu0
    %v8395 = vadd.f32 %v8320, %v8394
    %v8396 = vand.u32 %v7239, 4294901760
    %8397 = vmatmul.f32.gmra.mxu0 %v8396
    %v8398 = vpop.f32.mrf.mxu0
    %v8399 = vadd.f32 %v8324, %v8398
    %v8400 = vand.u32 %v7242, 4294901760
    %8401 = vmatmul.f32.gmra.mxu0 %v8400
    %v8402 = vpop.f32.mrf.mxu0
    %v8403 = vadd.f32 %v8328, %v8402
    %v8404 = vand.u32 %v7245, 4294901760
    %8405 = vmatmul.f32.gmra.mxu0 %v8404
    %v8406 = vpop.f32.mrf.mxu0
    %v8407 = vadd.f32 %v8332, %v8406
    %v8408 = vand.u32 %v7248, 4294901760
    %8409 = vmatmul.f32.gmra.mxu0 %v8408
    %v8410 = vpop.f32.mrf.mxu0
    %v8411 = vadd.f32 %v8336, %v8410
    %v8412 = vand.u32 %v7251, 4294901760
    %8413 = vmatmul.f32.gmra.mxu0 %v8412
    %v8414 = vpop.f32.mrf.mxu0
    %v8415 = vadd.f32 %v8340, %v8414
    %v8416 = vand.u32 %v7254, 4294901760
    %8417 = vmatmul.f32.gmra.mxu0 %v8416
    %v8418 = vpop.f32.mrf.mxu0
    %v8419 = vadd.f32 %v8344, %v8418
    %v8420 = vand.u32 %v7257, 4294901760
    %8421 = vmatmul.f32.gmra.mxu0 %v8420
    %v8422 = vpop.f32.mrf.mxu0
    %v8423 = vadd.f32 %v8348, %v8422
    %8424 = vdwg.mxu0
    %v8425 = vadd.f32 %v7792, %v7796
    %v8426 = vadd.f32 %v8425, %v7800
    %v8427 = vadd.f32 %v8426, %v7804
    %v8428 = vadd.f32 %v8427, %v7808
    %v8429 = vadd.f32 %v8428, %v7812
    %v8430 = vadd.f32 %v8429, %v7816
    %v8431 = vadd.f32 %v8430, %v7820
    %v8432 = vadd.f32 %v8431, %v7824
    %v8433 = vadd.f32 %v8432, %v7828
    %v8434 = vadd.f32 %v8433, %v7832
    %v8435 = vadd.f32 %v8434, %v7836
    %v8436 = vsel %vm7034, %v7840, 0.0
    %v8437 = vadd.f32 %v8435, %v8436
    %v8438 = vrot.slane %v8437, 4
    %v8439 = vadd.f32 %v8437, %v8438
    %v8440 = vrot.slane %v8439, 2
    %v8441 = vadd.f32 %v8439, %v8440
    %v8442 = vrot.slane %v8441, 1
    %v8443 = vadd.f32 %v8441, %v8442
    %v8444 = vadd.f32 %v8375, %v8379
    %v8445 = vadd.f32 %v8444, %v8383
    %v8446 = vadd.f32 %v8445, %v8387
    %v8447 = vadd.f32 %v8446, %v8391
    %v8448 = vadd.f32 %v8447, %v8395
    %v8449 = vadd.f32 %v8448, %v8399
    %v8450 = vadd.f32 %v8449, %v8403
    %v8451 = vadd.f32 %v8450, %v8407
    %v8452 = vadd.f32 %v8451, %v8411
    %v8453 = vadd.f32 %v8452, %v8415
    %v8454 = vadd.f32 %v8453, %v8419
    %v8455 = vsel %vm7034, %v8423, 0.0
    %v8456 = vadd.f32 %v8454, %v8455
    %v8457 = vrot.slane %v8456, 4
    %v8458 = vadd.f32 %v8456, %v8457
    %v8459 = vrot.slane %v8458, 2
    %v8460 = vadd.f32 %v8458, %v8459
    %v8461 = vrot.slane %v8460, 1
    %v8462 = vadd.f32 %v8460, %v8461
    %v8463 = vadd.f32 %v7062, %v8443
    %v8464 = vadd.f32 %v7063, %v8462
    %v8465 = vmul.f32 %v7792, %v7792
    %v8466 = vmul.f32 %v8375, %v8375
    %v8467 = vmul.f32 %v7796, %v7796
    %v8468 = vmul.f32 %v8379, %v8379
    %v8469 = vmul.f32 %v7800, %v7800
    %v8470 = vmul.f32 %v8383, %v8383
    %v8471 = vmul.f32 %v7804, %v7804
    %v8472 = vmul.f32 %v8387, %v8387
    %v8473 = vmul.f32 %v7808, %v7808
    %v8474 = vmul.f32 %v8391, %v8391
    %v8475 = vmul.f32 %v7812, %v7812
    %v8476 = vmul.f32 %v8395, %v8395
    %v8477 = vmul.f32 %v7816, %v7816
    %v8478 = vmul.f32 %v8399, %v8399
    %v8479 = vmul.f32 %v7820, %v7820
    %v8480 = vmul.f32 %v8403, %v8403
    %v8481 = vmul.f32 %v7824, %v7824
    %v8482 = vmul.f32 %v8407, %v8407
    %v8483 = vmul.f32 %v7828, %v7828
    %v8484 = vmul.f32 %v8411, %v8411
    %v8485 = vmul.f32 %v7832, %v7832
    %v8486 = vmul.f32 %v8415, %v8415
    %v8487 = vmul.f32 %v7836, %v7836
    %v8488 = vmul.f32 %v8419, %v8419
    %v8489 = vmul.f32 %v7840, %v7840
    %v8490 = vmul.f32 %v8423, %v8423
    %v8491 = vadd.f32 %v8465, %v8467
    %v8492 = vadd.f32 %v8491, %v8469
    %v8493 = vadd.f32 %v8492, %v8471
    %v8494 = vadd.f32 %v8493, %v8473
    %v8495 = vadd.f32 %v8494, %v8475
    %v8496 = vadd.f32 %v8495, %v8477
    %v8497 = vadd.f32 %v8496, %v8479
    %v8498 = vadd.f32 %v8497, %v8481
    %v8499 = vadd.f32 %v8498, %v8483
    %v8500 = vadd.f32 %v8499, %v8485
    %v8501 = vadd.f32 %v8500, %v8487
    %v8502 = vsel %vm7034, %v8489, 0.0
    %v8503 = vadd.f32 %v8501, %v8502
    %v8504 = vrot.slane %v8503, 4
    %v8505 = vadd.f32 %v8503, %v8504
    %v8506 = vrot.slane %v8505, 2
    %v8507 = vadd.f32 %v8505, %v8506
    %v8508 = vrot.slane %v8507, 1
    %v8509 = vadd.f32 %v8507, %v8508
    %v8510 = vadd.f32 %v8466, %v8468
    %v8511 = vadd.f32 %v8510, %v8470
    %v8512 = vadd.f32 %v8511, %v8472
    %v8513 = vadd.f32 %v8512, %v8474
    %v8514 = vadd.f32 %v8513, %v8476
    %v8515 = vadd.f32 %v8514, %v8478
    %v8516 = vadd.f32 %v8515, %v8480
    %v8517 = vadd.f32 %v8516, %v8482
    %v8518 = vadd.f32 %v8517, %v8484
    %v8519 = vadd.f32 %v8518, %v8486
    %v8520 = vadd.f32 %v8519, %v8488
    %v8521 = vsel %vm7034, %v8490, 0.0
    %v8522 = vadd.f32 %v8520, %v8521
    %v8523 = vrot.slane %v8522, 4
    %v8524 = vadd.f32 %v8522, %v8523
    %v8525 = vrot.slane %v8524, 2
    %v8526 = vadd.f32 %v8524, %v8525
    %v8527 = vrot.slane %v8526, 1
    %v8528 = vadd.f32 %v8526, %v8527
    %v8529 = vadd.f32 %v7128, %v8509
    %v8530 = vadd.f32 %v7129, %v8528
    %v8531 = vmax.f32 %v7792, %v7800
    %v8532 = vmax.f32 %v7796, %v7804
    %v8533 = vmax.f32 %v8531, %v7808
    %v8534 = vmax.f32 %v8532, %v7812
    %v8535 = vmax.f32 %v8533, %v7816
    %v8536 = vmax.f32 %v8534, %v7820
    %v8537 = vmax.f32 %v8535, %v7824
    %v8538 = vmax.f32 %v8536, %v7828
    %v8539 = vmax.f32 %v8537, %v7832
    %v8540 = vmax.f32 %v8538, %v7836
    %v8541 = vsel %vm7034, %v7840, -inf
    %v8542 = vmax.f32 %v8539, %v8541
    %v8543 = vmax.f32 %v8542, %v8540
    %v8544 = vrot.slane %v8543, 4
    %v8545 = vmax.f32 %v8543, %v8544
    %v8546 = vrot.slane %v8545, 2
    %v8547 = vmax.f32 %v8545, %v8546
    %v8548 = vrot.slane %v8547, 1
    %v8549 = vmax.f32 %v8547, %v8548
    %v8550 = vmax.f32 %v8375, %v8383
    %v8551 = vmax.f32 %v8379, %v8387
    %v8552 = vmax.f32 %v8550, %v8391
    %v8553 = vmax.f32 %v8551, %v8395
    %v8554 = vmax.f32 %v8552, %v8399
    %v8555 = vmax.f32 %v8553, %v8403
    %v8556 = vmax.f32 %v8554, %v8407
    %v8557 = vmax.f32 %v8555, %v8411
    %v8558 = vmax.f32 %v8556, %v8415
    %v8559 = vmax.f32 %v8557, %v8419
    %v8560 = vsel %vm7034, %v8423, -inf
    %v8561 = vmax.f32 %v8558, %v8560
    %v8562 = vmax.f32 %v8561, %v8559
    %v8563 = vrot.slane %v8562, 4
    %v8564 = vmax.f32 %v8562, %v8563
    %v8565 = vrot.slane %v8564, 2
    %v8566 = vmax.f32 %v8564, %v8565
    %v8567 = vrot.slane %v8566, 1
    %v8568 = vmax.f32 %v8566, %v8567
    %v8569 = vmin.f32 %v7792, %v7800
    %v8570 = vmin.f32 %v7796, %v7804
    %v8571 = vmin.f32 %v8569, %v7808
    %v8572 = vmin.f32 %v8570, %v7812
    %v8573 = vmin.f32 %v8571, %v7816
    %v8574 = vmin.f32 %v8572, %v7820
    %v8575 = vmin.f32 %v8573, %v7824
    %v8576 = vmin.f32 %v8574, %v7828
    %v8577 = vmin.f32 %v8575, %v7832
    %v8578 = vmin.f32 %v8576, %v7836
    %v8579 = vsel %vm7034, %v7840, inf
    %v8580 = vmin.f32 %v8577, %v8579
    %v8581 = vmin.f32 %v8580, %v8578
    %v8582 = vrot.slane %v8581, 4
    %v8583 = vmin.f32 %v8581, %v8582
    %v8584 = vrot.slane %v8583, 2
    %v8585 = vmin.f32 %v8583, %v8584
    %v8586 = vrot.slane %v8585, 1
    %v8587 = vmin.f32 %v8585, %v8586
    %v8588 = vmin.f32 %v8375, %v8383
    %v8589 = vmin.f32 %v8379, %v8387
    %v8590 = vmin.f32 %v8588, %v8391
    %v8591 = vmin.f32 %v8589, %v8395
    %v8592 = vmin.f32 %v8590, %v8399
    %v8593 = vmin.f32 %v8591, %v8403
    %v8594 = vmin.f32 %v8592, %v8407
    %v8595 = vmin.f32 %v8593, %v8411
    %v8596 = vmin.f32 %v8594, %v8415
    %v8597 = vmin.f32 %v8595, %v8419
    %v8598 = vsel %vm7034, %v8423, inf
    %v8599 = vmin.f32 %v8596, %v8598
    %v8600 = vmin.f32 %v8599, %v8597
    %v8601 = vrot.slane %v8600, 4
    %v8602 = vmin.f32 %v8600, %v8601
    %v8603 = vrot.slane %v8602, 2
    %v8604 = vmin.f32 %v8602, %v8603
    %v8605 = vrot.slane %v8604, 1
    %v8606 = vmin.f32 %v8604, %v8605
    %v8607 = vmul.f32 %v8463, 0.005050505
    %v8608 = vmul.f32 %v8464, 0.005050505
    %v8609 = vmul.f32 %v8529, 0.005050505
    %v8610 = vmul.f32 %v8530, 0.005050505
    %v8611 = vmul.f32 %v8607, %v8607
    %v8612 = vmul.f32 %v8608, %v8608
    %v8613 = vsub.f32 %v8609, %v8611
    %v8614 = vsub.f32 %v8610, %v8612
    %s8615 = scalar_lea.vmem %s8, 4
    %v8616 = vld [vmem:[%s8615] ss:$8 sm:$0x3]
    %s8617 = scalar_lea.vmem %s8, 5
    %v8618 = vld [vmem:[%s8617] ss:$8 sm:$0x3]
    %v8619 = vadd.f32 %v8613, 1e-05
    %v8620 = vadd.f32 %v8614, 1e-05
    %v8621 = vrsqrt.pop %v8619
    %v8622 = vmul.f32 %v8621, %v8619
    %v8623 = vmul.f32 %v8622, %v8621
    %v8624 = vmul.f32 0.5, %v8623
    %v8625 = vsub.f32 1.5, %v8624
    %v8626 = vmul.f32 %v8621, %v8625
    %vm8627 = vweird.f32 %v8619
    %vm8628 = vweird.f32 %v8621
    %vm8629 = vmor %vm8627, %vm8628
    %v8630 = vsel %vm8629, %v8621, %v8626
    %v8631 = vrsqrt.pop %v8620
    %v8632 = vmul.f32 %v8631, %v8620
    %v8633 = vmul.f32 %v8632, %v8631
    %v8634 = vmul.f32 0.5, %v8633
    %v8635 = vsub.f32 1.5, %v8634
    %v8636 = vmul.f32 %v8631, %v8635
    %vm8637 = vweird.f32 %v8620
    %vm8638 = vweird.f32 %v8631
    %vm8639 = vmor %vm8637, %vm8638
    %v8640 = vsel %vm8639, %v8631, %v8636
    %v8643 = vrot.slane %v8640, 7
    %v8644 = vsel %vm1258, %v8630, %v8643
    %v8646 = vmul.f32 %v8616, %v8644
    %v8648 = vperm.slane %v8646, 0
    %v8649 = vperm.slane %v8646, 1
    %v8652 = vmul.f32 %v8607, %v8648
    %v8653 = vmul.f32 %v8608, %v8649
    %v8656 = vrot.slane %v8653, 7
    %v8657 = vsel %vm1258, %v8652, %v8656
    %v8659 = vsub.f32 %v8618, %v8657
    %vm8660 = vcmp.ge.f32.partialorder %v8646, 0.0
    %v8661 = vmul.f32 %v7148, %v8648
    %v8662 = vmul.f32 %v7167, %v8649
    %v8663 = vmul.f32 %v7186, %v8648
    %v8664 = vmul.f32 %v7205, %v8649
    %v8667 = vrot.slane %v8662, 7
    %v8668 = vsel %vm1258, %v8661, %v8667
    %v8672 = vrot.slane %v8664, 7
    %v8673 = vsel %vm1258, %v8663, %v8672
    %v8675 = vsel %vm8660, %v8668, %v8673
    %v8676 = vadd.f32 %v8675, %v8659
    %v8677 = vmax.f32 %v8676, 0.0
    %s8678 = scalar_lea.vmem [#allocation2], 8
    %8679 = vst.msk [vmem:[%s8678] ss:$2 sm:$0x3] %vm2911, %v8677
    %v8680 = vmul.f32 %v8549, %v8648
    %v8681 = vmul.f32 %v8568, %v8649
    %v8682 = vmul.f32 %v8587, %v8648
    %v8683 = vmul.f32 %v8606, %v8649
    %v8686 = vrot.slane %v8681, 7
    %v8687 = vsel %vm1258, %v8680, %v8686
    %v8691 = vrot.slane %v8683, 7
    %v8692 = vsel %vm1258, %v8682, %v8691
    %v8694 = vsel %vm8660, %v8687, %v8692
    %v8695 = vadd.f32 %v8694, %v8659
    %v8696 = vmax.f32 %v8695, 0.0
    %s8697 = scalar_lea.vmem [#allocation2], 9
    %8698 = vst.msk [vmem:[%s8697] ss:$2 sm:$0x3] %vm2911, %v8696
    %v8699 = vld [vmem:[%s7] sm:$0xff]
    %v8700 = vld [vmem:[%s7 + $0x8] sm:$0xff]
    %v8701 = vld [vmem:[%s7 + $0x10] sm:$0xff]
    %v8702 = vld [vmem:[%s7 + $0x18] sm:$0xff]
    %v8703 = vld [vmem:[%s7 + $0x20] sm:$0xff]
    %v8704 = vld [vmem:[%s7 + $0x28] sm:$0xff]
    %v8705 = vld [vmem:[%s7 + $0x30] sm:$0xff]
    %v8706 = vld [vmem:[%s7 + $0x38] sm:$0xff]
    %v8707 = vld [vmem:[%s7 + $0x40] sm:$0xff]
    %v8708 = vld [vmem:[%s7 + $0x48] sm:$0xff]
    %v8709 = vld [vmem:[%s7 + $0x50] sm:$0xff]
    %v8710 = vld [vmem:[%s7 + $0x58] sm:$0xff]
    %v8711 = vld [vmem:[%s7 + $0x60] sm:$0xff]
    %v8712 = vld [vmem:[%s7 + $0x68] sm:$0xff]
    %v8713 = vld [vmem:[%s7 + $0x70] sm:$0xf]
    %v8714 = vld [vmem:[%s7 + $0x78] sm:$0xf]
    %v8715 = vld [vmem:[%s3] sm:$0xff]
    %v8716 = vld [vmem:[%s3 + $0x8] sm:$0xff]
    %v8717 = vld [vmem:[%s3 + $0x10] sm:$0xff]
    %v8718 = vld [vmem:[%s3 + $0x18] sm:$0xff]
    %v8719 = vld [vmem:[%s3 + $0x20] sm:$0xff]
    %v8720 = vld [vmem:[%s3 + $0x28] sm:$0xff]
    %v8721 = vld [vmem:[%s3 + $0x30] sm:$0xff]
    %v8722 = vld [vmem:[%s3 + $0x38] sm:$0xff]
    %v8723 = vld [vmem:[%s3 + $0x40] sm:$0xff]
    %v8724 = vld [vmem:[%s3 + $0x48] sm:$0xff]
    %v8725 = vld [vmem:[%s3 + $0x50] sm:$0xff]
    %v8726 = vld [vmem:[%s3 + $0x58] sm:$0xff]
    %vm8727 = vcmask 490496
    %v8729 = vsel %vm8727, %v8715, 0
    %v8732 = vsel %vm8727, %v8716, 0
    %v8735 = vsel %vm8727, %v8717, 0
    %v8738 = vsel %vm8727, %v8718, 0
    %v8741 = vsel %vm8727, %v8719, 0
    %v8744 = vsel %vm8727, %v8720, 0
    %v8747 = vsel %vm8727, %v8721, 0
    %v8750 = vsel %vm8727, %v8722, 0
    %v8753 = vsel %vm8727, %v8723, 0
    %v8756 = vsel %vm8727, %v8724, 0
    %v8759 = vsel %vm8727, %v8725, 0
    %v8762 = vsel %vm8727, %v8726, 0
    %v8765 = vsel %vm2995, %v8713, 0
    %v8768 = vsel %vm2995, %v8714, 0
    %8770 = vmatpush.msra.mxu0 0.0
    %8771 = vmatpush.msra.mxu0 0.0
    %8772 = vmatpush.msra.mxu0 0.0
    %8773 = vmatpush.msra.mxu0 0.0
    %8774 = vmatpush.msra.mxu0 0.0
    %8775 = vmatpush.msra.mxu0 0.0
    %8776 = vmatpush.msra.mxu0 0.0
    %8777 = vmatpush.msra.mxu0 0.0
    %v8778 = vand.u32 %v8765, 4294901760
    %8779 = vmatpush.msra.mxu0 %v8778
    %v8780 = vand.u32 %v8711, 4294901760
    %8781 = vmatpush.msra.mxu0 %v8780
    %v8782 = vand.u32 %v8709, 4294901760
    %8783 = vmatpush.msra.mxu0 %v8782
    %v8784 = vand.u32 %v8707, 4294901760
    %8785 = vmatpush.msra.mxu0 %v8784
    %v8786 = vand.u32 %v8705, 4294901760
    %8787 = vmatpush.msra.mxu0 %v8786
    %v8788 = vand.u32 %v8703, 4294901760
    %8789 = vmatpush.msra.mxu0 %v8788
    %v8790 = vand.u32 %v8701, 4294901760
    %8791 = vmatpush.msra.mxu0 %v8790
    %v8792 = vand.u32 %v8699, 4294901760
    %8793 = vmatpush.msra.mxu0 %v8792
    %v8794 = vand.u32 %v8729, 4294901760
    %v8795 = vsub.f32 %v8729, %v8794
    %v8796 = vand.u32 %v8795, 4294901760
    %v8797 = vsub.f32 %v8795, %v8796
    %v8798 = vand.u32 %v8797, 4294901760
    %8799 = vmatmul.f32.gmra.mxu0 %v8798
    %v8800 = vpop.f32.mrf.mxu0
    %v8801 = vadd.f32 0.0, %v8800
    %v8802 = vand.u32 %v8732, 4294901760
    %v8803 = vsub.f32 %v8732, %v8802
    %v8804 = vand.u32 %v8803, 4294901760
    %v8805 = vsub.f32 %v8803, %v8804
    %v8806 = vand.u32 %v8805, 4294901760
    %8807 = vmatmul.f32.gmra.mxu0 %v8806
    %v8808 = vpop.f32.mrf.mxu0
    %v8809 = vadd.f32 0.0, %v8808
    %v8810 = vand.u32 %v8735, 4294901760
    %v8811 = vsub.f32 %v8735, %v8810
    %v8812 = vand.u32 %v8811, 4294901760
    %v8813 = vsub.f32 %v8811, %v8812
    %v8814 = vand.u32 %v8813, 4294901760
    %8815 = vmatmul.f32.gmra.mxu0 %v8814
    %v8816 = vpop.f32.mrf.mxu0
    %v8817 = vadd.f32 0.0, %v8816
    %v8818 = vand.u32 %v8738, 4294901760
    %v8819 = vsub.f32 %v8738, %v8818
    %v8820 = vand.u32 %v8819, 4294901760
    %v8821 = vsub.f32 %v8819, %v8820
    %v8822 = vand.u32 %v8821, 4294901760
    %8823 = vmatmul.f32.gmra.mxu0 %v8822
    %v8824 = vpop.f32.mrf.mxu0
    %v8825 = vadd.f32 0.0, %v8824
    %v8826 = vand.u32 %v8741, 4294901760
    %v8827 = vsub.f32 %v8741, %v8826
    %v8828 = vand.u32 %v8827, 4294901760
    %v8829 = vsub.f32 %v8827, %v8828
    %v8830 = vand.u32 %v8829, 4294901760
    %8831 = vmatmul.f32.gmra.mxu0 %v8830
    %v8832 = vpop.f32.mrf.mxu0
    %v8833 = vadd.f32 0.0, %v8832
    %v8834 = vand.u32 %v8744, 4294901760
    %v8835 = vsub.f32 %v8744, %v8834
    %v8836 = vand.u32 %v8835, 4294901760
    %v8837 = vsub.f32 %v8835, %v8836
    %v8838 = vand.u32 %v8837, 4294901760
    %8839 = vmatmul.f32.gmra.mxu0 %v8838
    %v8840 = vpop.f32.mrf.mxu0
    %v8841 = vadd.f32 0.0, %v8840
    %v8842 = vand.u32 %v8747, 4294901760
    %v8843 = vsub.f32 %v8747, %v8842
    %v8844 = vand.u32 %v8843, 4294901760
    %v8845 = vsub.f32 %v8843, %v8844
    %v8846 = vand.u32 %v8845, 4294901760
    %8847 = vmatmul.f32.gmra.mxu0 %v8846
    %v8848 = vpop.f32.mrf.mxu0
    %v8849 = vadd.f32 0.0, %v8848
    %v8850 = vand.u32 %v8750, 4294901760
    %v8851 = vsub.f32 %v8750, %v8850
    %v8852 = vand.u32 %v8851, 4294901760
    %v8853 = vsub.f32 %v8851, %v8852
    %v8854 = vand.u32 %v8853, 4294901760
    %8855 = vmatmul.f32.gmra.mxu0 %v8854
    %v8856 = vpop.f32.mrf.mxu0
    %v8857 = vadd.f32 0.0, %v8856
    %v8858 = vand.u32 %v8753, 4294901760
    %v8859 = vsub.f32 %v8753, %v8858
    %v8860 = vand.u32 %v8859, 4294901760
    %v8861 = vsub.f32 %v8859, %v8860
    %v8862 = vand.u32 %v8861, 4294901760
    %8863 = vmatmul.f32.gmra.mxu0 %v8862
    %v8864 = vpop.f32.mrf.mxu0
    %v8865 = vadd.f32 0.0, %v8864
    %v8866 = vand.u32 %v8756, 4294901760
    %v8867 = vsub.f32 %v8756, %v8866
    %v8868 = vand.u32 %v8867, 4294901760
    %v8869 = vsub.f32 %v8867, %v8868
    %v8870 = vand.u32 %v8869, 4294901760
    %8871 = vmatmul.f32.gmra.mxu0 %v8870
    %v8872 = vpop.f32.mrf.mxu0
    %v8873 = vadd.f32 0.0, %v8872
    %v8874 = vand.u32 %v8759, 4294901760
    %v8875 = vsub.f32 %v8759, %v8874
    %v8876 = vand.u32 %v8875, 4294901760
    %v8877 = vsub.f32 %v8875, %v8876
    %v8878 = vand.u32 %v8877, 4294901760
    %8879 = vmatmul.f32.gmra.mxu0 %v8878
    %v8880 = vpop.f32.mrf.mxu0
    %v8881 = vadd.f32 0.0, %v8880
    %v8882 = vand.u32 %v8762, 4294901760
    %v8883 = vsub.f32 %v8762, %v8882
    %v8884 = vand.u32 %v8883, 4294901760
    %v8885 = vsub.f32 %v8883, %v8884
    %v8886 = vand.u32 %v8885, 4294901760
    %8887 = vmatmul.f32.gmra.mxu0 %v8886
    %v8888 = vpop.f32.mrf.mxu0
    %v8889 = vadd.f32 0.0, %v8888
    %8890 = vdwg.mxu0
    %8891 = vmatpush.msra.mxu0 0.0
    %8892 = vmatpush.msra.mxu0 0.0
    %8893 = vmatpush.msra.mxu0 0.0
    %8894 = vmatpush.msra.mxu0 0.0
    %8895 = vmatpush.msra.mxu0 0.0
    %8896 = vmatpush.msra.mxu0 0.0
    %8897 = vmatpush.msra.mxu0 0.0
    %8898 = vmatpush.msra.mxu0 0.0
    %v8899 = vand.u32 %v8765, 4294901760
    %v8900 = vsub.f32 %v8765, %v8899
    %v8901 = vand.u32 %v8900, 4294901760
    %v8902 = vsub.f32 %v8900, %v8901
    %v8903 = vand.u32 %v8902, 4294901760
    %8904 = vmatpush.msra.mxu0 %v8903
    %v8905 = vand.u32 %v8711, 4294901760
    %v8906 = vsub.f32 %v8711, %v8905
    %v8907 = vand.u32 %v8906, 4294901760
    %v8908 = vsub.f32 %v8906, %v8907
    %v8909 = vand.u32 %v8908, 4294901760
    %8910 = vmatpush.msra.mxu0 %v8909
    %v8911 = vand.u32 %v8709, 4294901760
    %v8912 = vsub.f32 %v8709, %v8911
    %v8913 = vand.u32 %v8912, 4294901760
    %v8914 = vsub.f32 %v8912, %v8913
    %v8915 = vand.u32 %v8914, 4294901760
    %8916 = vmatpush.msra.mxu0 %v8915
    %v8917 = vand.u32 %v8707, 4294901760
    %v8918 = vsub.f32 %v8707, %v8917
    %v8919 = vand.u32 %v8918, 4294901760
    %v8920 = vsub.f32 %v8918, %v8919
    %v8921 = vand.u32 %v8920, 4294901760
    %8922 = vmatpush.msra.mxu0 %v8921
    %v8923 = vand.u32 %v8705, 4294901760
    %v8924 = vsub.f32 %v8705, %v8923
    %v8925 = vand.u32 %v8924, 4294901760
    %v8926 = vsub.f32 %v8924, %v8925
    %v8927 = vand.u32 %v8926, 4294901760
    %8928 = vmatpush.msra.mxu0 %v8927
    %v8929 = vand.u32 %v8703, 4294901760
    %v8930 = vsub.f32 %v8703, %v8929
    %v8931 = vand.u32 %v8930, 4294901760
    %v8932 = vsub.f32 %v8930, %v8931
    %v8933 = vand.u32 %v8932, 4294901760
    %8934 = vmatpush.msra.mxu0 %v8933
    %v8935 = vand.u32 %v8701, 4294901760
    %v8936 = vsub.f32 %v8701, %v8935
    %v8937 = vand.u32 %v8936, 4294901760
    %v8938 = vsub.f32 %v8936, %v8937
    %v8939 = vand.u32 %v8938, 4294901760
    %8940 = vmatpush.msra.mxu0 %v8939
    %v8941 = vand.u32 %v8699, 4294901760
    %v8942 = vsub.f32 %v8699, %v8941
    %v8943 = vand.u32 %v8942, 4294901760
    %v8944 = vsub.f32 %v8942, %v8943
    %v8945 = vand.u32 %v8944, 4294901760
    %8946 = vmatpush.msra.mxu0 %v8945
    %v8947 = vand.u32 %v8729, 4294901760
    %8948 = vmatmul.f32.gmra.mxu0 %v8947
    %v8949 = vpop.f32.mrf.mxu0
    %v8950 = vadd.f32 %v8801, %v8949
    %v8951 = vand.u32 %v8732, 4294901760
    %8952 = vmatmul.f32.gmra.mxu0 %v8951
    %v8953 = vpop.f32.mrf.mxu0
    %v8954 = vadd.f32 %v8809, %v8953
    %v8955 = vand.u32 %v8735, 4294901760
    %8956 = vmatmul.f32.gmra.mxu0 %v8955
    %v8957 = vpop.f32.mrf.mxu0
    %v8958 = vadd.f32 %v8817, %v8957
    %v8959 = vand.u32 %v8738, 4294901760
    %8960 = vmatmul.f32.gmra.mxu0 %v8959
    %v8961 = vpop.f32.mrf.mxu0
    %v8962 = vadd.f32 %v8825, %v8961
    %v8963 = vand.u32 %v8741, 4294901760
    %8964 = vmatmul.f32.gmra.mxu0 %v8963
    %v8965 = vpop.f32.mrf.mxu0
    %v8966 = vadd.f32 %v8833, %v8965
    %v8967 = vand.u32 %v8744, 4294901760
    %8968 = vmatmul.f32.gmra.mxu0 %v8967
    %v8969 = vpop.f32.mrf.mxu0
    %v8970 = vadd.f32 %v8841, %v8969
    %v8971 = vand.u32 %v8747, 4294901760
    %8972 = vmatmul.f32.gmra.mxu0 %v8971
    %v8973 = vpop.f32.mrf.mxu0
    %v8974 = vadd.f32 %v8849, %v8973
    %v8975 = vand.u32 %v8750, 4294901760
    %8976 = vmatmul.f32.gmra.mxu0 %v8975
    %v8977 = vpop.f32.mrf.mxu0
    %v8978 = vadd.f32 %v8857, %v8977
    %v8979 = vand.u32 %v8753, 4294901760
    %8980 = vmatmul.f32.gmra.mxu0 %v8979
    %v8981 = vpop.f32.mrf.mxu0
    %v8982 = vadd.f32 %v8865, %v8981
    %v8983 = vand.u32 %v8756, 4294901760
    %8984 = vmatmul.f32.gmra.mxu0 %v8983
    %v8985 = vpop.f32.mrf.mxu0
    %v8986 = vadd.f32 %v8873, %v8985
    %v8987 = vand.u32 %v8759, 4294901760
    %8988 = vmatmul.f32.gmra.mxu0 %v8987
    %v8989 = vpop.f32.mrf.mxu0
    %v8990 = vadd.f32 %v8881, %v8989
    %v8991 = vand.u32 %v8762, 4294901760
    %8992 = vmatmul.f32.gmra.mxu0 %v8991
    %v8993 = vpop.f32.mrf.mxu0
    %v8994 = vadd.f32 %v8889, %v8993
    %8995 = vdwg.mxu0
    %8996 = vmatpush.msra.mxu0 0.0
    %8997 = vmatpush.msra.mxu0 0.0
    %8998 = vmatpush.msra.mxu0 0.0
    %8999 = vmatpush.msra.mxu0 0.0
    %9000 = vmatpush.msra.mxu0 0.0
    %9001 = vmatpush.msra.mxu0 0.0
    %9002 = vmatpush.msra.mxu0 0.0
    %9003 = vmatpush.msra.mxu0 0.0
    %v9004 = vand.u32 %v8765, 4294901760
    %v9005 = vsub.f32 %v8765, %v9004
    %9006 = vmatpush.msra.mxu0 %v9005
    %v9007 = vand.u32 %v8711, 4294901760
    %v9008 = vsub.f32 %v8711, %v9007
    %9009 = vmatpush.msra.mxu0 %v9008
    %v9010 = vand.u32 %v8709, 4294901760
    %v9011 = vsub.f32 %v8709, %v9010
    %9012 = vmatpush.msra.mxu0 %v9011
    %v9013 = vand.u32 %v8707, 4294901760
    %v9014 = vsub.f32 %v8707, %v9013
    %9015 = vmatpush.msra.mxu0 %v9014
    %v9016 = vand.u32 %v8705, 4294901760
    %v9017 = vsub.f32 %v8705, %v9016
    %9018 = vmatpush.msra.mxu0 %v9017
    %v9019 = vand.u32 %v8703, 4294901760
    %v9020 = vsub.f32 %v8703, %v9019
    %9021 = vmatpush.msra.mxu0 %v9020
    %v9022 = vand.u32 %v8701, 4294901760
    %v9023 = vsub.f32 %v8701, %v9022
    %9024 = vmatpush.msra.mxu0 %v9023
    %v9025 = vand.u32 %v8699, 4294901760
    %v9026 = vsub.f32 %v8699, %v9025
    %9027 = vmatpush.msra.mxu0 %v9026
    %v9028 = vand.u32 %v8729, 4294901760
    %v9029 = vsub.f32 %v8729, %v9028
    %9030 = vmatmul.f32.gmra.mxu0 %v9029
    %v9031 = vpop.f32.mrf.mxu0
    %v9032 = vadd.f32 %v8950, %v9031
    %v9033 = vand.u32 %v8732, 4294901760
    %v9034 = vsub.f32 %v8732, %v9033
    %9035 = vmatmul.f32.gmra.mxu0 %v9034
    %v9036 = vpop.f32.mrf.mxu0
    %v9037 = vadd.f32 %v8954, %v9036
    %v9038 = vand.u32 %v8735, 4294901760
    %v9039 = vsub.f32 %v8735, %v9038
    %9040 = vmatmul.f32.gmra.mxu0 %v9039
    %v9041 = vpop.f32.mrf.mxu0
    %v9042 = vadd.f32 %v8958, %v9041
    %v9043 = vand.u32 %v8738, 4294901760
    %v9044 = vsub.f32 %v8738, %v9043
    %9045 = vmatmul.f32.gmra.mxu0 %v9044
    %v9046 = vpop.f32.mrf.mxu0
    %v9047 = vadd.f32 %v8962, %v9046
    %v9048 = vand.u32 %v8741, 4294901760
    %v9049 = vsub.f32 %v8741, %v9048
    %9050 = vmatmul.f32.gmra.mxu0 %v9049
    %v9051 = vpop.f32.mrf.mxu0
    %v9052 = vadd.f32 %v8966, %v9051
    %v9053 = vand.u32 %v8744, 4294901760
    %v9054 = vsub.f32 %v8744, %v9053
    %9055 = vmatmul.f32.gmra.mxu0 %v9054
    %v9056 = vpop.f32.mrf.mxu0
    %v9057 = vadd.f32 %v8970, %v9056
    %v9058 = vand.u32 %v8747, 4294901760
    %v9059 = vsub.f32 %v8747, %v9058
    %9060 = vmatmul.f32.gmra.mxu0 %v9059
    %v9061 = vpop.f32.mrf.mxu0
    %v9062 = vadd.f32 %v8974, %v9061
    %v9063 = vand.u32 %v8750, 4294901760
    %v9064 = vsub.f32 %v8750, %v9063
    %9065 = vmatmul.f32.gmra.mxu0 %v9064
    %v9066 = vpop.f32.mrf.mxu0
    %v9067 = vadd.f32 %v8978, %v9066
    %v9068 = vand.u32 %v8753, 4294901760
    %v9069 = vsub.f32 %v8753, %v9068
    %9070 = vmatmul.f32.gmra.mxu0 %v9069
    %v9071 = vpop.f32.mrf.mxu0
    %v9072 = vadd.f32 %v8982, %v9071
    %v9073 = vand.u32 %v8756, 4294901760
    %v9074 = vsub.f32 %v8756, %v9073
    %9075 = vmatmul.f32.gmra.mxu0 %v9074
    %v9076 = vpop.f32.mrf.mxu0
    %v9077 = vadd.f32 %v8986, %v9076
    %v9078 = vand.u32 %v8759, 4294901760
    %v9079 = vsub.f32 %v8759, %v9078
    %9080 = vmatmul.f32.gmra.mxu0 %v9079
    %v9081 = vpop.f32.mrf.mxu0
    %v9082 = vadd.f32 %v8990, %v9081
    %v9083 = vand.u32 %v8762, 4294901760
    %v9084 = vsub.f32 %v8762, %v9083
    %9085 = vmatmul.f32.gmra.mxu0 %v9084
    %v9086 = vpop.f32.mrf.mxu0
    %v9087 = vadd.f32 %v8994, %v9086
    %9088 = vdwg.mxu0
    %9089 = vmatpush.msra.mxu0 0.0
    %9090 = vmatpush.msra.mxu0 0.0
    %9091 = vmatpush.msra.mxu0 0.0
    %9092 = vmatpush.msra.mxu0 0.0
    %9093 = vmatpush.msra.mxu0 0.0
    %9094 = vmatpush.msra.mxu0 0.0
    %9095 = vmatpush.msra.mxu0 0.0
    %9096 = vmatpush.msra.mxu0 0.0
    %v9097 = vand.u32 %v8765, 4294901760
    %9098 = vmatpush.msra.mxu0 %v9097
    %v9099 = vand.u32 %v8711, 4294901760
    %9100 = vmatpush.msra.mxu0 %v9099
    %v9101 = vand.u32 %v8709, 4294901760
    %9102 = vmatpush.msra.mxu0 %v9101
    %v9103 = vand.u32 %v8707, 4294901760
    %9104 = vmatpush.msra.mxu0 %v9103
    %v9105 = vand.u32 %v8705, 4294901760
    %9106 = vmatpush.msra.mxu0 %v9105
    %v9107 = vand.u32 %v8703, 4294901760
    %9108 = vmatpush.msra.mxu0 %v9107
    %v9109 = vand.u32 %v8701, 4294901760
    %9110 = vmatpush.msra.mxu0 %v9109
    %v9111 = vand.u32 %v8699, 4294901760
    %9112 = vmatpush.msra.mxu0 %v9111
    %v9113 = vand.u32 %v8729, 4294901760
    %v9114 = vsub.f32 %v8729, %v9113
    %v9115 = vand.u32 %v9114, 4294901760
    %9116 = vmatmul.f32.gmra.mxu0 %v9115
    %v9117 = vpop.f32.mrf.mxu0
    %v9118 = vadd.f32 %v9032, %v9117
    %v9119 = vand.u32 %v8732, 4294901760
    %v9120 = vsub.f32 %v8732, %v9119
    %v9121 = vand.u32 %v9120, 4294901760
    %9122 = vmatmul.f32.gmra.mxu0 %v9121
    %v9123 = vpop.f32.mrf.mxu0
    %v9124 = vadd.f32 %v9037, %v9123
    %v9125 = vand.u32 %v8735, 4294901760
    %v9126 = vsub.f32 %v8735, %v9125
    %v9127 = vand.u32 %v9126, 4294901760
    %9128 = vmatmul.f32.gmra.mxu0 %v9127
    %v9129 = vpop.f32.mrf.mxu0
    %v9130 = vadd.f32 %v9042, %v9129
    %v9131 = vand.u32 %v8738, 4294901760
    %v9132 = vsub.f32 %v8738, %v9131
    %v9133 = vand.u32 %v9132, 4294901760
    %9134 = vmatmul.f32.gmra.mxu0 %v9133
    %v9135 = vpop.f32.mrf.mxu0
    %v9136 = vadd.f32 %v9047, %v9135
    %v9137 = vand.u32 %v8741, 4294901760
    %v9138 = vsub.f32 %v8741, %v9137
    %v9139 = vand.u32 %v9138, 4294901760
    %9140 = vmatmul.f32.gmra.mxu0 %v9139
    %v9141 = vpop.f32.mrf.mxu0
    %v9142 = vadd.f32 %v9052, %v9141
    %v9143 = vand.u32 %v8744, 4294901760
    %v9144 = vsub.f32 %v8744, %v9143
    %v9145 = vand.u32 %v9144, 4294901760
    %9146 = vmatmul.f32.gmra.mxu0 %v9145
    %v9147 = vpop.f32.mrf.mxu0
    %v9148 = vadd.f32 %v9057, %v9147
    %v9149 = vand.u32 %v8747, 4294901760
    %v9150 = vsub.f32 %v8747, %v9149
    %v9151 = vand.u32 %v9150, 4294901760
    %9152 = vmatmul.f32.gmra.mxu0 %v9151
    %v9153 = vpop.f32.mrf.mxu0
    %v9154 = vadd.f32 %v9062, %v9153
    %v9155 = vand.u32 %v8750, 4294901760
    %v9156 = vsub.f32 %v8750, %v9155
    %v9157 = vand.u32 %v9156, 4294901760
    %9158 = vmatmul.f32.gmra.mxu0 %v9157
    %v9159 = vpop.f32.mrf.mxu0
    %v9160 = vadd.f32 %v9067, %v9159
    %v9161 = vand.u32 %v8753, 4294901760
    %v9162 = vsub.f32 %v8753, %v9161
    %v9163 = vand.u32 %v9162, 4294901760
    %9164 = vmatmul.f32.gmra.mxu0 %v9163
    %v9165 = vpop.f32.mrf.mxu0
    %v9166 = vadd.f32 %v9072, %v9165
    %v9167 = vand.u32 %v8756, 4294901760
    %v9168 = vsub.f32 %v8756, %v9167
    %v9169 = vand.u32 %v9168, 4294901760
    %9170 = vmatmul.f32.gmra.mxu0 %v9169
    %v9171 = vpop.f32.mrf.mxu0
    %v9172 = vadd.f32 %v9077, %v9171
    %v9173 = vand.u32 %v8759, 4294901760
    %v9174 = vsub.f32 %v8759, %v9173
    %v9175 = vand.u32 %v9174, 4294901760
    %9176 = vmatmul.f32.gmra.mxu0 %v9175
    %v9177 = vpop.f32.mrf.mxu0
    %v9178 = vadd.f32 %v9082, %v9177
    %v9179 = vand.u32 %v8762, 4294901760
    %v9180 = vsub.f32 %v8762, %v9179
    %v9181 = vand.u32 %v9180, 4294901760
    %9182 = vmatmul.f32.gmra.mxu0 %v9181
    %v9183 = vpop.f32.mrf.mxu0
    %v9184 = vadd.f32 %v9087, %v9183
    %9185 = vdwg.mxu0
    %9186 = vmatpush.msra.mxu0 0.0
    %9187 = vmatpush.msra.mxu0 0.0
    %9188 = vmatpush.msra.mxu0 0.0
    %9189 = vmatpush.msra.mxu0 0.0
    %9190 = vmatpush.msra.mxu0 0.0
    %9191 = vmatpush.msra.mxu0 0.0
    %9192 = vmatpush.msra.mxu0 0.0
    %9193 = vmatpush.msra.mxu0 0.0
    %v9194 = vand.u32 %v8765, 4294901760
    %v9195 = vsub.f32 %v8765, %v9194
    %v9196 = vand.u32 %v9195, 4294901760
    %9197 = vmatpush.msra.mxu0 %v9196
    %v9198 = vand.u32 %v8711, 4294901760
    %v9199 = vsub.f32 %v8711, %v9198
    %v9200 = vand.u32 %v9199, 4294901760
    %9201 = vmatpush.msra.mxu0 %v9200
    %v9202 = vand.u32 %v8709, 4294901760
    %v9203 = vsub.f32 %v8709, %v9202
    %v9204 = vand.u32 %v9203, 4294901760
    %9205 = vmatpush.msra.mxu0 %v9204
    %v9206 = vand.u32 %v8707, 4294901760
    %v9207 = vsub.f32 %v8707, %v9206
    %v9208 = vand.u32 %v9207, 4294901760
    %9209 = vmatpush.msra.mxu0 %v9208
    %v9210 = vand.u32 %v8705, 4294901760
    %v9211 = vsub.f32 %v8705, %v9210
    %v9212 = vand.u32 %v9211, 4294901760
    %9213 = vmatpush.msra.mxu0 %v9212
    %v9214 = vand.u32 %v8703, 4294901760
    %v9215 = vsub.f32 %v8703, %v9214
    %v9216 = vand.u32 %v9215, 4294901760
    %9217 = vmatpush.msra.mxu0 %v9216
    %v9218 = vand.u32 %v8701, 4294901760
    %v9219 = vsub.f32 %v8701, %v9218
    %v9220 = vand.u32 %v9219, 4294901760
    %9221 = vmatpush.msra.mxu0 %v9220
    %v9222 = vand.u32 %v8699, 4294901760
    %v9223 = vsub.f32 %v8699, %v9222
    %v9224 = vand.u32 %v9223, 4294901760
    %9225 = vmatpush.msra.mxu0 %v9224
    %v9226 = vand.u32 %v8729, 4294901760
    %9227 = vmatmul.f32.gmra.mxu0 %v9226
    %v9228 = vpop.f32.mrf.mxu0
    %v9229 = vadd.f32 %v9118, %v9228
    %v9230 = vand.u32 %v8732, 4294901760
    %9231 = vmatmul.f32.gmra.mxu0 %v9230
    %v9232 = vpop.f32.mrf.mxu0
    %v9233 = vadd.f32 %v9124, %v9232
    %v9234 = vand.u32 %v8735, 4294901760
    %9235 = vmatmul.f32.gmra.mxu0 %v9234
    %v9236 = vpop.f32.mrf.mxu0
    %v9237 = vadd.f32 %v9130, %v9236
    %v9238 = vand.u32 %v8738, 4294901760
    %9239 = vmatmul.f32.gmra.mxu0 %v9238
    %v9240 = vpop.f32.mrf.mxu0
    %v9241 = vadd.f32 %v9136, %v9240
    %v9242 = vand.u32 %v8741, 4294901760
    %9243 = vmatmul.f32.gmra.mxu0 %v9242
    %v9244 = vpop.f32.mrf.mxu0
    %v9245 = vadd.f32 %v9142, %v9244
    %v9246 = vand.u32 %v8744, 4294901760
    %9247 = vmatmul.f32.gmra.mxu0 %v9246
    %v9248 = vpop.f32.mrf.mxu0
    %v9249 = vadd.f32 %v9148, %v9248
    %v9250 = vand.u32 %v8747, 4294901760
    %9251 = vmatmul.f32.gmra.mxu0 %v9250
    %v9252 = vpop.f32.mrf.mxu0
    %v9253 = vadd.f32 %v9154, %v9252
    %v9254 = vand.u32 %v8750, 4294901760
    %9255 = vmatmul.f32.gmra.mxu0 %v9254
    %v9256 = vpop.f32.mrf.mxu0
    %v9257 = vadd.f32 %v9160, %v9256
    %v9258 = vand.u32 %v8753, 4294901760
    %9259 = vmatmul.f32.gmra.mxu0 %v9258
    %v9260 = vpop.f32.mrf.mxu0
    %v9261 = vadd.f32 %v9166, %v9260
    %v9262 = vand.u32 %v8756, 4294901760
    %9263 = vmatmul.f32.gmra.mxu0 %v9262
    %v9264 = vpop.f32.mrf.mxu0
    %v9265 = vadd.f32 %v9172, %v9264
    %v9266 = vand.u32 %v8759, 4294901760
    %9267 = vmatmul.f32.gmra.mxu0 %v9266
    %v9268 = vpop.f32.mrf.mxu0
    %v9269 = vadd.f32 %v9178, %v9268
    %v9270 = vand.u32 %v8762, 4294901760
    %9271 = vmatmul.f32.gmra.mxu0 %v9270
    %v9272 = vpop.f32.mrf.mxu0
    %v9273 = vadd.f32 %v9184, %v9272
    %9274 = vdwg.mxu0
    %9275 = vmatpush.msra.mxu0 0.0
    %9276 = vmatpush.msra.mxu0 0.0
    %9277 = vmatpush.msra.mxu0 0.0
    %9278 = vmatpush.msra.mxu0 0.0
    %9279 = vmatpush.msra.mxu0 0.0
    %9280 = vmatpush.msra.mxu0 0.0
    %9281 = vmatpush.msra.mxu0 0.0
    %9282 = vmatpush.msra.mxu0 0.0
    %v9283 = vand.u32 %v8765, 4294901760
    %9284 = vmatpush.msra.mxu0 %v9283
    %v9285 = vand.u32 %v8711, 4294901760
    %9286 = vmatpush.msra.mxu0 %v9285
    %v9287 = vand.u32 %v8709, 4294901760
    %9288 = vmatpush.msra.mxu0 %v9287
    %v9289 = vand.u32 %v8707, 4294901760
    %9290 = vmatpush.msra.mxu0 %v9289
    %v9291 = vand.u32 %v8705, 4294901760
    %9292 = vmatpush.msra.mxu0 %v9291
    %v9293 = vand.u32 %v8703, 4294901760
    %9294 = vmatpush.msra.mxu0 %v9293
    %v9295 = vand.u32 %v8701, 4294901760
    %9296 = vmatpush.msra.mxu0 %v9295
    %v9297 = vand.u32 %v8699, 4294901760
    %9298 = vmatpush.msra.mxu0 %v9297
    %v9299 = vand.u32 %v8729, 4294901760
    %9300 = vmatmul.f32.gmra.mxu0 %v9299
    %v9301 = vpop.f32.mrf.mxu0
    %v9302 = vadd.f32 %v9229, %v9301
    %v9303 = vand.u32 %v8732, 4294901760
    %9304 = vmatmul.f32.gmra.mxu0 %v9303
    %v9305 = vpop.f32.mrf.mxu0
    %v9306 = vadd.f32 %v9233, %v9305
    %v9307 = vand.u32 %v8735, 4294901760
    %9308 = vmatmul.f32.gmra.mxu0 %v9307
    %v9309 = vpop.f32.mrf.mxu0
    %v9310 = vadd.f32 %v9237, %v9309
    %v9311 = vand.u32 %v8738, 4294901760
    %9312 = vmatmul.f32.gmra.mxu0 %v9311
    %v9313 = vpop.f32.mrf.mxu0
    %v9314 = vadd.f32 %v9241, %v9313
    %v9315 = vand.u32 %v8741, 4294901760
    %9316 = vmatmul.f32.gmra.mxu0 %v9315
    %v9317 = vpop.f32.mrf.mxu0
    %v9318 = vadd.f32 %v9245, %v9317
    %v9319 = vand.u32 %v8744, 4294901760
    %9320 = vmatmul.f32.gmra.mxu0 %v9319
    %v9321 = vpop.f32.mrf.mxu0
    %v9322 = vadd.f32 %v9249, %v9321
    %v9323 = vand.u32 %v8747, 4294901760
    %9324 = vmatmul.f32.gmra.mxu0 %v9323
    %v9325 = vpop.f32.mrf.mxu0
    %v9326 = vadd.f32 %v9253, %v9325
    %v9327 = vand.u32 %v8750, 4294901760
    %9328 = vmatmul.f32.gmra.mxu0 %v9327
    %v9329 = vpop.f32.mrf.mxu0
    %v9330 = vadd.f32 %v9257, %v9329
    %v9331 = vand.u32 %v8753, 4294901760
    %9332 = vmatmul.f32.gmra.mxu0 %v9331
    %v9333 = vpop.f32.mrf.mxu0
    %v9334 = vadd.f32 %v9261, %v9333
    %v9335 = vand.u32 %v8756, 4294901760
    %9336 = vmatmul.f32.gmra.mxu0 %v9335
    %v9337 = vpop.f32.mrf.mxu0
    %v9338 = vadd.f32 %v9265, %v9337
    %v9339 = vand.u32 %v8759, 4294901760
    %9340 = vmatmul.f32.gmra.mxu0 %v9339
    %v9341 = vpop.f32.mrf.mxu0
    %v9342 = vadd.f32 %v9269, %v9341
    %v9343 = vand.u32 %v8762, 4294901760
    %9344 = vmatmul.f32.gmra.mxu0 %v9343
    %v9345 = vpop.f32.mrf.mxu0
    %v9346 = vadd.f32 %v9273, %v9345
    %9347 = vdwg.mxu0
    %9348 = vmatpush.msra.mxu0 0.0
    %9349 = vmatpush.msra.mxu0 0.0
    %9350 = vmatpush.msra.mxu0 0.0
    %9351 = vmatpush.msra.mxu0 0.0
    %9352 = vmatpush.msra.mxu0 0.0
    %9353 = vmatpush.msra.mxu0 0.0
    %9354 = vmatpush.msra.mxu0 0.0
    %9355 = vmatpush.msra.mxu0 0.0
    %v9356 = vand.u32 %v8768, 4294901760
    %9357 = vmatpush.msra.mxu0 %v9356
    %v9358 = vand.u32 %v8712, 4294901760
    %9359 = vmatpush.msra.mxu0 %v9358
    %v9360 = vand.u32 %v8710, 4294901760
    %9361 = vmatpush.msra.mxu0 %v9360
    %v9362 = vand.u32 %v8708, 4294901760
    %9363 = vmatpush.msra.mxu0 %v9362
    %v9364 = vand.u32 %v8706, 4294901760
    %9365 = vmatpush.msra.mxu0 %v9364
    %v9366 = vand.u32 %v8704, 4294901760
    %9367 = vmatpush.msra.mxu0 %v9366
    %v9368 = vand.u32 %v8702, 4294901760
    %9369 = vmatpush.msra.mxu0 %v9368
    %v9370 = vand.u32 %v8700, 4294901760
    %9371 = vmatpush.msra.mxu0 %v9370
    %v9372 = vand.u32 %v8729, 4294901760
    %v9373 = vsub.f32 %v8729, %v9372
    %v9374 = vand.u32 %v9373, 4294901760
    %v9375 = vsub.f32 %v9373, %v9374
    %v9376 = vand.u32 %v9375, 4294901760
    %9377 = vmatmul.f32.gmra.mxu0 %v9376
    %v9378 = vpop.f32.mrf.mxu0
    %v9379 = vadd.f32 0.0, %v9378
    %v9380 = vand.u32 %v8732, 4294901760
    %v9381 = vsub.f32 %v8732, %v9380
    %v9382 = vand.u32 %v9381, 4294901760
    %v9383 = vsub.f32 %v9381, %v9382
    %v9384 = vand.u32 %v9383, 4294901760
    %9385 = vmatmul.f32.gmra.mxu0 %v9384
    %v9386 = vpop.f32.mrf.mxu0
    %v9387 = vadd.f32 0.0, %v9386
    %v9388 = vand.u32 %v8735, 4294901760
    %v9389 = vsub.f32 %v8735, %v9388
    %v9390 = vand.u32 %v9389, 4294901760
    %v9391 = vsub.f32 %v9389, %v9390
    %v9392 = vand.u32 %v9391, 4294901760
    %9393 = vmatmul.f32.gmra.mxu0 %v9392
    %v9394 = vpop.f32.mrf.mxu0
    %v9395 = vadd.f32 0.0, %v9394
    %v9396 = vand.u32 %v8738, 4294901760
    %v9397 = vsub.f32 %v8738, %v9396
    %v9398 = vand.u32 %v9397, 4294901760
    %v9399 = vsub.f32 %v9397, %v9398
    %v9400 = vand.u32 %v9399, 4294901760
    %9401 = vmatmul.f32.gmra.mxu0 %v9400
    %v9402 = vpop.f32.mrf.mxu0
    %v9403 = vadd.f32 0.0, %v9402
    %v9404 = vand.u32 %v8741, 4294901760
    %v9405 = vsub.f32 %v8741, %v9404
    %v9406 = vand.u32 %v9405, 4294901760
    %v9407 = vsub.f32 %v9405, %v9406
    %v9408 = vand.u32 %v9407, 4294901760
    %9409 = vmatmul.f32.gmra.mxu0 %v9408
    %v9410 = vpop.f32.mrf.mxu0
    %v9411 = vadd.f32 0.0, %v9410
    %v9412 = vand.u32 %v8744, 4294901760
    %v9413 = vsub.f32 %v8744, %v9412
    %v9414 = vand.u32 %v9413, 4294901760
    %v9415 = vsub.f32 %v9413, %v9414
    %v9416 = vand.u32 %v9415, 4294901760
    %9417 = vmatmul.f32.gmra.mxu0 %v9416
    %v9418 = vpop.f32.mrf.mxu0
    %v9419 = vadd.f32 0.0, %v9418
    %v9420 = vand.u32 %v8747, 4294901760
    %v9421 = vsub.f32 %v8747, %v9420
    %v9422 = vand.u32 %v9421, 4294901760
    %v9423 = vsub.f32 %v9421, %v9422
    %v9424 = vand.u32 %v9423, 4294901760
    %9425 = vmatmul.f32.gmra.mxu0 %v9424
    %v9426 = vpop.f32.mrf.mxu0
    %v9427 = vadd.f32 0.0, %v9426
    %v9428 = vand.u32 %v8750, 4294901760
    %v9429 = vsub.f32 %v8750, %v9428
    %v9430 = vand.u32 %v9429, 4294901760
    %v9431 = vsub.f32 %v9429, %v9430
    %v9432 = vand.u32 %v9431, 4294901760
    %9433 = vmatmul.f32.gmra.mxu0 %v9432
    %v9434 = vpop.f32.mrf.mxu0
    %v9435 = vadd.f32 0.0, %v9434
    %v9436 = vand.u32 %v8753, 4294901760
    %v9437 = vsub.f32 %v8753, %v9436
    %v9438 = vand.u32 %v9437, 4294901760
    %v9439 = vsub.f32 %v9437, %v9438
    %v9440 = vand.u32 %v9439, 4294901760
    %9441 = vmatmul.f32.gmra.mxu0 %v9440
    %v9442 = vpop.f32.mrf.mxu0
    %v9443 = vadd.f32 0.0, %v9442
    %v9444 = vand.u32 %v8756, 4294901760
    %v9445 = vsub.f32 %v8756, %v9444
    %v9446 = vand.u32 %v9445, 4294901760
    %v9447 = vsub.f32 %v9445, %v9446
    %v9448 = vand.u32 %v9447, 4294901760
    %9449 = vmatmul.f32.gmra.mxu0 %v9448
    %v9450 = vpop.f32.mrf.mxu0
    %v9451 = vadd.f32 0.0, %v9450
    %v9452 = vand.u32 %v8759, 4294901760
    %v9453 = vsub.f32 %v8759, %v9452
    %v9454 = vand.u32 %v9453, 4294901760
    %v9455 = vsub.f32 %v9453, %v9454
    %v9456 = vand.u32 %v9455, 4294901760
    %9457 = vmatmul.f32.gmra.mxu0 %v9456
    %v9458 = vpop.f32.mrf.mxu0
    %v9459 = vadd.f32 0.0, %v9458
    %v9460 = vand.u32 %v8762, 4294901760
    %v9461 = vsub.f32 %v8762, %v9460
    %v9462 = vand.u32 %v9461, 4294901760
    %v9463 = vsub.f32 %v9461, %v9462
    %v9464 = vand.u32 %v9463, 4294901760
    %9465 = vmatmul.f32.gmra.mxu0 %v9464
    %v9466 = vpop.f32.mrf.mxu0
    %v9467 = vadd.f32 0.0, %v9466
    %9468 = vdwg.mxu0
    %9469 = vmatpush.msra.mxu0 0.0
    %9470 = vmatpush.msra.mxu0 0.0
    %9471 = vmatpush.msra.mxu0 0.0
    %9472 = vmatpush.msra.mxu0 0.0
    %9473 = vmatpush.msra.mxu0 0.0
    %9474 = vmatpush.msra.mxu0 0.0
    %9475 = vmatpush.msra.mxu0 0.0
    %9476 = vmatpush.msra.mxu0 0.0
    %v9477 = vand.u32 %v8768, 4294901760
    %v9478 = vsub.f32 %v8768, %v9477
    %v9479 = vand.u32 %v9478, 4294901760
    %v9480 = vsub.f32 %v9478, %v9479
    %v9481 = vand.u32 %v9480, 4294901760
    %9482 = vmatpush.msra.mxu0 %v9481
    %v9483 = vand.u32 %v8712, 4294901760
    %v9484 = vsub.f32 %v8712, %v9483
    %v9485 = vand.u32 %v9484, 4294901760
    %v9486 = vsub.f32 %v9484, %v9485
    %v9487 = vand.u32 %v9486, 4294901760
    %9488 = vmatpush.msra.mxu0 %v9487
    %v9489 = vand.u32 %v8710, 4294901760
    %v9490 = vsub.f32 %v8710, %v9489
    %v9491 = vand.u32 %v9490, 4294901760
    %v9492 = vsub.f32 %v9490, %v9491
    %v9493 = vand.u32 %v9492, 4294901760
    %9494 = vmatpush.msra.mxu0 %v9493
    %v9495 = vand.u32 %v8708, 4294901760
    %v9496 = vsub.f32 %v8708, %v9495
    %v9497 = vand.u32 %v9496, 4294901760
    %v9498 = vsub.f32 %v9496, %v9497
    %v9499 = vand.u32 %v9498, 4294901760
    %9500 = vmatpush.msra.mxu0 %v9499
    %v9501 = vand.u32 %v8706, 4294901760
    %v9502 = vsub.f32 %v8706, %v9501
    %v9503 = vand.u32 %v9502, 4294901760
    %v9504 = vsub.f32 %v9502, %v9503
    %v9505 = vand.u32 %v9504, 4294901760
    %9506 = vmatpush.msra.mxu0 %v9505
    %v9507 = vand.u32 %v8704, 4294901760
    %v9508 = vsub.f32 %v8704, %v9507
    %v9509 = vand.u32 %v9508, 4294901760
    %v9510 = vsub.f32 %v9508, %v9509
    %v9511 = vand.u32 %v9510, 4294901760
    %9512 = vmatpush.msra.mxu0 %v9511
    %v9513 = vand.u32 %v8702, 4294901760
    %v9514 = vsub.f32 %v8702, %v9513
    %v9515 = vand.u32 %v9514, 4294901760
    %v9516 = vsub.f32 %v9514, %v9515
    %v9517 = vand.u32 %v9516, 4294901760
    %9518 = vmatpush.msra.mxu0 %v9517
    %v9519 = vand.u32 %v8700, 4294901760
    %v9520 = vsub.f32 %v8700, %v9519
    %v9521 = vand.u32 %v9520, 4294901760
    %v9522 = vsub.f32 %v9520, %v9521
    %v9523 = vand.u32 %v9522, 4294901760
    %9524 = vmatpush.msra.mxu0 %v9523
    %v9525 = vand.u32 %v8729, 4294901760
    %9526 = vmatmul.f32.gmra.mxu0 %v9525
    %v9527 = vpop.f32.mrf.mxu0
    %v9528 = vadd.f32 %v9379, %v9527
    %v9529 = vand.u32 %v8732, 4294901760
    %9530 = vmatmul.f32.gmra.mxu0 %v9529
    %v9531 = vpop.f32.mrf.mxu0
    %v9532 = vadd.f32 %v9387, %v9531
    %v9533 = vand.u32 %v8735, 4294901760
    %9534 = vmatmul.f32.gmra.mxu0 %v9533
    %v9535 = vpop.f32.mrf.mxu0
    %v9536 = vadd.f32 %v9395, %v9535
    %v9537 = vand.u32 %v8738, 4294901760
    %9538 = vmatmul.f32.gmra.mxu0 %v9537
    %v9539 = vpop.f32.mrf.mxu0
    %v9540 = vadd.f32 %v9403, %v9539
    %v9541 = vand.u32 %v8741, 4294901760
    %9542 = vmatmul.f32.gmra.mxu0 %v9541
    %v9543 = vpop.f32.mrf.mxu0
    %v9544 = vadd.f32 %v9411, %v9543
    %v9545 = vand.u32 %v8744, 4294901760
    %9546 = vmatmul.f32.gmra.mxu0 %v9545
    %v9547 = vpop.f32.mrf.mxu0
    %v9548 = vadd.f32 %v9419, %v9547
    %v9549 = vand.u32 %v8747, 4294901760
    %9550 = vmatmul.f32.gmra.mxu0 %v9549
    %v9551 = vpop.f32.mrf.mxu0
    %v9552 = vadd.f32 %v9427, %v9551
    %v9553 = vand.u32 %v8750, 4294901760
    %9554 = vmatmul.f32.gmra.mxu0 %v9553
    %v9555 = vpop.f32.mrf.mxu0
    %v9556 = vadd.f32 %v9435, %v9555
    %v9557 = vand.u32 %v8753, 4294901760
    %9558 = vmatmul.f32.gmra.mxu0 %v9557
    %v9559 = vpop.f32.mrf.mxu0
    %v9560 = vadd.f32 %v9443, %v9559
    %v9561 = vand.u32 %v8756, 4294901760
    %9562 = vmatmul.f32.gmra.mxu0 %v9561
    %v9563 = vpop.f32.mrf.mxu0
    %v9564 = vadd.f32 %v9451, %v9563
    %v9565 = vand.u32 %v8759, 4294901760
    %9566 = vmatmul.f32.gmra.mxu0 %v9565
    %v9567 = vpop.f32.mrf.mxu0
    %v9568 = vadd.f32 %v9459, %v9567
    %v9569 = vand.u32 %v8762, 4294901760
    %9570 = vmatmul.f32.gmra.mxu0 %v9569
    %v9571 = vpop.f32.mrf.mxu0
    %v9572 = vadd.f32 %v9467, %v9571
    %9573 = vdwg.mxu0
    %9574 = vmatpush.msra.mxu0 0.0
    %9575 = vmatpush.msra.mxu0 0.0
    %9576 = vmatpush.msra.mxu0 0.0
    %9577 = vmatpush.msra.mxu0 0.0
    %9578 = vmatpush.msra.mxu0 0.0
    %9579 = vmatpush.msra.mxu0 0.0
    %9580 = vmatpush.msra.mxu0 0.0
    %9581 = vmatpush.msra.mxu0 0.0
    %v9582 = vand.u32 %v8768, 4294901760
    %v9583 = vsub.f32 %v8768, %v9582
    %9584 = vmatpush.msra.mxu0 %v9583
    %v9585 = vand.u32 %v8712, 4294901760
    %v9586 = vsub.f32 %v8712, %v9585
    %9587 = vmatpush.msra.mxu0 %v9586
    %v9588 = vand.u32 %v8710, 4294901760
    %v9589 = vsub.f32 %v8710, %v9588
    %9590 = vmatpush.msra.mxu0 %v9589
    %v9591 = vand.u32 %v8708, 4294901760
    %v9592 = vsub.f32 %v8708, %v9591
    %9593 = vmatpush.msra.mxu0 %v9592
    %v9594 = vand.u32 %v8706, 4294901760
    %v9595 = vsub.f32 %v8706, %v9594
    %9596 = vmatpush.msra.mxu0 %v9595
    %v9597 = vand.u32 %v8704, 4294901760
    %v9598 = vsub.f32 %v8704, %v9597
    %9599 = vmatpush.msra.mxu0 %v9598
    %v9600 = vand.u32 %v8702, 4294901760
    %v9601 = vsub.f32 %v8702, %v9600
    %9602 = vmatpush.msra.mxu0 %v9601
    %v9603 = vand.u32 %v8700, 4294901760
    %v9604 = vsub.f32 %v8700, %v9603
    %9605 = vmatpush.msra.mxu0 %v9604
    %v9606 = vand.u32 %v8729, 4294901760
    %v9607 = vsub.f32 %v8729, %v9606
    %9608 = vmatmul.f32.gmra.mxu0 %v9607
    %v9609 = vpop.f32.mrf.mxu0
    %v9610 = vadd.f32 %v9528, %v9609
    %v9611 = vand.u32 %v8732, 4294901760
    %v9612 = vsub.f32 %v8732, %v9611
    %9613 = vmatmul.f32.gmra.mxu0 %v9612
    %v9614 = vpop.f32.mrf.mxu0
    %v9615 = vadd.f32 %v9532, %v9614
    %v9616 = vand.u32 %v8735, 4294901760
    %v9617 = vsub.f32 %v8735, %v9616
    %9618 = vmatmul.f32.gmra.mxu0 %v9617
    %v9619 = vpop.f32.mrf.mxu0
    %v9620 = vadd.f32 %v9536, %v9619
    %v9621 = vand.u32 %v8738, 4294901760
    %v9622 = vsub.f32 %v8738, %v9621
    %9623 = vmatmul.f32.gmra.mxu0 %v9622
    %v9624 = vpop.f32.mrf.mxu0
    %v9625 = vadd.f32 %v9540, %v9624
    %v9626 = vand.u32 %v8741, 4294901760
    %v9627 = vsub.f32 %v8741, %v9626
    %9628 = vmatmul.f32.gmra.mxu0 %v9627
    %v9629 = vpop.f32.mrf.mxu0
    %v9630 = vadd.f32 %v9544, %v9629
    %v9631 = vand.u32 %v8744, 4294901760
    %v9632 = vsub.f32 %v8744, %v9631
    %9633 = vmatmul.f32.gmra.mxu0 %v9632
    %v9634 = vpop.f32.mrf.mxu0
    %v9635 = vadd.f32 %v9548, %v9634
    %v9636 = vand.u32 %v8747, 4294901760
    %v9637 = vsub.f32 %v8747, %v9636
    %9638 = vmatmul.f32.gmra.mxu0 %v9637
    %v9639 = vpop.f32.mrf.mxu0
    %v9640 = vadd.f32 %v9552, %v9639
    %v9641 = vand.u32 %v8750, 4294901760
    %v9642 = vsub.f32 %v8750, %v9641
    %9643 = vmatmul.f32.gmra.mxu0 %v9642
    %v9644 = vpop.f32.mrf.mxu0
    %v9645 = vadd.f32 %v9556, %v9644
    %v9646 = vand.u32 %v8753, 4294901760
    %v9647 = vsub.f32 %v8753, %v9646
    %9648 = vmatmul.f32.gmra.mxu0 %v9647
    %v9649 = vpop.f32.mrf.mxu0
    %v9650 = vadd.f32 %v9560, %v9649
    %v9651 = vand.u32 %v8756, 4294901760
    %v9652 = vsub.f32 %v8756, %v9651
    %9653 = vmatmul.f32.gmra.mxu0 %v9652
    %v9654 = vpop.f32.mrf.mxu0
    %v9655 = vadd.f32 %v9564, %v9654
    %v9656 = vand.u32 %v8759, 4294901760
    %v9657 = vsub.f32 %v8759, %v9656
    %9658 = vmatmul.f32.gmra.mxu0 %v9657
    %v9659 = vpop.f32.mrf.mxu0
    %v9660 = vadd.f32 %v9568, %v9659
    %v9661 = vand.u32 %v8762, 4294901760
    %v9662 = vsub.f32 %v8762, %v9661
    %9663 = vmatmul.f32.gmra.mxu0 %v9662
    %v9664 = vpop.f32.mrf.mxu0
    %v9665 = vadd.f32 %v9572, %v9664
    %9666 = vdwg.mxu0
    %9667 = vmatpush.msra.mxu0 0.0
    %9668 = vmatpush.msra.mxu0 0.0
    %9669 = vmatpush.msra.mxu0 0.0
    %9670 = vmatpush.msra.mxu0 0.0
    %9671 = vmatpush.msra.mxu0 0.0
    %9672 = vmatpush.msra.mxu0 0.0
    %9673 = vmatpush.msra.mxu0 0.0
    %9674 = vmatpush.msra.mxu0 0.0
    %v9675 = vand.u32 %v8768, 4294901760
    %9676 = vmatpush.msra.mxu0 %v9675
    %v9677 = vand.u32 %v8712, 4294901760
    %9678 = vmatpush.msra.mxu0 %v9677
    %v9679 = vand.u32 %v8710, 4294901760
    %9680 = vmatpush.msra.mxu0 %v9679
    %v9681 = vand.u32 %v8708, 4294901760
    %9682 = vmatpush.msra.mxu0 %v9681
    %v9683 = vand.u32 %v8706, 4294901760
    %9684 = vmatpush.msra.mxu0 %v9683
    %v9685 = vand.u32 %v8704, 4294901760
    %9686 = vmatpush.msra.mxu0 %v9685
    %v9687 = vand.u32 %v8702, 4294901760
    %9688 = vmatpush.msra.mxu0 %v9687
    %v9689 = vand.u32 %v8700, 4294901760
    %9690 = vmatpush.msra.mxu0 %v9689
    %v9691 = vand.u32 %v8729, 4294901760
    %v9692 = vsub.f32 %v8729, %v9691
    %v9693 = vand.u32 %v9692, 4294901760
    %9694 = vmatmul.f32.gmra.mxu0 %v9693
    %v9695 = vpop.f32.mrf.mxu0
    %v9696 = vadd.f32 %v9610, %v9695
    %v9697 = vand.u32 %v8732, 4294901760
    %v9698 = vsub.f32 %v8732, %v9697
    %v9699 = vand.u32 %v9698, 4294901760
    %9700 = vmatmul.f32.gmra.mxu0 %v9699
    %v9701 = vpop.f32.mrf.mxu0
    %v9702 = vadd.f32 %v9615, %v9701
    %v9703 = vand.u32 %v8735, 4294901760
    %v9704 = vsub.f32 %v8735, %v9703
    %v9705 = vand.u32 %v9704, 4294901760
    %9706 = vmatmul.f32.gmra.mxu0 %v9705
    %v9707 = vpop.f32.mrf.mxu0
    %v9708 = vadd.f32 %v9620, %v9707
    %v9709 = vand.u32 %v8738, 4294901760
    %v9710 = vsub.f32 %v8738, %v9709
    %v9711 = vand.u32 %v9710, 4294901760
    %9712 = vmatmul.f32.gmra.mxu0 %v9711
    %v9713 = vpop.f32.mrf.mxu0
    %v9714 = vadd.f32 %v9625, %v9713
    %v9715 = vand.u32 %v8741, 4294901760
    %v9716 = vsub.f32 %v8741, %v9715
    %v9717 = vand.u32 %v9716, 4294901760
    %9718 = vmatmul.f32.gmra.mxu0 %v9717
    %v9719 = vpop.f32.mrf.mxu0
    %v9720 = vadd.f32 %v9630, %v9719
    %v9721 = vand.u32 %v8744, 4294901760
    %v9722 = vsub.f32 %v8744, %v9721
    %v9723 = vand.u32 %v9722, 4294901760
    %9724 = vmatmul.f32.gmra.mxu0 %v9723
    %v9725 = vpop.f32.mrf.mxu0
    %v9726 = vadd.f32 %v9635, %v9725
    %v9727 = vand.u32 %v8747, 4294901760
    %v9728 = vsub.f32 %v8747, %v9727
    %v9729 = vand.u32 %v9728, 4294901760
    %9730 = vmatmul.f32.gmra.mxu0 %v9729
    %v9731 = vpop.f32.mrf.mxu0
    %v9732 = vadd.f32 %v9640, %v9731
    %v9733 = vand.u32 %v8750, 4294901760
    %v9734 = vsub.f32 %v8750, %v9733
    %v9735 = vand.u32 %v9734, 4294901760
    %9736 = vmatmul.f32.gmra.mxu0 %v9735
    %v9737 = vpop.f32.mrf.mxu0
    %v9738 = vadd.f32 %v9645, %v9737
    %v9739 = vand.u32 %v8753, 4294901760
    %v9740 = vsub.f32 %v8753, %v9739
    %v9741 = vand.u32 %v9740, 4294901760
    %9742 = vmatmul.f32.gmra.mxu0 %v9741
    %v9743 = vpop.f32.mrf.mxu0
    %v9744 = vadd.f32 %v9650, %v9743
    %v9745 = vand.u32 %v8756, 4294901760
    %v9746 = vsub.f32 %v8756, %v9745
    %v9747 = vand.u32 %v9746, 4294901760
    %9748 = vmatmul.f32.gmra.mxu0 %v9747
    %v9749 = vpop.f32.mrf.mxu0
    %v9750 = vadd.f32 %v9655, %v9749
    %v9751 = vand.u32 %v8759, 4294901760
    %v9752 = vsub.f32 %v8759, %v9751
    %v9753 = vand.u32 %v9752, 4294901760
    %9754 = vmatmul.f32.gmra.mxu0 %v9753
    %v9755 = vpop.f32.mrf.mxu0
    %v9756 = vadd.f32 %v9660, %v9755
    %v9757 = vand.u32 %v8762, 4294901760
    %v9758 = vsub.f32 %v8762, %v9757
    %v9759 = vand.u32 %v9758, 4294901760
    %9760 = vmatmul.f32.gmra.mxu0 %v9759
    %v9761 = vpop.f32.mrf.mxu0
    %v9762 = vadd.f32 %v9665, %v9761
    %9763 = vdwg.mxu0
    %9764 = vmatpush.msra.mxu0 0.0
    %9765 = vmatpush.msra.mxu0 0.0
    %9766 = vmatpush.msra.mxu0 0.0
    %9767 = vmatpush.msra.mxu0 0.0
    %9768 = vmatpush.msra.mxu0 0.0
    %9769 = vmatpush.msra.mxu0 0.0
    %9770 = vmatpush.msra.mxu0 0.0
    %9771 = vmatpush.msra.mxu0 0.0
    %v9772 = vand.u32 %v8768, 4294901760
    %v9773 = vsub.f32 %v8768, %v9772
    %v9774 = vand.u32 %v9773, 4294901760
    %9775 = vmatpush.msra.mxu0 %v9774
    %v9776 = vand.u32 %v8712, 4294901760
    %v9777 = vsub.f32 %v8712, %v9776
    %v9778 = vand.u32 %v9777, 4294901760
    %9779 = vmatpush.msra.mxu0 %v9778
    %v9780 = vand.u32 %v8710, 4294901760
    %v9781 = vsub.f32 %v8710, %v9780
    %v9782 = vand.u32 %v9781, 4294901760
    %9783 = vmatpush.msra.mxu0 %v9782
    %v9784 = vand.u32 %v8708, 4294901760
    %v9785 = vsub.f32 %v8708, %v9784
    %v9786 = vand.u32 %v9785, 4294901760
    %9787 = vmatpush.msra.mxu0 %v9786
    %v9788 = vand.u32 %v8706, 4294901760
    %v9789 = vsub.f32 %v8706, %v9788
    %v9790 = vand.u32 %v9789, 4294901760
    %9791 = vmatpush.msra.mxu0 %v9790
    %v9792 = vand.u32 %v8704, 4294901760
    %v9793 = vsub.f32 %v8704, %v9792
    %v9794 = vand.u32 %v9793, 4294901760
    %9795 = vmatpush.msra.mxu0 %v9794
    %v9796 = vand.u32 %v8702, 4294901760
    %v9797 = vsub.f32 %v8702, %v9796
    %v9798 = vand.u32 %v9797, 4294901760
    %9799 = vmatpush.msra.mxu0 %v9798
    %v9800 = vand.u32 %v8700, 4294901760
    %v9801 = vsub.f32 %v8700, %v9800
    %v9802 = vand.u32 %v9801, 4294901760
    %9803 = vmatpush.msra.mxu0 %v9802
    %v9804 = vand.u32 %v8729, 4294901760
    %9805 = vmatmul.f32.gmra.mxu0 %v9804
    %v9806 = vpop.f32.mrf.mxu0
    %v9807 = vadd.f32 %v9696, %v9806
    %v9808 = vand.u32 %v8732, 4294901760
    %9809 = vmatmul.f32.gmra.mxu0 %v9808
    %v9810 = vpop.f32.mrf.mxu0
    %v9811 = vadd.f32 %v9702, %v9810
    %v9812 = vand.u32 %v8735, 4294901760
    %9813 = vmatmul.f32.gmra.mxu0 %v9812
    %v9814 = vpop.f32.mrf.mxu0
    %v9815 = vadd.f32 %v9708, %v9814
    %v9816 = vand.u32 %v8738, 4294901760
    %9817 = vmatmul.f32.gmra.mxu0 %v9816
    %v9818 = vpop.f32.mrf.mxu0
    %v9819 = vadd.f32 %v9714, %v9818
    %v9820 = vand.u32 %v8741, 4294901760
    %9821 = vmatmul.f32.gmra.mxu0 %v9820
    %v9822 = vpop.f32.mrf.mxu0
    %v9823 = vadd.f32 %v9720, %v9822
    %v9824 = vand.u32 %v8744, 4294901760
    %9825 = vmatmul.f32.gmra.mxu0 %v9824
    %v9826 = vpop.f32.mrf.mxu0
    %v9827 = vadd.f32 %v9726, %v9826
    %v9828 = vand.u32 %v8747, 4294901760
    %9829 = vmatmul.f32.gmra.mxu0 %v9828
    %v9830 = vpop.f32.mrf.mxu0
    %v9831 = vadd.f32 %v9732, %v9830
    %v9832 = vand.u32 %v8750, 4294901760
    %9833 = vmatmul.f32.gmra.mxu0 %v9832
    %v9834 = vpop.f32.mrf.mxu0
    %v9835 = vadd.f32 %v9738, %v9834
    %v9836 = vand.u32 %v8753, 4294901760
    %9837 = vmatmul.f32.gmra.mxu0 %v9836
    %v9838 = vpop.f32.mrf.mxu0
    %v9839 = vadd.f32 %v9744, %v9838
    %v9840 = vand.u32 %v8756, 4294901760
    %9841 = vmatmul.f32.gmra.mxu0 %v9840
    %v9842 = vpop.f32.mrf.mxu0
    %v9843 = vadd.f32 %v9750, %v9842
    %v9844 = vand.u32 %v8759, 4294901760
    %9845 = vmatmul.f32.gmra.mxu0 %v9844
    %v9846 = vpop.f32.mrf.mxu0
    %v9847 = vadd.f32 %v9756, %v9846
    %v9848 = vand.u32 %v8762, 4294901760
    %9849 = vmatmul.f32.gmra.mxu0 %v9848
    %v9850 = vpop.f32.mrf.mxu0
    %v9851 = vadd.f32 %v9762, %v9850
    %9852 = vdwg.mxu0
    %9853 = vmatpush.msra.mxu0 0.0
    %9854 = vmatpush.msra.mxu0 0.0
    %9855 = vmatpush.msra.mxu0 0.0
    %9856 = vmatpush.msra.mxu0 0.0
    %9857 = vmatpush.msra.mxu0 0.0
    %9858 = vmatpush.msra.mxu0 0.0
    %9859 = vmatpush.msra.mxu0 0.0
    %9860 = vmatpush.msra.mxu0 0.0
    %v9861 = vand.u32 %v8768, 4294901760
    %9862 = vmatpush.msra.mxu0 %v9861
    %v9863 = vand.u32 %v8712, 4294901760
    %9864 = vmatpush.msra.mxu0 %v9863
    %v9865 = vand.u32 %v8710, 4294901760
    %9866 = vmatpush.msra.mxu0 %v9865
    %v9867 = vand.u32 %v8708, 4294901760
    %9868 = vmatpush.msra.mxu0 %v9867
    %v9869 = vand.u32 %v8706, 4294901760
    %9870 = vmatpush.msra.mxu0 %v9869
    %v9871 = vand.u32 %v8704, 4294901760
    %9872 = vmatpush.msra.mxu0 %v9871
    %v9873 = vand.u32 %v8702, 4294901760
    %9874 = vmatpush.msra.mxu0 %v9873
    %v9875 = vand.u32 %v8700, 4294901760
    %9876 = vmatpush.msra.mxu0 %v9875
    %v9877 = vand.u32 %v8729, 4294901760
    %9878 = vmatmul.f32.gmra.mxu0 %v9877
    %v9879 = vpop.f32.mrf.mxu0
    %v9880 = vadd.f32 %v9807, %v9879
    %v9881 = vand.u32 %v8732, 4294901760
    %9882 = vmatmul.f32.gmra.mxu0 %v9881
    %v9883 = vpop.f32.mrf.mxu0
    %v9884 = vadd.f32 %v9811, %v9883
    %v9885 = vand.u32 %v8735, 4294901760
    %9886 = vmatmul.f32.gmra.mxu0 %v9885
    %v9887 = vpop.f32.mrf.mxu0
    %v9888 = vadd.f32 %v9815, %v9887
    %v9889 = vand.u32 %v8738, 4294901760
    %9890 = vmatmul.f32.gmra.mxu0 %v9889
    %v9891 = vpop.f32.mrf.mxu0
    %v9892 = vadd.f32 %v9819, %v9891
    %v9893 = vand.u32 %v8741, 4294901760
    %9894 = vmatmul.f32.gmra.mxu0 %v9893
    %v9895 = vpop.f32.mrf.mxu0
    %v9896 = vadd.f32 %v9823, %v9895
    %v9897 = vand.u32 %v8744, 4294901760
    %9898 = vmatmul.f32.gmra.mxu0 %v9897
    %v9899 = vpop.f32.mrf.mxu0
    %v9900 = vadd.f32 %v9827, %v9899
    %v9901 = vand.u32 %v8747, 4294901760
    %9902 = vmatmul.f32.gmra.mxu0 %v9901
    %v9903 = vpop.f32.mrf.mxu0
    %v9904 = vadd.f32 %v9831, %v9903
    %v9905 = vand.u32 %v8750, 4294901760
    %9906 = vmatmul.f32.gmra.mxu0 %v9905
    %v9907 = vpop.f32.mrf.mxu0
    %v9908 = vadd.f32 %v9835, %v9907
    %v9909 = vand.u32 %v8753, 4294901760
    %9910 = vmatmul.f32.gmra.mxu0 %v9909
    %v9911 = vpop.f32.mrf.mxu0
    %v9912 = vadd.f32 %v9839, %v9911
    %v9913 = vand.u32 %v8756, 4294901760
    %9914 = vmatmul.f32.gmra.mxu0 %v9913
    %v9915 = vpop.f32.mrf.mxu0
    %v9916 = vadd.f32 %v9843, %v9915
    %v9917 = vand.u32 %v8759, 4294901760
    %9918 = vmatmul.f32.gmra.mxu0 %v9917
    %v9919 = vpop.f32.mrf.mxu0
    %v9920 = vadd.f32 %v9847, %v9919
    %v9921 = vand.u32 %v8762, 4294901760
    %9922 = vmatmul.f32.gmra.mxu0 %v9921
    %v9923 = vpop.f32.mrf.mxu0
    %v9924 = vadd.f32 %v9851, %v9923
    %9925 = vdwg.mxu0
    %v9926 = vadd.f32 %v9302, %v9306
    %v9927 = vadd.f32 %v9926, %v9310
    %v9928 = vadd.f32 %v9927, %v9314
    %v9929 = vadd.f32 %v9928, %v9318
    %v9930 = vadd.f32 %v9929, %v9322
    %v9931 = vadd.f32 %v9930, %v9326
    %v9932 = vadd.f32 %v9931, %v9330
    %v9933 = vadd.f32 %v9932, %v9334
    %v9934 = vadd.f32 %v9933, %v9338
    %v9935 = vadd.f32 %v9934, %v9342
    %v9936 = vadd.f32 %v9935, %v9346
    %v9937 = vrot.slane %v9936, 4
    %v9938 = vadd.f32 %v9936, %v9937
    %v9939 = vrot.slane %v9938, 2
    %v9940 = vadd.f32 %v9938, %v9939
    %v9941 = vrot.slane %v9940, 1
    %v9942 = vadd.f32 %v9940, %v9941
    %v9943 = vadd.f32 %v9880, %v9884
    %v9944 = vadd.f32 %v9943, %v9888
    %v9945 = vadd.f32 %v9944, %v9892
    %v9946 = vadd.f32 %v9945, %v9896
    %v9947 = vadd.f32 %v9946, %v9900
    %v9948 = vadd.f32 %v9947, %v9904
    %v9949 = vadd.f32 %v9948, %v9908
    %v9950 = vadd.f32 %v9949, %v9912
    %v9951 = vadd.f32 %v9950, %v9916
    %v9952 = vadd.f32 %v9951, %v9920
    %v9953 = vadd.f32 %v9952, %v9924
    %v9954 = vrot.slane %v9953, 4
    %v9955 = vadd.f32 %v9953, %v9954
    %v9956 = vrot.slane %v9955, 2
    %v9957 = vadd.f32 %v9955, %v9956
    %v9958 = vrot.slane %v9957, 1
    %v9959 = vadd.f32 %v9957, %v9958
    %v9960 = vadd.f32 %v9942, 0.0
    %v9961 = vadd.f32 %v9959, 0.0
    %v9962 = vmul.f32 %v9302, %v9302
    %v9963 = vmul.f32 %v9880, %v9880
    %v9964 = vmul.f32 %v9306, %v9306
    %v9965 = vmul.f32 %v9884, %v9884
    %v9966 = vmul.f32 %v9310, %v9310
    %v9967 = vmul.f32 %v9888, %v9888
    %v9968 = vmul.f32 %v9314, %v9314
    %v9969 = vmul.f32 %v9892, %v9892
    %v9970 = vmul.f32 %v9318, %v9318
    %v9971 = vmul.f32 %v9896, %v9896
    %v9972 = vmul.f32 %v9322, %v9322
    %v9973 = vmul.f32 %v9900, %v9900
    %v9974 = vmul.f32 %v9326, %v9326
    %v9975 = vmul.f32 %v9904, %v9904
    %v9976 = vmul.f32 %v9330, %v9330
    %v9977 = vmul.f32 %v9908, %v9908
    %v9978 = vmul.f32 %v9334, %v9334
    %v9979 = vmul.f32 %v9912, %v9912
    %v9980 = vmul.f32 %v9338, %v9338
    %v9981 = vmul.f32 %v9916, %v9916
    %v9982 = vmul.f32 %v9342, %v9342
    %v9983 = vmul.f32 %v9920, %v9920
    %v9984 = vmul.f32 %v9346, %v9346
    %v9985 = vmul.f32 %v9924, %v9924
    %v9986 = vadd.f32 %v9962, %v9964
    %v9987 = vadd.f32 %v9986, %v9966
    %v9988 = vadd.f32 %v9987, %v9968
    %v9989 = vadd.f32 %v9988, %v9970
    %v9990 = vadd.f32 %v9989, %v9972
    %v9991 = vadd.f32 %v9990, %v9974
    %v9992 = vadd.f32 %v9991, %v9976
    %v9993 = vadd.f32 %v9992, %v9978
    %v9994 = vadd.f32 %v9993, %v9980
    %v9995 = vadd.f32 %v9994, %v9982
    %v9996 = vadd.f32 %v9995, %v9984
    %v9997 = vrot.slane %v9996, 4
    %v9998 = vadd.f32 %v9996, %v9997
    %v9999 = vrot.slane %v9998, 2
    %v10000 = vadd.f32 %v9998, %v9999
    %v10001 = vrot.slane %v10000, 1
    %v10002 = vadd.f32 %v10000, %v10001
    %v10003 = vadd.f32 %v9963, %v9965
    %v10004 = vadd.f32 %v10003, %v9967
    %v10005 = vadd.f32 %v10004, %v9969
    %v10006 = vadd.f32 %v10005, %v9971
    %v10007 = vadd.f32 %v10006, %v9973
    %v10008 = vadd.f32 %v10007, %v9975
    %v10009 = vadd.f32 %v10008, %v9977
    %v10010 = vadd.f32 %v10009, %v9979
    %v10011 = vadd.f32 %v10010, %v9981
    %v10012 = vadd.f32 %v10011, %v9983
    %v10013 = vadd.f32 %v10012, %v9985
    %v10014 = vrot.slane %v10013, 4
    %v10015 = vadd.f32 %v10013, %v10014
    %v10016 = vrot.slane %v10015, 2
    %v10017 = vadd.f32 %v10015, %v10016
    %v10018 = vrot.slane %v10017, 1
    %v10019 = vadd.f32 %v10017, %v10018
    %v10020 = vadd.f32 %v10002, 0.0
    %v10021 = vadd.f32 %v10019, 0.0
    %v10022 = vmax.f32 %v9302, %v9310
    %v10023 = vmax.f32 %v9306, %v9314
    %v10024 = vmax.f32 %v10022, %v9318
    %v10025 = vmax.f32 %v10023, %v9322
    %v10026 = vmax.f32 %v10024, %v9326
    %v10027 = vmax.f32 %v10025, %v9330
    %v10028 = vmax.f32 %v10026, %v9334
    %v10029 = vmax.f32 %v10027, %v9338
    %v10030 = vmax.f32 %v10028, %v9342
    %v10031 = vmax.f32 %v10029, %v9346
    %v10032 = vmax.f32 %v10030, %v10031
    %v10033 = vrot.slane %v10032, 4
    %v10034 = vmax.f32 %v10032, %v10033
    %v10035 = vrot.slane %v10034, 2
    %v10036 = vmax.f32 %v10034, %v10035
    %v10037 = vrot.slane %v10036, 1
    %v10038 = vmax.f32 %v10036, %v10037
    %v10039 = vmax.f32 %v9880, %v9888
    %v10040 = vmax.f32 %v9884, %v9892
    %v10041 = vmax.f32 %v10039, %v9896
    %v10042 = vmax.f32 %v10040, %v9900
    %v10043 = vmax.f32 %v10041, %v9904
    %v10044 = vmax.f32 %v10042, %v9908
    %v10045 = vmax.f32 %v10043, %v9912
    %v10046 = vmax.f32 %v10044, %v9916
    %v10047 = vmax.f32 %v10045, %v9920
    %v10048 = vmax.f32 %v10046, %v9924
    %v10049 = vmax.f32 %v10047, %v10048
    %v10050 = vrot.slane %v10049, 4
    %v10051 = vmax.f32 %v10049, %v10050
    %v10052 = vrot.slane %v10051, 2
    %v10053 = vmax.f32 %v10051, %v10052
    %v10054 = vrot.slane %v10053, 1
    %v10055 = vmax.f32 %v10053, %v10054
    %v10056 = vmin.f32 %v9302, %v9310
    %v10057 = vmin.f32 %v9306, %v9314
    %v10058 = vmin.f32 %v10056, %v9318
    %v10059 = vmin.f32 %v10057, %v9322
    %v10060 = vmin.f32 %v10058, %v9326
    %v10061 = vmin.f32 %v10059, %v9330
    %v10062 = vmin.f32 %v10060, %v9334
    %v10063 = vmin.f32 %v10061, %v9338
    %v10064 = vmin.f32 %v10062, %v9342
    %v10065 = vmin.f32 %v10063, %v9346
    %v10066 = vmin.f32 %v10064, %v10065
    %v10067 = vrot.slane %v10066, 4
    %v10068 = vmin.f32 %v10066, %v10067
    %v10069 = vrot.slane %v10068, 2
    %v10070 = vmin.f32 %v10068, %v10069
    %v10071 = vrot.slane %v10070, 1
    %v10072 = vmin.f32 %v10070, %v10071
    %v10073 = vmin.f32 %v9880, %v9888
    %v10074 = vmin.f32 %v9884, %v9892
    %v10075 = vmin.f32 %v10073, %v9896
    %v10076 = vmin.f32 %v10074, %v9900
    %v10077 = vmin.f32 %v10075, %v9904
    %v10078 = vmin.f32 %v10076, %v9908
    %v10079 = vmin.f32 %v10077, %v9912
    %v10080 = vmin.f32 %v10078, %v9916
    %v10081 = vmin.f32 %v10079, %v9920
    %v10082 = vmin.f32 %v10080, %v9924
    %v10083 = vmin.f32 %v10081, %v10082
    %v10084 = vrot.slane %v10083, 4
    %v10085 = vmin.f32 %v10083, %v10084
    %v10086 = vrot.slane %v10085, 2
    %v10087 = vmin.f32 %v10085, %v10086
    %v10088 = vrot.slane %v10087, 1
    %v10089 = vmin.f32 %v10087, %v10088
    %s10090 = scalar_lea.vmem %s3, 96
    %v10091 = vld [vmem:[%s10090] sm:$0xff]
    %v10092 = vld [vmem:[%s10090 + $0x8] sm:$0xff]
    %v10093 = vld [vmem:[%s10090 + $0x10] sm:$0xff]
    %v10094 = vld [vmem:[%s10090 + $0x18] sm:$0xff]
    %v10095 = vld [vmem:[%s10090 + $0x20] sm:$0xff]
    %v10096 = vld [vmem:[%s10090 + $0x28] sm:$0xff]
    %v10097 = vld [vmem:[%s10090 + $0x30] sm:$0xff]
    %v10098 = vld [vmem:[%s10090 + $0x38] sm:$0xff]
    %v10099 = vld [vmem:[%s10090 + $0x40] sm:$0xff]
    %v10100 = vld [vmem:[%s10090 + $0x48] sm:$0xff]
    %v10101 = vld [vmem:[%s10090 + $0x50] sm:$0xff]
    %v10102 = vld [vmem:[%s10090 + $0x58] sm:$0xff]
    %v10104 = vsel %vm8727, %v10091, 0
    %v10107 = vsel %vm8727, %v10092, 0
    %v10110 = vsel %vm8727, %v10093, 0
    %v10113 = vsel %vm8727, %v10094, 0
    %v10116 = vsel %vm8727, %v10095, 0
    %v10119 = vsel %vm8727, %v10096, 0
    %v10122 = vsel %vm8727, %v10097, 0
    %v10125 = vsel %vm8727, %v10098, 0
    %v10128 = vsel %vm8727, %v10099, 0
    %v10131 = vsel %vm8727, %v10100, 0
    %v10134 = vsel %vm8727, %v10101, 0
    %v10137 = vsel %vm8727, %v10102, 0
    %10139 = vmatpush.msra.mxu0 0.0
    %10140 = vmatpush.msra.mxu0 0.0
    %10141 = vmatpush.msra.mxu0 0.0
    %10142 = vmatpush.msra.mxu0 0.0
    %10143 = vmatpush.msra.mxu0 0.0
    %10144 = vmatpush.msra.mxu0 0.0
    %10145 = vmatpush.msra.mxu0 0.0
    %10146 = vmatpush.msra.mxu0 0.0
    %v10147 = vand.u32 %v8765, 4294901760
    %10148 = vmatpush.msra.mxu0 %v10147
    %v10149 = vand.u32 %v8711, 4294901760
    %10150 = vmatpush.msra.mxu0 %v10149
    %v10151 = vand.u32 %v8709, 4294901760
    %10152 = vmatpush.msra.mxu0 %v10151
    %v10153 = vand.u32 %v8707, 4294901760
    %10154 = vmatpush.msra.mxu0 %v10153
    %v10155 = vand.u32 %v8705, 4294901760
    %10156 = vmatpush.msra.mxu0 %v10155
    %v10157 = vand.u32 %v8703, 4294901760
    %10158 = vmatpush.msra.mxu0 %v10157
    %v10159 = vand.u32 %v8701, 4294901760
    %10160 = vmatpush.msra.mxu0 %v10159
    %v10161 = vand.u32 %v8699, 4294901760
    %10162 = vmatpush.msra.mxu0 %v10161
    %v10163 = vand.u32 %v10104, 4294901760
    %v10164 = vsub.f32 %v10104, %v10163
    %v10165 = vand.u32 %v10164, 4294901760
    %v10166 = vsub.f32 %v10164, %v10165
    %v10167 = vand.u32 %v10166, 4294901760
    %10168 = vmatmul.f32.gmra.mxu0 %v10167
    %v10169 = vpop.f32.mrf.mxu0
    %v10170 = vadd.f32 0.0, %v10169
    %v10171 = vand.u32 %v10107, 4294901760
    %v10172 = vsub.f32 %v10107, %v10171
    %v10173 = vand.u32 %v10172, 4294901760
    %v10174 = vsub.f32 %v10172, %v10173
    %v10175 = vand.u32 %v10174, 4294901760
    %10176 = vmatmul.f32.gmra.mxu0 %v10175
    %v10177 = vpop.f32.mrf.mxu0
    %v10178 = vadd.f32 0.0, %v10177
    %v10179 = vand.u32 %v10110, 4294901760
    %v10180 = vsub.f32 %v10110, %v10179
    %v10181 = vand.u32 %v10180, 4294901760
    %v10182 = vsub.f32 %v10180, %v10181
    %v10183 = vand.u32 %v10182, 4294901760
    %10184 = vmatmul.f32.gmra.mxu0 %v10183
    %v10185 = vpop.f32.mrf.mxu0
    %v10186 = vadd.f32 0.0, %v10185
    %v10187 = vand.u32 %v10113, 4294901760
    %v10188 = vsub.f32 %v10113, %v10187
    %v10189 = vand.u32 %v10188, 4294901760
    %v10190 = vsub.f32 %v10188, %v10189
    %v10191 = vand.u32 %v10190, 4294901760
    %10192 = vmatmul.f32.gmra.mxu0 %v10191
    %v10193 = vpop.f32.mrf.mxu0
    %v10194 = vadd.f32 0.0, %v10193
    %v10195 = vand.u32 %v10116, 4294901760
    %v10196 = vsub.f32 %v10116, %v10195
    %v10197 = vand.u32 %v10196, 4294901760
    %v10198 = vsub.f32 %v10196, %v10197
    %v10199 = vand.u32 %v10198, 4294901760
    %10200 = vmatmul.f32.gmra.mxu0 %v10199
    %v10201 = vpop.f32.mrf.mxu0
    %v10202 = vadd.f32 0.0, %v10201
    %v10203 = vand.u32 %v10119, 4294901760
    %v10204 = vsub.f32 %v10119, %v10203
    %v10205 = vand.u32 %v10204, 4294901760
    %v10206 = vsub.f32 %v10204, %v10205
    %v10207 = vand.u32 %v10206, 4294901760
    %10208 = vmatmul.f32.gmra.mxu0 %v10207
    %v10209 = vpop.f32.mrf.mxu0
    %v10210 = vadd.f32 0.0, %v10209
    %v10211 = vand.u32 %v10122, 4294901760
    %v10212 = vsub.f32 %v10122, %v10211
    %v10213 = vand.u32 %v10212, 4294901760
    %v10214 = vsub.f32 %v10212, %v10213
    %v10215 = vand.u32 %v10214, 4294901760
    %10216 = vmatmul.f32.gmra.mxu0 %v10215
    %v10217 = vpop.f32.mrf.mxu0
    %v10218 = vadd.f32 0.0, %v10217
    %v10219 = vand.u32 %v10125, 4294901760
    %v10220 = vsub.f32 %v10125, %v10219
    %v10221 = vand.u32 %v10220, 4294901760
    %v10222 = vsub.f32 %v10220, %v10221
    %v10223 = vand.u32 %v10222, 4294901760
    %10224 = vmatmul.f32.gmra.mxu0 %v10223
    %v10225 = vpop.f32.mrf.mxu0
    %v10226 = vadd.f32 0.0, %v10225
    %v10227 = vand.u32 %v10128, 4294901760
    %v10228 = vsub.f32 %v10128, %v10227
    %v10229 = vand.u32 %v10228, 4294901760
    %v10230 = vsub.f32 %v10228, %v10229
    %v10231 = vand.u32 %v10230, 4294901760
    %10232 = vmatmul.f32.gmra.mxu0 %v10231
    %v10233 = vpop.f32.mrf.mxu0
    %v10234 = vadd.f32 0.0, %v10233
    %v10235 = vand.u32 %v10131, 4294901760
    %v10236 = vsub.f32 %v10131, %v10235
    %v10237 = vand.u32 %v10236, 4294901760
    %v10238 = vsub.f32 %v10236, %v10237
    %v10239 = vand.u32 %v10238, 4294901760
    %10240 = vmatmul.f32.gmra.mxu0 %v10239
    %v10241 = vpop.f32.mrf.mxu0
    %v10242 = vadd.f32 0.0, %v10241
    %v10243 = vand.u32 %v10134, 4294901760
    %v10244 = vsub.f32 %v10134, %v10243
    %v10245 = vand.u32 %v10244, 4294901760
    %v10246 = vsub.f32 %v10244, %v10245
    %v10247 = vand.u32 %v10246, 4294901760
    %10248 = vmatmul.f32.gmra.mxu0 %v10247
    %v10249 = vpop.f32.mrf.mxu0
    %v10250 = vadd.f32 0.0, %v10249
    %v10251 = vand.u32 %v10137, 4294901760
    %v10252 = vsub.f32 %v10137, %v10251
    %v10253 = vand.u32 %v10252, 4294901760
    %v10254 = vsub.f32 %v10252, %v10253
    %v10255 = vand.u32 %v10254, 4294901760
    %10256 = vmatmul.f32.gmra.mxu0 %v10255
    %v10257 = vpop.f32.mrf.mxu0
    %v10258 = vadd.f32 0.0, %v10257
    %10259 = vdwg.mxu0
    %10260 = vmatpush.msra.mxu0 0.0
    %10261 = vmatpush.msra.mxu0 0.0
    %10262 = vmatpush.msra.mxu0 0.0
    %10263 = vmatpush.msra.mxu0 0.0
    %10264 = vmatpush.msra.mxu0 0.0
    %10265 = vmatpush.msra.mxu0 0.0
    %10266 = vmatpush.msra.mxu0 0.0
    %10267 = vmatpush.msra.mxu0 0.0
    %v10268 = vand.u32 %v8765, 4294901760
    %v10269 = vsub.f32 %v8765, %v10268
    %v10270 = vand.u32 %v10269, 4294901760
    %v10271 = vsub.f32 %v10269, %v10270
    %v10272 = vand.u32 %v10271, 4294901760
    %10273 = vmatpush.msra.mxu0 %v10272
    %v10274 = vand.u32 %v8711, 4294901760
    %v10275 = vsub.f32 %v8711, %v10274
    %v10276 = vand.u32 %v10275, 4294901760
    %v10277 = vsub.f32 %v10275, %v10276
    %v10278 = vand.u32 %v10277, 4294901760
    %10279 = vmatpush.msra.mxu0 %v10278
    %v10280 = vand.u32 %v8709, 4294901760
    %v10281 = vsub.f32 %v8709, %v10280
    %v10282 = vand.u32 %v10281, 4294901760
    %v10283 = vsub.f32 %v10281, %v10282
    %v10284 = vand.u32 %v10283, 4294901760
    %10285 = vmatpush.msra.mxu0 %v10284
    %v10286 = vand.u32 %v8707, 4294901760
    %v10287 = vsub.f32 %v8707, %v10286
    %v10288 = vand.u32 %v10287, 4294901760
    %v10289 = vsub.f32 %v10287, %v10288
    %v10290 = vand.u32 %v10289, 4294901760
    %10291 = vmatpush.msra.mxu0 %v10290
    %v10292 = vand.u32 %v8705, 4294901760
    %v10293 = vsub.f32 %v8705, %v10292
    %v10294 = vand.u32 %v10293, 4294901760
    %v10295 = vsub.f32 %v10293, %v10294
    %v10296 = vand.u32 %v10295, 4294901760
    %10297 = vmatpush.msra.mxu0 %v10296
    %v10298 = vand.u32 %v8703, 4294901760
    %v10299 = vsub.f32 %v8703, %v10298
    %v10300 = vand.u32 %v10299, 4294901760
    %v10301 = vsub.f32 %v10299, %v10300
    %v10302 = vand.u32 %v10301, 4294901760
    %10303 = vmatpush.msra.mxu0 %v10302
    %v10304 = vand.u32 %v8701, 4294901760
    %v10305 = vsub.f32 %v8701, %v10304
    %v10306 = vand.u32 %v10305, 4294901760
    %v10307 = vsub.f32 %v10305, %v10306
    %v10308 = vand.u32 %v10307, 4294901760
    %10309 = vmatpush.msra.mxu0 %v10308
    %v10310 = vand.u32 %v8699, 4294901760
    %v10311 = vsub.f32 %v8699, %v10310
    %v10312 = vand.u32 %v10311, 4294901760
    %v10313 = vsub.f32 %v10311, %v10312
    %v10314 = vand.u32 %v10313, 4294901760
    %10315 = vmatpush.msra.mxu0 %v10314
    %v10316 = vand.u32 %v10104, 4294901760
    %10317 = vmatmul.f32.gmra.mxu0 %v10316
    %v10318 = vpop.f32.mrf.mxu0
    %v10319 = vadd.f32 %v10170, %v10318
    %v10320 = vand.u32 %v10107, 4294901760
    %10321 = vmatmul.f32.gmra.mxu0 %v10320
    %v10322 = vpop.f32.mrf.mxu0
    %v10323 = vadd.f32 %v10178, %v10322
    %v10324 = vand.u32 %v10110, 4294901760
    %10325 = vmatmul.f32.gmra.mxu0 %v10324
    %v10326 = vpop.f32.mrf.mxu0
    %v10327 = vadd.f32 %v10186, %v10326
    %v10328 = vand.u32 %v10113, 4294901760
    %10329 = vmatmul.f32.gmra.mxu0 %v10328
    %v10330 = vpop.f32.mrf.mxu0
    %v10331 = vadd.f32 %v10194, %v10330
    %v10332 = vand.u32 %v10116, 4294901760
    %10333 = vmatmul.f32.gmra.mxu0 %v10332
    %v10334 = vpop.f32.mrf.mxu0
    %v10335 = vadd.f32 %v10202, %v10334
    %v10336 = vand.u32 %v10119, 4294901760
    %10337 = vmatmul.f32.gmra.mxu0 %v10336
    %v10338 = vpop.f32.mrf.mxu0
    %v10339 = vadd.f32 %v10210, %v10338
    %v10340 = vand.u32 %v10122, 4294901760
    %10341 = vmatmul.f32.gmra.mxu0 %v10340
    %v10342 = vpop.f32.mrf.mxu0
    %v10343 = vadd.f32 %v10218, %v10342
    %v10344 = vand.u32 %v10125, 4294901760
    %10345 = vmatmul.f32.gmra.mxu0 %v10344
    %v10346 = vpop.f32.mrf.mxu0
    %v10347 = vadd.f32 %v10226, %v10346
    %v10348 = vand.u32 %v10128, 4294901760
    %10349 = vmatmul.f32.gmra.mxu0 %v10348
    %v10350 = vpop.f32.mrf.mxu0
    %v10351 = vadd.f32 %v10234, %v10350
    %v10352 = vand.u32 %v10131, 4294901760
    %10353 = vmatmul.f32.gmra.mxu0 %v10352
    %v10354 = vpop.f32.mrf.mxu0
    %v10355 = vadd.f32 %v10242, %v10354
    %v10356 = vand.u32 %v10134, 4294901760
    %10357 = vmatmul.f32.gmra.mxu0 %v10356
    %v10358 = vpop.f32.mrf.mxu0
    %v10359 = vadd.f32 %v10250, %v10358
    %v10360 = vand.u32 %v10137, 4294901760
    %10361 = vmatmul.f32.gmra.mxu0 %v10360
    %v10362 = vpop.f32.mrf.mxu0
    %v10363 = vadd.f32 %v10258, %v10362
    %10364 = vdwg.mxu0
    %10365 = vmatpush.msra.mxu0 0.0
    %10366 = vmatpush.msra.mxu0 0.0
    %10367 = vmatpush.msra.mxu0 0.0
    %10368 = vmatpush.msra.mxu0 0.0
    %10369 = vmatpush.msra.mxu0 0.0
    %10370 = vmatpush.msra.mxu0 0.0
    %10371 = vmatpush.msra.mxu0 0.0
    %10372 = vmatpush.msra.mxu0 0.0
    %v10373 = vand.u32 %v8765, 4294901760
    %v10374 = vsub.f32 %v8765, %v10373
    %10375 = vmatpush.msra.mxu0 %v10374
    %v10376 = vand.u32 %v8711, 4294901760
    %v10377 = vsub.f32 %v8711, %v10376
    %10378 = vmatpush.msra.mxu0 %v10377
    %v10379 = vand.u32 %v8709, 4294901760
    %v10380 = vsub.f32 %v8709, %v10379
    %10381 = vmatpush.msra.mxu0 %v10380
    %v10382 = vand.u32 %v8707, 4294901760
    %v10383 = vsub.f32 %v8707, %v10382
    %10384 = vmatpush.msra.mxu0 %v10383
    %v10385 = vand.u32 %v8705, 4294901760
    %v10386 = vsub.f32 %v8705, %v10385
    %10387 = vmatpush.msra.mxu0 %v10386
    %v10388 = vand.u32 %v8703, 4294901760
    %v10389 = vsub.f32 %v8703, %v10388
    %10390 = vmatpush.msra.mxu0 %v10389
    %v10391 = vand.u32 %v8701, 4294901760
    %v10392 = vsub.f32 %v8701, %v10391
    %10393 = vmatpush.msra.mxu0 %v10392
    %v10394 = vand.u32 %v8699, 4294901760
    %v10395 = vsub.f32 %v8699, %v10394
    %10396 = vmatpush.msra.mxu0 %v10395
    %v10397 = vand.u32 %v10104, 4294901760
    %v10398 = vsub.f32 %v10104, %v10397
    %10399 = vmatmul.f32.gmra.mxu0 %v10398
    %v10400 = vpop.f32.mrf.mxu0
    %v10401 = vadd.f32 %v10319, %v10400
    %v10402 = vand.u32 %v10107, 4294901760
    %v10403 = vsub.f32 %v10107, %v10402
    %10404 = vmatmul.f32.gmra.mxu0 %v10403
    %v10405 = vpop.f32.mrf.mxu0
    %v10406 = vadd.f32 %v10323, %v10405
    %v10407 = vand.u32 %v10110, 4294901760
    %v10408 = vsub.f32 %v10110, %v10407
    %10409 = vmatmul.f32.gmra.mxu0 %v10408
    %v10410 = vpop.f32.mrf.mxu0
    %v10411 = vadd.f32 %v10327, %v10410
    %v10412 = vand.u32 %v10113, 4294901760
    %v10413 = vsub.f32 %v10113, %v10412
    %10414 = vmatmul.f32.gmra.mxu0 %v10413
    %v10415 = vpop.f32.mrf.mxu0
    %v10416 = vadd.f32 %v10331, %v10415
    %v10417 = vand.u32 %v10116, 4294901760
    %v10418 = vsub.f32 %v10116, %v10417
    %10419 = vmatmul.f32.gmra.mxu0 %v10418
    %v10420 = vpop.f32.mrf.mxu0
    %v10421 = vadd.f32 %v10335, %v10420
    %v10422 = vand.u32 %v10119, 4294901760
    %v10423 = vsub.f32 %v10119, %v10422
    %10424 = vmatmul.f32.gmra.mxu0 %v10423
    %v10425 = vpop.f32.mrf.mxu0
    %v10426 = vadd.f32 %v10339, %v10425
    %v10427 = vand.u32 %v10122, 4294901760
    %v10428 = vsub.f32 %v10122, %v10427
    %10429 = vmatmul.f32.gmra.mxu0 %v10428
    %v10430 = vpop.f32.mrf.mxu0
    %v10431 = vadd.f32 %v10343, %v10430
    %v10432 = vand.u32 %v10125, 4294901760
    %v10433 = vsub.f32 %v10125, %v10432
    %10434 = vmatmul.f32.gmra.mxu0 %v10433
    %v10435 = vpop.f32.mrf.mxu0
    %v10436 = vadd.f32 %v10347, %v10435
    %v10437 = vand.u32 %v10128, 4294901760
    %v10438 = vsub.f32 %v10128, %v10437
    %10439 = vmatmul.f32.gmra.mxu0 %v10438
    %v10440 = vpop.f32.mrf.mxu0
    %v10441 = vadd.f32 %v10351, %v10440
    %v10442 = vand.u32 %v10131, 4294901760
    %v10443 = vsub.f32 %v10131, %v10442
    %10444 = vmatmul.f32.gmra.mxu0 %v10443
    %v10445 = vpop.f32.mrf.mxu0
    %v10446 = vadd.f32 %v10355, %v10445
    %v10447 = vand.u32 %v10134, 4294901760
    %v10448 = vsub.f32 %v10134, %v10447
    %10449 = vmatmul.f32.gmra.mxu0 %v10448
    %v10450 = vpop.f32.mrf.mxu0
    %v10451 = vadd.f32 %v10359, %v10450
    %v10452 = vand.u32 %v10137, 4294901760
    %v10453 = vsub.f32 %v10137, %v10452
    %10454 = vmatmul.f32.gmra.mxu0 %v10453
    %v10455 = vpop.f32.mrf.mxu0
    %v10456 = vadd.f32 %v10363, %v10455
    %10457 = vdwg.mxu0
    %10458 = vmatpush.msra.mxu0 0.0
    %10459 = vmatpush.msra.mxu0 0.0
    %10460 = vmatpush.msra.mxu0 0.0
    %10461 = vmatpush.msra.mxu0 0.0
    %10462 = vmatpush.msra.mxu0 0.0
    %10463 = vmatpush.msra.mxu0 0.0
    %10464 = vmatpush.msra.mxu0 0.0
    %10465 = vmatpush.msra.mxu0 0.0
    %v10466 = vand.u32 %v8765, 4294901760
    %10467 = vmatpush.msra.mxu0 %v10466
    %v10468 = vand.u32 %v8711, 4294901760
    %10469 = vmatpush.msra.mxu0 %v10468
    %v10470 = vand.u32 %v8709, 4294901760
    %10471 = vmatpush.msra.mxu0 %v10470
    %v10472 = vand.u32 %v8707, 4294901760
    %10473 = vmatpush.msra.mxu0 %v10472
    %v10474 = vand.u32 %v8705, 4294901760
    %10475 = vmatpush.msra.mxu0 %v10474
    %v10476 = vand.u32 %v8703, 4294901760
    %10477 = vmatpush.msra.mxu0 %v10476
    %v10478 = vand.u32 %v8701, 4294901760
    %10479 = vmatpush.msra.mxu0 %v10478
    %v10480 = vand.u32 %v8699, 4294901760
    %10481 = vmatpush.msra.mxu0 %v10480
    %v10482 = vand.u32 %v10104, 4294901760
    %v10483 = vsub.f32 %v10104, %v10482
    %v10484 = vand.u32 %v10483, 4294901760
    %10485 = vmatmul.f32.gmra.mxu0 %v10484
    %v10486 = vpop.f32.mrf.mxu0
    %v10487 = vadd.f32 %v10401, %v10486
    %v10488 = vand.u32 %v10107, 4294901760
    %v10489 = vsub.f32 %v10107, %v10488
    %v10490 = vand.u32 %v10489, 4294901760
    %10491 = vmatmul.f32.gmra.mxu0 %v10490
    %v10492 = vpop.f32.mrf.mxu0
    %v10493 = vadd.f32 %v10406, %v10492
    %v10494 = vand.u32 %v10110, 4294901760
    %v10495 = vsub.f32 %v10110, %v10494
    %v10496 = vand.u32 %v10495, 4294901760
    %10497 = vmatmul.f32.gmra.mxu0 %v10496
    %v10498 = vpop.f32.mrf.mxu0
    %v10499 = vadd.f32 %v10411, %v10498
    %v10500 = vand.u32 %v10113, 4294901760
    %v10501 = vsub.f32 %v10113, %v10500
    %v10502 = vand.u32 %v10501, 4294901760
    %10503 = vmatmul.f32.gmra.mxu0 %v10502
    %v10504 = vpop.f32.mrf.mxu0
    %v10505 = vadd.f32 %v10416, %v10504
    %v10506 = vand.u32 %v10116, 4294901760
    %v10507 = vsub.f32 %v10116, %v10506
    %v10508 = vand.u32 %v10507, 4294901760
    %10509 = vmatmul.f32.gmra.mxu0 %v10508
    %v10510 = vpop.f32.mrf.mxu0
    %v10511 = vadd.f32 %v10421, %v10510
    %v10512 = vand.u32 %v10119, 4294901760
    %v10513 = vsub.f32 %v10119, %v10512
    %v10514 = vand.u32 %v10513, 4294901760
    %10515 = vmatmul.f32.gmra.mxu0 %v10514
    %v10516 = vpop.f32.mrf.mxu0
    %v10517 = vadd.f32 %v10426, %v10516
    %v10518 = vand.u32 %v10122, 4294901760
    %v10519 = vsub.f32 %v10122, %v10518
    %v10520 = vand.u32 %v10519, 4294901760
    %10521 = vmatmul.f32.gmra.mxu0 %v10520
    %v10522 = vpop.f32.mrf.mxu0
    %v10523 = vadd.f32 %v10431, %v10522
    %v10524 = vand.u32 %v10125, 4294901760
    %v10525 = vsub.f32 %v10125, %v10524
    %v10526 = vand.u32 %v10525, 4294901760
    %10527 = vmatmul.f32.gmra.mxu0 %v10526
    %v10528 = vpop.f32.mrf.mxu0
    %v10529 = vadd.f32 %v10436, %v10528
    %v10530 = vand.u32 %v10128, 4294901760
    %v10531 = vsub.f32 %v10128, %v10530
    %v10532 = vand.u32 %v10531, 4294901760
    %10533 = vmatmul.f32.gmra.mxu0 %v10532
    %v10534 = vpop.f32.mrf.mxu0
    %v10535 = vadd.f32 %v10441, %v10534
    %v10536 = vand.u32 %v10131, 4294901760
    %v10537 = vsub.f32 %v10131, %v10536
    %v10538 = vand.u32 %v10537, 4294901760
    %10539 = vmatmul.f32.gmra.mxu0 %v10538
    %v10540 = vpop.f32.mrf.mxu0
    %v10541 = vadd.f32 %v10446, %v10540
    %v10542 = vand.u32 %v10134, 4294901760
    %v10543 = vsub.f32 %v10134, %v10542
    %v10544 = vand.u32 %v10543, 4294901760
    %10545 = vmatmul.f32.gmra.mxu0 %v10544
    %v10546 = vpop.f32.mrf.mxu0
    %v10547 = vadd.f32 %v10451, %v10546
    %v10548 = vand.u32 %v10137, 4294901760
    %v10549 = vsub.f32 %v10137, %v10548
    %v10550 = vand.u32 %v10549, 4294901760
    %10551 = vmatmul.f32.gmra.mxu0 %v10550
    %v10552 = vpop.f32.mrf.mxu0
    %v10553 = vadd.f32 %v10456, %v10552
    %10554 = vdwg.mxu0
    %10555 = vmatpush.msra.mxu0 0.0
    %10556 = vmatpush.msra.mxu0 0.0
    %10557 = vmatpush.msra.mxu0 0.0
    %10558 = vmatpush.msra.mxu0 0.0
    %10559 = vmatpush.msra.mxu0 0.0
    %10560 = vmatpush.msra.mxu0 0.0
    %10561 = vmatpush.msra.mxu0 0.0
    %10562 = vmatpush.msra.mxu0 0.0
    %v10563 = vand.u32 %v8765, 4294901760
    %v10564 = vsub.f32 %v8765, %v10563
    %v10565 = vand.u32 %v10564, 4294901760
    %10566 = vmatpush.msra.mxu0 %v10565
    %v10567 = vand.u32 %v8711, 4294901760
    %v10568 = vsub.f32 %v8711, %v10567
    %v10569 = vand.u32 %v10568, 4294901760
    %10570 = vmatpush.msra.mxu0 %v10569
    %v10571 = vand.u32 %v8709, 4294901760
    %v10572 = vsub.f32 %v8709, %v10571
    %v10573 = vand.u32 %v10572, 4294901760
    %10574 = vmatpush.msra.mxu0 %v10573
    %v10575 = vand.u32 %v8707, 4294901760
    %v10576 = vsub.f32 %v8707, %v10575
    %v10577 = vand.u32 %v10576, 4294901760
    %10578 = vmatpush.msra.mxu0 %v10577
    %v10579 = vand.u32 %v8705, 4294901760
    %v10580 = vsub.f32 %v8705, %v10579
    %v10581 = vand.u32 %v10580, 4294901760
    %10582 = vmatpush.msra.mxu0 %v10581
    %v10583 = vand.u32 %v8703, 4294901760
    %v10584 = vsub.f32 %v8703, %v10583
    %v10585 = vand.u32 %v10584, 4294901760
    %10586 = vmatpush.msra.mxu0 %v10585
    %v10587 = vand.u32 %v8701, 4294901760
    %v10588 = vsub.f32 %v8701, %v10587
    %v10589 = vand.u32 %v10588, 4294901760
    %10590 = vmatpush.msra.mxu0 %v10589
    %v10591 = vand.u32 %v8699, 4294901760
    %v10592 = vsub.f32 %v8699, %v10591
    %v10593 = vand.u32 %v10592, 4294901760
    %10594 = vmatpush.msra.mxu0 %v10593
    %v10595 = vand.u32 %v10104, 4294901760
    %10596 = vmatmul.f32.gmra.mxu0 %v10595
    %v10597 = vpop.f32.mrf.mxu0
    %v10598 = vadd.f32 %v10487, %v10597
    %v10599 = vand.u32 %v10107, 4294901760
    %10600 = vmatmul.f32.gmra.mxu0 %v10599
    %v10601 = vpop.f32.mrf.mxu0
    %v10602 = vadd.f32 %v10493, %v10601
    %v10603 = vand.u32 %v10110, 4294901760
    %10604 = vmatmul.f32.gmra.mxu0 %v10603
    %v10605 = vpop.f32.mrf.mxu0
    %v10606 = vadd.f32 %v10499, %v10605
    %v10607 = vand.u32 %v10113, 4294901760
    %10608 = vmatmul.f32.gmra.mxu0 %v10607
    %v10609 = vpop.f32.mrf.mxu0
    %v10610 = vadd.f32 %v10505, %v10609
    %v10611 = vand.u32 %v10116, 4294901760
    %10612 = vmatmul.f32.gmra.mxu0 %v10611
    %v10613 = vpop.f32.mrf.mxu0
    %v10614 = vadd.f32 %v10511, %v10613
    %v10615 = vand.u32 %v10119, 4294901760
    %10616 = vmatmul.f32.gmra.mxu0 %v10615
    %v10617 = vpop.f32.mrf.mxu0
    %v10618 = vadd.f32 %v10517, %v10617
    %v10619 = vand.u32 %v10122, 4294901760
    %10620 = vmatmul.f32.gmra.mxu0 %v10619
    %v10621 = vpop.f32.mrf.mxu0
    %v10622 = vadd.f32 %v10523, %v10621
    %v10623 = vand.u32 %v10125, 4294901760
    %10624 = vmatmul.f32.gmra.mxu0 %v10623
    %v10625 = vpop.f32.mrf.mxu0
    %v10626 = vadd.f32 %v10529, %v10625
    %v10627 = vand.u32 %v10128, 4294901760
    %10628 = vmatmul.f32.gmra.mxu0 %v10627
    %v10629 = vpop.f32.mrf.mxu0
    %v10630 = vadd.f32 %v10535, %v10629
    %v10631 = vand.u32 %v10131, 4294901760
    %10632 = vmatmul.f32.gmra.mxu0 %v10631
    %v10633 = vpop.f32.mrf.mxu0
    %v10634 = vadd.f32 %v10541, %v10633
    %v10635 = vand.u32 %v10134, 4294901760
    %10636 = vmatmul.f32.gmra.mxu0 %v10635
    %v10637 = vpop.f32.mrf.mxu0
    %v10638 = vadd.f32 %v10547, %v10637
    %v10639 = vand.u32 %v10137, 4294901760
    %10640 = vmatmul.f32.gmra.mxu0 %v10639
    %v10641 = vpop.f32.mrf.mxu0
    %v10642 = vadd.f32 %v10553, %v10641
    %10643 = vdwg.mxu0
    %10644 = vmatpush.msra.mxu0 0.0
    %10645 = vmatpush.msra.mxu0 0.0
    %10646 = vmatpush.msra.mxu0 0.0
    %10647 = vmatpush.msra.mxu0 0.0
    %10648 = vmatpush.msra.mxu0 0.0
    %10649 = vmatpush.msra.mxu0 0.0
    %10650 = vmatpush.msra.mxu0 0.0
    %10651 = vmatpush.msra.mxu0 0.0
    %v10652 = vand.u32 %v8765, 4294901760
    %10653 = vmatpush.msra.mxu0 %v10652
    %v10654 = vand.u32 %v8711, 4294901760
    %10655 = vmatpush.msra.mxu0 %v10654
    %v10656 = vand.u32 %v8709, 4294901760
    %10657 = vmatpush.msra.mxu0 %v10656
    %v10658 = vand.u32 %v8707, 4294901760
    %10659 = vmatpush.msra.mxu0 %v10658
    %v10660 = vand.u32 %v8705, 4294901760
    %10661 = vmatpush.msra.mxu0 %v10660
    %v10662 = vand.u32 %v8703, 4294901760
    %10663 = vmatpush.msra.mxu0 %v10662
    %v10664 = vand.u32 %v8701, 4294901760
    %10665 = vmatpush.msra.mxu0 %v10664
    %v10666 = vand.u32 %v8699, 4294901760
    %10667 = vmatpush.msra.mxu0 %v10666
    %v10668 = vand.u32 %v10104, 4294901760
    %10669 = vmatmul.f32.gmra.mxu0 %v10668
    %v10670 = vpop.f32.mrf.mxu0
    %v10671 = vadd.f32 %v10598, %v10670
    %v10672 = vand.u32 %v10107, 4294901760
    %10673 = vmatmul.f32.gmra.mxu0 %v10672
    %v10674 = vpop.f32.mrf.mxu0
    %v10675 = vadd.f32 %v10602, %v10674
    %v10676 = vand.u32 %v10110, 4294901760
    %10677 = vmatmul.f32.gmra.mxu0 %v10676
    %v10678 = vpop.f32.mrf.mxu0
    %v10679 = vadd.f32 %v10606, %v10678
    %v10680 = vand.u32 %v10113, 4294901760
    %10681 = vmatmul.f32.gmra.mxu0 %v10680
    %v10682 = vpop.f32.mrf.mxu0
    %v10683 = vadd.f32 %v10610, %v10682
    %v10684 = vand.u32 %v10116, 4294901760
    %10685 = vmatmul.f32.gmra.mxu0 %v10684
    %v10686 = vpop.f32.mrf.mxu0
    %v10687 = vadd.f32 %v10614, %v10686
    %v10688 = vand.u32 %v10119, 4294901760
    %10689 = vmatmul.f32.gmra.mxu0 %v10688
    %v10690 = vpop.f32.mrf.mxu0
    %v10691 = vadd.f32 %v10618, %v10690
    %v10692 = vand.u32 %v10122, 4294901760
    %10693 = vmatmul.f32.gmra.mxu0 %v10692
    %v10694 = vpop.f32.mrf.mxu0
    %v10695 = vadd.f32 %v10622, %v10694
    %v10696 = vand.u32 %v10125, 4294901760
    %10697 = vmatmul.f32.gmra.mxu0 %v10696
    %v10698 = vpop.f32.mrf.mxu0
    %v10699 = vadd.f32 %v10626, %v10698
    %v10700 = vand.u32 %v10128, 4294901760
    %10701 = vmatmul.f32.gmra.mxu0 %v10700
    %v10702 = vpop.f32.mrf.mxu0
    %v10703 = vadd.f32 %v10630, %v10702
    %v10704 = vand.u32 %v10131, 4294901760
    %10705 = vmatmul.f32.gmra.mxu0 %v10704
    %v10706 = vpop.f32.mrf.mxu0
    %v10707 = vadd.f32 %v10634, %v10706
    %v10708 = vand.u32 %v10134, 4294901760
    %10709 = vmatmul.f32.gmra.mxu0 %v10708
    %v10710 = vpop.f32.mrf.mxu0
    %v10711 = vadd.f32 %v10638, %v10710
    %v10712 = vand.u32 %v10137, 4294901760
    %10713 = vmatmul.f32.gmra.mxu0 %v10712
    %v10714 = vpop.f32.mrf.mxu0
    %v10715 = vadd.f32 %v10642, %v10714
    %10716 = vdwg.mxu0
    %10717 = vmatpush.msra.mxu0 0.0
    %10718 = vmatpush.msra.mxu0 0.0
    %10719 = vmatpush.msra.mxu0 0.0
    %10720 = vmatpush.msra.mxu0 0.0
    %10721 = vmatpush.msra.mxu0 0.0
    %10722 = vmatpush.msra.mxu0 0.0
    %10723 = vmatpush.msra.mxu0 0.0
    %10724 = vmatpush.msra.mxu0 0.0
    %v10725 = vand.u32 %v8768, 4294901760
    %10726 = vmatpush.msra.mxu0 %v10725
    %v10727 = vand.u32 %v8712, 4294901760
    %10728 = vmatpush.msra.mxu0 %v10727
    %v10729 = vand.u32 %v8710, 4294901760
    %10730 = vmatpush.msra.mxu0 %v10729
    %v10731 = vand.u32 %v8708, 4294901760
    %10732 = vmatpush.msra.mxu0 %v10731
    %v10733 = vand.u32 %v8706, 4294901760
    %10734 = vmatpush.msra.mxu0 %v10733
    %v10735 = vand.u32 %v8704, 4294901760
    %10736 = vmatpush.msra.mxu0 %v10735
    %v10737 = vand.u32 %v8702, 4294901760
    %10738 = vmatpush.msra.mxu0 %v10737
    %v10739 = vand.u32 %v8700, 4294901760
    %10740 = vmatpush.msra.mxu0 %v10739
    %v10741 = vand.u32 %v10104, 4294901760
    %v10742 = vsub.f32 %v10104, %v10741
    %v10743 = vand.u32 %v10742, 4294901760
    %v10744 = vsub.f32 %v10742, %v10743
    %v10745 = vand.u32 %v10744, 4294901760
    %10746 = vmatmul.f32.gmra.mxu0 %v10745
    %v10747 = vpop.f32.mrf.mxu0
    %v10748 = vadd.f32 0.0, %v10747
    %v10749 = vand.u32 %v10107, 4294901760
    %v10750 = vsub.f32 %v10107, %v10749
    %v10751 = vand.u32 %v10750, 4294901760
    %v10752 = vsub.f32 %v10750, %v10751
    %v10753 = vand.u32 %v10752, 4294901760
    %10754 = vmatmul.f32.gmra.mxu0 %v10753
    %v10755 = vpop.f32.mrf.mxu0
    %v10756 = vadd.f32 0.0, %v10755
    %v10757 = vand.u32 %v10110, 4294901760
    %v10758 = vsub.f32 %v10110, %v10757
    %v10759 = vand.u32 %v10758, 4294901760
    %v10760 = vsub.f32 %v10758, %v10759
    %v10761 = vand.u32 %v10760, 4294901760
    %10762 = vmatmul.f32.gmra.mxu0 %v10761
    %v10763 = vpop.f32.mrf.mxu0
    %v10764 = vadd.f32 0.0, %v10763
    %v10765 = vand.u32 %v10113, 4294901760
    %v10766 = vsub.f32 %v10113, %v10765
    %v10767 = vand.u32 %v10766, 4294901760
    %v10768 = vsub.f32 %v10766, %v10767
    %v10769 = vand.u32 %v10768, 4294901760
    %10770 = vmatmul.f32.gmra.mxu0 %v10769
    %v10771 = vpop.f32.mrf.mxu0
    %v10772 = vadd.f32 0.0, %v10771
    %v10773 = vand.u32 %v10116, 4294901760
    %v10774 = vsub.f32 %v10116, %v10773
    %v10775 = vand.u32 %v10774, 4294901760
    %v10776 = vsub.f32 %v10774, %v10775
    %v10777 = vand.u32 %v10776, 4294901760
    %10778 = vmatmul.f32.gmra.mxu0 %v10777
    %v10779 = vpop.f32.mrf.mxu0
    %v10780 = vadd.f32 0.0, %v10779
    %v10781 = vand.u32 %v10119, 4294901760
    %v10782 = vsub.f32 %v10119, %v10781
    %v10783 = vand.u32 %v10782, 4294901760
    %v10784 = vsub.f32 %v10782, %v10783
    %v10785 = vand.u32 %v10784, 4294901760
    %10786 = vmatmul.f32.gmra.mxu0 %v10785
    %v10787 = vpop.f32.mrf.mxu0
    %v10788 = vadd.f32 0.0, %v10787
    %v10789 = vand.u32 %v10122, 4294901760
    %v10790 = vsub.f32 %v10122, %v10789
    %v10791 = vand.u32 %v10790, 4294901760
    %v10792 = vsub.f32 %v10790, %v10791
    %v10793 = vand.u32 %v10792, 4294901760
    %10794 = vmatmul.f32.gmra.mxu0 %v10793
    %v10795 = vpop.f32.mrf.mxu0
    %v10796 = vadd.f32 0.0, %v10795
    %v10797 = vand.u32 %v10125, 4294901760
    %v10798 = vsub.f32 %v10125, %v10797
    %v10799 = vand.u32 %v10798, 4294901760
    %v10800 = vsub.f32 %v10798, %v10799
    %v10801 = vand.u32 %v10800, 4294901760
    %10802 = vmatmul.f32.gmra.mxu0 %v10801
    %v10803 = vpop.f32.mrf.mxu0
    %v10804 = vadd.f32 0.0, %v10803
    %v10805 = vand.u32 %v10128, 4294901760
    %v10806 = vsub.f32 %v10128, %v10805
    %v10807 = vand.u32 %v10806, 4294901760
    %v10808 = vsub.f32 %v10806, %v10807
    %v10809 = vand.u32 %v10808, 4294901760
    %10810 = vmatmul.f32.gmra.mxu0 %v10809
    %v10811 = vpop.f32.mrf.mxu0
    %v10812 = vadd.f32 0.0, %v10811
    %v10813 = vand.u32 %v10131, 4294901760
    %v10814 = vsub.f32 %v10131, %v10813
    %v10815 = vand.u32 %v10814, 4294901760
    %v10816 = vsub.f32 %v10814, %v10815
    %v10817 = vand.u32 %v10816, 4294901760
    %10818 = vmatmul.f32.gmra.mxu0 %v10817
    %v10819 = vpop.f32.mrf.mxu0
    %v10820 = vadd.f32 0.0, %v10819
    %v10821 = vand.u32 %v10134, 4294901760
    %v10822 = vsub.f32 %v10134, %v10821
    %v10823 = vand.u32 %v10822, 4294901760
    %v10824 = vsub.f32 %v10822, %v10823
    %v10825 = vand.u32 %v10824, 4294901760
    %10826 = vmatmul.f32.gmra.mxu0 %v10825
    %v10827 = vpop.f32.mrf.mxu0
    %v10828 = vadd.f32 0.0, %v10827
    %v10829 = vand.u32 %v10137, 4294901760
    %v10830 = vsub.f32 %v10137, %v10829
    %v10831 = vand.u32 %v10830, 4294901760
    %v10832 = vsub.f32 %v10830, %v10831
    %v10833 = vand.u32 %v10832, 4294901760
    %10834 = vmatmul.f32.gmra.mxu0 %v10833
    %v10835 = vpop.f32.mrf.mxu0
    %v10836 = vadd.f32 0.0, %v10835
    %10837 = vdwg.mxu0
    %10838 = vmatpush.msra.mxu0 0.0
    %10839 = vmatpush.msra.mxu0 0.0
    %10840 = vmatpush.msra.mxu0 0.0
    %10841 = vmatpush.msra.mxu0 0.0
    %10842 = vmatpush.msra.mxu0 0.0
    %10843 = vmatpush.msra.mxu0 0.0
    %10844 = vmatpush.msra.mxu0 0.0
    %10845 = vmatpush.msra.mxu0 0.0
    %v10846 = vand.u32 %v8768, 4294901760
    %v10847 = vsub.f32 %v8768, %v10846
    %v10848 = vand.u32 %v10847, 4294901760
    %v10849 = vsub.f32 %v10847, %v10848
    %v10850 = vand.u32 %v10849, 4294901760
    %10851 = vmatpush.msra.mxu0 %v10850
    %v10852 = vand.u32 %v8712, 4294901760
    %v10853 = vsub.f32 %v8712, %v10852
    %v10854 = vand.u32 %v10853, 4294901760
    %v10855 = vsub.f32 %v10853, %v10854
    %v10856 = vand.u32 %v10855, 4294901760
    %10857 = vmatpush.msra.mxu0 %v10856
    %v10858 = vand.u32 %v8710, 4294901760
    %v10859 = vsub.f32 %v8710, %v10858
    %v10860 = vand.u32 %v10859, 4294901760
    %v10861 = vsub.f32 %v10859, %v10860
    %v10862 = vand.u32 %v10861, 4294901760
    %10863 = vmatpush.msra.mxu0 %v10862
    %v10864 = vand.u32 %v8708, 4294901760
    %v10865 = vsub.f32 %v8708, %v10864
    %v10866 = vand.u32 %v10865, 4294901760
    %v10867 = vsub.f32 %v10865, %v10866
    %v10868 = vand.u32 %v10867, 4294901760
    %10869 = vmatpush.msra.mxu0 %v10868
    %v10870 = vand.u32 %v8706, 4294901760
    %v10871 = vsub.f32 %v8706, %v10870
    %v10872 = vand.u32 %v10871, 4294901760
    %v10873 = vsub.f32 %v10871, %v10872
    %v10874 = vand.u32 %v10873, 4294901760
    %10875 = vmatpush.msra.mxu0 %v10874
    %v10876 = vand.u32 %v8704, 4294901760
    %v10877 = vsub.f32 %v8704, %v10876
    %v10878 = vand.u32 %v10877, 4294901760
    %v10879 = vsub.f32 %v10877, %v10878
    %v10880 = vand.u32 %v10879, 4294901760
    %10881 = vmatpush.msra.mxu0 %v10880
    %v10882 = vand.u32 %v8702, 4294901760
    %v10883 = vsub.f32 %v8702, %v10882
    %v10884 = vand.u32 %v10883, 4294901760
    %v10885 = vsub.f32 %v10883, %v10884
    %v10886 = vand.u32 %v10885, 4294901760
    %10887 = vmatpush.msra.mxu0 %v10886
    %v10888 = vand.u32 %v8700, 4294901760
    %v10889 = vsub.f32 %v8700, %v10888
    %v10890 = vand.u32 %v10889, 4294901760
    %v10891 = vsub.f32 %v10889, %v10890
    %v10892 = vand.u32 %v10891, 4294901760
    %10893 = vmatpush.msra.mxu0 %v10892
    %v10894 = vand.u32 %v10104, 4294901760
    %10895 = vmatmul.f32.gmra.mxu0 %v10894
    %v10896 = vpop.f32.mrf.mxu0
    %v10897 = vadd.f32 %v10748, %v10896
    %v10898 = vand.u32 %v10107, 4294901760
    %10899 = vmatmul.f32.gmra.mxu0 %v10898
    %v10900 = vpop.f32.mrf.mxu0
    %v10901 = vadd.f32 %v10756, %v10900
    %v10902 = vand.u32 %v10110, 4294901760
    %10903 = vmatmul.f32.gmra.mxu0 %v10902
    %v10904 = vpop.f32.mrf.mxu0
    %v10905 = vadd.f32 %v10764, %v10904
    %v10906 = vand.u32 %v10113, 4294901760
    %10907 = vmatmul.f32.gmra.mxu0 %v10906
    %v10908 = vpop.f32.mrf.mxu0
    %v10909 = vadd.f32 %v10772, %v10908
    %v10910 = vand.u32 %v10116, 4294901760
    %10911 = vmatmul.f32.gmra.mxu0 %v10910
    %v10912 = vpop.f32.mrf.mxu0
    %v10913 = vadd.f32 %v10780, %v10912
    %v10914 = vand.u32 %v10119, 4294901760
    %10915 = vmatmul.f32.gmra.mxu0 %v10914
    %v10916 = vpop.f32.mrf.mxu0
    %v10917 = vadd.f32 %v10788, %v10916
    %v10918 = vand.u32 %v10122, 4294901760
    %10919 = vmatmul.f32.gmra.mxu0 %v10918
    %v10920 = vpop.f32.mrf.mxu0
    %v10921 = vadd.f32 %v10796, %v10920
    %v10922 = vand.u32 %v10125, 4294901760
    %10923 = vmatmul.f32.gmra.mxu0 %v10922
    %v10924 = vpop.f32.mrf.mxu0
    %v10925 = vadd.f32 %v10804, %v10924
    %v10926 = vand.u32 %v10128, 4294901760
    %10927 = vmatmul.f32.gmra.mxu0 %v10926
    %v10928 = vpop.f32.mrf.mxu0
    %v10929 = vadd.f32 %v10812, %v10928
    %v10930 = vand.u32 %v10131, 4294901760
    %10931 = vmatmul.f32.gmra.mxu0 %v10930
    %v10932 = vpop.f32.mrf.mxu0
    %v10933 = vadd.f32 %v10820, %v10932
    %v10934 = vand.u32 %v10134, 4294901760
    %10935 = vmatmul.f32.gmra.mxu0 %v10934
    %v10936 = vpop.f32.mrf.mxu0
    %v10937 = vadd.f32 %v10828, %v10936
    %v10938 = vand.u32 %v10137, 4294901760
    %10939 = vmatmul.f32.gmra.mxu0 %v10938
    %v10940 = vpop.f32.mrf.mxu0
    %v10941 = vadd.f32 %v10836, %v10940
    %10942 = vdwg.mxu0
    %10943 = vmatpush.msra.mxu0 0.0
    %10944 = vmatpush.msra.mxu0 0.0
    %10945 = vmatpush.msra.mxu0 0.0
    %10946 = vmatpush.msra.mxu0 0.0
    %10947 = vmatpush.msra.mxu0 0.0
    %10948 = vmatpush.msra.mxu0 0.0
    %10949 = vmatpush.msra.mxu0 0.0
    %10950 = vmatpush.msra.mxu0 0.0
    %v10951 = vand.u32 %v8768, 4294901760
    %v10952 = vsub.f32 %v8768, %v10951
    %10953 = vmatpush.msra.mxu0 %v10952
    %v10954 = vand.u32 %v8712, 4294901760
    %v10955 = vsub.f32 %v8712, %v10954
    %10956 = vmatpush.msra.mxu0 %v10955
    %v10957 = vand.u32 %v8710, 4294901760
    %v10958 = vsub.f32 %v8710, %v10957
    %10959 = vmatpush.msra.mxu0 %v10958
    %v10960 = vand.u32 %v8708, 4294901760
    %v10961 = vsub.f32 %v8708, %v10960
    %10962 = vmatpush.msra.mxu0 %v10961
    %v10963 = vand.u32 %v8706, 4294901760
    %v10964 = vsub.f32 %v8706, %v10963
    %10965 = vmatpush.msra.mxu0 %v10964
    %v10966 = vand.u32 %v8704, 4294901760
    %v10967 = vsub.f32 %v8704, %v10966
    %10968 = vmatpush.msra.mxu0 %v10967
    %v10969 = vand.u32 %v8702, 4294901760
    %v10970 = vsub.f32 %v8702, %v10969
    %10971 = vmatpush.msra.mxu0 %v10970
    %v10972 = vand.u32 %v8700, 4294901760
    %v10973 = vsub.f32 %v8700, %v10972
    %10974 = vmatpush.msra.mxu0 %v10973
    %v10975 = vand.u32 %v10104, 4294901760
    %v10976 = vsub.f32 %v10104, %v10975
    %10977 = vmatmul.f32.gmra.mxu0 %v10976
    %v10978 = vpop.f32.mrf.mxu0
    %v10979 = vadd.f32 %v10897, %v10978
    %v10980 = vand.u32 %v10107, 4294901760
    %v10981 = vsub.f32 %v10107, %v10980
    %10982 = vmatmul.f32.gmra.mxu0 %v10981
    %v10983 = vpop.f32.mrf.mxu0
    %v10984 = vadd.f32 %v10901, %v10983
    %v10985 = vand.u32 %v10110, 4294901760
    %v10986 = vsub.f32 %v10110, %v10985
    %10987 = vmatmul.f32.gmra.mxu0 %v10986
    %v10988 = vpop.f32.mrf.mxu0
    %v10989 = vadd.f32 %v10905, %v10988
    %v10990 = vand.u32 %v10113, 4294901760
    %v10991 = vsub.f32 %v10113, %v10990
    %10992 = vmatmul.f32.gmra.mxu0 %v10991
    %v10993 = vpop.f32.mrf.mxu0
    %v10994 = vadd.f32 %v10909, %v10993
    %v10995 = vand.u32 %v10116, 4294901760
    %v10996 = vsub.f32 %v10116, %v10995
    %10997 = vmatmul.f32.gmra.mxu0 %v10996
    %v10998 = vpop.f32.mrf.mxu0
    %v10999 = vadd.f32 %v10913, %v10998
    %v11000 = vand.u32 %v10119, 4294901760
    %v11001 = vsub.f32 %v10119, %v11000
    %11002 = vmatmul.f32.gmra.mxu0 %v11001
    %v11003 = vpop.f32.mrf.mxu0
    %v11004 = vadd.f32 %v10917, %v11003
    %v11005 = vand.u32 %v10122, 4294901760
    %v11006 = vsub.f32 %v10122, %v11005
    %11007 = vmatmul.f32.gmra.mxu0 %v11006
    %v11008 = vpop.f32.mrf.mxu0
    %v11009 = vadd.f32 %v10921, %v11008
    %v11010 = vand.u32 %v10125, 4294901760
    %v11011 = vsub.f32 %v10125, %v11010
    %11012 = vmatmul.f32.gmra.mxu0 %v11011
    %v11013 = vpop.f32.mrf.mxu0
    %v11014 = vadd.f32 %v10925, %v11013
    %v11015 = vand.u32 %v10128, 4294901760
    %v11016 = vsub.f32 %v10128, %v11015
    %11017 = vmatmul.f32.gmra.mxu0 %v11016
    %v11018 = vpop.f32.mrf.mxu0
    %v11019 = vadd.f32 %v10929, %v11018
    %v11020 = vand.u32 %v10131, 4294901760
    %v11021 = vsub.f32 %v10131, %v11020
    %11022 = vmatmul.f32.gmra.mxu0 %v11021
    %v11023 = vpop.f32.mrf.mxu0
    %v11024 = vadd.f32 %v10933, %v11023
    %v11025 = vand.u32 %v10134, 4294901760
    %v11026 = vsub.f32 %v10134, %v11025
    %11027 = vmatmul.f32.gmra.mxu0 %v11026
    %v11028 = vpop.f32.mrf.mxu0
    %v11029 = vadd.f32 %v10937, %v11028
    %v11030 = vand.u32 %v10137, 4294901760
    %v11031 = vsub.f32 %v10137, %v11030
    %11032 = vmatmul.f32.gmra.mxu0 %v11031
    %v11033 = vpop.f32.mrf.mxu0
    %v11034 = vadd.f32 %v10941, %v11033
    %11035 = vdwg.mxu0
    %11036 = vmatpush.msra.mxu0 0.0
    %11037 = vmatpush.msra.mxu0 0.0
    %11038 = vmatpush.msra.mxu0 0.0
    %11039 = vmatpush.msra.mxu0 0.0
    %11040 = vmatpush.msra.mxu0 0.0
    %11041 = vmatpush.msra.mxu0 0.0
    %11042 = vmatpush.msra.mxu0 0.0
    %11043 = vmatpush.msra.mxu0 0.0
    %v11044 = vand.u32 %v8768, 4294901760
    %11045 = vmatpush.msra.mxu0 %v11044
    %v11046 = vand.u32 %v8712, 4294901760
    %11047 = vmatpush.msra.mxu0 %v11046
    %v11048 = vand.u32 %v8710, 4294901760
    %11049 = vmatpush.msra.mxu0 %v11048
    %v11050 = vand.u32 %v8708, 4294901760
    %11051 = vmatpush.msra.mxu0 %v11050
    %v11052 = vand.u32 %v8706, 4294901760
    %11053 = vmatpush.msra.mxu0 %v11052
    %v11054 = vand.u32 %v8704, 4294901760
    %11055 = vmatpush.msra.mxu0 %v11054
    %v11056 = vand.u32 %v8702, 4294901760
    %11057 = vmatpush.msra.mxu0 %v11056
    %v11058 = vand.u32 %v8700, 4294901760
    %11059 = vmatpush.msra.mxu0 %v11058
    %v11060 = vand.u32 %v10104, 4294901760
    %v11061 = vsub.f32 %v10104, %v11060
    %v11062 = vand.u32 %v11061, 4294901760
    %11063 = vmatmul.f32.gmra.mxu0 %v11062
    %v11064 = vpop.f32.mrf.mxu0
    %v11065 = vadd.f32 %v10979, %v11064
    %v11066 = vand.u32 %v10107, 4294901760
    %v11067 = vsub.f32 %v10107, %v11066
    %v11068 = vand.u32 %v11067, 4294901760
    %11069 = vmatmul.f32.gmra.mxu0 %v11068
    %v11070 = vpop.f32.mrf.mxu0
    %v11071 = vadd.f32 %v10984, %v11070
    %v11072 = vand.u32 %v10110, 4294901760
    %v11073 = vsub.f32 %v10110, %v11072
    %v11074 = vand.u32 %v11073, 4294901760
    %11075 = vmatmul.f32.gmra.mxu0 %v11074
    %v11076 = vpop.f32.mrf.mxu0
    %v11077 = vadd.f32 %v10989, %v11076
    %v11078 = vand.u32 %v10113, 4294901760
    %v11079 = vsub.f32 %v10113, %v11078
    %v11080 = vand.u32 %v11079, 4294901760
    %11081 = vmatmul.f32.gmra.mxu0 %v11080
    %v11082 = vpop.f32.mrf.mxu0
    %v11083 = vadd.f32 %v10994, %v11082
    %v11084 = vand.u32 %v10116, 4294901760
    %v11085 = vsub.f32 %v10116, %v11084
    %v11086 = vand.u32 %v11085, 4294901760
    %11087 = vmatmul.f32.gmra.mxu0 %v11086
    %v11088 = vpop.f32.mrf.mxu0
    %v11089 = vadd.f32 %v10999, %v11088
    %v11090 = vand.u32 %v10119, 4294901760
    %v11091 = vsub.f32 %v10119, %v11090
    %v11092 = vand.u32 %v11091, 4294901760
    %11093 = vmatmul.f32.gmra.mxu0 %v11092
    %v11094 = vpop.f32.mrf.mxu0
    %v11095 = vadd.f32 %v11004, %v11094
    %v11096 = vand.u32 %v10122, 4294901760
    %v11097 = vsub.f32 %v10122, %v11096
    %v11098 = vand.u32 %v11097, 4294901760
    %11099 = vmatmul.f32.gmra.mxu0 %v11098
    %v11100 = vpop.f32.mrf.mxu0
    %v11101 = vadd.f32 %v11009, %v11100
    %v11102 = vand.u32 %v10125, 4294901760
    %v11103 = vsub.f32 %v10125, %v11102
    %v11104 = vand.u32 %v11103, 4294901760
    %11105 = vmatmul.f32.gmra.mxu0 %v11104
    %v11106 = vpop.f32.mrf.mxu0
    %v11107 = vadd.f32 %v11014, %v11106
    %v11108 = vand.u32 %v10128, 4294901760
    %v11109 = vsub.f32 %v10128, %v11108
    %v11110 = vand.u32 %v11109, 4294901760
    %11111 = vmatmul.f32.gmra.mxu0 %v11110
    %v11112 = vpop.f32.mrf.mxu0
    %v11113 = vadd.f32 %v11019, %v11112
    %v11114 = vand.u32 %v10131, 4294901760
    %v11115 = vsub.f32 %v10131, %v11114
    %v11116 = vand.u32 %v11115, 4294901760
    %11117 = vmatmul.f32.gmra.mxu0 %v11116
    %v11118 = vpop.f32.mrf.mxu0
    %v11119 = vadd.f32 %v11024, %v11118
    %v11120 = vand.u32 %v10134, 4294901760
    %v11121 = vsub.f32 %v10134, %v11120
    %v11122 = vand.u32 %v11121, 4294901760
    %11123 = vmatmul.f32.gmra.mxu0 %v11122
    %v11124 = vpop.f32.mrf.mxu0
    %v11125 = vadd.f32 %v11029, %v11124
    %v11126 = vand.u32 %v10137, 4294901760
    %v11127 = vsub.f32 %v10137, %v11126
    %v11128 = vand.u32 %v11127, 4294901760
    %11129 = vmatmul.f32.gmra.mxu0 %v11128
    %v11130 = vpop.f32.mrf.mxu0
    %v11131 = vadd.f32 %v11034, %v11130
    %11132 = vdwg.mxu0
    %11133 = vmatpush.msra.mxu0 0.0
    %11134 = vmatpush.msra.mxu0 0.0
    %11135 = vmatpush.msra.mxu0 0.0
    %11136 = vmatpush.msra.mxu0 0.0
    %11137 = vmatpush.msra.mxu0 0.0
    %11138 = vmatpush.msra.mxu0 0.0
    %11139 = vmatpush.msra.mxu0 0.0
    %11140 = vmatpush.msra.mxu0 0.0
    %v11141 = vand.u32 %v8768, 4294901760
    %v11142 = vsub.f32 %v8768, %v11141
    %v11143 = vand.u32 %v11142, 4294901760
    %11144 = vmatpush.msra.mxu0 %v11143
    %v11145 = vand.u32 %v8712, 4294901760
    %v11146 = vsub.f32 %v8712, %v11145
    %v11147 = vand.u32 %v11146, 4294901760
    %11148 = vmatpush.msra.mxu0 %v11147
    %v11149 = vand.u32 %v8710, 4294901760
    %v11150 = vsub.f32 %v8710, %v11149
    %v11151 = vand.u32 %v11150, 4294901760
    %11152 = vmatpush.msra.mxu0 %v11151
    %v11153 = vand.u32 %v8708, 4294901760
    %v11154 = vsub.f32 %v8708, %v11153
    %v11155 = vand.u32 %v11154, 4294901760
    %11156 = vmatpush.msra.mxu0 %v11155
    %v11157 = vand.u32 %v8706, 4294901760
    %v11158 = vsub.f32 %v8706, %v11157
    %v11159 = vand.u32 %v11158, 4294901760
    %11160 = vmatpush.msra.mxu0 %v11159
    %v11161 = vand.u32 %v8704, 4294901760
    %v11162 = vsub.f32 %v8704, %v11161
    %v11163 = vand.u32 %v11162, 4294901760
    %11164 = vmatpush.msra.mxu0 %v11163
    %v11165 = vand.u32 %v8702, 4294901760
    %v11166 = vsub.f32 %v8702, %v11165
    %v11167 = vand.u32 %v11166, 4294901760
    %11168 = vmatpush.msra.mxu0 %v11167
    %v11169 = vand.u32 %v8700, 4294901760
    %v11170 = vsub.f32 %v8700, %v11169
    %v11171 = vand.u32 %v11170, 4294901760
    %11172 = vmatpush.msra.mxu0 %v11171
    %v11173 = vand.u32 %v10104, 4294901760
    %11174 = vmatmul.f32.gmra.mxu0 %v11173
    %v11175 = vpop.f32.mrf.mxu0
    %v11176 = vadd.f32 %v11065, %v11175
    %v11177 = vand.u32 %v10107, 4294901760
    %11178 = vmatmul.f32.gmra.mxu0 %v11177
    %v11179 = vpop.f32.mrf.mxu0
    %v11180 = vadd.f32 %v11071, %v11179
    %v11181 = vand.u32 %v10110, 4294901760
    %11182 = vmatmul.f32.gmra.mxu0 %v11181
    %v11183 = vpop.f32.mrf.mxu0
    %v11184 = vadd.f32 %v11077, %v11183
    %v11185 = vand.u32 %v10113, 4294901760
    %11186 = vmatmul.f32.gmra.mxu0 %v11185
    %v11187 = vpop.f32.mrf.mxu0
    %v11188 = vadd.f32 %v11083, %v11187
    %v11189 = vand.u32 %v10116, 4294901760
    %11190 = vmatmul.f32.gmra.mxu0 %v11189
    %v11191 = vpop.f32.mrf.mxu0
    %v11192 = vadd.f32 %v11089, %v11191
    %v11193 = vand.u32 %v10119, 4294901760
    %11194 = vmatmul.f32.gmra.mxu0 %v11193
    %v11195 = vpop.f32.mrf.mxu0
    %v11196 = vadd.f32 %v11095, %v11195
    %v11197 = vand.u32 %v10122, 4294901760
    %11198 = vmatmul.f32.gmra.mxu0 %v11197
    %v11199 = vpop.f32.mrf.mxu0
    %v11200 = vadd.f32 %v11101, %v11199
    %v11201 = vand.u32 %v10125, 4294901760
    %11202 = vmatmul.f32.gmra.mxu0 %v11201
    %v11203 = vpop.f32.mrf.mxu0
    %v11204 = vadd.f32 %v11107, %v11203
    %v11205 = vand.u32 %v10128, 4294901760
    %11206 = vmatmul.f32.gmra.mxu0 %v11205
    %v11207 = vpop.f32.mrf.mxu0
    %v11208 = vadd.f32 %v11113, %v11207
    %v11209 = vand.u32 %v10131, 4294901760
    %11210 = vmatmul.f32.gmra.mxu0 %v11209
    %v11211 = vpop.f32.mrf.mxu0
    %v11212 = vadd.f32 %v11119, %v11211
    %v11213 = vand.u32 %v10134, 4294901760
    %11214 = vmatmul.f32.gmra.mxu0 %v11213
    %v11215 = vpop.f32.mrf.mxu0
    %v11216 = vadd.f32 %v11125, %v11215
    %v11217 = vand.u32 %v10137, 4294901760
    %11218 = vmatmul.f32.gmra.mxu0 %v11217
    %v11219 = vpop.f32.mrf.mxu0
    %v11220 = vadd.f32 %v11131, %v11219
    %11221 = vdwg.mxu0
    %11222 = vmatpush.msra.mxu0 0.0
    %11223 = vmatpush.msra.mxu0 0.0
    %11224 = vmatpush.msra.mxu0 0.0
    %11225 = vmatpush.msra.mxu0 0.0
    %11226 = vmatpush.msra.mxu0 0.0
    %11227 = vmatpush.msra.mxu0 0.0
    %11228 = vmatpush.msra.mxu0 0.0
    %11229 = vmatpush.msra.mxu0 0.0
    %v11230 = vand.u32 %v8768, 4294901760
    %11231 = vmatpush.msra.mxu0 %v11230
    %v11232 = vand.u32 %v8712, 4294901760
    %11233 = vmatpush.msra.mxu0 %v11232
    %v11234 = vand.u32 %v8710, 4294901760
    %11235 = vmatpush.msra.mxu0 %v11234
    %v11236 = vand.u32 %v8708, 4294901760
    %11237 = vmatpush.msra.mxu0 %v11236
    %v11238 = vand.u32 %v8706, 4294901760
    %11239 = vmatpush.msra.mxu0 %v11238
    %v11240 = vand.u32 %v8704, 4294901760
    %11241 = vmatpush.msra.mxu0 %v11240
    %v11242 = vand.u32 %v8702, 4294901760
    %11243 = vmatpush.msra.mxu0 %v11242
    %v11244 = vand.u32 %v8700, 4294901760
    %11245 = vmatpush.msra.mxu0 %v11244
    %v11246 = vand.u32 %v10104, 4294901760
    %11247 = vmatmul.f32.gmra.mxu0 %v11246
    %v11248 = vpop.f32.mrf.mxu0
    %v11249 = vadd.f32 %v11176, %v11248
    %v11250 = vand.u32 %v10107, 4294901760
    %11251 = vmatmul.f32.gmra.mxu0 %v11250
    %v11252 = vpop.f32.mrf.mxu0
    %v11253 = vadd.f32 %v11180, %v11252
    %v11254 = vand.u32 %v10110, 4294901760
    %11255 = vmatmul.f32.gmra.mxu0 %v11254
    %v11256 = vpop.f32.mrf.mxu0
    %v11257 = vadd.f32 %v11184, %v11256
    %v11258 = vand.u32 %v10113, 4294901760
    %11259 = vmatmul.f32.gmra.mxu0 %v11258
    %v11260 = vpop.f32.mrf.mxu0
    %v11261 = vadd.f32 %v11188, %v11260
    %v11262 = vand.u32 %v10116, 4294901760
    %11263 = vmatmul.f32.gmra.mxu0 %v11262
    %v11264 = vpop.f32.mrf.mxu0
    %v11265 = vadd.f32 %v11192, %v11264
    %v11266 = vand.u32 %v10119, 4294901760
    %11267 = vmatmul.f32.gmra.mxu0 %v11266
    %v11268 = vpop.f32.mrf.mxu0
    %v11269 = vadd.f32 %v11196, %v11268
    %v11270 = vand.u32 %v10122, 4294901760
    %11271 = vmatmul.f32.gmra.mxu0 %v11270
    %v11272 = vpop.f32.mrf.mxu0
    %v11273 = vadd.f32 %v11200, %v11272
    %v11274 = vand.u32 %v10125, 4294901760
    %11275 = vmatmul.f32.gmra.mxu0 %v11274
    %v11276 = vpop.f32.mrf.mxu0
    %v11277 = vadd.f32 %v11204, %v11276
    %v11278 = vand.u32 %v10128, 4294901760
    %11279 = vmatmul.f32.gmra.mxu0 %v11278
    %v11280 = vpop.f32.mrf.mxu0
    %v11281 = vadd.f32 %v11208, %v11280
    %v11282 = vand.u32 %v10131, 4294901760
    %11283 = vmatmul.f32.gmra.mxu0 %v11282
    %v11284 = vpop.f32.mrf.mxu0
    %v11285 = vadd.f32 %v11212, %v11284
    %v11286 = vand.u32 %v10134, 4294901760
    %11287 = vmatmul.f32.gmra.mxu0 %v11286
    %v11288 = vpop.f32.mrf.mxu0
    %v11289 = vadd.f32 %v11216, %v11288
    %v11290 = vand.u32 %v10137, 4294901760
    %11291 = vmatmul.f32.gmra.mxu0 %v11290
    %v11292 = vpop.f32.mrf.mxu0
    %v11293 = vadd.f32 %v11220, %v11292
    %11294 = vdwg.mxu0
    %v11295 = vadd.f32 %v10671, %v10675
    %v11296 = vadd.f32 %v11295, %v10679
    %v11297 = vadd.f32 %v11296, %v10683
    %v11298 = vadd.f32 %v11297, %v10687
    %v11299 = vadd.f32 %v11298, %v10691
    %v11300 = vadd.f32 %v11299, %v10695
    %v11301 = vadd.f32 %v11300, %v10699
    %v11302 = vadd.f32 %v11301, %v10703
    %v11303 = vadd.f32 %v11302, %v10707
    %v11304 = vadd.f32 %v11303, %v10711
    %v11305 = vadd.f32 %v11304, %v10715
    %v11306 = vrot.slane %v11305, 4
    %v11307 = vadd.f32 %v11305, %v11306
    %v11308 = vrot.slane %v11307, 2
    %v11309 = vadd.f32 %v11307, %v11308
    %v11310 = vrot.slane %v11309, 1
    %v11311 = vadd.f32 %v11309, %v11310
    %v11312 = vadd.f32 %v11249, %v11253
    %v11313 = vadd.f32 %v11312, %v11257
    %v11314 = vadd.f32 %v11313, %v11261
    %v11315 = vadd.f32 %v11314, %v11265
    %v11316 = vadd.f32 %v11315, %v11269
    %v11317 = vadd.f32 %v11316, %v11273
    %v11318 = vadd.f32 %v11317, %v11277
    %v11319 = vadd.f32 %v11318, %v11281
    %v11320 = vadd.f32 %v11319, %v11285
    %v11321 = vadd.f32 %v11320, %v11289
    %v11322 = vadd.f32 %v11321, %v11293
    %v11323 = vrot.slane %v11322, 4
    %v11324 = vadd.f32 %v11322, %v11323
    %v11325 = vrot.slane %v11324, 2
    %v11326 = vadd.f32 %v11324, %v11325
    %v11327 = vrot.slane %v11326, 1
    %v11328 = vadd.f32 %v11326, %v11327
    %v11329 = vadd.f32 %v9960, %v11311
    %v11330 = vadd.f32 %v9961, %v11328
    %v11331 = vmul.f32 %v10671, %v10671
    %v11332 = vmul.f32 %v11249, %v11249
    %v11333 = vmul.f32 %v10675, %v10675
    %v11334 = vmul.f32 %v11253, %v11253
    %v11335 = vmul.f32 %v10679, %v10679
    %v11336 = vmul.f32 %v11257, %v11257
    %v11337 = vmul.f32 %v10683, %v10683
    %v11338 = vmul.f32 %v11261, %v11261
    %v11339 = vmul.f32 %v10687, %v10687
    %v11340 = vmul.f32 %v11265, %v11265
    %v11341 = vmul.f32 %v10691, %v10691
    %v11342 = vmul.f32 %v11269, %v11269
    %v11343 = vmul.f32 %v10695, %v10695
    %v11344 = vmul.f32 %v11273, %v11273
    %v11345 = vmul.f32 %v10699, %v10699
    %v11346 = vmul.f32 %v11277, %v11277
    %v11347 = vmul.f32 %v10703, %v10703
    %v11348 = vmul.f32 %v11281, %v11281
    %v11349 = vmul.f32 %v10707, %v10707
    %v11350 = vmul.f32 %v11285, %v11285
    %v11351 = vmul.f32 %v10711, %v10711
    %v11352 = vmul.f32 %v11289, %v11289
    %v11353 = vmul.f32 %v10715, %v10715
    %v11354 = vmul.f32 %v11293, %v11293
    %v11355 = vadd.f32 %v11331, %v11333
    %v11356 = vadd.f32 %v11355, %v11335
    %v11357 = vadd.f32 %v11356, %v11337
    %v11358 = vadd.f32 %v11357, %v11339
    %v11359 = vadd.f32 %v11358, %v11341
    %v11360 = vadd.f32 %v11359, %v11343
    %v11361 = vadd.f32 %v11360, %v11345
    %v11362 = vadd.f32 %v11361, %v11347
    %v11363 = vadd.f32 %v11362, %v11349
    %v11364 = vadd.f32 %v11363, %v11351
    %v11365 = vadd.f32 %v11364, %v11353
    %v11366 = vrot.slane %v11365, 4
    %v11367 = vadd.f32 %v11365, %v11366
    %v11368 = vrot.slane %v11367, 2
    %v11369 = vadd.f32 %v11367, %v11368
    %v11370 = vrot.slane %v11369, 1
    %v11371 = vadd.f32 %v11369, %v11370
    %v11372 = vadd.f32 %v11332, %v11334
    %v11373 = vadd.f32 %v11372, %v11336
    %v11374 = vadd.f32 %v11373, %v11338
    %v11375 = vadd.f32 %v11374, %v11340
    %v11376 = vadd.f32 %v11375, %v11342
    %v11377 = vadd.f32 %v11376, %v11344
    %v11378 = vadd.f32 %v11377, %v11346
    %v11379 = vadd.f32 %v11378, %v11348
    %v11380 = vadd.f32 %v11379, %v11350
    %v11381 = vadd.f32 %v11380, %v11352
    %v11382 = vadd.f32 %v11381, %v11354
    %v11383 = vrot.slane %v11382, 4
    %v11384 = vadd.f32 %v11382, %v11383
    %v11385 = vrot.slane %v11384, 2
    %v11386 = vadd.f32 %v11384, %v11385
    %v11387 = vrot.slane %v11386, 1
    %v11388 = vadd.f32 %v11386, %v11387
    %v11389 = vadd.f32 %v10020, %v11371
    %v11390 = vadd.f32 %v10021, %v11388
    %v11391 = vmax.f32 %v10671, %v10679
    %v11392 = vmax.f32 %v10675, %v10683
    %v11393 = vmax.f32 %v11391, %v10687
    %v11394 = vmax.f32 %v11392, %v10691
    %v11395 = vmax.f32 %v11393, %v10695
    %v11396 = vmax.f32 %v11394, %v10699
    %v11397 = vmax.f32 %v11395, %v10703
    %v11398 = vmax.f32 %v11396, %v10707
    %v11399 = vmax.f32 %v11397, %v10711
    %v11400 = vmax.f32 %v11398, %v10715
    %v11401 = vmax.f32 %v11399, %v11400
    %v11402 = vrot.slane %v11401, 4
    %v11403 = vmax.f32 %v11401, %v11402
    %v11404 = vrot.slane %v11403, 2
    %v11405 = vmax.f32 %v11403, %v11404
    %v11406 = vrot.slane %v11405, 1
    %v11407 = vmax.f32 %v11405, %v11406
    %v11408 = vmax.f32 %v11249, %v11257
    %v11409 = vmax.f32 %v11253, %v11261
    %v11410 = vmax.f32 %v11408, %v11265
    %v11411 = vmax.f32 %v11409, %v11269
    %v11412 = vmax.f32 %v11410, %v11273
    %v11413 = vmax.f32 %v11411, %v11277
    %v11414 = vmax.f32 %v11412, %v11281
    %v11415 = vmax.f32 %v11413, %v11285
    %v11416 = vmax.f32 %v11414, %v11289
    %v11417 = vmax.f32 %v11415, %v11293
    %v11418 = vmax.f32 %v11416, %v11417
    %v11419 = vrot.slane %v11418, 4
    %v11420 = vmax.f32 %v11418, %v11419
    %v11421 = vrot.slane %v11420, 2
    %v11422 = vmax.f32 %v11420, %v11421
    %v11423 = vrot.slane %v11422, 1
    %v11424 = vmax.f32 %v11422, %v11423
    %v11425 = vmin.f32 %v10671, %v10679
    %v11426 = vmin.f32 %v10675, %v10683
    %v11427 = vmin.f32 %v11425, %v10687
    %v11428 = vmin.f32 %v11426, %v10691
    %v11429 = vmin.f32 %v11427, %v10695
    %v11430 = vmin.f32 %v11428, %v10699
    %v11431 = vmin.f32 %v11429, %v10703
    %v11432 = vmin.f32 %v11430, %v10707
    %v11433 = vmin.f32 %v11431, %v10711
    %v11434 = vmin.f32 %v11432, %v10715
    %v11435 = vmin.f32 %v11433, %v11434
    %v11436 = vrot.slane %v11435, 4
    %v11437 = vmin.f32 %v11435, %v11436
    %v11438 = vrot.slane %v11437, 2
    %v11439 = vmin.f32 %v11437, %v11438
    %v11440 = vrot.slane %v11439, 1
    %v11441 = vmin.f32 %v11439, %v11440
    %v11442 = vmin.f32 %v11249, %v11257
    %v11443 = vmin.f32 %v11253, %v11261
    %v11444 = vmin.f32 %v11442, %v11265
    %v11445 = vmin.f32 %v11443, %v11269
    %v11446 = vmin.f32 %v11444, %v11273
    %v11447 = vmin.f32 %v11445, %v11277
    %v11448 = vmin.f32 %v11446, %v11281
    %v11449 = vmin.f32 %v11447, %v11285
    %v11450 = vmin.f32 %v11448, %v11289
    %v11451 = vmin.f32 %v11449, %v11293
    %v11452 = vmin.f32 %v11450, %v11451
    %v11453 = vrot.slane %v11452, 4
    %v11454 = vmin.f32 %v11452, %v11453
    %v11455 = vrot.slane %v11454, 2
    %v11456 = vmin.f32 %v11454, %v11455
    %v11457 = vrot.slane %v11456, 1
    %v11458 = vmin.f32 %v11456, %v11457
    %v11459 = vmul.f32 %v11329, 0.0052083335
    %v11460 = vmul.f32 %v11330, 0.0052083335
    %v11461 = vmul.f32 %v11389, 0.0052083335
    %v11462 = vmul.f32 %v11390, 0.0052083335
    %v11463 = vmul.f32 %v11459, %v11459
    %v11464 = vmul.f32 %v11460, %v11460
    %v11465 = vsub.f32 %v11461, %v11463
    %v11466 = vsub.f32 %v11462, %v11464
    %s11467 = scalar_lea.vmem %s8, 6
    %v11468 = vld [vmem:[%s11467] ss:$8 sm:$0x3]
    %s11469 = scalar_lea.vmem %s8, 7
    %v11470 = vld [vmem:[%s11469] ss:$8 sm:$0x3]
    %v11471 = vadd.f32 %v11465, 1e-05
    %v11472 = vadd.f32 %v11466, 1e-05
    %v11473 = vrsqrt.pop %v11471
    %v11474 = vmul.f32 %v11473, %v11471
    %v11475 = vmul.f32 %v11474, %v11473
    %v11476 = vmul.f32 0.5, %v11475
    %v11477 = vsub.f32 1.5, %v11476
    %v11478 = vmul.f32 %v11473, %v11477
    %vm11479 = vweird.f32 %v11471
    %vm11480 = vweird.f32 %v11473
    %vm11481 = vmor %vm11479, %vm11480
    %v11482 = vsel %vm11481, %v11473, %v11478
    %v11483 = vrsqrt.pop %v11472
    %v11484 = vmul.f32 %v11483, %v11472
    %v11485 = vmul.f32 %v11484, %v11483
    %v11486 = vmul.f32 0.5, %v11485
    %v11487 = vsub.f32 1.5, %v11486
    %v11488 = vmul.f32 %v11483, %v11487
    %vm11489 = vweird.f32 %v11472
    %vm11490 = vweird.f32 %v11483
    %vm11491 = vmor %vm11489, %vm11490
    %v11492 = vsel %vm11491, %v11483, %v11488
    %v11495 = vrot.slane %v11492, 7
    %v11496 = vsel %vm1258, %v11482, %v11495
    %v11498 = vmul.f32 %v11468, %v11496
    %v11500 = vperm.slane %v11498, 0
    %v11501 = vperm.slane %v11498, 1
    %v11504 = vmul.f32 %v11459, %v11500
    %v11505 = vmul.f32 %v11460, %v11501
    %v11508 = vrot.slane %v11505, 7
    %v11509 = vsel %vm1258, %v11504, %v11508
    %v11511 = vsub.f32 %v11470, %v11509
    %vm11512 = vcmp.ge.f32.partialorder %v11498, 0.0
    %v11513 = vmul.f32 %v10038, %v11500
    %v11514 = vmul.f32 %v10055, %v11501
    %v11515 = vmul.f32 %v10072, %v11500
    %v11516 = vmul.f32 %v10089, %v11501
    %v11519 = vrot.slane %v11514, 7
    %v11520 = vsel %vm1258, %v11513, %v11519
    %v11524 = vrot.slane %v11516, 7
    %v11525 = vsel %vm1258, %v11515, %v11524
    %v11527 = vsel %vm11512, %v11520, %v11525
    %v11528 = vadd.f32 %v11527, %v11511
    %v11529 = vmax.f32 %v11528, 0.0
    %s11530 = scalar_lea.vmem [#allocation2], 12
    %11531 = vst.msk [vmem:[%s11530] ss:$2 sm:$0x3] %vm2911, %v11529
    %v11532 = vmul.f32 %v11407, %v11500
    %v11533 = vmul.f32 %v11424, %v11501
    %v11534 = vmul.f32 %v11441, %v11500
    %v11535 = vmul.f32 %v11458, %v11501
    %v11538 = vrot.slane %v11533, 7
    %v11539 = vsel %vm1258, %v11532, %v11538
    %v11543 = vrot.slane %v11535, 7
    %v11544 = vsel %vm1258, %v11534, %v11543
    %v11546 = vsel %vm11512, %v11539, %v11544
    %v11547 = vadd.f32 %v11546, %v11511
    %v11548 = vmax.f32 %v11547, 0.0
    %s11549 = scalar_lea.vmem [#allocation2], 13
    %11550 = vst.msk [vmem:[%s11549] ss:$2 sm:$0x3] %vm2911, %v11548
    // Predicated region
    $region38: #{tpu_custom_call.1} parent=1 // pred_check
      _
    $region39: #{tpu_custom_call.1} parent=1 // pred_check_branch
      %11552 = sbr.rel (0) target = $region41
    $region40: #{tpu_custom_call.1} parent=1 // pred_region
      %11554 = vsyncadd [#allocation3], 0
      %s11556 = sshll.u32 [#allocation2], 4
      %s11557 = int_to_ptr.vmem [resolvable:$true] %s11556
      %s11558 = sshll.u32 %s9, 4
      %s11559 = int_to_ptr.hbm [resolvable:$true] %s11558
      %11561 = dma.vmem_to_hbm [thread:$0]  %s11557, 256, %s11559, [#allocation3]
    $region41: #{tpu_custom_call.1} parent=1 // pred_fallthru
      _
    // Predicated region
    $region42: #{tpu_custom_call.1} parent=1 // pred_check
      _
    $region43: #{tpu_custom_call.1} parent=1 // pred_check_branch
      %11563 = sbr.rel (0) target = $region45
    $region44: #{tpu_custom_call.1} parent=1 // pred_region
      %11565 = dma.done [#allocation3], 256
    $region45: #{tpu_custom_call.1} parent=1 // pred_fallthru
      _
    %11566 = vsyncpa [#allocation3], 1

</llo_original>
